<compile_context>
chip_gen: v6e
topology: v6e:2x2x1
jax: 0.10.0
libtpu: 0.0.40
codegen_flags: <defaults>
</compile_context>

<pallas_src>
import jax
import jax.numpy as jnp
from jax.experimental import pallas as pl
from jax.experimental.pallas import tpu as pltpu


# ----------------------------------------------------------------------------
# VMEM limit per generation
# ----------------------------------------------------------------------------
def _vmem_limit_bytes():
    """~75% of physical VMEM: ~96 MiB on v5e/v6e (128 MiB), ~48 MiB on v7x (64 MiB)."""
    try:
        cap = getattr(pltpu.get_tpu_info(), "vmem_capacity_bytes", None)
        if cap:
            return int(cap) * 3 // 4
    except Exception:
        pass
    return 48 * 1024 * 1024


# ----------------------------------------------------------------------------
# Fused RDB kernel
# ----------------------------------------------------------------------------
def _make_rdb_kernel(C, cin0, G, H, W, Cslab):
    """Fused-RDB kernel for static (C, in_channels, G, H, W)."""
    Hp, Wp = H + 2, W + 2

    def kernel(x_ref, wcat_ref, bcat_ref, lffw_ref, lffb_ref, o_ref, slab):
        # Zero only the 1-pixel conv halo (not the whole slab).  Every interior
        # element of the slab is overwritten each image, so the halo is the only
        # part that must be zero.  Done unconditionally (cheap, perimeter-only)
        # rather than under pl.program_id(0)==0: with a "parallel" batch axis the
        # scratch is per-TensorCore and non-zero cores never execute program 0.
        zrow = jnp.zeros((1, Wp, Cslab), jnp.float32)
        zcol = jnp.zeros((Hp, 1, Cslab), jnp.float32)
        slab[0:1, :, :] = zrow
        slab[H + 1:H + 2, :, :] = zrow
        slab[:, 0:1, :] = zcol
        slab[:, W + 1:W + 2, :] = zcol

        # Block input into the slab interior (channels [0, cin0)).
        x = x_ref[0].astype(jnp.float32)                       # (H, W, cin0)
        slab[1:H + 1, 1:W + 1, 0:cin0] = x

        # LFF (1x1 conv) is folded into the layer loop: start the output
        # accumulator with the residual, the LFF bias and the input-channel
        # contribution of the LFF weight.
        lff_b = lffb_ref[...]                                  # (1, G)
        out_acc = x + lff_b + jnp.einsum(
            "hwc,cg->hwg", x, lffw_ref[0:cin0, :],
            preferred_element_type=jnp.float32)                # (H, W, G)

        off = 0
        for i in range(C):
            cin_i = cin0 + G * i
            K = 9 * cin_i
            # im2col: build the (H, W, 9*cin_i) patch slab and do ONE MXU matmul
            # with contraction K = 9*cin_i instead of 9 tiny-K einsums + VPU adds.
            patches = jnp.concatenate(
                [slab[kh:kh + H, kw:kw + W, 0:cin_i]
                 for kh in range(3) for kw in range(3)],
                axis=-1)                                       # (H, W, 9*cin_i)
            w = wcat_ref[off:off + K, :]                       # (9*cin_i, G)
            y = jnp.einsum("hwk,kg->hwg", patches, w,
                           preferred_element_type=jnp.float32)
            y = jnp.maximum(y + bcat_ref[i:i + 1, :], 0.0)     # bias + ReLU

            if i + 1 < C:
                # "torch.cat" == append the G new channels in the resident slab
                # (only needed if a later layer will read them).
                slab[1:H + 1, 1:W + 1, cin_i:cin_i + G] = y

            # Fold this layer's slice of the 1x1 LFF conv into the output.
            out_acc = out_acc + jnp.einsum(
                "hwc,cg->hwg", y, lffw_ref[cin_i:cin_i + G, :],
                preferred_element_type=jnp.float32)
            off += K

        o_ref[0] = out_acc.astype(o_ref.dtype)

    return kernel


# ----------------------------------------------------------------------------
# Wrappers (pallas_call plumbing)
# ----------------------------------------------------------------------------
def rdb_fused_nhwc(x_nhwc, params):
    """Fused RDB forward in NHWC. x: (N, H, W, in_channels) -> (N, H, W, G)."""
    N, H, W, cin0 = x_nhwc.shape
    dense = params["dense"]
    C = len(dense)
    G = dense[0][0].shape[-1]
    Ctot = cin0 + G * C
    if cin0 != G:
        raise ValueError(
            f"RDB residual add requires in_channels == G (got {cin0} vs {G}).")

    # Only channels that are ever read by a 3x3 conv live in the slab.
    Cslab = cin0 + G * (C - 1)

    # Pack all dense-layer weights (flattened to im2col layout (9*cin_i, G)) and
    # biases into single constant arrays -> one DMA each, fewer BlockSpecs.
    w_flat = jnp.concatenate(
        [w.reshape(-1, w.shape[-1]) for (w, _) in dense], axis=0)   # (sum 9*cin_i, G)
    b_cat = jnp.stack([b for (_, b) in dense], axis=0)              # (C, G)
    lff_w = params["lff_w"]                                         # (Ctot, G)
    lff_b = params["lff_b"].reshape(1, G)
    Ksum = w_flat.shape[0]

    kernel = _make_rdb_kernel(C, cin0, G, H, W, Cslab)

    in_specs = [
        pl.BlockSpec((1, H, W, cin0), lambda n: (n, 0, 0, 0)),
        pl.BlockSpec((Ksum, G), lambda n: (0, 0)),
        pl.BlockSpec((C, G), lambda n: (0, 0)),
        pl.BlockSpec((Ctot, G), lambda n: (0, 0)),
        pl.BlockSpec((1, G), lambda n: (0, 0)),
    ]

    # TODO(synk): lane-dense output packing (last block dim a multiple of 128) and a
    #             row-strip grid axis with recompute halo for production H/W sizes.
    return pl.pallas_call(
        kernel,
        out_shape=jax.ShapeDtypeStruct((N, H, W, G), x_nhwc.dtype),
        grid=(N,),
        in_specs=in_specs,
        out_specs=pl.BlockSpec((1, H, W, G), lambda n: (n, 0, 0, 0)),
        scratch_shapes=[pltpu.VMEM((H + 2, W + 2, Cslab), jnp.float32)],
        compiler_params=pltpu.CompilerParams(
            dimension_semantics=("parallel",),
            vmem_limit_bytes=_vmem_limit_bytes()),
    )(x_nhwc, w_flat, b_cat, lff_w, lff_b)


@jax.jit
def rdb_forward(x_nchw, params):
    """PyTorch-parity entry point: (N, in_channels, H, W) -> (N, G, H, W).

    For a full RDN, keep the model NHWC end-to-end and call rdb_fused_nhwc
    directly; these transposes should live only at model entry/exit.
    """
    x = jnp.transpose(x_nchw, (0, 2, 3, 1))      # NCHW -> NHWC
    out = rdb_fused_nhwc(x, params)
    return jnp.transpose(out, (0, 3, 1, 2))      # NHWC -> NCHW


# ----------------------------------------------------------------------------
# Synthetic parameters (same shapes as the PyTorch module, HWIO conv layout)
# ----------------------------------------------------------------------------
def init_rdb_params(key, in_channels, G, C):
    params = {"dense": []}
    for i in range(C):
        cin = in_channels + G * i
        key, kw, kb = jax.random.split(key, 3)
        scale = 1.0 / jnp.sqrt(9.0 * cin)
        w = jax.random.uniform(kw, (3, 3, cin, G), jnp.float32, -scale, scale)
        b = jax.random.uniform(kb, (G,), jnp.float32, -scale, scale)
        params["dense"].append((w, b))
    cin = in_channels + G * C
    key, kw, kb = jax.random.split(key, 3)
    scale = 1.0 / jnp.sqrt(float(cin))
    params["lff_w"] = jax.random.uniform(kw, (cin, G), jnp.float32, -scale, scale)
    params["lff_b"] = jax.random.uniform(kb, (G,), jnp.float32, -scale, scale)
    return params


# ----------------------------------------------------------------------------
# Pure-JAX reference (correctness check)
# ----------------------------------------------------------------------------
def rdb_reference(x_nchw, params):
    x = jnp.transpose(x_nchw, (0, 2, 3, 1))
    feat = x
    dn = jax.lax.conv_dimension_numbers(x.shape, (3, 3, 1, 1),
                                        ("NHWC", "HWIO", "NHWC"))
    for (w, b) in params["dense"]:
        y = jax.lax.conv_general_dilated(
            feat, w, window_strides=(1, 1), padding="SAME", dimension_numbers=dn)
        y = jnp.maximum(y + b, 0.0)
        feat = jnp.concatenate([feat, y], axis=-1)
    y = jnp.einsum("nhwc,cg->nhwg", feat, params["lff_w"]) + params["lff_b"]
    out = x + y
    return jnp.transpose(out, (0, 3, 1, 2))


# ----------------------------------------------------------------------------
if __name__ == "__main__":
    # RDB(in_channels, G, C) — the residual add requires in_channels == G.
    in_channels, G, C = 8, 8, 3
    N, H, W = 2, 16, 16

    key = jax.random.PRNGKey(0)
    key, kx = jax.random.split(key)
    x = jax.random.normal(kx, (N, in_channels, H, W), jnp.float32)

    params = init_rdb_params(key, in_channels, G, C)

    out = jax.block_until_ready(rdb_forward(x, params))
    ref = rdb_reference(x, params)

    assert out.shape == (N, G, H, W), out.shape
    max_err = float(jnp.max(jnp.abs(out - ref)))
    assert jnp.allclose(out, ref, atol=2e-4, rtol=2e-4), max_err

    print("KERNEL_OK")
</pallas_src>

<mosaic_0001>
module attributes {stable_mosaic.version = 11 : i64} {
  func.func @kernel(%arg0: i32, %arg1: memref<1x16x16x8xf32, #tpu.memory_space<vmem>>, %arg2: memref<432x8xf32, #tpu.memory_space<vmem>>, %arg3: memref<3x8xf32, #tpu.memory_space<vmem>>, %arg4: memref<32x8xf32, #tpu.memory_space<vmem>>, %arg5: memref<1x8xf32, #tpu.memory_space<vmem>>, %arg6: memref<1x16x16x8xf32, #tpu.memory_space<vmem>>, %arg7: memref<18x18x24xf32, #tpu.memory_space<vmem>>) attributes {dimension_semantics = [#tpu.dimension_semantics<parallel>], iteration_bounds = array<i64: 2>, scalar_prefetch = 0 : i64, scratch_operands = 1 : i64, tpu.core_type = #tpu.core_type<tc>, window_params = [{transform_indices = @transform_0, window_bounds = array<i64: 1, 16, 16, 8>}, {pipeline_mode = #tpu.pipeline_mode<synchronous>, transform_indices = @transform_1, window_bounds = array<i64: 432, 8>}, {pipeline_mode = #tpu.pipeline_mode<synchronous>, transform_indices = @transform_2, window_bounds = array<i64: 3, 8>}, {pipeline_mode = #tpu.pipeline_mode<synchronous>, transform_indices = @transform_3, window_bounds = array<i64: 32, 8>}, {pipeline_mode = #tpu.pipeline_mode<synchronous>, transform_indices = @transform_4, window_bounds = array<i64: 1, 8>}, {transform_indices = @transform_5, window_bounds = array<i64: 1, 16, 16, 8>}]} {
    %cst = arith.constant 0.000000e+00 : f32
    %0 = vector.broadcast %cst : f32 to vector<1x18x24xf32>
    %cst_0 = arith.constant 0.000000e+00 : f32
    %1 = vector.broadcast %cst_0 : f32 to vector<18x1x24xf32>
    %c0 = arith.constant 0 : index
    %c0_1 = arith.constant 0 : index
    %c0_2 = arith.constant 0 : index
    %2 = vector.load %arg7[%c0, %c0_1, %c0_2] : memref<18x18x24xf32, #tpu.memory_space<vmem>>, vector<1x18x24xf32>
    tpu.vector_store %arg7[%c0, %c0_1, %c0_2], %0 {strides = array<i32>} : memref<18x18x24xf32, #tpu.memory_space<vmem>>, vector<1x18x24xf32>,
    %c17 = arith.constant 17 : index
    %c0_3 = arith.constant 0 : index
    %c0_4 = arith.constant 0 : index
    %3 = vector.load %arg7[%c17, %c0_3, %c0_4] : memref<18x18x24xf32, #tpu.memory_space<vmem>>, vector<1x18x24xf32>
    tpu.vector_store %arg7[%c17, %c0_3, %c0_4], %0 {strides = array<i32>} : memref<18x18x24xf32, #tpu.memory_space<vmem>>, vector<1x18x24xf32>,
    %c0_5 = arith.constant 0 : index
    %c0_6 = arith.constant 0 : index
    %c0_7 = arith.constant 0 : index
    %4 = vector.load %arg7[%c0_5, %c0_6, %c0_7] : memref<18x18x24xf32, #tpu.memory_space<vmem>>, vector<18x1x24xf32>
    tpu.vector_store %arg7[%c0_5, %c0_6, %c0_7], %1 {strides = array<i32>} : memref<18x18x24xf32, #tpu.memory_space<vmem>>, vector<18x1x24xf32>,
    %c0_8 = arith.constant 0 : index
    %c17_9 = arith.constant 17 : index
    %c0_10 = arith.constant 0 : index
    %5 = vector.load %arg7[%c0_8, %c17_9, %c0_10] : memref<18x18x24xf32, #tpu.memory_space<vmem>>, vector<18x1x24xf32>
    tpu.vector_store %arg7[%c0_8, %c17_9, %c0_10], %1 {strides = array<i32>} : memref<18x18x24xf32, #tpu.memory_space<vmem>>, vector<18x1x24xf32>,
    %c0_11 = arith.constant 0 : index
    %c0_12 = arith.constant 0 : index
    %c0_13 = arith.constant 0 : index
    %c0_14 = arith.constant 0 : index
    %6 = vector.load %arg1[%c0_11, %c0_12, %c0_13, %c0_14] : memref<1x16x16x8xf32, #tpu.memory_space<vmem>>, vector<1x16x16x8xf32>
    %7 = vector.shape_cast %6 : vector<1x16x16x8xf32> to vector<16x16x8xf32>
    %c1 = arith.constant 1 : index
    %c1_15 = arith.constant 1 : index
    %c0_16 = arith.constant 0 : index
    %8 = vector.load %arg7[%c1, %c1_15, %c0_16] : memref<18x18x24xf32, #tpu.memory_space<vmem>>, vector<16x16x8xf32>
    tpu.vector_store %arg7[%c1, %c1_15, %c0_16], %7 {strides = array<i32>} : memref<18x18x24xf32, #tpu.memory_space<vmem>>, vector<16x16x8xf32>,
    %c0_17 = arith.constant 0 : index
    %c0_18 = arith.constant 0 : index
    %9 = vector.load %arg5[%c0_17, %c0_18] : memref<1x8xf32, #tpu.memory_space<vmem>>, vector<1x8xf32>
    %10 = vector.shape_cast %9 : vector<1x8xf32> to vector<1x1x8xf32>
    %11 = vector.broadcast %10 : vector<1x1x8xf32> to vector<16x16x8xf32>
    %12 = arith.addf %7, %11 : vector<16x16x8xf32>
    %c0_19 = arith.constant 0 : index
    %c0_20 = arith.constant 0 : index
    %13 = vector.load %arg4[%c0_19, %c0_20] : memref<32x8xf32, #tpu.memory_space<vmem>>, vector<8x8xf32>
    "tpu.trace_start"() <{level = 10 : i32, message = "hwc,cg->hwg"}> : () -> ()
    %cst_21 = arith.constant dense<0.000000e+00> : vector<16x16x8xf32>
    %14 = tpu.matmul %7, %13, %cst_21 {dimension_numbers = #tpu.dot_dimension_numbers<[2], [0], [0, 1], [1], [0, 0, 0, 1, 1, 1], [], []>} : vector<16x16x8xf32>, vector<8x8xf32>, vector<16x16x8xf32> -> vector<16x16x8xf32>
    "tpu.trace_stop"() : () -> ()
    %15 = arith.addf %12, %14 : vector<16x16x8xf32>
    %c0_22 = arith.constant 0 : index
    %c0_23 = arith.constant 0 : index
    %c0_24 = arith.constant 0 : index
    %16 = vector.load %arg7[%c0_22, %c0_23, %c0_24] : memref<18x18x24xf32, #tpu.memory_space<vmem>>, vector<16x16x8xf32>
    %c0_25 = arith.constant 0 : index
    %c1_26 = arith.constant 1 : index
    %c0_27 = arith.constant 0 : index
    %17 = vector.load %arg7[%c0_25, %c1_26, %c0_27] : memref<18x18x24xf32, #tpu.memory_space<vmem>>, vector<16x16x8xf32>
    %c0_28 = arith.constant 0 : index
    %c2 = arith.constant 2 : index
    %c0_29 = arith.constant 0 : index
    %18 = vector.load %arg7[%c0_28, %c2, %c0_29] : memref<18x18x24xf32, #tpu.memory_space<vmem>>, vector<16x16x8xf32>
    %c1_30 = arith.constant 1 : index
    %c0_31 = arith.constant 0 : index
    %c0_32 = arith.constant 0 : index
    %19 = vector.load %arg7[%c1_30, %c0_31, %c0_32] : memref<18x18x24xf32, #tpu.memory_space<vmem>>, vector<16x16x8xf32>
    %c1_33 = arith.constant 1 : index
    %c1_34 = arith.constant 1 : index
    %c0_35 = arith.constant 0 : index
    %20 = vector.load %arg7[%c1_33, %c1_34, %c0_35] : memref<18x18x24xf32, #tpu.memory_space<vmem>>, vector<16x16x8xf32>
    %c1_36 = arith.constant 1 : index
    %c2_37 = arith.constant 2 : index
    %c0_38 = arith.constant 0 : index
    %21 = vector.load %arg7[%c1_36, %c2_37, %c0_38] : memref<18x18x24xf32, #tpu.memory_space<vmem>>, vector<16x16x8xf32>
    %c2_39 = arith.constant 2 : index
    %c0_40 = arith.constant 0 : index
    %c0_41 = arith.constant 0 : index
    %22 = vector.load %arg7[%c2_39, %c0_40, %c0_41] : memref<18x18x24xf32, #tpu.memory_space<vmem>>, vector<16x16x8xf32>
    %c2_42 = arith.constant 2 : index
    %c1_43 = arith.constant 1 : index
    %c0_44 = arith.constant 0 : index
    %23 = vector.load %arg7[%c2_42, %c1_43, %c0_44] : memref<18x18x24xf32, #tpu.memory_space<vmem>>, vector<16x16x8xf32>
    %c2_45 = arith.constant 2 : index
    %c2_46 = arith.constant 2 : index
    %c0_47 = arith.constant 0 : index
    %24 = vector.load %arg7[%c2_45, %c2_46, %c0_47] : memref<18x18x24xf32, #tpu.memory_space<vmem>>, vector<16x16x8xf32>
    %25 = tpu.concatenate %16, %17, %18, %19, %20, %21, %22, %23, %24 in 2 : vector<16x16x8xf32>, vector<16x16x8xf32>, vector<16x16x8xf32>, vector<16x16x8xf32>, vector<16x16x8xf32>, vector<16x16x8xf32>, vector<16x16x8xf32>, vector<16x16x8xf32>, vector<16x16x8xf32> -> vector<16x16x72xf32>
    %c0_48 = arith.constant 0 : index
    %c0_49 = arith.constant 0 : index
    %26 = vector.load %arg2[%c0_48, %c0_49] : memref<432x8xf32, #tpu.memory_space<vmem>>, vector<72x8xf32>
    "tpu.trace_start"() <{level = 10 : i32, message = "hwk,kg->hwg"}> : () -> ()
    %cst_50 = arith.constant dense<0.000000e+00> : vector<16x16x8xf32>
    %27 = tpu.matmul %25, %26, %cst_50 {dimension_numbers = #tpu.dot_dimension_numbers<[2], [0], [0, 1], [1], [0, 0, 0, 1, 1, 1], [], []>} : vector<16x16x72xf32>, vector<72x8xf32>, vector<16x16x8xf32> -> vector<16x16x8xf32>
    "tpu.trace_stop"() : () -> ()
    %c0_51 = arith.constant 0 : index
    %c0_52 = arith.constant 0 : index
    %28 = vector.load %arg3[%c0_51, %c0_52] : memref<3x8xf32, #tpu.memory_space<vmem>>, vector<1x8xf32>
    %29 = vector.shape_cast %28 : vector<1x8xf32> to vector<1x1x8xf32>
    %30 = vector.broadcast %29 : vector<1x1x8xf32> to vector<16x16x8xf32>
    %31 = arith.addf %27, %30 : vector<16x16x8xf32>
    %cst_53 = arith.constant 0.000000e+00 : f32
    %32 = vector.broadcast %cst_53 : f32 to vector<16x16x8xf32>
    %33 = arith.maximumf %31, %32 : vector<16x16x8xf32>
    %c1_54 = arith.constant 1 : index
    %c1_55 = arith.constant 1 : index
    %c8 = arith.constant 8 : index
    %34 = vector.load %arg7[%c1_54, %c1_55, %c8] : memref<18x18x24xf32, #tpu.memory_space<vmem>>, vector<16x16x8xf32>
    tpu.vector_store %arg7[%c1_54, %c1_55, %c8], %33 {strides = array<i32>} : memref<18x18x24xf32, #tpu.memory_space<vmem>>, vector<16x16x8xf32>,
    %c8_56 = arith.constant 8 : index
    %c0_57 = arith.constant 0 : index
    %35 = vector.load %arg4[%c8_56, %c0_57] : memref<32x8xf32, #tpu.memory_space<vmem>>, vector<8x8xf32>
    "tpu.trace_start"() <{level = 10 : i32, message = "hwc,cg->hwg"}> : () -> ()
    %cst_58 = arith.constant dense<0.000000e+00> : vector<16x16x8xf32>
    %36 = tpu.matmul %33, %35, %cst_58 {dimension_numbers = #tpu.dot_dimension_numbers<[2], [0], [0, 1], [1], [0, 0, 0, 1, 1, 1], [], []>} : vector<16x16x8xf32>, vector<8x8xf32>, vector<16x16x8xf32> -> vector<16x16x8xf32>
    "tpu.trace_stop"() : () -> ()
    %37 = arith.addf %15, %36 : vector<16x16x8xf32>
    %c0_59 = arith.constant 0 : index
    %c0_60 = arith.constant 0 : index
    %c0_61 = arith.constant 0 : index
    %38 = vector.load %arg7[%c0_59, %c0_60, %c0_61] : memref<18x18x24xf32, #tpu.memory_space<vmem>>, vector<16x16x16xf32>
    %c0_62 = arith.constant 0 : index
    %c1_63 = arith.constant 1 : index
    %c0_64 = arith.constant 0 : index
    %39 = vector.load %arg7[%c0_62, %c1_63, %c0_64] : memref<18x18x24xf32, #tpu.memory_space<vmem>>, vector<16x16x16xf32>
    %c0_65 = arith.constant 0 : index
    %c2_66 = arith.constant 2 : index
    %c0_67 = arith.constant 0 : index
    %40 = vector.load %arg7[%c0_65, %c2_66, %c0_67] : memref<18x18x24xf32, #tpu.memory_space<vmem>>, vector<16x16x16xf32>
    %c1_68 = arith.constant 1 : index
    %c0_69 = arith.constant 0 : index
    %c0_70 = arith.constant 0 : index
    %41 = vector.load %arg7[%c1_68, %c0_69, %c0_70] : memref<18x18x24xf32, #tpu.memory_space<vmem>>, vector<16x16x16xf32>
    %c1_71 = arith.constant 1 : index
    %c1_72 = arith.constant 1 : index
    %c0_73 = arith.constant 0 : index
    %42 = vector.load %arg7[%c1_71, %c1_72, %c0_73] : memref<18x18x24xf32, #tpu.memory_space<vmem>>, vector<16x16x16xf32>
    %c1_74 = arith.constant 1 : index
    %c2_75 = arith.constant 2 : index
    %c0_76 = arith.constant 0 : index
    %43 = vector.load %arg7[%c1_74, %c2_75, %c0_76] : memref<18x18x24xf32, #tpu.memory_space<vmem>>, vector<16x16x16xf32>
    %c2_77 = arith.constant 2 : index
    %c0_78 = arith.constant 0 : index
    %c0_79 = arith.constant 0 : index
    %44 = vector.load %arg7[%c2_77, %c0_78, %c0_79] : memref<18x18x24xf32, #tpu.memory_space<vmem>>, vector<16x16x16xf32>
    %c2_80 = arith.constant 2 : index
    %c1_81 = arith.constant 1 : index
    %c0_82 = arith.constant 0 : index
    %45 = vector.load %arg7[%c2_80, %c1_81, %c0_82] : memref<18x18x24xf32, #tpu.memory_space<vmem>>, vector<16x16x16xf32>
    %c2_83 = arith.constant 2 : index
    %c2_84 = arith.constant 2 : index
    %c0_85 = arith.constant 0 : index
    %46 = vector.load %arg7[%c2_83, %c2_84, %c0_85] : memref<18x18x24xf32, #tpu.memory_space<vmem>>, vector<16x16x16xf32>
    %47 = tpu.concatenate %38, %39, %40, %41, %42, %43, %44, %45, %46 in 2 : vector<16x16x16xf32>, vector<16x16x16xf32>, vector<16x16x16xf32>, vector<16x16x16xf32>, vector<16x16x16xf32>, vector<16x16x16xf32>, vector<16x16x16xf32>, vector<16x16x16xf32>, vector<16x16x16xf32> -> vector<16x16x144xf32>
    %c72 = arith.constant 72 : index
    %c0_86 = arith.constant 0 : index
    %48 = vector.load %arg2[%c72, %c0_86] : memref<432x8xf32, #tpu.memory_space<vmem>>, vector<144x8xf32>
    "tpu.trace_start"() <{level = 10 : i32, message = "hwk,kg->hwg"}> : () -> ()
    %cst_87 = arith.constant dense<0.000000e+00> : vector<16x16x8xf32>
    %49 = tpu.matmul %47, %48, %cst_87 {dimension_numbers = #tpu.dot_dimension_numbers<[2], [0], [0, 1], [1], [0, 0, 0, 1, 1, 1], [], []>} : vector<16x16x144xf32>, vector<144x8xf32>, vector<16x16x8xf32> -> vector<16x16x8xf32>
    "tpu.trace_stop"() : () -> ()
    %c1_88 = arith.constant 1 : index
    %c0_89 = arith.constant 0 : index
    %50 = vector.load %arg3[%c1_88, %c0_89] : memref<3x8xf32, #tpu.memory_space<vmem>>, vector<1x8xf32>
    %51 = vector.shape_cast %50 : vector<1x8xf32> to vector<1x1x8xf32>
    %52 = vector.broadcast %51 : vector<1x1x8xf32> to vector<16x16x8xf32>
    %53 = arith.addf %49, %52 : vector<16x16x8xf32>
    %cst_90 = arith.constant 0.000000e+00 : f32
    %54 = vector.broadcast %cst_90 : f32 to vector<16x16x8xf32>
    %55 = arith.maximumf %53, %54 : vector<16x16x8xf32>
    %c1_91 = arith.constant 1 : index
    %c1_92 = arith.constant 1 : index
    %c16 = arith.constant 16 : index
    %56 = vector.load %arg7[%c1_91, %c1_92, %c16] : memref<18x18x24xf32, #tpu.memory_space<vmem>>, vector<16x16x8xf32>
    tpu.vector_store %arg7[%c1_91, %c1_92, %c16], %55 {strides = array<i32>} : memref<18x18x24xf32, #tpu.memory_space<vmem>>, vector<16x16x8xf32>,
    %c16_93 = arith.constant 16 : index
    %c0_94 = arith.constant 0 : index
    %57 = vector.load %arg4[%c16_93, %c0_94] : memref<32x8xf32, #tpu.memory_space<vmem>>, vector<8x8xf32>
    "tpu.trace_start"() <{level = 10 : i32, message = "hwc,cg->hwg"}> : () -> ()
    %cst_95 = arith.constant dense<0.000000e+00> : vector<16x16x8xf32>
    %58 = tpu.matmul %55, %57, %cst_95 {dimension_numbers = #tpu.dot_dimension_numbers<[2], [0], [0, 1], [1], [0, 0, 0, 1, 1, 1], [], []>} : vector<16x16x8xf32>, vector<8x8xf32>, vector<16x16x8xf32> -> vector<16x16x8xf32>
    "tpu.trace_stop"() : () -> ()
    %59 = arith.addf %37, %58 : vector<16x16x8xf32>
    %c0_96 = arith.constant 0 : index
    %c0_97 = arith.constant 0 : index
    %c0_98 = arith.constant 0 : index
    %60 = vector.load %arg7[%c0_96, %c0_97, %c0_98] : memref<18x18x24xf32, #tpu.memory_space<vmem>>, vector<16x16x24xf32>
    %c0_99 = arith.constant 0 : index
    %c1_100 = arith.constant 1 : index
    %c0_101 = arith.constant 0 : index
    %61 = vector.load %arg7[%c0_99, %c1_100, %c0_101] : memref<18x18x24xf32, #tpu.memory_space<vmem>>, vector<16x16x24xf32>
    %c0_102 = arith.constant 0 : index
    %c2_103 = arith.constant 2 : index
    %c0_104 = arith.constant 0 : index
    %62 = vector.load %arg7[%c0_102, %c2_103, %c0_104] : memref<18x18x24xf32, #tpu.memory_space<vmem>>, vector<16x16x24xf32>
    %c1_105 = arith.constant 1 : index
    %c0_106 = arith.constant 0 : index
    %c0_107 = arith.constant 0 : index
    %63 = vector.load %arg7[%c1_105, %c0_106, %c0_107] : memref<18x18x24xf32, #tpu.memory_space<vmem>>, vector<16x16x24xf32>
    %c1_108 = arith.constant 1 : index
    %c1_109 = arith.constant 1 : index
    %c0_110 = arith.constant 0 : index
    %64 = vector.load %arg7[%c1_108, %c1_109, %c0_110] : memref<18x18x24xf32, #tpu.memory_space<vmem>>, vector<16x16x24xf32>
    %c1_111 = arith.constant 1 : index
    %c2_112 = arith.constant 2 : index
    %c0_113 = arith.constant 0 : index
    %65 = vector.load %arg7[%c1_111, %c2_112, %c0_113] : memref<18x18x24xf32, #tpu.memory_space<vmem>>, vector<16x16x24xf32>
    %c2_114 = arith.constant 2 : index
    %c0_115 = arith.constant 0 : index
    %c0_116 = arith.constant 0 : index
    %66 = vector.load %arg7[%c2_114, %c0_115, %c0_116] : memref<18x18x24xf32, #tpu.memory_space<vmem>>, vector<16x16x24xf32>
    %c2_117 = arith.constant 2 : index
    %c1_118 = arith.constant 1 : index
    %c0_119 = arith.constant 0 : index
    %67 = vector.load %arg7[%c2_117, %c1_118, %c0_119] : memref<18x18x24xf32, #tpu.memory_space<vmem>>, vector<16x16x24xf32>
    %c2_120 = arith.constant 2 : index
    %c2_121 = arith.constant 2 : index
    %c0_122 = arith.constant 0 : index
    %68 = vector.load %arg7[%c2_120, %c2_121, %c0_122] : memref<18x18x24xf32, #tpu.memory_space<vmem>>, vector<16x16x24xf32>
    %69 = tpu.concatenate %60, %61, %62, %63, %64, %65, %66, %67, %68 in 2 : vector<16x16x24xf32>, vector<16x16x24xf32>, vector<16x16x24xf32>, vector<16x16x24xf32>, vector<16x16x24xf32>, vector<16x16x24xf32>, vector<16x16x24xf32>, vector<16x16x24xf32>, vector<16x16x24xf32> -> vector<16x16x216xf32>
    %c216 = arith.constant 216 : index
    %c0_123 = arith.constant 0 : index
    %70 = vector.load %arg2[%c216, %c0_123] : memref<432x8xf32, #tpu.memory_space<vmem>>, vector<216x8xf32>
    "tpu.trace_start"() <{level = 10 : i32, message = "hwk,kg->hwg"}> : () -> ()
    %cst_124 = arith.constant dense<0.000000e+00> : vector<16x16x8xf32>
    %71 = tpu.matmul %69, %70, %cst_124 {dimension_numbers = #tpu.dot_dimension_numbers<[2], [0], [0, 1], [1], [0, 0, 0, 1, 1, 1], [], []>} : vector<16x16x216xf32>, vector<216x8xf32>, vector<16x16x8xf32> -> vector<16x16x8xf32>
    "tpu.trace_stop"() : () -> ()
    %c2_125 = arith.constant 2 : index
    %c0_126 = arith.constant 0 : index
    %72 = vector.load %arg3[%c2_125, %c0_126] : memref<3x8xf32, #tpu.memory_space<vmem>>, vector<1x8xf32>
    %73 = vector.shape_cast %72 : vector<1x8xf32> to vector<1x1x8xf32>
    %74 = vector.broadcast %73 : vector<1x1x8xf32> to vector<16x16x8xf32>
    %75 = arith.addf %71, %74 : vector<16x16x8xf32>
    %cst_127 = arith.constant 0.000000e+00 : f32
    %76 = vector.broadcast %cst_127 : f32 to vector<16x16x8xf32>
    %77 = arith.maximumf %75, %76 : vector<16x16x8xf32>
    %c24 = arith.constant 24 : index
    %c0_128 = arith.constant 0 : index
    %78 = vector.load %arg4[%c24, %c0_128] : memref<32x8xf32, #tpu.memory_space<vmem>>, vector<8x8xf32>
    "tpu.trace_start"() <{level = 10 : i32, message = "hwc,cg->hwg"}> : () -> ()
    %cst_129 = arith.constant dense<0.000000e+00> : vector<16x16x8xf32>
    %79 = tpu.matmul %77, %78, %cst_129 {dimension_numbers = #tpu.dot_dimension_numbers<[2], [0], [0, 1], [1], [0, 0, 0, 1, 1, 1], [], []>} : vector<16x16x8xf32>, vector<8x8xf32>, vector<16x16x8xf32> -> vector<16x16x8xf32>
    "tpu.trace_stop"() : () -> ()
    %80 = arith.addf %59, %79 : vector<16x16x8xf32>
    %c0_130 = arith.constant 0 : index
    %c0_131 = arith.constant 0 : index
    %c0_132 = arith.constant 0 : index
    %c0_133 = arith.constant 0 : index
    %81 = vector.load %arg6[%c0_130, %c0_131, %c0_132, %c0_133] : memref<1x16x16x8xf32, #tpu.memory_space<vmem>>, vector<1x16x16x8xf32>
    %82 = vector.shape_cast %81 : vector<1x16x16x8xf32> to vector<16x16x8xf32>
    %83 = vector.shape_cast %80 : vector<16x16x8xf32> to vector<1x16x16x8xf32>
    tpu.vector_store %arg6[%c0_130, %c0_131, %c0_132, %c0_133], %83 {strides = array<i32>} : memref<1x16x16x8xf32, #tpu.memory_space<vmem>>, vector<1x16x16x8xf32>,
    return
  }
  func.func @transform_0(%arg0: i32) -> (i32, i32, i32, i32) {
    %c0_i32 = arith.constant 0 : i32
    %c0_i32_0 = arith.constant 0 : i32
    %c0_i32_1 = arith.constant 0 : i32
    %c0_i32_2 = arith.constant 0 : i32
    return %arg0, %c0_i32, %c0_i32_0, %c0_i32_1 : i32, i32, i32, i32
  }
  func.func @transform_1(%arg0: i32) -> (i32, i32) {
    %c0_i32 = arith.constant 0 : i32
    %c0_i32_0 = arith.constant 0 : i32
    %c0_i32_1 = arith.constant 0 : i32
    return %c0_i32, %c0_i32_0 : i32, i32
  }
  func.func @transform_2(%arg0: i32) -> (i32, i32) {
    %c0_i32 = arith.constant 0 : i32
    %c0_i32_0 = arith.constant 0 : i32
    %c0_i32_1 = arith.constant 0 : i32
    return %c0_i32, %c0_i32_0 : i32, i32
  }
  func.func @transform_3(%arg0: i32) -> (i32, i32) {
    %c0_i32 = arith.constant 0 : i32
    %c0_i32_0 = arith.constant 0 : i32
    %c0_i32_1 = arith.constant 0 : i32
    return %c0_i32, %c0_i32_0 : i32, i32
  }
  func.func @transform_4(%arg0: i32) -> (i32, i32) {
    %c0_i32 = arith.constant 0 : i32
    %c0_i32_0 = arith.constant 0 : i32
    %c0_i32_1 = arith.constant 0 : i32
    return %c0_i32, %c0_i32_0 : i32, i32
  }
  func.func @transform_5(%arg0: i32) -> (i32, i32, i32, i32) {
    %c0_i32 = arith.constant 0 : i32
    %c0_i32_0 = arith.constant 0 : i32
    %c0_i32_1 = arith.constant 0 : i32
    %c0_i32_2 = arith.constant 0 : i32
    return %arg0, %c0_i32, %c0_i32_0, %c0_i32_1 : i32, i32, i32, i32
  }
}

</mosaic_0001>

<llo_original>
// kernel: rdb_forward.1
$region0: #{rdb_forward.1}
  #allocation0 [shape = 'u32[]', space=smem, size = 0x4, offset = 0x4, fixed_abs, tag = 'smem constant byte address 0x4 - core index']
  #allocation1 [shape = 'u32[144,128]{1,0:T(1,128)}', space=vmem, size = 0x12000, scoped, tag = 'internal scratch']
  #allocation2 [shape = 'f32[18,18,24]{2,1,0:T(8,128)}', space=vmem, size = 0x36000, scoped, tag = 'scratch operand']
  %s0 = inlined_call_operand.vmem [shape: f32[2,16,16,8], index: 0, kind: input, shape index: {}]
  %s1 = inlined_call_operand.vmem [shape: f32[432,8], index: 1, kind: input, shape index: {}]
  %s2 = inlined_call_operand.vmem [shape: f32[3,8], index: 2, kind: input, shape index: {}]
  %s3 = inlined_call_operand.vmem [shape: f32[32,8], index: 3, kind: input, shape index: {}]
  %s4 = inlined_call_operand.vmem [shape: f32[1,8], index: 4, kind: input, shape index: {}]
  %s5 = inlined_call_operand.vmem [shape: f32[2,16,16,8], index: 5, kind: output, shape index: {}]
  %s6 = sld [smem:[#allocation0]]
  $region53: #{rdb_forward.1} parent=0
    _
  %s8 = ssub.s32 1, %s6
  %s9 = scalar_select 0, %s8, %s6
  loop: start=0, step=1, limit=4
  $region2: #{rdb_forward.1} parent=0 // loop_pre_header
    _
  $region3: #{rdb_forward.1} parent=0 // loop_header
    %s11 = sphi 0, %s15
    %p12 = scmp.ge.s32.totalorder %s11, 4
    %s21 = sphi 0, %s23
    %s24 = sphi 0, %s21
    %s25 = sphi 0, %s24
    %s41 = sphi 0, %s25
    %s45 = sphi 0, %s45
    %s47 = sphi 0, %s45
    %s48 = sphi 0, %s47
    %s62 = sphi 0, %s48
    %s66 = sphi 0, %s66
    %s68 = sphi 0, %s66
    %s69 = sphi 0, %s68
    %s83 = sphi 0, %s69
    %s87 = sphi 0, %s87
    %s89 = sphi 0, %s87
    %s90 = sphi 0, %s89
    %s104 = sphi 0, %s90
    %s108 = sphi 0, %s108
    %s110 = sphi 0, %s108
    %s111 = sphi 0, %s110
    %s125 = sphi 0, %s111
    %s131 = sphi 0, %s133
    %s134 = sphi 0, %s131
    %s135 = sphi 0, %s134
    %s151 = sphi 0, %s135
  $region4: #{rdb_forward.1} parent=0 // loop_header_branch
    %14 = sbr.rel (%p12) target = $region8
  $region5: #{rdb_forward.1} parent=0 // loop_body
    %s16 = ssub.s32 %s11, 1
    %s17 = ssub.s32 %s11, 2
    %s18 = sadd.s32 %s11, 1
    %s19 = ssub.s32 %s11, %s18
    %p20 = scmp.eq.s32.totalorder %s19, 0
    %s22 = sadd.s32 %s21, 1
    %s23 = scalar_select %p20, %s21, %s22
    %p26 = pneg %p20
    %p27 = scmp.eq.s32.totalorder %s11, 1
    %p28 = por %p26, %p27
    %p29 = scmp.ne.s32.totalorder %s21, %s24
    %p30 = scmp.eq.s32.totalorder %s11, 0
    %p31 = por %p29, %p30
    %p32 = scmp.ne.s32.totalorder %s21, %s24
    %p33 = scmp.eq.s32.totalorder %s16, 1
    %p34 = por %p32, %p33
    %p35 = scmp.ne.s32.totalorder %s24, %s25
    %p36 = scmp.eq.s32.totalorder %s16, 0
    %p37 = por %p35, %p36
    %p38 = scmp.ne.s32.totalorder %s24, %s25
    %p39 = scmp.eq.s32.totalorder %s17, 1
    %p40 = por %p38, %p39
    %p42 = scmp.ne.s32.totalorder %s25, %s41
    %p43 = scmp.eq.s32.totalorder %s17, 0
    %p44 = por %p42, %p43
    %s46 = sadd.s32 %s45, 1
    %p49 = scmp.eq.s32.totalorder %s11, 1
    %p50 = scmp.ne.s32.totalorder %s45, %s47
    %p51 = scmp.eq.s32.totalorder %s11, 0
    %p52 = por %p50, %p51
    %p53 = scmp.ne.s32.totalorder %s45, %s47
    %p54 = scmp.eq.s32.totalorder %s16, 1
    %p55 = por %p53, %p54
    %p56 = scmp.ne.s32.totalorder %s47, %s48
    %p57 = scmp.eq.s32.totalorder %s16, 0
    %p58 = por %p56, %p57
    %p59 = scmp.ne.s32.totalorder %s47, %s48
    %p60 = scmp.eq.s32.totalorder %s17, 1
    %p61 = por %p59, %p60
    %p63 = scmp.ne.s32.totalorder %s48, %s62
    %p64 = scmp.eq.s32.totalorder %s17, 0
    %p65 = por %p63, %p64
    %s67 = sadd.s32 %s66, 1
    %p70 = scmp.eq.s32.totalorder %s11, 1
    %p71 = scmp.ne.s32.totalorder %s66, %s68
    %p72 = scmp.eq.s32.totalorder %s11, 0
    %p73 = por %p71, %p72
    %p74 = scmp.ne.s32.totalorder %s66, %s68
    %p75 = scmp.eq.s32.totalorder %s16, 1
    %p76 = por %p74, %p75
    %p77 = scmp.ne.s32.totalorder %s68, %s69
    %p78 = scmp.eq.s32.totalorder %s16, 0
    %p79 = por %p77, %p78
    %p80 = scmp.ne.s32.totalorder %s68, %s69
    %p81 = scmp.eq.s32.totalorder %s17, 1
    %p82 = por %p80, %p81
    %p84 = scmp.ne.s32.totalorder %s69, %s83
    %p85 = scmp.eq.s32.totalorder %s17, 0
    %p86 = por %p84, %p85
    %s88 = sadd.s32 %s87, 1
    %p91 = scmp.eq.s32.totalorder %s11, 1
    %p92 = scmp.ne.s32.totalorder %s87, %s89
    %p93 = scmp.eq.s32.totalorder %s11, 0
    %p94 = por %p92, %p93
    %p95 = scmp.ne.s32.totalorder %s87, %s89
    %p96 = scmp.eq.s32.totalorder %s16, 1
    %p97 = por %p95, %p96
    %p98 = scmp.ne.s32.totalorder %s89, %s90
    %p99 = scmp.eq.s32.totalorder %s16, 0
    %p100 = por %p98, %p99
    %p101 = scmp.ne.s32.totalorder %s89, %s90
    %p102 = scmp.eq.s32.totalorder %s17, 1
    %p103 = por %p101, %p102
    %p105 = scmp.ne.s32.totalorder %s90, %s104
    %p106 = scmp.eq.s32.totalorder %s17, 0
    %p107 = por %p105, %p106
    %s109 = sadd.s32 %s108, 1
    %p112 = scmp.eq.s32.totalorder %s11, 1
    %p113 = scmp.ne.s32.totalorder %s108, %s110
    %p114 = scmp.eq.s32.totalorder %s11, 0
    %p115 = por %p113, %p114
    %p116 = scmp.ne.s32.totalorder %s108, %s110
    %p117 = scmp.eq.s32.totalorder %s16, 1
    %p118 = por %p116, %p117
    %p119 = scmp.ne.s32.totalorder %s110, %s111
    %p120 = scmp.eq.s32.totalorder %s16, 0
    %p121 = por %p119, %p120
    %p122 = scmp.ne.s32.totalorder %s110, %s111
    %p123 = scmp.eq.s32.totalorder %s17, 1
    %p124 = por %p122, %p123
    %p126 = scmp.ne.s32.totalorder %s111, %s125
    %p127 = scmp.eq.s32.totalorder %s17, 0
    %p128 = por %p126, %p127
    %s129 = ssub.s32 %s11, %s18
    %p130 = scmp.eq.s32.totalorder %s129, 0
    %s132 = sadd.s32 %s131, 1
    %s133 = scalar_select %p130, %s131, %s132
    %p136 = pneg %p130
    %p137 = scmp.eq.s32.totalorder %s11, 1
    %p138 = por %p136, %p137
    %p139 = scmp.ne.s32.totalorder %s131, %s134
    %p140 = scmp.eq.s32.totalorder %s11, 0
    %p141 = por %p139, %p140
    %p142 = scmp.ne.s32.totalorder %s131, %s134
    %p143 = scmp.eq.s32.totalorder %s16, 1
    %p144 = por %p142, %p143
    %p145 = scmp.ne.s32.totalorder %s134, %s135
    %p146 = scmp.eq.s32.totalorder %s16, 0
    %p147 = por %p145, %p146
    %p148 = scmp.ne.s32.totalorder %s134, %s135
    %p149 = scmp.eq.s32.totalorder %s17, 1
    %p150 = por %p148, %p149
    %p152 = scmp.ne.s32.totalorder %s135, %s151
    %p153 = scmp.eq.s32.totalorder %s17, 0
    %p154 = por %p152, %p153
    %p155 = scmp.le.s32.totalorder 1, %s11
    %p156 = scmp.lt.s32.totalorder %s11, 3
    %p157 = pnand %p155, %p156
    %p158 = pneg %p157
    // Predicated region
    $region9: #{rdb_forward.1} parent=5 // pred_check
      _
    $region10: #{rdb_forward.1} parent=5 // pred_check_branch
      %160 = sbr.rel (%p157) target = $region12
    $region11: #{rdb_forward.1} parent=5 // pred_region
      %s161 = ssub.s32 %s11, 1
      // Predicated region
      $region13: #{rdb_forward.1} parent=11 // pred_check
        %p162 = pneg %p58
      $region14: #{rdb_forward.1} parent=11 // pred_check_branch
        %164 = sbr.rel (%p162) target = $region16
      $region15: #{rdb_forward.1} parent=11 // pred_region
        _
      $region16: #{rdb_forward.1} parent=11 // pred_fallthru
        _
      // Predicated region
      $region17: #{rdb_forward.1} parent=11 // pred_check
        %p165 = pneg %p79
      $region18: #{rdb_forward.1} parent=11 // pred_check_branch
        %167 = sbr.rel (%p165) target = $region20
      $region19: #{rdb_forward.1} parent=11 // pred_region
        _
      $region20: #{rdb_forward.1} parent=11 // pred_fallthru
        _
      // Predicated region
      $region21: #{rdb_forward.1} parent=11 // pred_check
        %p168 = pneg %p100
      $region22: #{rdb_forward.1} parent=11 // pred_check_branch
        %170 = sbr.rel (%p168) target = $region24
      $region23: #{rdb_forward.1} parent=11 // pred_region
        _
      $region24: #{rdb_forward.1} parent=11 // pred_fallthru
        _
      // Predicated region
      $region25: #{rdb_forward.1} parent=11 // pred_check
        %p171 = pneg %p121
      $region26: #{rdb_forward.1} parent=11 // pred_check_branch
        %173 = sbr.rel (%p171) target = $region28
      $region27: #{rdb_forward.1} parent=11 // pred_region
        _
      $region28: #{rdb_forward.1} parent=11 // pred_fallthru
        _
    $region12: #{rdb_forward.1} parent=5 // pred_fallthru
      _
    %p174 = scmp.lt.s32.totalorder %s11, 2
    // Predicated region
    $region29: #{rdb_forward.1} parent=5 // pred_check
      %p175 = pneg %p174
    $region30: #{rdb_forward.1} parent=5 // pred_check_branch
      %177 = sbr.rel (%p175) target = $region32
    $region31: #{rdb_forward.1} parent=5 // pred_region
      // Predicated region
      $region33: #{rdb_forward.1} parent=31 // pred_check
        %p178 = pneg %p31
      $region34: #{rdb_forward.1} parent=31 // pred_check_branch
        %180 = sbr.rel (%p178) target = $region36
      $region35: #{rdb_forward.1} parent=31 // pred_region
        %p181 = scmp.lt.s32.totalorder %s11, 1
        %s182 = scalar_select %p181, %s11, 1
        %s183 = smul.addr %s182, 32
        %s184 = smul.addr %s183, 8
        %s185 = scalar_lea.vmem %s0, %s184
      $region36: #{rdb_forward.1} parent=31 // pred_fallthru
        _
    $region32: #{rdb_forward.1} parent=5 // pred_fallthru
      _
    %p186 = scmp.le.s32.totalorder 1, %s11
    %p187 = scmp.lt.s32.totalorder %s11, 3
    %p188 = pnand %p186, %p187
    %p189 = pneg %p188
    // Predicated region
    $region37: #{rdb_forward.1} parent=5 // pred_check
      _
    $region38: #{rdb_forward.1} parent=5 // pred_check_branch
      %191 = sbr.rel (%p188) target = $region40
    $region39: #{rdb_forward.1} parent=5 // pred_region
      %s192 = ssub.s32 %s11, 1
      %p193 = scmp.lt.s32.totalorder %s16, 1
      %s194 = scalar_select %p193, %s16, 1
      %s195 = smul.addr %s194, 32
      %s196 = smul.addr %s195, 8
      %s197 = scalar_lea.vmem %s0, %s196
      %p198 = pneg %p37
      %p199 = pneg %p34
      %p200 = pneg %p58
      %p201 = pneg %p55
      %p202 = pneg %p79
      %p203 = pneg %p76
      %p204 = pneg %p100
      %p205 = pneg %p97
      %p206 = pneg %p121
      %p207 = pneg %p118
      %p208 = pneg %p147
      %p209 = pneg %p144
      %p210 = scmp.lt.s32.totalorder %s16, 1
      %s211 = scalar_select %p210, %s16, 1
      %s212 = smul.addr %s211, 32
      %s213 = smul.addr %s212, 8
      %s214 = scalar_lea.vmem %s5, %s213
      %p215 = scmp.lt.s32.totalorder %s16, 1
      %s216 = scalar_select %p215, %s16, 1
      %s217 = smul.addr %s216, 32
      %s218 = smul.addr %s217, 8
      %s219 = scalar_lea.vmem %s0, %s218
      %p220 = scmp.lt.s32.totalorder %s16, 1
      %s221 = scalar_select %p220, %s16, 1
      %s222 = smul.addr %s221, 32
      %s223 = smul.addr %s222, 8
      %s224 = scalar_lea.vmem %s5, %s223
      %vm225 = vcmask 195584
      %226 = vst.msk [vmem:[#allocation2] sm:$0xff] %vm225, 0.0
      %227 = vst.msk [vmem:[#allocation2 + $0x8] sm:$0xff] %vm225, 0.0
      %vm228 = vcmask 189440
      %229 = vst.msk [vmem:[#allocation2 + $0x10] sm:$0x3] %vm228, 0.0
      %s230 = scalar_lea.vmem [#allocation2], 408
      %231 = vst.msk [vmem:[%s230] sm:$0xff] %vm225, 0.0
      %232 = vst.msk [vmem:[%s230 + $0x8] sm:$0xff] %vm225, 0.0
      %233 = vst.msk [vmem:[%s230 + $0x10] sm:$0x3] %vm228, 0.0
      %vm234 = vcmask 188416
      %235 = vst.msk [vmem:[#allocation2] sm:$0x1] %vm234, 0.0
      %236 = vst.msk [vmem:[#allocation2 + $0x18] sm:$0x1] %vm234, 0.0
      %237 = vst.msk [vmem:[#allocation2 + $0x30] sm:$0x1] %vm234, 0.0
      %238 = vst.msk [vmem:[#allocation2 + $0x48] sm:$0x1] %vm234, 0.0
      %239 = vst.msk [vmem:[#allocation2 + $0x60] sm:$0x1] %vm234, 0.0
      %240 = vst.msk [vmem:[#allocation2 + $0x78] sm:$0x1] %vm234, 0.0
      %241 = vst.msk [vmem:[#allocation2 + $0x90] sm:$0x1] %vm234, 0.0
      %242 = vst.msk [vmem:[#allocation2 + $0xa8] sm:$0x1] %vm234, 0.0
      %243 = vst.msk [vmem:[#allocation2 + $0xc0] sm:$0x1] %vm234, 0.0
      %244 = vst.msk [vmem:[#allocation2 + $0xd8] sm:$0x1] %vm234, 0.0
      %245 = vst.msk [vmem:[#allocation2 + $0xf0] sm:$0x1] %vm234, 0.0
      %246 = vst.msk [vmem:[#allocation2 + $0x108] sm:$0x1] %vm234, 0.0
      %247 = vst.msk [vmem:[#allocation2 + $0x120] sm:$0x1] %vm234, 0.0
      %248 = vst.msk [vmem:[#allocation2 + $0x138] sm:$0x1] %vm234, 0.0
      %249 = vst.msk [vmem:[#allocation2 + $0x150] sm:$0x1] %vm234, 0.0
      %250 = vst.msk [vmem:[#allocation2 + $0x168] sm:$0x1] %vm234, 0.0
      %251 = vst.msk [vmem:[#allocation2 + $0x180] sm:$0x1] %vm234, 0.0
      %252 = vst.msk [vmem:[#allocation2 + $0x198] sm:$0x1] %vm234, 0.0
      %253 = vst.msk [vmem:[#allocation2 + $0x11] sm:$0x1] %vm234, 0.0
      %254 = vst.msk [vmem:[#allocation2 + $0x29] sm:$0x1] %vm234, 0.0
      %255 = vst.msk [vmem:[#allocation2 + $0x41] sm:$0x1] %vm234, 0.0
      %256 = vst.msk [vmem:[#allocation2 + $0x59] sm:$0x1] %vm234, 0.0
      %257 = vst.msk [vmem:[#allocation2 + $0x71] sm:$0x1] %vm234, 0.0
      %258 = vst.msk [vmem:[#allocation2 + $0x89] sm:$0x1] %vm234, 0.0
      %259 = vst.msk [vmem:[#allocation2 + $0xa1] sm:$0x1] %vm234, 0.0
      %260 = vst.msk [vmem:[#allocation2 + $0xb9] sm:$0x1] %vm234, 0.0
      %261 = vst.msk [vmem:[#allocation2 + $0xd1] sm:$0x1] %vm234, 0.0
      %262 = vst.msk [vmem:[#allocation2 + $0xe9] sm:$0x1] %vm234, 0.0
      %263 = vst.msk [vmem:[#allocation2 + $0x101] sm:$0x1] %vm234, 0.0
      %264 = vst.msk [vmem:[#allocation2 + $0x119] sm:$0x1] %vm234, 0.0
      %265 = vst.msk [vmem:[#allocation2 + $0x131] sm:$0x1] %vm234, 0.0
      %266 = vst.msk [vmem:[#allocation2 + $0x149] sm:$0x1] %vm234, 0.0
      %267 = vst.msk [vmem:[#allocation2 + $0x161] sm:$0x1] %vm234, 0.0
      %268 = vst.msk [vmem:[#allocation2 + $0x179] sm:$0x1] %vm234, 0.0
      %269 = vst.msk [vmem:[#allocation2 + $0x191] sm:$0x1] %vm234, 0.0
      %270 = vst.msk [vmem:[#allocation2 + $0x1a9] sm:$0x1] %vm234, 0.0
      %v271 = vld [vmem:[%s219] sm:$0xff]
      %v272 = vld [vmem:[%s219 + $0x8] sm:$0xff]
      %v273 = vld [vmem:[%s219 + $0x10] sm:$0xff]
      %v274 = vld [vmem:[%s219 + $0x18] sm:$0xff]
      %v275 = vld [vmem:[%s219 + $0x20] sm:$0xff]
      %v276 = vld [vmem:[%s219 + $0x28] sm:$0xff]
      %v277 = vld [vmem:[%s219 + $0x30] sm:$0xff]
      %v278 = vld [vmem:[%s219 + $0x38] sm:$0xff]
      %v279 = vld [vmem:[%s219 + $0x40] sm:$0xff]
      %v280 = vld [vmem:[%s219 + $0x48] sm:$0xff]
      %v281 = vld [vmem:[%s219 + $0x50] sm:$0xff]
      %v282 = vld [vmem:[%s219 + $0x58] sm:$0xff]
      %v283 = vld [vmem:[%s219 + $0x60] sm:$0xff]
      %v284 = vld [vmem:[%s219 + $0x68] sm:$0xff]
      %v285 = vld [vmem:[%s219 + $0x70] sm:$0xff]
      %v286 = vld [vmem:[%s219 + $0x78] sm:$0xff]
      %v287 = vld [vmem:[%s219 + $0x80] sm:$0xff]
      %v288 = vld [vmem:[%s219 + $0x88] sm:$0xff]
      %v289 = vld [vmem:[%s219 + $0x90] sm:$0xff]
      %v290 = vld [vmem:[%s219 + $0x98] sm:$0xff]
      %v291 = vld [vmem:[%s219 + $0xa0] sm:$0xff]
      %v292 = vld [vmem:[%s219 + $0xa8] sm:$0xff]
      %v293 = vld [vmem:[%s219 + $0xb0] sm:$0xff]
      %v294 = vld [vmem:[%s219 + $0xb8] sm:$0xff]
      %v295 = vld [vmem:[%s219 + $0xc0] sm:$0xff]
      %v296 = vld [vmem:[%s219 + $0xc8] sm:$0xff]
      %v297 = vld [vmem:[%s219 + $0xd0] sm:$0xff]
      %v298 = vld [vmem:[%s219 + $0xd8] sm:$0xff]
      %v299 = vld [vmem:[%s219 + $0xe0] sm:$0xff]
      %v300 = vld [vmem:[%s219 + $0xe8] sm:$0xff]
      %v301 = vld [vmem:[%s219 + $0xf0] sm:$0xff]
      %v302 = vld [vmem:[%s219 + $0xf8] sm:$0xff]
      %s303 = scalar_lea.vmem [#allocation2], 24
      %vm304 = vcmask 64512
      %305 = vst.msk [vmem:[%s303 + $0x1] sm:$0xff] %vm304, %v271
      %306 = vst.msk [vmem:[%s303 + $0x9] sm:$0xff] %vm304, %v272
      %307 = vst.msk [vmem:[%s303 + $0x19] sm:$0xff] %vm304, %v273
      %308 = vst.msk [vmem:[%s303 + $0x21] sm:$0xff] %vm304, %v274
      %309 = vst.msk [vmem:[%s303 + $0x31] sm:$0xff] %vm304, %v275
      %310 = vst.msk [vmem:[%s303 + $0x39] sm:$0xff] %vm304, %v276
      %311 = vst.msk [vmem:[%s303 + $0x49] sm:$0xff] %vm304, %v277
      %312 = vst.msk [vmem:[%s303 + $0x51] sm:$0xff] %vm304, %v278
      %313 = vst.msk [vmem:[%s303 + $0x61] sm:$0xff] %vm304, %v279
      %314 = vst.msk [vmem:[%s303 + $0x69] sm:$0xff] %vm304, %v280
      %315 = vst.msk [vmem:[%s303 + $0x79] sm:$0xff] %vm304, %v281
      %316 = vst.msk [vmem:[%s303 + $0x81] sm:$0xff] %vm304, %v282
      %317 = vst.msk [vmem:[%s303 + $0x91] sm:$0xff] %vm304, %v283
      %318 = vst.msk [vmem:[%s303 + $0x99] sm:$0xff] %vm304, %v284
      %319 = vst.msk [vmem:[%s303 + $0xa9] sm:$0xff] %vm304, %v285
      %320 = vst.msk [vmem:[%s303 + $0xb1] sm:$0xff] %vm304, %v286
      %321 = vst.msk [vmem:[%s303 + $0xc1] sm:$0xff] %vm304, %v287
      %322 = vst.msk [vmem:[%s303 + $0xc9] sm:$0xff] %vm304, %v288
      %323 = vst.msk [vmem:[%s303 + $0xd9] sm:$0xff] %vm304, %v289
      %324 = vst.msk [vmem:[%s303 + $0xe1] sm:$0xff] %vm304, %v290
      %325 = vst.msk [vmem:[%s303 + $0xf1] sm:$0xff] %vm304, %v291
      %326 = vst.msk [vmem:[%s303 + $0xf9] sm:$0xff] %vm304, %v292
      %327 = vst.msk [vmem:[%s303 + $0x109] sm:$0xff] %vm304, %v293
      %328 = vst.msk [vmem:[%s303 + $0x111] sm:$0xff] %vm304, %v294
      %329 = vst.msk [vmem:[%s303 + $0x121] sm:$0xff] %vm304, %v295
      %330 = vst.msk [vmem:[%s303 + $0x129] sm:$0xff] %vm304, %v296
      %331 = vst.msk [vmem:[%s303 + $0x139] sm:$0xff] %vm304, %v297
      %332 = vst.msk [vmem:[%s303 + $0x141] sm:$0xff] %vm304, %v298
      %333 = vst.msk [vmem:[%s303 + $0x151] sm:$0xff] %vm304, %v299
      %334 = vst.msk [vmem:[%s303 + $0x159] sm:$0xff] %vm304, %v300
      %335 = vst.msk [vmem:[%s303 + $0x169] sm:$0xff] %vm304, %v301
      %336 = vst.msk [vmem:[%s303 + $0x171] sm:$0xff] %vm304, %v302
      %v337 = vld [vmem:[%s4] sm:$0x1]
      %v339 = vlaneseq
      %v340 = vshrl.u32 %v339, 7
      %v341 = vsub.s32 0, %v340
      %v342 = vrot.slane %v337, %v341
      %v344 = vadd.f32 %v271, %v342
      %v345 = vadd.f32 %v272, %v342
      %v346 = vadd.f32 %v273, %v342
      %v347 = vadd.f32 %v274, %v342
      %v348 = vadd.f32 %v275, %v342
      %v349 = vadd.f32 %v276, %v342
      %v350 = vadd.f32 %v277, %v342
      %v351 = vadd.f32 %v278, %v342
      %v352 = vadd.f32 %v279, %v342
      %v353 = vadd.f32 %v280, %v342
      %v354 = vadd.f32 %v281, %v342
      %v355 = vadd.f32 %v282, %v342
      %v356 = vadd.f32 %v283, %v342
      %v357 = vadd.f32 %v284, %v342
      %v358 = vadd.f32 %v285, %v342
      %v359 = vadd.f32 %v286, %v342
      %v360 = vadd.f32 %v287, %v342
      %v361 = vadd.f32 %v288, %v342
      %v362 = vadd.f32 %v289, %v342
      %v363 = vadd.f32 %v290, %v342
      %v364 = vadd.f32 %v291, %v342
      %v365 = vadd.f32 %v292, %v342
      %v366 = vadd.f32 %v293, %v342
      %v367 = vadd.f32 %v294, %v342
      %v368 = vadd.f32 %v295, %v342
      %v369 = vadd.f32 %v296, %v342
      %v370 = vadd.f32 %v297, %v342
      %v371 = vadd.f32 %v298, %v342
      %v372 = vadd.f32 %v299, %v342
      %v373 = vadd.f32 %v300, %v342
      %v374 = vadd.f32 %v301, %v342
      %v375 = vadd.f32 %v302, %v342
      %v376 = vld [vmem:[%s3] sm:$0xff]
      %v378 = vsel %vm304, %v271, 0
      %v381 = vsel %vm304, %v272, 0
      %v384 = vsel %vm304, %v273, 0
      %v387 = vsel %vm304, %v274, 0
      %v390 = vsel %vm304, %v275, 0
      %v393 = vsel %vm304, %v276, 0
      %v396 = vsel %vm304, %v277, 0
      %v399 = vsel %vm304, %v278, 0
      %v402 = vsel %vm304, %v279, 0
      %v405 = vsel %vm304, %v280, 0
      %v408 = vsel %vm304, %v281, 0
      %v411 = vsel %vm304, %v282, 0
      %v414 = vsel %vm304, %v283, 0
      %v417 = vsel %vm304, %v284, 0
      %v420 = vsel %vm304, %v285, 0
      %v423 = vsel %vm304, %v286, 0
      %v426 = vsel %vm304, %v287, 0
      %v429 = vsel %vm304, %v288, 0
      %v432 = vsel %vm304, %v289, 0
      %v435 = vsel %vm304, %v290, 0
      %v438 = vsel %vm304, %v291, 0
      %v441 = vsel %vm304, %v292, 0
      %v444 = vsel %vm304, %v293, 0
      %v447 = vsel %vm304, %v294, 0
      %v450 = vsel %vm304, %v295, 0
      %v453 = vsel %vm304, %v296, 0
      %v456 = vsel %vm304, %v297, 0
      %v459 = vsel %vm304, %v298, 0
      %v462 = vsel %vm304, %v299, 0
      %v465 = vsel %vm304, %v300, 0
      %v468 = vsel %vm304, %v301, 0
      %v471 = vsel %vm304, %v302, 0
      %473 = vmatprep.subr.mxu0 0.0
      %474 = vmatpush1.msra.mxu0 0.0
      %475 = vmatprep.subr.mxu0 0.0
      %476 = vmatpush1.msra.mxu0 0.0
      %477 = vmatprep.subr.mxu0 0.0
      %478 = vmatpush1.msra.mxu0 0.0
      %479 = vmatprep.subr.mxu0 0.0
      %480 = vmatpush1.msra.mxu0 0.0
      %481 = vmatprep.subr.mxu0 0.0
      %482 = vmatpush1.msra.mxu0 0.0
      %483 = vmatprep.subr.mxu0 0.0
      %484 = vmatpush1.msra.mxu0 0.0
      %485 = vmatprep.subr.mxu0 0.0
      %486 = vmatpush1.msra.mxu0 0.0
      %487 = vmatprep.subr.mxu0 0.0
      %488 = vmatpush1.msra.mxu0 0.0
      %489 = vmatprep.subr.mxu0 0.0
      %490 = vmatpush1.msra.mxu0 0.0
      %491 = vmatprep.subr.mxu0 0.0
      %492 = vmatpush1.msra.mxu0 0.0
      %493 = vmatprep.subr.mxu0 0.0
      %494 = vmatpush1.msra.mxu0 0.0
      %495 = vmatprep.subr.mxu0 0.0
      %496 = vmatpush1.msra.mxu0 0.0
      %497 = vmatprep.subr.mxu0 0.0
      %498 = vmatpush1.msra.mxu0 0.0
      %499 = vmatprep.subr.mxu0 0.0
      %500 = vmatpush1.msra.mxu0 0.0
      %501 = vmatprep.subr.mxu0 0.0
      %502 = vmatpush1.msra.mxu0 0.0
      %503 = vmatprep.subr.mxu0 0.0
      %504 = vmatpush1.msra.mxu0 %v376
      %505 = vmatprep.subr.mxu0 0.0
      %506 = vmatpush2.msra.mxu0 0.0
      %507 = vmatprep.subr.mxu0 0.0
      %508 = vmatpush2.msra.mxu0 0.0
      %509 = vmatprep.subr.mxu0 0.0
      %510 = vmatpush2.msra.mxu0 0.0
      %511 = vmatprep.subr.mxu0 0.0
      %512 = vmatpush2.msra.mxu0 0.0
      %513 = vmatprep.subr.mxu0 0.0
      %514 = vmatpush2.msra.mxu0 0.0
      %515 = vmatprep.subr.mxu0 0.0
      %516 = vmatpush2.msra.mxu0 0.0
      %517 = vmatprep.subr.mxu0 0.0
      %518 = vmatpush2.msra.mxu0 0.0
      %519 = vmatprep.subr.mxu0 0.0
      %520 = vmatpush2.msra.mxu0 0.0
      %521 = vmatprep.subr.mxu0 0.0
      %522 = vmatpush2.msra.mxu0 0.0
      %523 = vmatprep.subr.mxu0 0.0
      %524 = vmatpush2.msra.mxu0 0.0
      %525 = vmatprep.subr.mxu0 0.0
      %526 = vmatpush2.msra.mxu0 0.0
      %527 = vmatprep.subr.mxu0 0.0
      %528 = vmatpush2.msra.mxu0 0.0
      %529 = vmatprep.subr.mxu0 0.0
      %530 = vmatpush2.msra.mxu0 0.0
      %531 = vmatprep.subr.mxu0 0.0
      %532 = vmatpush2.msra.mxu0 0.0
      %533 = vmatprep.subr.mxu0 0.0
      %534 = vmatpush2.msra.mxu0 0.0
      %535 = vmatprep.subr.mxu0 0.0
      %536 = vmatpush2.msra.mxu0 0.0
      %537 = vmatprep.mubr.f32.mxu0 0.0
      %538 = vmatmul.mubr.f32.gmra.mxu0 %v378
      %v539 = vpop.f32.mrf.mxu0
      %v540 = vadd.f32 0.0, %v539
      %v541 = vpop.f32.mrf.mxu0
      %542 = vmatprep.mubr.f32.mxu0 0.0
      %543 = vmatmul.mubr.f32.gmra.mxu0 %v381
      %v544 = vpop.f32.mrf.mxu0
      %v545 = vadd.f32 0.0, %v544
      %v546 = vpop.f32.mrf.mxu0
      %547 = vmatprep.mubr.f32.mxu0 0.0
      %548 = vmatmul.mubr.f32.gmra.mxu0 %v384
      %v549 = vpop.f32.mrf.mxu0
      %v550 = vadd.f32 0.0, %v549
      %v551 = vpop.f32.mrf.mxu0
      %552 = vmatprep.mubr.f32.mxu0 0.0
      %553 = vmatmul.mubr.f32.gmra.mxu0 %v387
      %v554 = vpop.f32.mrf.mxu0
      %v555 = vadd.f32 0.0, %v554
      %v556 = vpop.f32.mrf.mxu0
      %557 = vmatprep.mubr.f32.mxu0 0.0
      %558 = vmatmul.mubr.f32.gmra.mxu0 %v390
      %v559 = vpop.f32.mrf.mxu0
      %v560 = vadd.f32 0.0, %v559
      %v561 = vpop.f32.mrf.mxu0
      %562 = vmatprep.mubr.f32.mxu0 0.0
      %563 = vmatmul.mubr.f32.gmra.mxu0 %v393
      %v564 = vpop.f32.mrf.mxu0
      %v565 = vadd.f32 0.0, %v564
      %v566 = vpop.f32.mrf.mxu0
      %567 = vmatprep.mubr.f32.mxu0 0.0
      %568 = vmatmul.mubr.f32.gmra.mxu0 %v396
      %v569 = vpop.f32.mrf.mxu0
      %v570 = vadd.f32 0.0, %v569
      %v571 = vpop.f32.mrf.mxu0
      %572 = vmatprep.mubr.f32.mxu0 0.0
      %573 = vmatmul.mubr.f32.gmra.mxu0 %v399
      %v574 = vpop.f32.mrf.mxu0
      %v575 = vadd.f32 0.0, %v574
      %v576 = vpop.f32.mrf.mxu0
      %577 = vmatprep.mubr.f32.mxu0 0.0
      %578 = vmatmul.mubr.f32.gmra.mxu0 %v402
      %v579 = vpop.f32.mrf.mxu0
      %v580 = vadd.f32 0.0, %v579
      %v581 = vpop.f32.mrf.mxu0
      %582 = vmatprep.mubr.f32.mxu0 0.0
      %583 = vmatmul.mubr.f32.gmra.mxu0 %v405
      %v584 = vpop.f32.mrf.mxu0
      %v585 = vadd.f32 0.0, %v584
      %v586 = vpop.f32.mrf.mxu0
      %587 = vmatprep.mubr.f32.mxu0 0.0
      %588 = vmatmul.mubr.f32.gmra.mxu0 %v408
      %v589 = vpop.f32.mrf.mxu0
      %v590 = vadd.f32 0.0, %v589
      %v591 = vpop.f32.mrf.mxu0
      %592 = vmatprep.mubr.f32.mxu0 0.0
      %593 = vmatmul.mubr.f32.gmra.mxu0 %v411
      %v594 = vpop.f32.mrf.mxu0
      %v595 = vadd.f32 0.0, %v594
      %v596 = vpop.f32.mrf.mxu0
      %597 = vmatprep.mubr.f32.mxu0 0.0
      %598 = vmatmul.mubr.f32.gmra.mxu0 %v414
      %v599 = vpop.f32.mrf.mxu0
      %v600 = vadd.f32 0.0, %v599
      %v601 = vpop.f32.mrf.mxu0
      %602 = vmatprep.mubr.f32.mxu0 0.0
      %603 = vmatmul.mubr.f32.gmra.mxu0 %v417
      %v604 = vpop.f32.mrf.mxu0
      %v605 = vadd.f32 0.0, %v604
      %v606 = vpop.f32.mrf.mxu0
      %607 = vmatprep.mubr.f32.mxu0 0.0
      %608 = vmatmul.mubr.f32.gmra.mxu0 %v420
      %v609 = vpop.f32.mrf.mxu0
      %v610 = vadd.f32 0.0, %v609
      %v611 = vpop.f32.mrf.mxu0
      %612 = vmatprep.mubr.f32.mxu0 0.0
      %613 = vmatmul.mubr.f32.gmra.mxu0 %v423
      %v614 = vpop.f32.mrf.mxu0
      %v615 = vadd.f32 0.0, %v614
      %v616 = vpop.f32.mrf.mxu0
      %617 = vmatprep.mubr.f32.mxu0 0.0
      %618 = vmatmul.mubr.f32.gmra.mxu0 %v426
      %v619 = vpop.f32.mrf.mxu0
      %v620 = vadd.f32 0.0, %v619
      %v621 = vpop.f32.mrf.mxu0
      %622 = vmatprep.mubr.f32.mxu0 0.0
      %623 = vmatmul.mubr.f32.gmra.mxu0 %v429
      %v624 = vpop.f32.mrf.mxu0
      %v625 = vadd.f32 0.0, %v624
      %v626 = vpop.f32.mrf.mxu0
      %627 = vmatprep.mubr.f32.mxu0 0.0
      %628 = vmatmul.mubr.f32.gmra.mxu0 %v432
      %v629 = vpop.f32.mrf.mxu0
      %v630 = vadd.f32 0.0, %v629
      %v631 = vpop.f32.mrf.mxu0
      %632 = vmatprep.mubr.f32.mxu0 0.0
      %633 = vmatmul.mubr.f32.gmra.mxu0 %v435
      %v634 = vpop.f32.mrf.mxu0
      %v635 = vadd.f32 0.0, %v634
      %v636 = vpop.f32.mrf.mxu0
      %637 = vmatprep.mubr.f32.mxu0 0.0
      %638 = vmatmul.mubr.f32.gmra.mxu0 %v438
      %v639 = vpop.f32.mrf.mxu0
      %v640 = vadd.f32 0.0, %v639
      %v641 = vpop.f32.mrf.mxu0
      %642 = vmatprep.mubr.f32.mxu0 0.0
      %643 = vmatmul.mubr.f32.gmra.mxu0 %v441
      %v644 = vpop.f32.mrf.mxu0
      %v645 = vadd.f32 0.0, %v644
      %v646 = vpop.f32.mrf.mxu0
      %647 = vmatprep.mubr.f32.mxu0 0.0
      %648 = vmatmul.mubr.f32.gmra.mxu0 %v444
      %v649 = vpop.f32.mrf.mxu0
      %v650 = vadd.f32 0.0, %v649
      %v651 = vpop.f32.mrf.mxu0
      %652 = vmatprep.mubr.f32.mxu0 0.0
      %653 = vmatmul.mubr.f32.gmra.mxu0 %v447
      %v654 = vpop.f32.mrf.mxu0
      %v655 = vadd.f32 0.0, %v654
      %v656 = vpop.f32.mrf.mxu0
      %657 = vmatprep.mubr.f32.mxu0 0.0
      %658 = vmatmul.mubr.f32.gmra.mxu0 %v450
      %v659 = vpop.f32.mrf.mxu0
      %v660 = vadd.f32 0.0, %v659
      %v661 = vpop.f32.mrf.mxu0
      %662 = vmatprep.mubr.f32.mxu0 0.0
      %663 = vmatmul.mubr.f32.gmra.mxu0 %v453
      %v664 = vpop.f32.mrf.mxu0
      %v665 = vadd.f32 0.0, %v664
      %v666 = vpop.f32.mrf.mxu0
      %667 = vmatprep.mubr.f32.mxu0 0.0
      %668 = vmatmul.mubr.f32.gmra.mxu0 %v456
      %v669 = vpop.f32.mrf.mxu0
      %v670 = vadd.f32 0.0, %v669
      %v671 = vpop.f32.mrf.mxu0
      %672 = vmatprep.mubr.f32.mxu0 0.0
      %673 = vmatmul.mubr.f32.gmra.mxu0 %v459
      %v674 = vpop.f32.mrf.mxu0
      %v675 = vadd.f32 0.0, %v674
      %v676 = vpop.f32.mrf.mxu0
      %677 = vmatprep.mubr.f32.mxu0 0.0
      %678 = vmatmul.mubr.f32.gmra.mxu0 %v462
      %v679 = vpop.f32.mrf.mxu0
      %v680 = vadd.f32 0.0, %v679
      %v681 = vpop.f32.mrf.mxu0
      %682 = vmatprep.mubr.f32.mxu0 0.0
      %683 = vmatmul.mubr.f32.gmra.mxu0 %v465
      %v684 = vpop.f32.mrf.mxu0
      %v685 = vadd.f32 0.0, %v684
      %v686 = vpop.f32.mrf.mxu0
      %687 = vmatprep.mubr.f32.mxu0 0.0
      %688 = vmatmul.mubr.f32.gmra.mxu0 %v468
      %v689 = vpop.f32.mrf.mxu0
      %v690 = vadd.f32 0.0, %v689
      %v691 = vpop.f32.mrf.mxu0
      %692 = vmatprep.mubr.f32.mxu0 0.0
      %693 = vmatmul.mubr.f32.gmra.mxu0 %v471
      %v694 = vpop.f32.mrf.mxu0
      %v695 = vadd.f32 0.0, %v694
      %v696 = vpop.f32.mrf.mxu0
      %697 = vdwg.mxu0
      %v698 = vadd.f32 %v344, %v540
      %v699 = vadd.f32 %v345, %v545
      %v700 = vadd.f32 %v346, %v550
      %v701 = vadd.f32 %v347, %v555
      %v702 = vadd.f32 %v348, %v560
      %v703 = vadd.f32 %v349, %v565
      %v704 = vadd.f32 %v350, %v570
      %v705 = vadd.f32 %v351, %v575
      %v706 = vadd.f32 %v352, %v580
      %v707 = vadd.f32 %v353, %v585
      %v708 = vadd.f32 %v354, %v590
      %v709 = vadd.f32 %v355, %v595
      %v710 = vadd.f32 %v356, %v600
      %v711 = vadd.f32 %v357, %v605
      %v712 = vadd.f32 %v358, %v610
      %v713 = vadd.f32 %v359, %v615
      %v714 = vadd.f32 %v360, %v620
      %v715 = vadd.f32 %v361, %v625
      %v716 = vadd.f32 %v362, %v630
      %v717 = vadd.f32 %v363, %v635
      %v718 = vadd.f32 %v364, %v640
      %v719 = vadd.f32 %v365, %v645
      %v720 = vadd.f32 %v366, %v650
      %v721 = vadd.f32 %v367, %v655
      %v722 = vadd.f32 %v368, %v660
      %v723 = vadd.f32 %v369, %v665
      %v724 = vadd.f32 %v370, %v670
      %v725 = vadd.f32 %v371, %v675
      %v726 = vadd.f32 %v372, %v680
      %v727 = vadd.f32 %v373, %v685
      %v728 = vadd.f32 %v374, %v690
      %v729 = vadd.f32 %v375, %v695
      %v730 = vld [vmem:[#allocation2] sm:$0xff]
      %v731 = vld [vmem:[#allocation2 + $0x8] sm:$0xff]
      %v732 = vld [vmem:[#allocation2 + $0x18] sm:$0xff]
      %v733 = vld [vmem:[#allocation2 + $0x20] sm:$0xff]
      %v734 = vld [vmem:[#allocation2 + $0x30] sm:$0xff]
      %v735 = vld [vmem:[#allocation2 + $0x38] sm:$0xff]
      %v736 = vld [vmem:[#allocation2 + $0x48] sm:$0xff]
      %v737 = vld [vmem:[#allocation2 + $0x50] sm:$0xff]
      %v738 = vld [vmem:[#allocation2 + $0x60] sm:$0xff]
      %v739 = vld [vmem:[#allocation2 + $0x68] sm:$0xff]
      %v740 = vld [vmem:[#allocation2 + $0x78] sm:$0xff]
      %v741 = vld [vmem:[#allocation2 + $0x80] sm:$0xff]
      %v742 = vld [vmem:[#allocation2 + $0x90] sm:$0xff]
      %v743 = vld [vmem:[#allocation2 + $0x98] sm:$0xff]
      %v744 = vld [vmem:[#allocation2 + $0xa8] sm:$0xff]
      %v745 = vld [vmem:[#allocation2 + $0xb0] sm:$0xff]
      %v746 = vld [vmem:[#allocation2 + $0xc0] sm:$0xff]
      %v747 = vld [vmem:[#allocation2 + $0xc8] sm:$0xff]
      %v748 = vld [vmem:[#allocation2 + $0xd8] sm:$0xff]
      %v749 = vld [vmem:[#allocation2 + $0xe0] sm:$0xff]
      %v750 = vld [vmem:[#allocation2 + $0xf0] sm:$0xff]
      %v751 = vld [vmem:[#allocation2 + $0xf8] sm:$0xff]
      %v752 = vld [vmem:[#allocation2 + $0x108] sm:$0xff]
      %v753 = vld [vmem:[#allocation2 + $0x110] sm:$0xff]
      %v754 = vld [vmem:[#allocation2 + $0x120] sm:$0xff]
      %v755 = vld [vmem:[#allocation2 + $0x128] sm:$0xff]
      %v756 = vld [vmem:[#allocation2 + $0x138] sm:$0xff]
      %v757 = vld [vmem:[#allocation2 + $0x140] sm:$0xff]
      %v758 = vld [vmem:[#allocation2 + $0x150] sm:$0xff]
      %v759 = vld [vmem:[#allocation2 + $0x158] sm:$0xff]
      %v760 = vld [vmem:[#allocation2 + $0x168] sm:$0xff]
      %v761 = vld [vmem:[#allocation2 + $0x170] sm:$0xff]
      %v762 = vld [vmem:[#allocation2 + $0x1] sm:$0xff]
      %v763 = vld [vmem:[#allocation2 + $0x9] sm:$0xff]
      %v764 = vld [vmem:[#allocation2 + $0x19] sm:$0xff]
      %v765 = vld [vmem:[#allocation2 + $0x21] sm:$0xff]
      %v766 = vld [vmem:[#allocation2 + $0x31] sm:$0xff]
      %v767 = vld [vmem:[#allocation2 + $0x39] sm:$0xff]
      %v768 = vld [vmem:[#allocation2 + $0x49] sm:$0xff]
      %v769 = vld [vmem:[#allocation2 + $0x51] sm:$0xff]
      %v770 = vld [vmem:[#allocation2 + $0x61] sm:$0xff]
      %v771 = vld [vmem:[#allocation2 + $0x69] sm:$0xff]
      %v772 = vld [vmem:[#allocation2 + $0x79] sm:$0xff]
      %v773 = vld [vmem:[#allocation2 + $0x81] sm:$0xff]
      %v774 = vld [vmem:[#allocation2 + $0x91] sm:$0xff]
      %v775 = vld [vmem:[#allocation2 + $0x99] sm:$0xff]
      %v776 = vld [vmem:[#allocation2 + $0xa9] sm:$0xff]
      %v777 = vld [vmem:[#allocation2 + $0xb1] sm:$0xff]
      %v778 = vld [vmem:[#allocation2 + $0xc1] sm:$0xff]
      %v779 = vld [vmem:[#allocation2 + $0xc9] sm:$0xff]
      %v780 = vld [vmem:[#allocation2 + $0xd9] sm:$0xff]
      %v781 = vld [vmem:[#allocation2 + $0xe1] sm:$0xff]
      %v782 = vld [vmem:[#allocation2 + $0xf1] sm:$0xff]
      %v783 = vld [vmem:[#allocation2 + $0xf9] sm:$0xff]
      %v784 = vld [vmem:[#allocation2 + $0x109] sm:$0xff]
      %v785 = vld [vmem:[#allocation2 + $0x111] sm:$0xff]
      %v786 = vld [vmem:[#allocation2 + $0x121] sm:$0xff]
      %v787 = vld [vmem:[#allocation2 + $0x129] sm:$0xff]
      %v788 = vld [vmem:[#allocation2 + $0x139] sm:$0xff]
      %v789 = vld [vmem:[#allocation2 + $0x141] sm:$0xff]
      %v790 = vld [vmem:[#allocation2 + $0x151] sm:$0xff]
      %v791 = vld [vmem:[#allocation2 + $0x159] sm:$0xff]
      %v792 = vld [vmem:[#allocation2 + $0x169] sm:$0xff]
      %v793 = vld [vmem:[#allocation2 + $0x171] sm:$0xff]
      %v794 = vld [vmem:[#allocation2 + $0x2] sm:$0xff]
      %v795 = vld [vmem:[#allocation2 + $0xa] sm:$0xff]
      %v796 = vld [vmem:[#allocation2 + $0x1a] sm:$0xff]
      %v797 = vld [vmem:[#allocation2 + $0x22] sm:$0xff]
      %v798 = vld [vmem:[#allocation2 + $0x32] sm:$0xff]
      %v799 = vld [vmem:[#allocation2 + $0x3a] sm:$0xff]
      %v800 = vld [vmem:[#allocation2 + $0x4a] sm:$0xff]
      %v801 = vld [vmem:[#allocation2 + $0x52] sm:$0xff]
      %v802 = vld [vmem:[#allocation2 + $0x62] sm:$0xff]
      %v803 = vld [vmem:[#allocation2 + $0x6a] sm:$0xff]
      %v804 = vld [vmem:[#allocation2 + $0x7a] sm:$0xff]
      %v805 = vld [vmem:[#allocation2 + $0x82] sm:$0xff]
      %v806 = vld [vmem:[#allocation2 + $0x92] sm:$0xff]
      %v807 = vld [vmem:[#allocation2 + $0x9a] sm:$0xff]
      %v808 = vld [vmem:[#allocation2 + $0xaa] sm:$0xff]
      %v809 = vld [vmem:[#allocation2 + $0xb2] sm:$0xff]
      %v810 = vld [vmem:[#allocation2 + $0xc2] sm:$0xff]
      %v811 = vld [vmem:[#allocation2 + $0xca] sm:$0xff]
      %v812 = vld [vmem:[#allocation2 + $0xda] sm:$0xff]
      %v813 = vld [vmem:[#allocation2 + $0xe2] sm:$0xff]
      %v814 = vld [vmem:[#allocation2 + $0xf2] sm:$0xff]
      %v815 = vld [vmem:[#allocation2 + $0xfa] sm:$0xff]
      %v816 = vld [vmem:[#allocation2 + $0x10a] sm:$0xff]
      %v817 = vld [vmem:[#allocation2 + $0x112] sm:$0xff]
      %v818 = vld [vmem:[#allocation2 + $0x122] sm:$0xff]
      %v819 = vld [vmem:[#allocation2 + $0x12a] sm:$0xff]
      %v820 = vld [vmem:[#allocation2 + $0x13a] sm:$0xff]
      %v821 = vld [vmem:[#allocation2 + $0x142] sm:$0xff]
      %v822 = vld [vmem:[#allocation2 + $0x152] sm:$0xff]
      %v823 = vld [vmem:[#allocation2 + $0x15a] sm:$0xff]
      %v824 = vld [vmem:[#allocation2 + $0x16a] sm:$0xff]
      %v825 = vld [vmem:[#allocation2 + $0x172] sm:$0xff]
      %v826 = vld [vmem:[%s303] sm:$0xff]
      %v827 = vld [vmem:[%s303 + $0x8] sm:$0xff]
      %v828 = vld [vmem:[%s303 + $0x18] sm:$0xff]
      %v829 = vld [vmem:[%s303 + $0x20] sm:$0xff]
      %v830 = vld [vmem:[%s303 + $0x30] sm:$0xff]
      %v831 = vld [vmem:[%s303 + $0x38] sm:$0xff]
      %v832 = vld [vmem:[%s303 + $0x48] sm:$0xff]
      %v833 = vld [vmem:[%s303 + $0x50] sm:$0xff]
      %v834 = vld [vmem:[%s303 + $0x60] sm:$0xff]
      %v835 = vld [vmem:[%s303 + $0x68] sm:$0xff]
      %v836 = vld [vmem:[%s303 + $0x78] sm:$0xff]
      %v837 = vld [vmem:[%s303 + $0x80] sm:$0xff]
      %v838 = vld [vmem:[%s303 + $0x90] sm:$0xff]
      %v839 = vld [vmem:[%s303 + $0x98] sm:$0xff]
      %v840 = vld [vmem:[%s303 + $0xa8] sm:$0xff]
      %v841 = vld [vmem:[%s303 + $0xb0] sm:$0xff]
      %v842 = vld [vmem:[%s303 + $0xc0] sm:$0xff]
      %v843 = vld [vmem:[%s303 + $0xc8] sm:$0xff]
      %v844 = vld [vmem:[%s303 + $0xd8] sm:$0xff]
      %v845 = vld [vmem:[%s303 + $0xe0] sm:$0xff]
      %v846 = vld [vmem:[%s303 + $0xf0] sm:$0xff]
      %v847 = vld [vmem:[%s303 + $0xf8] sm:$0xff]
      %v848 = vld [vmem:[%s303 + $0x108] sm:$0xff]
      %v849 = vld [vmem:[%s303 + $0x110] sm:$0xff]
      %v850 = vld [vmem:[%s303 + $0x120] sm:$0xff]
      %v851 = vld [vmem:[%s303 + $0x128] sm:$0xff]
      %v852 = vld [vmem:[%s303 + $0x138] sm:$0xff]
      %v853 = vld [vmem:[%s303 + $0x140] sm:$0xff]
      %v854 = vld [vmem:[%s303 + $0x150] sm:$0xff]
      %v855 = vld [vmem:[%s303 + $0x158] sm:$0xff]
      %v856 = vld [vmem:[%s303 + $0x168] sm:$0xff]
      %v857 = vld [vmem:[%s303 + $0x170] sm:$0xff]
      %v858 = vld [vmem:[%s303 + $0x1] sm:$0xff]
      %v859 = vld [vmem:[%s303 + $0x9] sm:$0xff]
      %v860 = vld [vmem:[%s303 + $0x19] sm:$0xff]
      %v861 = vld [vmem:[%s303 + $0x21] sm:$0xff]
      %v862 = vld [vmem:[%s303 + $0x31] sm:$0xff]
      %v863 = vld [vmem:[%s303 + $0x39] sm:$0xff]
      %v864 = vld [vmem:[%s303 + $0x49] sm:$0xff]
      %v865 = vld [vmem:[%s303 + $0x51] sm:$0xff]
      %v866 = vld [vmem:[%s303 + $0x61] sm:$0xff]
      %v867 = vld [vmem:[%s303 + $0x69] sm:$0xff]
      %v868 = vld [vmem:[%s303 + $0x79] sm:$0xff]
      %v869 = vld [vmem:[%s303 + $0x81] sm:$0xff]
      %v870 = vld [vmem:[%s303 + $0x91] sm:$0xff]
      %v871 = vld [vmem:[%s303 + $0x99] sm:$0xff]
      %v872 = vld [vmem:[%s303 + $0xa9] sm:$0xff]
      %v873 = vld [vmem:[%s303 + $0xb1] sm:$0xff]
      %v874 = vld [vmem:[%s303 + $0xc1] sm:$0xff]
      %v875 = vld [vmem:[%s303 + $0xc9] sm:$0xff]
      %v876 = vld [vmem:[%s303 + $0xd9] sm:$0xff]
      %v877 = vld [vmem:[%s303 + $0xe1] sm:$0xff]
      %v878 = vld [vmem:[%s303 + $0xf1] sm:$0xff]
      %v879 = vld [vmem:[%s303 + $0xf9] sm:$0xff]
      %v880 = vld [vmem:[%s303 + $0x109] sm:$0xff]
      %v881 = vld [vmem:[%s303 + $0x111] sm:$0xff]
      %v882 = vld [vmem:[%s303 + $0x121] sm:$0xff]
      %v883 = vld [vmem:[%s303 + $0x129] sm:$0xff]
      %v884 = vld [vmem:[%s303 + $0x139] sm:$0xff]
      %v885 = vld [vmem:[%s303 + $0x141] sm:$0xff]
      %v886 = vld [vmem:[%s303 + $0x151] sm:$0xff]
      %v887 = vld [vmem:[%s303 + $0x159] sm:$0xff]
      %v888 = vld [vmem:[%s303 + $0x169] sm:$0xff]
      %v889 = vld [vmem:[%s303 + $0x171] sm:$0xff]
      %v890 = vld [vmem:[%s303 + $0x2] sm:$0xff]
      %v891 = vld [vmem:[%s303 + $0xa] sm:$0xff]
      %v892 = vld [vmem:[%s303 + $0x1a] sm:$0xff]
      %v893 = vld [vmem:[%s303 + $0x22] sm:$0xff]
      %v894 = vld [vmem:[%s303 + $0x32] sm:$0xff]
      %v895 = vld [vmem:[%s303 + $0x3a] sm:$0xff]
      %v896 = vld [vmem:[%s303 + $0x4a] sm:$0xff]
      %v897 = vld [vmem:[%s303 + $0x52] sm:$0xff]
      %v898 = vld [vmem:[%s303 + $0x62] sm:$0xff]
      %v899 = vld [vmem:[%s303 + $0x6a] sm:$0xff]
      %v900 = vld [vmem:[%s303 + $0x7a] sm:$0xff]
      %v901 = vld [vmem:[%s303 + $0x82] sm:$0xff]
      %v902 = vld [vmem:[%s303 + $0x92] sm:$0xff]
      %v903 = vld [vmem:[%s303 + $0x9a] sm:$0xff]
      %v904 = vld [vmem:[%s303 + $0xaa] sm:$0xff]
      %v905 = vld [vmem:[%s303 + $0xb2] sm:$0xff]
      %v906 = vld [vmem:[%s303 + $0xc2] sm:$0xff]
      %v907 = vld [vmem:[%s303 + $0xca] sm:$0xff]
      %v908 = vld [vmem:[%s303 + $0xda] sm:$0xff]
      %v909 = vld [vmem:[%s303 + $0xe2] sm:$0xff]
      %v910 = vld [vmem:[%s303 + $0xf2] sm:$0xff]
      %v911 = vld [vmem:[%s303 + $0xfa] sm:$0xff]
      %v912 = vld [vmem:[%s303 + $0x10a] sm:$0xff]
      %v913 = vld [vmem:[%s303 + $0x112] sm:$0xff]
      %v914 = vld [vmem:[%s303 + $0x122] sm:$0xff]
      %v915 = vld [vmem:[%s303 + $0x12a] sm:$0xff]
      %v916 = vld [vmem:[%s303 + $0x13a] sm:$0xff]
      %v917 = vld [vmem:[%s303 + $0x142] sm:$0xff]
      %v918 = vld [vmem:[%s303 + $0x152] sm:$0xff]
      %v919 = vld [vmem:[%s303 + $0x15a] sm:$0xff]
      %v920 = vld [vmem:[%s303 + $0x16a] sm:$0xff]
      %v921 = vld [vmem:[%s303 + $0x172] sm:$0xff]
      %s922 = scalar_lea.vmem [#allocation2], 48
      %v923 = vld [vmem:[%s922] sm:$0xff]
      %v924 = vld [vmem:[%s922 + $0x8] sm:$0xff]
      %v925 = vld [vmem:[%s922 + $0x18] sm:$0xff]
      %v926 = vld [vmem:[%s922 + $0x20] sm:$0xff]
      %v927 = vld [vmem:[%s922 + $0x30] sm:$0xff]
      %v928 = vld [vmem:[%s922 + $0x38] sm:$0xff]
      %v929 = vld [vmem:[%s922 + $0x48] sm:$0xff]
      %v930 = vld [vmem:[%s922 + $0x50] sm:$0xff]
      %v931 = vld [vmem:[%s922 + $0x60] sm:$0xff]
      %v932 = vld [vmem:[%s922 + $0x68] sm:$0xff]
      %v933 = vld [vmem:[%s922 + $0x78] sm:$0xff]
      %v934 = vld [vmem:[%s922 + $0x80] sm:$0xff]
      %v935 = vld [vmem:[%s922 + $0x90] sm:$0xff]
      %v936 = vld [vmem:[%s922 + $0x98] sm:$0xff]
      %v937 = vld [vmem:[%s922 + $0xa8] sm:$0xff]
      %v938 = vld [vmem:[%s922 + $0xb0] sm:$0xff]
      %v939 = vld [vmem:[%s922 + $0xc0] sm:$0xff]
      %v940 = vld [vmem:[%s922 + $0xc8] sm:$0xff]
      %v941 = vld [vmem:[%s922 + $0xd8] sm:$0xff]
      %v942 = vld [vmem:[%s922 + $0xe0] sm:$0xff]
      %v943 = vld [vmem:[%s922 + $0xf0] sm:$0xff]
      %v944 = vld [vmem:[%s922 + $0xf8] sm:$0xff]
      %v945 = vld [vmem:[%s922 + $0x108] sm:$0xff]
      %v946 = vld [vmem:[%s922 + $0x110] sm:$0xff]
      %v947 = vld [vmem:[%s922 + $0x120] sm:$0xff]
      %v948 = vld [vmem:[%s922 + $0x128] sm:$0xff]
      %v949 = vld [vmem:[%s922 + $0x138] sm:$0xff]
      %v950 = vld [vmem:[%s922 + $0x140] sm:$0xff]
      %v951 = vld [vmem:[%s922 + $0x150] sm:$0xff]
      %v952 = vld [vmem:[%s922 + $0x158] sm:$0xff]
      %v953 = vld [vmem:[%s922 + $0x168] sm:$0xff]
      %v954 = vld [vmem:[%s922 + $0x170] sm:$0xff]
      %v955 = vld [vmem:[%s922 + $0x1] sm:$0xff]
      %v956 = vld [vmem:[%s922 + $0x9] sm:$0xff]
      %v957 = vld [vmem:[%s922 + $0x19] sm:$0xff]
      %v958 = vld [vmem:[%s922 + $0x21] sm:$0xff]
      %v959 = vld [vmem:[%s922 + $0x31] sm:$0xff]
      %v960 = vld [vmem:[%s922 + $0x39] sm:$0xff]
      %v961 = vld [vmem:[%s922 + $0x49] sm:$0xff]
      %v962 = vld [vmem:[%s922 + $0x51] sm:$0xff]
      %v963 = vld [vmem:[%s922 + $0x61] sm:$0xff]
      %v964 = vld [vmem:[%s922 + $0x69] sm:$0xff]
      %v965 = vld [vmem:[%s922 + $0x79] sm:$0xff]
      %v966 = vld [vmem:[%s922 + $0x81] sm:$0xff]
      %v967 = vld [vmem:[%s922 + $0x91] sm:$0xff]
      %v968 = vld [vmem:[%s922 + $0x99] sm:$0xff]
      %v969 = vld [vmem:[%s922 + $0xa9] sm:$0xff]
      %v970 = vld [vmem:[%s922 + $0xb1] sm:$0xff]
      %v971 = vld [vmem:[%s922 + $0xc1] sm:$0xff]
      %v972 = vld [vmem:[%s922 + $0xc9] sm:$0xff]
      %v973 = vld [vmem:[%s922 + $0xd9] sm:$0xff]
      %v974 = vld [vmem:[%s922 + $0xe1] sm:$0xff]
      %v975 = vld [vmem:[%s922 + $0xf1] sm:$0xff]
      %v976 = vld [vmem:[%s922 + $0xf9] sm:$0xff]
      %v977 = vld [vmem:[%s922 + $0x109] sm:$0xff]
      %v978 = vld [vmem:[%s922 + $0x111] sm:$0xff]
      %v979 = vld [vmem:[%s922 + $0x121] sm:$0xff]
      %v980 = vld [vmem:[%s922 + $0x129] sm:$0xff]
      %v981 = vld [vmem:[%s922 + $0x139] sm:$0xff]
      %v982 = vld [vmem:[%s922 + $0x141] sm:$0xff]
      %v983 = vld [vmem:[%s922 + $0x151] sm:$0xff]
      %v984 = vld [vmem:[%s922 + $0x159] sm:$0xff]
      %v985 = vld [vmem:[%s922 + $0x169] sm:$0xff]
      %v986 = vld [vmem:[%s922 + $0x171] sm:$0xff]
      %v987 = vld [vmem:[%s922 + $0x2] sm:$0xff]
      %v988 = vld [vmem:[%s922 + $0xa] sm:$0xff]
      %v989 = vld [vmem:[%s922 + $0x1a] sm:$0xff]
      %v990 = vld [vmem:[%s922 + $0x22] sm:$0xff]
      %v991 = vld [vmem:[%s922 + $0x32] sm:$0xff]
      %v992 = vld [vmem:[%s922 + $0x3a] sm:$0xff]
      %v993 = vld [vmem:[%s922 + $0x4a] sm:$0xff]
      %v994 = vld [vmem:[%s922 + $0x52] sm:$0xff]
      %v995 = vld [vmem:[%s922 + $0x62] sm:$0xff]
      %v996 = vld [vmem:[%s922 + $0x6a] sm:$0xff]
      %v997 = vld [vmem:[%s922 + $0x7a] sm:$0xff]
      %v998 = vld [vmem:[%s922 + $0x82] sm:$0xff]
      %v999 = vld [vmem:[%s922 + $0x92] sm:$0xff]
      %v1000 = vld [vmem:[%s922 + $0x9a] sm:$0xff]
      %v1001 = vld [vmem:[%s922 + $0xaa] sm:$0xff]
      %v1002 = vld [vmem:[%s922 + $0xb2] sm:$0xff]
      %v1003 = vld [vmem:[%s922 + $0xc2] sm:$0xff]
      %v1004 = vld [vmem:[%s922 + $0xca] sm:$0xff]
      %v1005 = vld [vmem:[%s922 + $0xda] sm:$0xff]
      %v1006 = vld [vmem:[%s922 + $0xe2] sm:$0xff]
      %v1007 = vld [vmem:[%s922 + $0xf2] sm:$0xff]
      %v1008 = vld [vmem:[%s922 + $0xfa] sm:$0xff]
      %v1009 = vld [vmem:[%s922 + $0x10a] sm:$0xff]
      %v1010 = vld [vmem:[%s922 + $0x112] sm:$0xff]
      %v1011 = vld [vmem:[%s922 + $0x122] sm:$0xff]
      %v1012 = vld [vmem:[%s922 + $0x12a] sm:$0xff]
      %v1013 = vld [vmem:[%s922 + $0x13a] sm:$0xff]
      %v1014 = vld [vmem:[%s922 + $0x142] sm:$0xff]
      %v1015 = vld [vmem:[%s922 + $0x152] sm:$0xff]
      %v1016 = vld [vmem:[%s922 + $0x15a] sm:$0xff]
      %v1017 = vld [vmem:[%s922 + $0x16a] sm:$0xff]
      %v1018 = vld [vmem:[%s922 + $0x172] sm:$0xff]
      %1051 = vrot.lane.b32.xlu0 %v762, 8
      %v1052 = vpop.permute.xlu0 %1051
      %1053 = vrot.lane.b32.xlu0 %v763, 8
      %v1054 = vpop.permute.xlu0 %1053
      %1055 = vrot.lane.b32.xlu0 %v764, 8
      %v1056 = vpop.permute.xlu0 %1055
      %1057 = vrot.lane.b32.xlu0 %v765, 8
      %v1058 = vpop.permute.xlu0 %1057
      %1059 = vrot.lane.b32.xlu0 %v766, 8
      %v1060 = vpop.permute.xlu0 %1059
      %1061 = vrot.lane.b32.xlu0 %v767, 8
      %v1062 = vpop.permute.xlu0 %1061
      %1063 = vrot.lane.b32.xlu0 %v768, 8
      %v1064 = vpop.permute.xlu0 %1063
      %1065 = vrot.lane.b32.xlu0 %v769, 8
      %v1066 = vpop.permute.xlu0 %1065
      %1067 = vrot.lane.b32.xlu0 %v770, 8
      %v1068 = vpop.permute.xlu0 %1067
      %1069 = vrot.lane.b32.xlu0 %v771, 8
      %v1070 = vpop.permute.xlu0 %1069
      %1071 = vrot.lane.b32.xlu0 %v772, 8
      %v1072 = vpop.permute.xlu0 %1071
      %1073 = vrot.lane.b32.xlu0 %v773, 8
      %v1074 = vpop.permute.xlu0 %1073
      %1075 = vrot.lane.b32.xlu0 %v774, 8
      %v1076 = vpop.permute.xlu0 %1075
      %1077 = vrot.lane.b32.xlu0 %v775, 8
      %v1078 = vpop.permute.xlu0 %1077
      %1079 = vrot.lane.b32.xlu0 %v776, 8
      %v1080 = vpop.permute.xlu0 %1079
      %1081 = vrot.lane.b32.xlu0 %v777, 8
      %v1082 = vpop.permute.xlu0 %1081
      %1083 = vrot.lane.b32.xlu0 %v778, 8
      %v1084 = vpop.permute.xlu0 %1083
      %1085 = vrot.lane.b32.xlu0 %v779, 8
      %v1086 = vpop.permute.xlu0 %1085
      %1087 = vrot.lane.b32.xlu0 %v780, 8
      %v1088 = vpop.permute.xlu0 %1087
      %1089 = vrot.lane.b32.xlu0 %v781, 8
      %v1090 = vpop.permute.xlu0 %1089
      %1091 = vrot.lane.b32.xlu0 %v782, 8
      %v1092 = vpop.permute.xlu0 %1091
      %1093 = vrot.lane.b32.xlu0 %v783, 8
      %v1094 = vpop.permute.xlu0 %1093
      %1095 = vrot.lane.b32.xlu0 %v784, 8
      %v1096 = vpop.permute.xlu0 %1095
      %1097 = vrot.lane.b32.xlu0 %v785, 8
      %v1098 = vpop.permute.xlu0 %1097
      %1099 = vrot.lane.b32.xlu0 %v786, 8
      %v1100 = vpop.permute.xlu0 %1099
      %1101 = vrot.lane.b32.xlu0 %v787, 8
      %v1102 = vpop.permute.xlu0 %1101
      %1103 = vrot.lane.b32.xlu0 %v788, 8
      %v1104 = vpop.permute.xlu0 %1103
      %1105 = vrot.lane.b32.xlu0 %v789, 8
      %v1106 = vpop.permute.xlu0 %1105
      %1107 = vrot.lane.b32.xlu0 %v790, 8
      %v1108 = vpop.permute.xlu0 %1107
      %1109 = vrot.lane.b32.xlu0 %v791, 8
      %v1110 = vpop.permute.xlu0 %1109
      %1111 = vrot.lane.b32.xlu0 %v792, 8
      %v1112 = vpop.permute.xlu0 %1111
      %1113 = vrot.lane.b32.xlu0 %v793, 8
      %v1114 = vpop.permute.xlu0 %1113
      %1179 = vrot.lane.b32.xlu0 %v794, 16
      %v1180 = vpop.permute.xlu0 %1179
      %1181 = vrot.lane.b32.xlu0 %v795, 16
      %v1182 = vpop.permute.xlu0 %1181
      %1183 = vrot.lane.b32.xlu0 %v796, 16
      %v1184 = vpop.permute.xlu0 %1183
      %1185 = vrot.lane.b32.xlu0 %v797, 16
      %v1186 = vpop.permute.xlu0 %1185
      %1187 = vrot.lane.b32.xlu0 %v798, 16
      %v1188 = vpop.permute.xlu0 %1187
      %1189 = vrot.lane.b32.xlu0 %v799, 16
      %v1190 = vpop.permute.xlu0 %1189
      %1191 = vrot.lane.b32.xlu0 %v800, 16
      %v1192 = vpop.permute.xlu0 %1191
      %1193 = vrot.lane.b32.xlu0 %v801, 16
      %v1194 = vpop.permute.xlu0 %1193
      %1195 = vrot.lane.b32.xlu0 %v802, 16
      %v1196 = vpop.permute.xlu0 %1195
      %1197 = vrot.lane.b32.xlu0 %v803, 16
      %v1198 = vpop.permute.xlu0 %1197
      %1199 = vrot.lane.b32.xlu0 %v804, 16
      %v1200 = vpop.permute.xlu0 %1199
      %1201 = vrot.lane.b32.xlu0 %v805, 16
      %v1202 = vpop.permute.xlu0 %1201
      %1203 = vrot.lane.b32.xlu0 %v806, 16
      %v1204 = vpop.permute.xlu0 %1203
      %1205 = vrot.lane.b32.xlu0 %v807, 16
      %v1206 = vpop.permute.xlu0 %1205
      %1207 = vrot.lane.b32.xlu0 %v808, 16
      %v1208 = vpop.permute.xlu0 %1207
      %1209 = vrot.lane.b32.xlu0 %v809, 16
      %v1210 = vpop.permute.xlu0 %1209
      %1211 = vrot.lane.b32.xlu0 %v810, 16
      %v1212 = vpop.permute.xlu0 %1211
      %1213 = vrot.lane.b32.xlu0 %v811, 16
      %v1214 = vpop.permute.xlu0 %1213
      %1215 = vrot.lane.b32.xlu0 %v812, 16
      %v1216 = vpop.permute.xlu0 %1215
      %1217 = vrot.lane.b32.xlu0 %v813, 16
      %v1218 = vpop.permute.xlu0 %1217
      %1219 = vrot.lane.b32.xlu0 %v814, 16
      %v1220 = vpop.permute.xlu0 %1219
      %1221 = vrot.lane.b32.xlu0 %v815, 16
      %v1222 = vpop.permute.xlu0 %1221
      %1223 = vrot.lane.b32.xlu0 %v816, 16
      %v1224 = vpop.permute.xlu0 %1223
      %1225 = vrot.lane.b32.xlu0 %v817, 16
      %v1226 = vpop.permute.xlu0 %1225
      %1227 = vrot.lane.b32.xlu0 %v818, 16
      %v1228 = vpop.permute.xlu0 %1227
      %1229 = vrot.lane.b32.xlu0 %v819, 16
      %v1230 = vpop.permute.xlu0 %1229
      %1231 = vrot.lane.b32.xlu0 %v820, 16
      %v1232 = vpop.permute.xlu0 %1231
      %1233 = vrot.lane.b32.xlu0 %v821, 16
      %v1234 = vpop.permute.xlu0 %1233
      %1235 = vrot.lane.b32.xlu0 %v822, 16
      %v1236 = vpop.permute.xlu0 %1235
      %1237 = vrot.lane.b32.xlu0 %v823, 16
      %v1238 = vpop.permute.xlu0 %1237
      %1239 = vrot.lane.b32.xlu0 %v824, 16
      %v1240 = vpop.permute.xlu0 %1239
      %1241 = vrot.lane.b32.xlu0 %v825, 16
      %v1242 = vpop.permute.xlu0 %1241
      %1307 = vrot.lane.b32.xlu0 %v826, 24
      %v1308 = vpop.permute.xlu0 %1307
      %1309 = vrot.lane.b32.xlu0 %v827, 24
      %v1310 = vpop.permute.xlu0 %1309
      %1311 = vrot.lane.b32.xlu0 %v828, 24
      %v1312 = vpop.permute.xlu0 %1311
      %1313 = vrot.lane.b32.xlu0 %v829, 24
      %v1314 = vpop.permute.xlu0 %1313
      %1315 = vrot.lane.b32.xlu0 %v830, 24
      %v1316 = vpop.permute.xlu0 %1315
      %1317 = vrot.lane.b32.xlu0 %v831, 24
      %v1318 = vpop.permute.xlu0 %1317
      %1319 = vrot.lane.b32.xlu0 %v832, 24
      %v1320 = vpop.permute.xlu0 %1319
      %1321 = vrot.lane.b32.xlu0 %v833, 24
      %v1322 = vpop.permute.xlu0 %1321
      %1323 = vrot.lane.b32.xlu0 %v834, 24
      %v1324 = vpop.permute.xlu0 %1323
      %1325 = vrot.lane.b32.xlu0 %v835, 24
      %v1326 = vpop.permute.xlu0 %1325
      %1327 = vrot.lane.b32.xlu0 %v836, 24
      %v1328 = vpop.permute.xlu0 %1327
      %1329 = vrot.lane.b32.xlu0 %v837, 24
      %v1330 = vpop.permute.xlu0 %1329
      %1331 = vrot.lane.b32.xlu0 %v838, 24
      %v1332 = vpop.permute.xlu0 %1331
      %1333 = vrot.lane.b32.xlu0 %v839, 24
      %v1334 = vpop.permute.xlu0 %1333
      %1335 = vrot.lane.b32.xlu0 %v840, 24
      %v1336 = vpop.permute.xlu0 %1335
      %1337 = vrot.lane.b32.xlu0 %v841, 24
      %v1338 = vpop.permute.xlu0 %1337
      %1339 = vrot.lane.b32.xlu0 %v842, 24
      %v1340 = vpop.permute.xlu0 %1339
      %1341 = vrot.lane.b32.xlu0 %v843, 24
      %v1342 = vpop.permute.xlu0 %1341
      %1343 = vrot.lane.b32.xlu0 %v844, 24
      %v1344 = vpop.permute.xlu0 %1343
      %1345 = vrot.lane.b32.xlu0 %v845, 24
      %v1346 = vpop.permute.xlu0 %1345
      %1347 = vrot.lane.b32.xlu0 %v846, 24
      %v1348 = vpop.permute.xlu0 %1347
      %1349 = vrot.lane.b32.xlu0 %v847, 24
      %v1350 = vpop.permute.xlu0 %1349
      %1351 = vrot.lane.b32.xlu0 %v848, 24
      %v1352 = vpop.permute.xlu0 %1351
      %1353 = vrot.lane.b32.xlu0 %v849, 24
      %v1354 = vpop.permute.xlu0 %1353
      %1355 = vrot.lane.b32.xlu0 %v850, 24
      %v1356 = vpop.permute.xlu0 %1355
      %1357 = vrot.lane.b32.xlu0 %v851, 24
      %v1358 = vpop.permute.xlu0 %1357
      %1359 = vrot.lane.b32.xlu0 %v852, 24
      %v1360 = vpop.permute.xlu0 %1359
      %1361 = vrot.lane.b32.xlu0 %v853, 24
      %v1362 = vpop.permute.xlu0 %1361
      %1363 = vrot.lane.b32.xlu0 %v854, 24
      %v1364 = vpop.permute.xlu0 %1363
      %1365 = vrot.lane.b32.xlu0 %v855, 24
      %v1366 = vpop.permute.xlu0 %1365
      %1367 = vrot.lane.b32.xlu0 %v856, 24
      %v1368 = vpop.permute.xlu0 %1367
      %1369 = vrot.lane.b32.xlu0 %v857, 24
      %v1370 = vpop.permute.xlu0 %1369
      %1435 = vrot.lane.b32.xlu0 %v858, 32
      %v1436 = vpop.permute.xlu0 %1435
      %1437 = vrot.lane.b32.xlu0 %v859, 32
      %v1438 = vpop.permute.xlu0 %1437
      %1439 = vrot.lane.b32.xlu0 %v860, 32
      %v1440 = vpop.permute.xlu0 %1439
      %1441 = vrot.lane.b32.xlu0 %v861, 32
      %v1442 = vpop.permute.xlu0 %1441
      %1443 = vrot.lane.b32.xlu0 %v862, 32
      %v1444 = vpop.permute.xlu0 %1443
      %1445 = vrot.lane.b32.xlu0 %v863, 32
      %v1446 = vpop.permute.xlu0 %1445
      %1447 = vrot.lane.b32.xlu0 %v864, 32
      %v1448 = vpop.permute.xlu0 %1447
      %1449 = vrot.lane.b32.xlu0 %v865, 32
      %v1450 = vpop.permute.xlu0 %1449
      %1451 = vrot.lane.b32.xlu0 %v866, 32
      %v1452 = vpop.permute.xlu0 %1451
      %1453 = vrot.lane.b32.xlu0 %v867, 32
      %v1454 = vpop.permute.xlu0 %1453
      %1455 = vrot.lane.b32.xlu0 %v868, 32
      %v1456 = vpop.permute.xlu0 %1455
      %1457 = vrot.lane.b32.xlu0 %v869, 32
      %v1458 = vpop.permute.xlu0 %1457
      %1459 = vrot.lane.b32.xlu0 %v870, 32
      %v1460 = vpop.permute.xlu0 %1459
      %1461 = vrot.lane.b32.xlu0 %v871, 32
      %v1462 = vpop.permute.xlu0 %1461
      %1463 = vrot.lane.b32.xlu0 %v872, 32
      %v1464 = vpop.permute.xlu0 %1463
      %1465 = vrot.lane.b32.xlu0 %v873, 32
      %v1466 = vpop.permute.xlu0 %1465
      %1467 = vrot.lane.b32.xlu0 %v874, 32
      %v1468 = vpop.permute.xlu0 %1467
      %1469 = vrot.lane.b32.xlu0 %v875, 32
      %v1470 = vpop.permute.xlu0 %1469
      %1471 = vrot.lane.b32.xlu0 %v876, 32
      %v1472 = vpop.permute.xlu0 %1471
      %1473 = vrot.lane.b32.xlu0 %v877, 32
      %v1474 = vpop.permute.xlu0 %1473
      %1475 = vrot.lane.b32.xlu0 %v878, 32
      %v1476 = vpop.permute.xlu0 %1475
      %1477 = vrot.lane.b32.xlu0 %v879, 32
      %v1478 = vpop.permute.xlu0 %1477
      %1479 = vrot.lane.b32.xlu0 %v880, 32
      %v1480 = vpop.permute.xlu0 %1479
      %1481 = vrot.lane.b32.xlu0 %v881, 32
      %v1482 = vpop.permute.xlu0 %1481
      %1483 = vrot.lane.b32.xlu0 %v882, 32
      %v1484 = vpop.permute.xlu0 %1483
      %1485 = vrot.lane.b32.xlu0 %v883, 32
      %v1486 = vpop.permute.xlu0 %1485
      %1487 = vrot.lane.b32.xlu0 %v884, 32
      %v1488 = vpop.permute.xlu0 %1487
      %1489 = vrot.lane.b32.xlu0 %v885, 32
      %v1490 = vpop.permute.xlu0 %1489
      %1491 = vrot.lane.b32.xlu0 %v886, 32
      %v1492 = vpop.permute.xlu0 %1491
      %1493 = vrot.lane.b32.xlu0 %v887, 32
      %v1494 = vpop.permute.xlu0 %1493
      %1495 = vrot.lane.b32.xlu0 %v888, 32
      %v1496 = vpop.permute.xlu0 %1495
      %1497 = vrot.lane.b32.xlu0 %v889, 32
      %v1498 = vpop.permute.xlu0 %1497
      %1563 = vrot.lane.b32.xlu0 %v890, 40
      %v1564 = vpop.permute.xlu0 %1563
      %1565 = vrot.lane.b32.xlu0 %v891, 40
      %v1566 = vpop.permute.xlu0 %1565
      %1567 = vrot.lane.b32.xlu0 %v892, 40
      %v1568 = vpop.permute.xlu0 %1567
      %1569 = vrot.lane.b32.xlu0 %v893, 40
      %v1570 = vpop.permute.xlu0 %1569
      %1571 = vrot.lane.b32.xlu0 %v894, 40
      %v1572 = vpop.permute.xlu0 %1571
      %1573 = vrot.lane.b32.xlu0 %v895, 40
      %v1574 = vpop.permute.xlu0 %1573
      %1575 = vrot.lane.b32.xlu0 %v896, 40
      %v1576 = vpop.permute.xlu0 %1575
      %1577 = vrot.lane.b32.xlu0 %v897, 40
      %v1578 = vpop.permute.xlu0 %1577
      %1579 = vrot.lane.b32.xlu0 %v898, 40
      %v1580 = vpop.permute.xlu0 %1579
      %1581 = vrot.lane.b32.xlu0 %v899, 40
      %v1582 = vpop.permute.xlu0 %1581
      %1583 = vrot.lane.b32.xlu0 %v900, 40
      %v1584 = vpop.permute.xlu0 %1583
      %1585 = vrot.lane.b32.xlu0 %v901, 40
      %v1586 = vpop.permute.xlu0 %1585
      %1587 = vrot.lane.b32.xlu0 %v902, 40
      %v1588 = vpop.permute.xlu0 %1587
      %1589 = vrot.lane.b32.xlu0 %v903, 40
      %v1590 = vpop.permute.xlu0 %1589
      %1591 = vrot.lane.b32.xlu0 %v904, 40
      %v1592 = vpop.permute.xlu0 %1591
      %1593 = vrot.lane.b32.xlu0 %v905, 40
      %v1594 = vpop.permute.xlu0 %1593
      %1595 = vrot.lane.b32.xlu0 %v906, 40
      %v1596 = vpop.permute.xlu0 %1595
      %1597 = vrot.lane.b32.xlu0 %v907, 40
      %v1598 = vpop.permute.xlu0 %1597
      %1599 = vrot.lane.b32.xlu0 %v908, 40
      %v1600 = vpop.permute.xlu0 %1599
      %1601 = vrot.lane.b32.xlu0 %v909, 40
      %v1602 = vpop.permute.xlu0 %1601
      %1603 = vrot.lane.b32.xlu0 %v910, 40
      %v1604 = vpop.permute.xlu0 %1603
      %1605 = vrot.lane.b32.xlu0 %v911, 40
      %v1606 = vpop.permute.xlu0 %1605
      %1607 = vrot.lane.b32.xlu0 %v912, 40
      %v1608 = vpop.permute.xlu0 %1607
      %1609 = vrot.lane.b32.xlu0 %v913, 40
      %v1610 = vpop.permute.xlu0 %1609
      %1611 = vrot.lane.b32.xlu0 %v914, 40
      %v1612 = vpop.permute.xlu0 %1611
      %1613 = vrot.lane.b32.xlu0 %v915, 40
      %v1614 = vpop.permute.xlu0 %1613
      %1615 = vrot.lane.b32.xlu0 %v916, 40
      %v1616 = vpop.permute.xlu0 %1615
      %1617 = vrot.lane.b32.xlu0 %v917, 40
      %v1618 = vpop.permute.xlu0 %1617
      %1619 = vrot.lane.b32.xlu0 %v918, 40
      %v1620 = vpop.permute.xlu0 %1619
      %1621 = vrot.lane.b32.xlu0 %v919, 40
      %v1622 = vpop.permute.xlu0 %1621
      %1623 = vrot.lane.b32.xlu0 %v920, 40
      %v1624 = vpop.permute.xlu0 %1623
      %1625 = vrot.lane.b32.xlu0 %v921, 40
      %v1626 = vpop.permute.xlu0 %1625
      %1691 = vrot.lane.b32.xlu0 %v923, 48
      %v1692 = vpop.permute.xlu0 %1691
      %1693 = vrot.lane.b32.xlu0 %v924, 48
      %v1694 = vpop.permute.xlu0 %1693
      %1695 = vrot.lane.b32.xlu0 %v925, 48
      %v1696 = vpop.permute.xlu0 %1695
      %1697 = vrot.lane.b32.xlu0 %v926, 48
      %v1698 = vpop.permute.xlu0 %1697
      %1699 = vrot.lane.b32.xlu0 %v927, 48
      %v1700 = vpop.permute.xlu0 %1699
      %1701 = vrot.lane.b32.xlu0 %v928, 48
      %v1702 = vpop.permute.xlu0 %1701
      %1703 = vrot.lane.b32.xlu0 %v929, 48
      %v1704 = vpop.permute.xlu0 %1703
      %1705 = vrot.lane.b32.xlu0 %v930, 48
      %v1706 = vpop.permute.xlu0 %1705
      %1707 = vrot.lane.b32.xlu0 %v931, 48
      %v1708 = vpop.permute.xlu0 %1707
      %1709 = vrot.lane.b32.xlu0 %v932, 48
      %v1710 = vpop.permute.xlu0 %1709
      %1711 = vrot.lane.b32.xlu0 %v933, 48
      %v1712 = vpop.permute.xlu0 %1711
      %1713 = vrot.lane.b32.xlu0 %v934, 48
      %v1714 = vpop.permute.xlu0 %1713
      %1715 = vrot.lane.b32.xlu0 %v935, 48
      %v1716 = vpop.permute.xlu0 %1715
      %1717 = vrot.lane.b32.xlu0 %v936, 48
      %v1718 = vpop.permute.xlu0 %1717
      %1719 = vrot.lane.b32.xlu0 %v937, 48
      %v1720 = vpop.permute.xlu0 %1719
      %1721 = vrot.lane.b32.xlu0 %v938, 48
      %v1722 = vpop.permute.xlu0 %1721
      %1723 = vrot.lane.b32.xlu0 %v939, 48
      %v1724 = vpop.permute.xlu0 %1723
      %1725 = vrot.lane.b32.xlu0 %v940, 48
      %v1726 = vpop.permute.xlu0 %1725
      %1727 = vrot.lane.b32.xlu0 %v941, 48
      %v1728 = vpop.permute.xlu0 %1727
      %1729 = vrot.lane.b32.xlu0 %v942, 48
      %v1730 = vpop.permute.xlu0 %1729
      %1731 = vrot.lane.b32.xlu0 %v943, 48
      %v1732 = vpop.permute.xlu0 %1731
      %1733 = vrot.lane.b32.xlu0 %v944, 48
      %v1734 = vpop.permute.xlu0 %1733
      %1735 = vrot.lane.b32.xlu0 %v945, 48
      %v1736 = vpop.permute.xlu0 %1735
      %1737 = vrot.lane.b32.xlu0 %v946, 48
      %v1738 = vpop.permute.xlu0 %1737
      %1739 = vrot.lane.b32.xlu0 %v947, 48
      %v1740 = vpop.permute.xlu0 %1739
      %1741 = vrot.lane.b32.xlu0 %v948, 48
      %v1742 = vpop.permute.xlu0 %1741
      %1743 = vrot.lane.b32.xlu0 %v949, 48
      %v1744 = vpop.permute.xlu0 %1743
      %1745 = vrot.lane.b32.xlu0 %v950, 48
      %v1746 = vpop.permute.xlu0 %1745
      %1747 = vrot.lane.b32.xlu0 %v951, 48
      %v1748 = vpop.permute.xlu0 %1747
      %1749 = vrot.lane.b32.xlu0 %v952, 48
      %v1750 = vpop.permute.xlu0 %1749
      %1751 = vrot.lane.b32.xlu0 %v953, 48
      %v1752 = vpop.permute.xlu0 %1751
      %1753 = vrot.lane.b32.xlu0 %v954, 48
      %v1754 = vpop.permute.xlu0 %1753
      %1819 = vrot.lane.b32.xlu0 %v955, 56
      %v1820 = vpop.permute.xlu0 %1819
      %1821 = vrot.lane.b32.xlu0 %v956, 56
      %v1822 = vpop.permute.xlu0 %1821
      %1823 = vrot.lane.b32.xlu0 %v957, 56
      %v1824 = vpop.permute.xlu0 %1823
      %1825 = vrot.lane.b32.xlu0 %v958, 56
      %v1826 = vpop.permute.xlu0 %1825
      %1827 = vrot.lane.b32.xlu0 %v959, 56
      %v1828 = vpop.permute.xlu0 %1827
      %1829 = vrot.lane.b32.xlu0 %v960, 56
      %v1830 = vpop.permute.xlu0 %1829
      %1831 = vrot.lane.b32.xlu0 %v961, 56
      %v1832 = vpop.permute.xlu0 %1831
      %1833 = vrot.lane.b32.xlu0 %v962, 56
      %v1834 = vpop.permute.xlu0 %1833
      %1835 = vrot.lane.b32.xlu0 %v963, 56
      %v1836 = vpop.permute.xlu0 %1835
      %1837 = vrot.lane.b32.xlu0 %v964, 56
      %v1838 = vpop.permute.xlu0 %1837
      %1839 = vrot.lane.b32.xlu0 %v965, 56
      %v1840 = vpop.permute.xlu0 %1839
      %1841 = vrot.lane.b32.xlu0 %v966, 56
      %v1842 = vpop.permute.xlu0 %1841
      %1843 = vrot.lane.b32.xlu0 %v967, 56
      %v1844 = vpop.permute.xlu0 %1843
      %1845 = vrot.lane.b32.xlu0 %v968, 56
      %v1846 = vpop.permute.xlu0 %1845
      %1847 = vrot.lane.b32.xlu0 %v969, 56
      %v1848 = vpop.permute.xlu0 %1847
      %1849 = vrot.lane.b32.xlu0 %v970, 56
      %v1850 = vpop.permute.xlu0 %1849
      %1851 = vrot.lane.b32.xlu0 %v971, 56
      %v1852 = vpop.permute.xlu0 %1851
      %1853 = vrot.lane.b32.xlu0 %v972, 56
      %v1854 = vpop.permute.xlu0 %1853
      %1855 = vrot.lane.b32.xlu0 %v973, 56
      %v1856 = vpop.permute.xlu0 %1855
      %1857 = vrot.lane.b32.xlu0 %v974, 56
      %v1858 = vpop.permute.xlu0 %1857
      %1859 = vrot.lane.b32.xlu0 %v975, 56
      %v1860 = vpop.permute.xlu0 %1859
      %1861 = vrot.lane.b32.xlu0 %v976, 56
      %v1862 = vpop.permute.xlu0 %1861
      %1863 = vrot.lane.b32.xlu0 %v977, 56
      %v1864 = vpop.permute.xlu0 %1863
      %1865 = vrot.lane.b32.xlu0 %v978, 56
      %v1866 = vpop.permute.xlu0 %1865
      %1867 = vrot.lane.b32.xlu0 %v979, 56
      %v1868 = vpop.permute.xlu0 %1867
      %1869 = vrot.lane.b32.xlu0 %v980, 56
      %v1870 = vpop.permute.xlu0 %1869
      %1871 = vrot.lane.b32.xlu0 %v981, 56
      %v1872 = vpop.permute.xlu0 %1871
      %1873 = vrot.lane.b32.xlu0 %v982, 56
      %v1874 = vpop.permute.xlu0 %1873
      %1875 = vrot.lane.b32.xlu0 %v983, 56
      %v1876 = vpop.permute.xlu0 %1875
      %1877 = vrot.lane.b32.xlu0 %v984, 56
      %v1878 = vpop.permute.xlu0 %1877
      %1879 = vrot.lane.b32.xlu0 %v985, 56
      %v1880 = vpop.permute.xlu0 %1879
      %1881 = vrot.lane.b32.xlu0 %v986, 56
      %v1882 = vpop.permute.xlu0 %1881
      %1947 = vrot.lane.b32.xlu0 %v987, 64
      %v1948 = vpop.permute.xlu0 %1947
      %1949 = vrot.lane.b32.xlu0 %v988, 64
      %v1950 = vpop.permute.xlu0 %1949
      %1951 = vrot.lane.b32.xlu0 %v989, 64
      %v1952 = vpop.permute.xlu0 %1951
      %1953 = vrot.lane.b32.xlu0 %v990, 64
      %v1954 = vpop.permute.xlu0 %1953
      %1955 = vrot.lane.b32.xlu0 %v991, 64
      %v1956 = vpop.permute.xlu0 %1955
      %1957 = vrot.lane.b32.xlu0 %v992, 64
      %v1958 = vpop.permute.xlu0 %1957
      %1959 = vrot.lane.b32.xlu0 %v993, 64
      %v1960 = vpop.permute.xlu0 %1959
      %1961 = vrot.lane.b32.xlu0 %v994, 64
      %v1962 = vpop.permute.xlu0 %1961
      %1963 = vrot.lane.b32.xlu0 %v995, 64
      %v1964 = vpop.permute.xlu0 %1963
      %1965 = vrot.lane.b32.xlu0 %v996, 64
      %v1966 = vpop.permute.xlu0 %1965
      %1967 = vrot.lane.b32.xlu0 %v997, 64
      %v1968 = vpop.permute.xlu0 %1967
      %1969 = vrot.lane.b32.xlu0 %v998, 64
      %v1970 = vpop.permute.xlu0 %1969
      %1971 = vrot.lane.b32.xlu0 %v999, 64
      %v1972 = vpop.permute.xlu0 %1971
      %1973 = vrot.lane.b32.xlu0 %v1000, 64
      %v1974 = vpop.permute.xlu0 %1973
      %1975 = vrot.lane.b32.xlu0 %v1001, 64
      %v1976 = vpop.permute.xlu0 %1975
      %1977 = vrot.lane.b32.xlu0 %v1002, 64
      %v1978 = vpop.permute.xlu0 %1977
      %1979 = vrot.lane.b32.xlu0 %v1003, 64
      %v1980 = vpop.permute.xlu0 %1979
      %1981 = vrot.lane.b32.xlu0 %v1004, 64
      %v1982 = vpop.permute.xlu0 %1981
      %1983 = vrot.lane.b32.xlu0 %v1005, 64
      %v1984 = vpop.permute.xlu0 %1983
      %1985 = vrot.lane.b32.xlu0 %v1006, 64
      %v1986 = vpop.permute.xlu0 %1985
      %1987 = vrot.lane.b32.xlu0 %v1007, 64
      %v1988 = vpop.permute.xlu0 %1987
      %1989 = vrot.lane.b32.xlu0 %v1008, 64
      %v1990 = vpop.permute.xlu0 %1989
      %1991 = vrot.lane.b32.xlu0 %v1009, 64
      %v1992 = vpop.permute.xlu0 %1991
      %1993 = vrot.lane.b32.xlu0 %v1010, 64
      %v1994 = vpop.permute.xlu0 %1993
      %1995 = vrot.lane.b32.xlu0 %v1011, 64
      %v1996 = vpop.permute.xlu0 %1995
      %1997 = vrot.lane.b32.xlu0 %v1012, 64
      %v1998 = vpop.permute.xlu0 %1997
      %1999 = vrot.lane.b32.xlu0 %v1013, 64
      %v2000 = vpop.permute.xlu0 %1999
      %2001 = vrot.lane.b32.xlu0 %v1014, 64
      %v2002 = vpop.permute.xlu0 %2001
      %2003 = vrot.lane.b32.xlu0 %v1015, 64
      %v2004 = vpop.permute.xlu0 %2003
      %2005 = vrot.lane.b32.xlu0 %v1016, 64
      %v2006 = vpop.permute.xlu0 %2005
      %2007 = vrot.lane.b32.xlu0 %v1017, 64
      %v2008 = vpop.permute.xlu0 %2007
      %2009 = vrot.lane.b32.xlu0 %v1018, 64
      %v2010 = vpop.permute.xlu0 %2009
      %v2043 = vsel %vm304, %v730, %v1052
      %v2044 = vsel %vm304, %v731, %v1054
      %v2045 = vsel %vm304, %v732, %v1056
      %v2046 = vsel %vm304, %v733, %v1058
      %v2047 = vsel %vm304, %v734, %v1060
      %v2048 = vsel %vm304, %v735, %v1062
      %v2049 = vsel %vm304, %v736, %v1064
      %v2050 = vsel %vm304, %v737, %v1066
      %v2051 = vsel %vm304, %v738, %v1068
      %v2052 = vsel %vm304, %v739, %v1070
      %v2053 = vsel %vm304, %v740, %v1072
      %v2054 = vsel %vm304, %v741, %v1074
      %v2055 = vsel %vm304, %v742, %v1076
      %v2056 = vsel %vm304, %v743, %v1078
      %v2057 = vsel %vm304, %v744, %v1080
      %v2058 = vsel %vm304, %v745, %v1082
      %v2059 = vsel %vm304, %v746, %v1084
      %v2060 = vsel %vm304, %v747, %v1086
      %v2061 = vsel %vm304, %v748, %v1088
      %v2062 = vsel %vm304, %v749, %v1090
      %v2063 = vsel %vm304, %v750, %v1092
      %v2064 = vsel %vm304, %v751, %v1094
      %v2065 = vsel %vm304, %v752, %v1096
      %v2066 = vsel %vm304, %v753, %v1098
      %v2067 = vsel %vm304, %v754, %v1100
      %v2068 = vsel %vm304, %v755, %v1102
      %v2069 = vsel %vm304, %v756, %v1104
      %v2070 = vsel %vm304, %v757, %v1106
      %v2071 = vsel %vm304, %v758, %v1108
      %v2072 = vsel %vm304, %v759, %v1110
      %v2073 = vsel %vm304, %v760, %v1112
      %v2074 = vsel %vm304, %v761, %v1114
      %vm2075 = vcmask 130048
      %v2076 = vsel %vm2075, %v2043, %v1180
      %v2077 = vsel %vm2075, %v2044, %v1182
      %v2078 = vsel %vm2075, %v2045, %v1184
      %v2079 = vsel %vm2075, %v2046, %v1186
      %v2080 = vsel %vm2075, %v2047, %v1188
      %v2081 = vsel %vm2075, %v2048, %v1190
      %v2082 = vsel %vm2075, %v2049, %v1192
      %v2083 = vsel %vm2075, %v2050, %v1194
      %v2084 = vsel %vm2075, %v2051, %v1196
      %v2085 = vsel %vm2075, %v2052, %v1198
      %v2086 = vsel %vm2075, %v2053, %v1200
      %v2087 = vsel %vm2075, %v2054, %v1202
      %v2088 = vsel %vm2075, %v2055, %v1204
      %v2089 = vsel %vm2075, %v2056, %v1206
      %v2090 = vsel %vm2075, %v2057, %v1208
      %v2091 = vsel %vm2075, %v2058, %v1210
      %v2092 = vsel %vm2075, %v2059, %v1212
      %v2093 = vsel %vm2075, %v2060, %v1214
      %v2094 = vsel %vm2075, %v2061, %v1216
      %v2095 = vsel %vm2075, %v2062, %v1218
      %v2096 = vsel %vm2075, %v2063, %v1220
      %v2097 = vsel %vm2075, %v2064, %v1222
      %v2098 = vsel %vm2075, %v2065, %v1224
      %v2099 = vsel %vm2075, %v2066, %v1226
      %v2100 = vsel %vm2075, %v2067, %v1228
      %v2101 = vsel %vm2075, %v2068, %v1230
      %v2102 = vsel %vm2075, %v2069, %v1232
      %v2103 = vsel %vm2075, %v2070, %v1234
      %v2104 = vsel %vm2075, %v2071, %v1236
      %v2105 = vsel %vm2075, %v2072, %v1238
      %v2106 = vsel %vm2075, %v2073, %v1240
      %v2107 = vsel %vm2075, %v2074, %v1242
      %v2108 = vsel %vm225, %v2076, %v1308
      %v2109 = vsel %vm225, %v2077, %v1310
      %v2110 = vsel %vm225, %v2078, %v1312
      %v2111 = vsel %vm225, %v2079, %v1314
      %v2112 = vsel %vm225, %v2080, %v1316
      %v2113 = vsel %vm225, %v2081, %v1318
      %v2114 = vsel %vm225, %v2082, %v1320
      %v2115 = vsel %vm225, %v2083, %v1322
      %v2116 = vsel %vm225, %v2084, %v1324
      %v2117 = vsel %vm225, %v2085, %v1326
      %v2118 = vsel %vm225, %v2086, %v1328
      %v2119 = vsel %vm225, %v2087, %v1330
      %v2120 = vsel %vm225, %v2088, %v1332
      %v2121 = vsel %vm225, %v2089, %v1334
      %v2122 = vsel %vm225, %v2090, %v1336
      %v2123 = vsel %vm225, %v2091, %v1338
      %v2124 = vsel %vm225, %v2092, %v1340
      %v2125 = vsel %vm225, %v2093, %v1342
      %v2126 = vsel %vm225, %v2094, %v1344
      %v2127 = vsel %vm225, %v2095, %v1346
      %v2128 = vsel %vm225, %v2096, %v1348
      %v2129 = vsel %vm225, %v2097, %v1350
      %v2130 = vsel %vm225, %v2098, %v1352
      %v2131 = vsel %vm225, %v2099, %v1354
      %v2132 = vsel %vm225, %v2100, %v1356
      %v2133 = vsel %vm225, %v2101, %v1358
      %v2134 = vsel %vm225, %v2102, %v1360
      %v2135 = vsel %vm225, %v2103, %v1362
      %v2136 = vsel %vm225, %v2104, %v1364
      %v2137 = vsel %vm225, %v2105, %v1366
      %v2138 = vsel %vm225, %v2106, %v1368
      %v2139 = vsel %vm225, %v2107, %v1370
      %vm2140 = vcmask 261120
      %v2141 = vsel %vm2140, %v2108, %v1436
      %v2142 = vsel %vm2140, %v2109, %v1438
      %v2143 = vsel %vm2140, %v2110, %v1440
      %v2144 = vsel %vm2140, %v2111, %v1442
      %v2145 = vsel %vm2140, %v2112, %v1444
      %v2146 = vsel %vm2140, %v2113, %v1446
      %v2147 = vsel %vm2140, %v2114, %v1448
      %v2148 = vsel %vm2140, %v2115, %v1450
      %v2149 = vsel %vm2140, %v2116, %v1452
      %v2150 = vsel %vm2140, %v2117, %v1454
      %v2151 = vsel %vm2140, %v2118, %v1456
      %v2152 = vsel %vm2140, %v2119, %v1458
      %v2153 = vsel %vm2140, %v2120, %v1460
      %v2154 = vsel %vm2140, %v2121, %v1462
      %v2155 = vsel %vm2140, %v2122, %v1464
      %v2156 = vsel %vm2140, %v2123, %v1466
      %v2157 = vsel %vm2140, %v2124, %v1468
      %v2158 = vsel %vm2140, %v2125, %v1470
      %v2159 = vsel %vm2140, %v2126, %v1472
      %v2160 = vsel %vm2140, %v2127, %v1474
      %v2161 = vsel %vm2140, %v2128, %v1476
      %v2162 = vsel %vm2140, %v2129, %v1478
      %v2163 = vsel %vm2140, %v2130, %v1480
      %v2164 = vsel %vm2140, %v2131, %v1482
      %v2165 = vsel %vm2140, %v2132, %v1484
      %v2166 = vsel %vm2140, %v2133, %v1486
      %v2167 = vsel %vm2140, %v2134, %v1488
      %v2168 = vsel %vm2140, %v2135, %v1490
      %v2169 = vsel %vm2140, %v2136, %v1492
      %v2170 = vsel %vm2140, %v2137, %v1494
      %v2171 = vsel %vm2140, %v2138, %v1496
      %v2172 = vsel %vm2140, %v2139, %v1498
      %vm2173 = vcmask 326656
      %v2174 = vsel %vm2173, %v2141, %v1564
      %v2175 = vsel %vm2173, %v2142, %v1566
      %v2176 = vsel %vm2173, %v2143, %v1568
      %v2177 = vsel %vm2173, %v2144, %v1570
      %v2178 = vsel %vm2173, %v2145, %v1572
      %v2179 = vsel %vm2173, %v2146, %v1574
      %v2180 = vsel %vm2173, %v2147, %v1576
      %v2181 = vsel %vm2173, %v2148, %v1578
      %v2182 = vsel %vm2173, %v2149, %v1580
      %v2183 = vsel %vm2173, %v2150, %v1582
      %v2184 = vsel %vm2173, %v2151, %v1584
      %v2185 = vsel %vm2173, %v2152, %v1586
      %v2186 = vsel %vm2173, %v2153, %v1588
      %v2187 = vsel %vm2173, %v2154, %v1590
      %v2188 = vsel %vm2173, %v2155, %v1592
      %v2189 = vsel %vm2173, %v2156, %v1594
      %v2190 = vsel %vm2173, %v2157, %v1596
      %v2191 = vsel %vm2173, %v2158, %v1598
      %v2192 = vsel %vm2173, %v2159, %v1600
      %v2193 = vsel %vm2173, %v2160, %v1602
      %v2194 = vsel %vm2173, %v2161, %v1604
      %v2195 = vsel %vm2173, %v2162, %v1606
      %v2196 = vsel %vm2173, %v2163, %v1608
      %v2197 = vsel %vm2173, %v2164, %v1610
      %v2198 = vsel %vm2173, %v2165, %v1612
      %v2199 = vsel %vm2173, %v2166, %v1614
      %v2200 = vsel %vm2173, %v2167, %v1616
      %v2201 = vsel %vm2173, %v2168, %v1618
      %v2202 = vsel %vm2173, %v2169, %v1620
      %v2203 = vsel %vm2173, %v2170, %v1622
      %v2204 = vsel %vm2173, %v2171, %v1624
      %v2205 = vsel %vm2173, %v2172, %v1626
      %vm2206 = vcmask 392192
      %v2207 = vsel %vm2206, %v2174, %v1692
      %v2208 = vsel %vm2206, %v2175, %v1694
      %v2209 = vsel %vm2206, %v2176, %v1696
      %v2210 = vsel %vm2206, %v2177, %v1698
      %v2211 = vsel %vm2206, %v2178, %v1700
      %v2212 = vsel %vm2206, %v2179, %v1702
      %v2213 = vsel %vm2206, %v2180, %v1704
      %v2214 = vsel %vm2206, %v2181, %v1706
      %v2215 = vsel %vm2206, %v2182, %v1708
      %v2216 = vsel %vm2206, %v2183, %v1710
      %v2217 = vsel %vm2206, %v2184, %v1712
      %v2218 = vsel %vm2206, %v2185, %v1714
      %v2219 = vsel %vm2206, %v2186, %v1716
      %v2220 = vsel %vm2206, %v2187, %v1718
      %v2221 = vsel %vm2206, %v2188, %v1720
      %v2222 = vsel %vm2206, %v2189, %v1722
      %v2223 = vsel %vm2206, %v2190, %v1724
      %v2224 = vsel %vm2206, %v2191, %v1726
      %v2225 = vsel %vm2206, %v2192, %v1728
      %v2226 = vsel %vm2206, %v2193, %v1730
      %v2227 = vsel %vm2206, %v2194, %v1732
      %v2228 = vsel %vm2206, %v2195, %v1734
      %v2229 = vsel %vm2206, %v2196, %v1736
      %v2230 = vsel %vm2206, %v2197, %v1738
      %v2231 = vsel %vm2206, %v2198, %v1740
      %v2232 = vsel %vm2206, %v2199, %v1742
      %v2233 = vsel %vm2206, %v2200, %v1744
      %v2234 = vsel %vm2206, %v2201, %v1746
      %v2235 = vsel %vm2206, %v2202, %v1748
      %v2236 = vsel %vm2206, %v2203, %v1750
      %v2237 = vsel %vm2206, %v2204, %v1752
      %v2238 = vsel %vm2206, %v2205, %v1754
      %vm2239 = vcmask 457728
      %v2240 = vsel %vm2239, %v2207, %v1820
      %v2241 = vsel %vm2239, %v2208, %v1822
      %v2242 = vsel %vm2239, %v2209, %v1824
      %v2243 = vsel %vm2239, %v2210, %v1826
      %v2244 = vsel %vm2239, %v2211, %v1828
      %v2245 = vsel %vm2239, %v2212, %v1830
      %v2246 = vsel %vm2239, %v2213, %v1832
      %v2247 = vsel %vm2239, %v2214, %v1834
      %v2248 = vsel %vm2239, %v2215, %v1836
      %v2249 = vsel %vm2239, %v2216, %v1838
      %v2250 = vsel %vm2239, %v2217, %v1840
      %v2251 = vsel %vm2239, %v2218, %v1842
      %v2252 = vsel %vm2239, %v2219, %v1844
      %v2253 = vsel %vm2239, %v2220, %v1846
      %v2254 = vsel %vm2239, %v2221, %v1848
      %v2255 = vsel %vm2239, %v2222, %v1850
      %v2256 = vsel %vm2239, %v2223, %v1852
      %v2257 = vsel %vm2239, %v2224, %v1854
      %v2258 = vsel %vm2239, %v2225, %v1856
      %v2259 = vsel %vm2239, %v2226, %v1858
      %v2260 = vsel %vm2239, %v2227, %v1860
      %v2261 = vsel %vm2239, %v2228, %v1862
      %v2262 = vsel %vm2239, %v2229, %v1864
      %v2263 = vsel %vm2239, %v2230, %v1866
      %v2264 = vsel %vm2239, %v2231, %v1868
      %v2265 = vsel %vm2239, %v2232, %v1870
      %v2266 = vsel %vm2239, %v2233, %v1872
      %v2267 = vsel %vm2239, %v2234, %v1874
      %v2268 = vsel %vm2239, %v2235, %v1876
      %v2269 = vsel %vm2239, %v2236, %v1878
      %v2270 = vsel %vm2239, %v2237, %v1880
      %v2271 = vsel %vm2239, %v2238, %v1882
      %vm2272 = vcmask 523264
      %v2273 = vsel %vm2272, %v2240, %v1948
      %v2274 = vsel %vm2272, %v2241, %v1950
      %v2275 = vsel %vm2272, %v2242, %v1952
      %v2276 = vsel %vm2272, %v2243, %v1954
      %v2277 = vsel %vm2272, %v2244, %v1956
      %v2278 = vsel %vm2272, %v2245, %v1958
      %v2279 = vsel %vm2272, %v2246, %v1960
      %v2280 = vsel %vm2272, %v2247, %v1962
      %v2281 = vsel %vm2272, %v2248, %v1964
      %v2282 = vsel %vm2272, %v2249, %v1966
      %v2283 = vsel %vm2272, %v2250, %v1968
      %v2284 = vsel %vm2272, %v2251, %v1970
      %v2285 = vsel %vm2272, %v2252, %v1972
      %v2286 = vsel %vm2272, %v2253, %v1974
      %v2287 = vsel %vm2272, %v2254, %v1976
      %v2288 = vsel %vm2272, %v2255, %v1978
      %v2289 = vsel %vm2272, %v2256, %v1980
      %v2290 = vsel %vm2272, %v2257, %v1982
      %v2291 = vsel %vm2272, %v2258, %v1984
      %v2292 = vsel %vm2272, %v2259, %v1986
      %v2293 = vsel %vm2272, %v2260, %v1988
      %v2294 = vsel %vm2272, %v2261, %v1990
      %v2295 = vsel %vm2272, %v2262, %v1992
      %v2296 = vsel %vm2272, %v2263, %v1994
      %v2297 = vsel %vm2272, %v2264, %v1996
      %v2298 = vsel %vm2272, %v2265, %v1998
      %v2299 = vsel %vm2272, %v2266, %v2000
      %v2300 = vsel %vm2272, %v2267, %v2002
      %v2301 = vsel %vm2272, %v2268, %v2004
      %v2302 = vsel %vm2272, %v2269, %v2006
      %v2303 = vsel %vm2272, %v2270, %v2008
      %v2304 = vsel %vm2272, %v2271, %v2010
      %v2305 = vld [vmem:[%s1] sm:$0xff]
      %v2306 = vld [vmem:[%s1 + $0x8] sm:$0xff]
      %v2307 = vld [vmem:[%s1 + $0x10] sm:$0xff]
      %v2308 = vld [vmem:[%s1 + $0x18] sm:$0xff]
      %v2309 = vld [vmem:[%s1 + $0x20] sm:$0xff]
      %v2310 = vld [vmem:[%s1 + $0x28] sm:$0xff]
      %v2311 = vld [vmem:[%s1 + $0x30] sm:$0xff]
      %v2312 = vld [vmem:[%s1 + $0x38] sm:$0xff]
      %v2313 = vld [vmem:[%s1 + $0x40] sm:$0xff]
      %v2314 = vld [vmem:[%s2] sm:$0x1]
      %v2315 = vlaneseq
      %v2316 = vshrl.u32 %v2315, 7
      %v2317 = vsub.s32 0, %v2316
      %v2318 = vrot.slane %v2314, %v2317
      %vm2319 = vcmask 588800
      %v2321 = vsel %vm2319, %v2273, 0
      %v2324 = vsel %vm2319, %v2274, 0
      %v2327 = vsel %vm2319, %v2275, 0
      %v2330 = vsel %vm2319, %v2276, 0
      %v2333 = vsel %vm2319, %v2277, 0
      %v2336 = vsel %vm2319, %v2278, 0
      %v2339 = vsel %vm2319, %v2279, 0
      %v2342 = vsel %vm2319, %v2280, 0
      %v2345 = vsel %vm2319, %v2281, 0
      %v2348 = vsel %vm2319, %v2282, 0
      %v2351 = vsel %vm2319, %v2283, 0
      %v2354 = vsel %vm2319, %v2284, 0
      %v2357 = vsel %vm2319, %v2285, 0
      %v2360 = vsel %vm2319, %v2286, 0
      %v2363 = vsel %vm2319, %v2287, 0
      %v2366 = vsel %vm2319, %v2288, 0
      %v2369 = vsel %vm2319, %v2289, 0
      %v2372 = vsel %vm2319, %v2290, 0
      %v2375 = vsel %vm2319, %v2291, 0
      %v2378 = vsel %vm2319, %v2292, 0
      %v2381 = vsel %vm2319, %v2293, 0
      %v2384 = vsel %vm2319, %v2294, 0
      %v2387 = vsel %vm2319, %v2295, 0
      %v2390 = vsel %vm2319, %v2296, 0
      %v2393 = vsel %vm2319, %v2297, 0
      %v2396 = vsel %vm2319, %v2298, 0
      %v2399 = vsel %vm2319, %v2299, 0
      %v2402 = vsel %vm2319, %v2300, 0
      %v2405 = vsel %vm2319, %v2301, 0
      %v2408 = vsel %vm2319, %v2302, 0
      %v2411 = vsel %vm2319, %v2303, 0
      %v2414 = vsel %vm2319, %v2304, 0
      %2416 = vmatprep.subr.mxu0 0.0
      %2417 = vmatpush1.msra.mxu0 0.0
      %2418 = vmatprep.subr.mxu0 0.0
      %2419 = vmatpush1.msra.mxu0 0.0
      %2420 = vmatprep.subr.mxu0 0.0
      %2421 = vmatpush1.msra.mxu0 0.0
      %2422 = vmatprep.subr.mxu0 0.0
      %2423 = vmatpush1.msra.mxu0 0.0
      %2424 = vmatprep.subr.mxu0 0.0
      %2425 = vmatpush1.msra.mxu0 0.0
      %2426 = vmatprep.subr.mxu0 0.0
      %2427 = vmatpush1.msra.mxu0 0.0
      %2428 = vmatprep.subr.mxu0 0.0
      %2429 = vmatpush1.msra.mxu0 0.0
      %2430 = vmatprep.subr.mxu0 0.0
      %2431 = vmatpush1.msra.mxu0 %v2313
      %2432 = vmatprep.subr.mxu0 0.0
      %2433 = vmatpush1.msra.mxu0 %v2312
      %2434 = vmatprep.subr.mxu0 0.0
      %2435 = vmatpush1.msra.mxu0 %v2311
      %2436 = vmatprep.subr.mxu0 0.0
      %2437 = vmatpush1.msra.mxu0 %v2310
      %2438 = vmatprep.subr.mxu0 0.0
      %2439 = vmatpush1.msra.mxu0 %v2309
      %2440 = vmatprep.subr.mxu0 0.0
      %2441 = vmatpush1.msra.mxu0 %v2308
      %2442 = vmatprep.subr.mxu0 0.0
      %2443 = vmatpush1.msra.mxu0 %v2307
      %2444 = vmatprep.subr.mxu0 0.0
      %2445 = vmatpush1.msra.mxu0 %v2306
      %2446 = vmatprep.subr.mxu0 0.0
      %2447 = vmatpush1.msra.mxu0 %v2305
      %2448 = vmatprep.subr.mxu0 0.0
      %2449 = vmatpush2.msra.mxu0 0.0
      %2450 = vmatprep.subr.mxu0 0.0
      %2451 = vmatpush2.msra.mxu0 0.0
      %2452 = vmatprep.subr.mxu0 0.0
      %2453 = vmatpush2.msra.mxu0 0.0
      %2454 = vmatprep.subr.mxu0 0.0
      %2455 = vmatpush2.msra.mxu0 0.0
      %2456 = vmatprep.subr.mxu0 0.0
      %2457 = vmatpush2.msra.mxu0 0.0
      %2458 = vmatprep.subr.mxu0 0.0
      %2459 = vmatpush2.msra.mxu0 0.0
      %2460 = vmatprep.subr.mxu0 0.0
      %2461 = vmatpush2.msra.mxu0 0.0
      %2462 = vmatprep.subr.mxu0 0.0
      %2463 = vmatpush2.msra.mxu0 0.0
      %2464 = vmatprep.subr.mxu0 0.0
      %2465 = vmatpush2.msra.mxu0 0.0
      %2466 = vmatprep.subr.mxu0 0.0
      %2467 = vmatpush2.msra.mxu0 0.0
      %2468 = vmatprep.subr.mxu0 0.0
      %2469 = vmatpush2.msra.mxu0 0.0
      %2470 = vmatprep.subr.mxu0 0.0
      %2471 = vmatpush2.msra.mxu0 0.0
      %2472 = vmatprep.subr.mxu0 0.0
      %2473 = vmatpush2.msra.mxu0 0.0
      %2474 = vmatprep.subr.mxu0 0.0
      %2475 = vmatpush2.msra.mxu0 0.0
      %2476 = vmatprep.subr.mxu0 0.0
      %2477 = vmatpush2.msra.mxu0 0.0
      %2478 = vmatprep.subr.mxu0 0.0
      %2479 = vmatpush2.msra.mxu0 0.0
      %2480 = vmatprep.mubr.f32.mxu0 0.0
      %2481 = vmatmul.mubr.f32.gmra.mxu0 %v2321
      %v2482 = vpop.f32.mrf.mxu0
      %v2483 = vadd.f32 %v2318, %v2482
      %v2484 = vpop.f32.mrf.mxu0
      %2485 = vmatprep.mubr.f32.mxu0 0.0
      %2486 = vmatmul.mubr.f32.gmra.mxu0 %v2324
      %v2487 = vpop.f32.mrf.mxu0
      %v2488 = vadd.f32 %v2318, %v2487
      %v2489 = vpop.f32.mrf.mxu0
      %2490 = vmatprep.mubr.f32.mxu0 0.0
      %2491 = vmatmul.mubr.f32.gmra.mxu0 %v2327
      %v2492 = vpop.f32.mrf.mxu0
      %v2493 = vadd.f32 %v2318, %v2492
      %v2494 = vpop.f32.mrf.mxu0
      %2495 = vmatprep.mubr.f32.mxu0 0.0
      %2496 = vmatmul.mubr.f32.gmra.mxu0 %v2330
      %v2497 = vpop.f32.mrf.mxu0
      %v2498 = vadd.f32 %v2318, %v2497
      %v2499 = vpop.f32.mrf.mxu0
      %2500 = vmatprep.mubr.f32.mxu0 0.0
      %2501 = vmatmul.mubr.f32.gmra.mxu0 %v2333
      %v2502 = vpop.f32.mrf.mxu0
      %v2503 = vadd.f32 %v2318, %v2502
      %v2504 = vpop.f32.mrf.mxu0
      %2505 = vmatprep.mubr.f32.mxu0 0.0
      %2506 = vmatmul.mubr.f32.gmra.mxu0 %v2336
      %v2507 = vpop.f32.mrf.mxu0
      %v2508 = vadd.f32 %v2318, %v2507
      %v2509 = vpop.f32.mrf.mxu0
      %2510 = vmatprep.mubr.f32.mxu0 0.0
      %2511 = vmatmul.mubr.f32.gmra.mxu0 %v2339
      %v2512 = vpop.f32.mrf.mxu0
      %v2513 = vadd.f32 %v2318, %v2512
      %v2514 = vpop.f32.mrf.mxu0
      %2515 = vmatprep.mubr.f32.mxu0 0.0
      %2516 = vmatmul.mubr.f32.gmra.mxu0 %v2342
      %v2517 = vpop.f32.mrf.mxu0
      %v2518 = vadd.f32 %v2318, %v2517
      %v2519 = vpop.f32.mrf.mxu0
      %2520 = vmatprep.mubr.f32.mxu0 0.0
      %2521 = vmatmul.mubr.f32.gmra.mxu0 %v2345
      %v2522 = vpop.f32.mrf.mxu0
      %v2523 = vadd.f32 %v2318, %v2522
      %v2524 = vpop.f32.mrf.mxu0
      %2525 = vmatprep.mubr.f32.mxu0 0.0
      %2526 = vmatmul.mubr.f32.gmra.mxu0 %v2348
      %v2527 = vpop.f32.mrf.mxu0
      %v2528 = vadd.f32 %v2318, %v2527
      %v2529 = vpop.f32.mrf.mxu0
      %2530 = vmatprep.mubr.f32.mxu0 0.0
      %2531 = vmatmul.mubr.f32.gmra.mxu0 %v2351
      %v2532 = vpop.f32.mrf.mxu0
      %v2533 = vadd.f32 %v2318, %v2532
      %v2534 = vpop.f32.mrf.mxu0
      %2535 = vmatprep.mubr.f32.mxu0 0.0
      %2536 = vmatmul.mubr.f32.gmra.mxu0 %v2354
      %v2537 = vpop.f32.mrf.mxu0
      %v2538 = vadd.f32 %v2318, %v2537
      %v2539 = vpop.f32.mrf.mxu0
      %2540 = vmatprep.mubr.f32.mxu0 0.0
      %2541 = vmatmul.mubr.f32.gmra.mxu0 %v2357
      %v2542 = vpop.f32.mrf.mxu0
      %v2543 = vadd.f32 %v2318, %v2542
      %v2544 = vpop.f32.mrf.mxu0
      %2545 = vmatprep.mubr.f32.mxu0 0.0
      %2546 = vmatmul.mubr.f32.gmra.mxu0 %v2360
      %v2547 = vpop.f32.mrf.mxu0
      %v2548 = vadd.f32 %v2318, %v2547
      %v2549 = vpop.f32.mrf.mxu0
      %2550 = vmatprep.mubr.f32.mxu0 0.0
      %2551 = vmatmul.mubr.f32.gmra.mxu0 %v2363
      %v2552 = vpop.f32.mrf.mxu0
      %v2553 = vadd.f32 %v2318, %v2552
      %v2554 = vpop.f32.mrf.mxu0
      %2555 = vmatprep.mubr.f32.mxu0 0.0
      %2556 = vmatmul.mubr.f32.gmra.mxu0 %v2366
      %v2557 = vpop.f32.mrf.mxu0
      %v2558 = vadd.f32 %v2318, %v2557
      %v2559 = vpop.f32.mrf.mxu0
      %2560 = vmatprep.mubr.f32.mxu0 0.0
      %2561 = vmatmul.mubr.f32.gmra.mxu0 %v2369
      %v2562 = vpop.f32.mrf.mxu0
      %v2563 = vadd.f32 %v2318, %v2562
      %v2564 = vpop.f32.mrf.mxu0
      %2565 = vmatprep.mubr.f32.mxu0 0.0
      %2566 = vmatmul.mubr.f32.gmra.mxu0 %v2372
      %v2567 = vpop.f32.mrf.mxu0
      %v2568 = vadd.f32 %v2318, %v2567
      %v2569 = vpop.f32.mrf.mxu0
      %2570 = vmatprep.mubr.f32.mxu0 0.0
      %2571 = vmatmul.mubr.f32.gmra.mxu0 %v2375
      %v2572 = vpop.f32.mrf.mxu0
      %v2573 = vadd.f32 %v2318, %v2572
      %v2574 = vpop.f32.mrf.mxu0
      %2575 = vmatprep.mubr.f32.mxu0 0.0
      %2576 = vmatmul.mubr.f32.gmra.mxu0 %v2378
      %v2577 = vpop.f32.mrf.mxu0
      %v2578 = vadd.f32 %v2318, %v2577
      %v2579 = vpop.f32.mrf.mxu0
      %2580 = vmatprep.mubr.f32.mxu0 0.0
      %2581 = vmatmul.mubr.f32.gmra.mxu0 %v2381
      %v2582 = vpop.f32.mrf.mxu0
      %v2583 = vadd.f32 %v2318, %v2582
      %v2584 = vpop.f32.mrf.mxu0
      %2585 = vmatprep.mubr.f32.mxu0 0.0
      %2586 = vmatmul.mubr.f32.gmra.mxu0 %v2384
      %v2587 = vpop.f32.mrf.mxu0
      %v2588 = vadd.f32 %v2318, %v2587
      %v2589 = vpop.f32.mrf.mxu0
      %2590 = vmatprep.mubr.f32.mxu0 0.0
      %2591 = vmatmul.mubr.f32.gmra.mxu0 %v2387
      %v2592 = vpop.f32.mrf.mxu0
      %v2593 = vadd.f32 %v2318, %v2592
      %v2594 = vpop.f32.mrf.mxu0
      %2595 = vmatprep.mubr.f32.mxu0 0.0
      %2596 = vmatmul.mubr.f32.gmra.mxu0 %v2390
      %v2597 = vpop.f32.mrf.mxu0
      %v2598 = vadd.f32 %v2318, %v2597
      %v2599 = vpop.f32.mrf.mxu0
      %2600 = vmatprep.mubr.f32.mxu0 0.0
      %2601 = vmatmul.mubr.f32.gmra.mxu0 %v2393
      %v2602 = vpop.f32.mrf.mxu0
      %v2603 = vadd.f32 %v2318, %v2602
      %v2604 = vpop.f32.mrf.mxu0
      %2605 = vmatprep.mubr.f32.mxu0 0.0
      %2606 = vmatmul.mubr.f32.gmra.mxu0 %v2396
      %v2607 = vpop.f32.mrf.mxu0
      %v2608 = vadd.f32 %v2318, %v2607
      %v2609 = vpop.f32.mrf.mxu0
      %2610 = vmatprep.mubr.f32.mxu0 0.0
      %2611 = vmatmul.mubr.f32.gmra.mxu0 %v2399
      %v2612 = vpop.f32.mrf.mxu0
      %v2613 = vadd.f32 %v2318, %v2612
      %v2614 = vpop.f32.mrf.mxu0
      %2615 = vmatprep.mubr.f32.mxu0 0.0
      %2616 = vmatmul.mubr.f32.gmra.mxu0 %v2402
      %v2617 = vpop.f32.mrf.mxu0
      %v2618 = vadd.f32 %v2318, %v2617
      %v2619 = vpop.f32.mrf.mxu0
      %2620 = vmatprep.mubr.f32.mxu0 0.0
      %2621 = vmatmul.mubr.f32.gmra.mxu0 %v2405
      %v2622 = vpop.f32.mrf.mxu0
      %v2623 = vadd.f32 %v2318, %v2622
      %v2624 = vpop.f32.mrf.mxu0
      %2625 = vmatprep.mubr.f32.mxu0 0.0
      %2626 = vmatmul.mubr.f32.gmra.mxu0 %v2408
      %v2627 = vpop.f32.mrf.mxu0
      %v2628 = vadd.f32 %v2318, %v2627
      %v2629 = vpop.f32.mrf.mxu0
      %2630 = vmatprep.mubr.f32.mxu0 0.0
      %2631 = vmatmul.mubr.f32.gmra.mxu0 %v2411
      %v2632 = vpop.f32.mrf.mxu0
      %v2633 = vadd.f32 %v2318, %v2632
      %v2634 = vpop.f32.mrf.mxu0
      %2635 = vmatprep.mubr.f32.mxu0 0.0
      %2636 = vmatmul.mubr.f32.gmra.mxu0 %v2414
      %v2637 = vpop.f32.mrf.mxu0
      %v2638 = vadd.f32 %v2318, %v2637
      %v2639 = vpop.f32.mrf.mxu0
      %2640 = vdwg.mxu0
      %v2641 = vmax.f32 %v2483, 0.0
      %v2642 = vmax.f32 %v2488, 0.0
      %v2643 = vmax.f32 %v2493, 0.0
      %v2644 = vmax.f32 %v2498, 0.0
      %v2645 = vmax.f32 %v2503, 0.0
      %v2646 = vmax.f32 %v2508, 0.0
      %v2647 = vmax.f32 %v2513, 0.0
      %v2648 = vmax.f32 %v2518, 0.0
      %v2649 = vmax.f32 %v2523, 0.0
      %v2650 = vmax.f32 %v2528, 0.0
      %v2651 = vmax.f32 %v2533, 0.0
      %v2652 = vmax.f32 %v2538, 0.0
      %v2653 = vmax.f32 %v2543, 0.0
      %v2654 = vmax.f32 %v2548, 0.0
      %v2655 = vmax.f32 %v2553, 0.0
      %v2656 = vmax.f32 %v2558, 0.0
      %v2657 = vmax.f32 %v2563, 0.0
      %v2658 = vmax.f32 %v2568, 0.0
      %v2659 = vmax.f32 %v2573, 0.0
      %v2660 = vmax.f32 %v2578, 0.0
      %v2661 = vmax.f32 %v2583, 0.0
      %v2662 = vmax.f32 %v2588, 0.0
      %v2663 = vmax.f32 %v2593, 0.0
      %v2664 = vmax.f32 %v2598, 0.0
      %v2665 = vmax.f32 %v2603, 0.0
      %v2666 = vmax.f32 %v2608, 0.0
      %v2667 = vmax.f32 %v2613, 0.0
      %v2668 = vmax.f32 %v2618, 0.0
      %v2669 = vmax.f32 %v2623, 0.0
      %v2670 = vmax.f32 %v2628, 0.0
      %v2671 = vmax.f32 %v2633, 0.0
      %v2672 = vmax.f32 %v2638, 0.0
      %2705 = vrot.lane.b32.xlu0 %v2641, 8
      %v2706 = vpop.permute.xlu0 %2705
      %2707 = vrot.lane.b32.xlu0 %v2642, 8
      %v2708 = vpop.permute.xlu0 %2707
      %2709 = vrot.lane.b32.xlu0 %v2643, 8
      %v2710 = vpop.permute.xlu0 %2709
      %2711 = vrot.lane.b32.xlu0 %v2644, 8
      %v2712 = vpop.permute.xlu0 %2711
      %2713 = vrot.lane.b32.xlu0 %v2645, 8
      %v2714 = vpop.permute.xlu0 %2713
      %2715 = vrot.lane.b32.xlu0 %v2646, 8
      %v2716 = vpop.permute.xlu0 %2715
      %2717 = vrot.lane.b32.xlu0 %v2647, 8
      %v2718 = vpop.permute.xlu0 %2717
      %2719 = vrot.lane.b32.xlu0 %v2648, 8
      %v2720 = vpop.permute.xlu0 %2719
      %2721 = vrot.lane.b32.xlu0 %v2649, 8
      %v2722 = vpop.permute.xlu0 %2721
      %2723 = vrot.lane.b32.xlu0 %v2650, 8
      %v2724 = vpop.permute.xlu0 %2723
      %2725 = vrot.lane.b32.xlu0 %v2651, 8
      %v2726 = vpop.permute.xlu0 %2725
      %2727 = vrot.lane.b32.xlu0 %v2652, 8
      %v2728 = vpop.permute.xlu0 %2727
      %2729 = vrot.lane.b32.xlu0 %v2653, 8
      %v2730 = vpop.permute.xlu0 %2729
      %2731 = vrot.lane.b32.xlu0 %v2654, 8
      %v2732 = vpop.permute.xlu0 %2731
      %2733 = vrot.lane.b32.xlu0 %v2655, 8
      %v2734 = vpop.permute.xlu0 %2733
      %2735 = vrot.lane.b32.xlu0 %v2656, 8
      %v2736 = vpop.permute.xlu0 %2735
      %2737 = vrot.lane.b32.xlu0 %v2657, 8
      %v2738 = vpop.permute.xlu0 %2737
      %2739 = vrot.lane.b32.xlu0 %v2658, 8
      %v2740 = vpop.permute.xlu0 %2739
      %2741 = vrot.lane.b32.xlu0 %v2659, 8
      %v2742 = vpop.permute.xlu0 %2741
      %2743 = vrot.lane.b32.xlu0 %v2660, 8
      %v2744 = vpop.permute.xlu0 %2743
      %2745 = vrot.lane.b32.xlu0 %v2661, 8
      %v2746 = vpop.permute.xlu0 %2745
      %2747 = vrot.lane.b32.xlu0 %v2662, 8
      %v2748 = vpop.permute.xlu0 %2747
      %2749 = vrot.lane.b32.xlu0 %v2663, 8
      %v2750 = vpop.permute.xlu0 %2749
      %2751 = vrot.lane.b32.xlu0 %v2664, 8
      %v2752 = vpop.permute.xlu0 %2751
      %2753 = vrot.lane.b32.xlu0 %v2665, 8
      %v2754 = vpop.permute.xlu0 %2753
      %2755 = vrot.lane.b32.xlu0 %v2666, 8
      %v2756 = vpop.permute.xlu0 %2755
      %2757 = vrot.lane.b32.xlu0 %v2667, 8
      %v2758 = vpop.permute.xlu0 %2757
      %2759 = vrot.lane.b32.xlu0 %v2668, 8
      %v2760 = vpop.permute.xlu0 %2759
      %2761 = vrot.lane.b32.xlu0 %v2669, 8
      %v2762 = vpop.permute.xlu0 %2761
      %2763 = vrot.lane.b32.xlu0 %v2670, 8
      %v2764 = vpop.permute.xlu0 %2763
      %2765 = vrot.lane.b32.xlu0 %v2671, 8
      %v2766 = vpop.permute.xlu0 %2765
      %2767 = vrot.lane.b32.xlu0 %v2672, 8
      %v2768 = vpop.permute.xlu0 %2767
      %vm2801 = vcmask 130112
      %2802 = vst.msk [vmem:[%s303 + $0x1] sm:$0xff] %vm2801, %v2706
      %2803 = vst.msk [vmem:[%s303 + $0x9] sm:$0xff] %vm2801, %v2708
      %2804 = vst.msk [vmem:[%s303 + $0x19] sm:$0xff] %vm2801, %v2710
      %2805 = vst.msk [vmem:[%s303 + $0x21] sm:$0xff] %vm2801, %v2712
      %2806 = vst.msk [vmem:[%s303 + $0x31] sm:$0xff] %vm2801, %v2714
      %2807 = vst.msk [vmem:[%s303 + $0x39] sm:$0xff] %vm2801, %v2716
      %2808 = vst.msk [vmem:[%s303 + $0x49] sm:$0xff] %vm2801, %v2718
      %2809 = vst.msk [vmem:[%s303 + $0x51] sm:$0xff] %vm2801, %v2720
      %2810 = vst.msk [vmem:[%s303 + $0x61] sm:$0xff] %vm2801, %v2722
      %2811 = vst.msk [vmem:[%s303 + $0x69] sm:$0xff] %vm2801, %v2724
      %2812 = vst.msk [vmem:[%s303 + $0x79] sm:$0xff] %vm2801, %v2726
      %2813 = vst.msk [vmem:[%s303 + $0x81] sm:$0xff] %vm2801, %v2728
      %2814 = vst.msk [vmem:[%s303 + $0x91] sm:$0xff] %vm2801, %v2730
      %2815 = vst.msk [vmem:[%s303 + $0x99] sm:$0xff] %vm2801, %v2732
      %2816 = vst.msk [vmem:[%s303 + $0xa9] sm:$0xff] %vm2801, %v2734
      %2817 = vst.msk [vmem:[%s303 + $0xb1] sm:$0xff] %vm2801, %v2736
      %2818 = vst.msk [vmem:[%s303 + $0xc1] sm:$0xff] %vm2801, %v2738
      %2819 = vst.msk [vmem:[%s303 + $0xc9] sm:$0xff] %vm2801, %v2740
      %2820 = vst.msk [vmem:[%s303 + $0xd9] sm:$0xff] %vm2801, %v2742
      %2821 = vst.msk [vmem:[%s303 + $0xe1] sm:$0xff] %vm2801, %v2744
      %2822 = vst.msk [vmem:[%s303 + $0xf1] sm:$0xff] %vm2801, %v2746
      %2823 = vst.msk [vmem:[%s303 + $0xf9] sm:$0xff] %vm2801, %v2748
      %2824 = vst.msk [vmem:[%s303 + $0x109] sm:$0xff] %vm2801, %v2750
      %2825 = vst.msk [vmem:[%s303 + $0x111] sm:$0xff] %vm2801, %v2752
      %2826 = vst.msk [vmem:[%s303 + $0x121] sm:$0xff] %vm2801, %v2754
      %2827 = vst.msk [vmem:[%s303 + $0x129] sm:$0xff] %vm2801, %v2756
      %2828 = vst.msk [vmem:[%s303 + $0x139] sm:$0xff] %vm2801, %v2758
      %2829 = vst.msk [vmem:[%s303 + $0x141] sm:$0xff] %vm2801, %v2760
      %2830 = vst.msk [vmem:[%s303 + $0x151] sm:$0xff] %vm2801, %v2762
      %2831 = vst.msk [vmem:[%s303 + $0x159] sm:$0xff] %vm2801, %v2764
      %2832 = vst.msk [vmem:[%s303 + $0x169] sm:$0xff] %vm2801, %v2766
      %2833 = vst.msk [vmem:[%s303 + $0x171] sm:$0xff] %vm2801, %v2768
      %v2834 = vld [vmem:[%s3 + $0x8] sm:$0xff]
      %v2835 = vsel %vm304, %v2641, 0
      %v2837 = vsel %vm304, %v2642, 0
      %v2839 = vsel %vm304, %v2643, 0
      %v2841 = vsel %vm304, %v2644, 0
      %v2843 = vsel %vm304, %v2645, 0
      %v2845 = vsel %vm304, %v2646, 0
      %v2847 = vsel %vm304, %v2647, 0
      %v2849 = vsel %vm304, %v2648, 0
      %v2851 = vsel %vm304, %v2649, 0
      %v2853 = vsel %vm304, %v2650, 0
      %v2855 = vsel %vm304, %v2651, 0
      %v2857 = vsel %vm304, %v2652, 0
      %v2859 = vsel %vm304, %v2653, 0
      %v2861 = vsel %vm304, %v2654, 0
      %v2863 = vsel %vm304, %v2655, 0
      %v2865 = vsel %vm304, %v2656, 0
      %v2867 = vsel %vm304, %v2657, 0
      %v2869 = vsel %vm304, %v2658, 0
      %v2871 = vsel %vm304, %v2659, 0
      %v2873 = vsel %vm304, %v2660, 0
      %v2875 = vsel %vm304, %v2661, 0
      %v2877 = vsel %vm304, %v2662, 0
      %v2879 = vsel %vm304, %v2663, 0
      %v2881 = vsel %vm304, %v2664, 0
      %v2883 = vsel %vm304, %v2665, 0
      %v2885 = vsel %vm304, %v2666, 0
      %v2887 = vsel %vm304, %v2667, 0
      %v2889 = vsel %vm304, %v2668, 0
      %v2891 = vsel %vm304, %v2669, 0
      %v2893 = vsel %vm304, %v2670, 0
      %v2895 = vsel %vm304, %v2671, 0
      %v2897 = vsel %vm304, %v2672, 0
      %2899 = vmatprep.subr.mxu0 0.0
      %2900 = vmatpush1.msra.mxu0 0.0
      %2901 = vmatprep.subr.mxu0 0.0
      %2902 = vmatpush1.msra.mxu0 0.0
      %2903 = vmatprep.subr.mxu0 0.0
      %2904 = vmatpush1.msra.mxu0 0.0
      %2905 = vmatprep.subr.mxu0 0.0
      %2906 = vmatpush1.msra.mxu0 0.0
      %2907 = vmatprep.subr.mxu0 0.0
      %2908 = vmatpush1.msra.mxu0 0.0
      %2909 = vmatprep.subr.mxu0 0.0
      %2910 = vmatpush1.msra.mxu0 0.0
      %2911 = vmatprep.subr.mxu0 0.0
      %2912 = vmatpush1.msra.mxu0 0.0
      %2913 = vmatprep.subr.mxu0 0.0
      %2914 = vmatpush1.msra.mxu0 0.0
      %2915 = vmatprep.subr.mxu0 0.0
      %2916 = vmatpush1.msra.mxu0 0.0
      %2917 = vmatprep.subr.mxu0 0.0
      %2918 = vmatpush1.msra.mxu0 0.0
      %2919 = vmatprep.subr.mxu0 0.0
      %2920 = vmatpush1.msra.mxu0 0.0
      %2921 = vmatprep.subr.mxu0 0.0
      %2922 = vmatpush1.msra.mxu0 0.0
      %2923 = vmatprep.subr.mxu0 0.0
      %2924 = vmatpush1.msra.mxu0 0.0
      %2925 = vmatprep.subr.mxu0 0.0
      %2926 = vmatpush1.msra.mxu0 0.0
      %2927 = vmatprep.subr.mxu0 0.0
      %2928 = vmatpush1.msra.mxu0 0.0
      %2929 = vmatprep.subr.mxu0 0.0
      %2930 = vmatpush1.msra.mxu0 %v2834
      %2931 = vmatprep.subr.mxu0 0.0
      %2932 = vmatpush2.msra.mxu0 0.0
      %2933 = vmatprep.subr.mxu0 0.0
      %2934 = vmatpush2.msra.mxu0 0.0
      %2935 = vmatprep.subr.mxu0 0.0
      %2936 = vmatpush2.msra.mxu0 0.0
      %2937 = vmatprep.subr.mxu0 0.0
      %2938 = vmatpush2.msra.mxu0 0.0
      %2939 = vmatprep.subr.mxu0 0.0
      %2940 = vmatpush2.msra.mxu0 0.0
      %2941 = vmatprep.subr.mxu0 0.0
      %2942 = vmatpush2.msra.mxu0 0.0
      %2943 = vmatprep.subr.mxu0 0.0
      %2944 = vmatpush2.msra.mxu0 0.0
      %2945 = vmatprep.subr.mxu0 0.0
      %2946 = vmatpush2.msra.mxu0 0.0
      %2947 = vmatprep.subr.mxu0 0.0
      %2948 = vmatpush2.msra.mxu0 0.0
      %2949 = vmatprep.subr.mxu0 0.0
      %2950 = vmatpush2.msra.mxu0 0.0
      %2951 = vmatprep.subr.mxu0 0.0
      %2952 = vmatpush2.msra.mxu0 0.0
      %2953 = vmatprep.subr.mxu0 0.0
      %2954 = vmatpush2.msra.mxu0 0.0
      %2955 = vmatprep.subr.mxu0 0.0
      %2956 = vmatpush2.msra.mxu0 0.0
      %2957 = vmatprep.subr.mxu0 0.0
      %2958 = vmatpush2.msra.mxu0 0.0
      %2959 = vmatprep.subr.mxu0 0.0
      %2960 = vmatpush2.msra.mxu0 0.0
      %2961 = vmatprep.subr.mxu0 0.0
      %2962 = vmatpush2.msra.mxu0 0.0
      %2963 = vmatprep.mubr.f32.mxu0 0.0
      %2964 = vmatmul.mubr.f32.gmra.mxu0 %v2835
      %v2965 = vpop.f32.mrf.mxu0
      %v2966 = vadd.f32 0.0, %v2965
      %v2967 = vpop.f32.mrf.mxu0
      %2968 = vmatprep.mubr.f32.mxu0 0.0
      %2969 = vmatmul.mubr.f32.gmra.mxu0 %v2837
      %v2970 = vpop.f32.mrf.mxu0
      %v2971 = vadd.f32 0.0, %v2970
      %v2972 = vpop.f32.mrf.mxu0
      %2973 = vmatprep.mubr.f32.mxu0 0.0
      %2974 = vmatmul.mubr.f32.gmra.mxu0 %v2839
      %v2975 = vpop.f32.mrf.mxu0
      %v2976 = vadd.f32 0.0, %v2975
      %v2977 = vpop.f32.mrf.mxu0
      %2978 = vmatprep.mubr.f32.mxu0 0.0
      %2979 = vmatmul.mubr.f32.gmra.mxu0 %v2841
      %v2980 = vpop.f32.mrf.mxu0
      %v2981 = vadd.f32 0.0, %v2980
      %v2982 = vpop.f32.mrf.mxu0
      %2983 = vmatprep.mubr.f32.mxu0 0.0
      %2984 = vmatmul.mubr.f32.gmra.mxu0 %v2843
      %v2985 = vpop.f32.mrf.mxu0
      %v2986 = vadd.f32 0.0, %v2985
      %v2987 = vpop.f32.mrf.mxu0
      %2988 = vmatprep.mubr.f32.mxu0 0.0
      %2989 = vmatmul.mubr.f32.gmra.mxu0 %v2845
      %v2990 = vpop.f32.mrf.mxu0
      %v2991 = vadd.f32 0.0, %v2990
      %v2992 = vpop.f32.mrf.mxu0
      %2993 = vmatprep.mubr.f32.mxu0 0.0
      %2994 = vmatmul.mubr.f32.gmra.mxu0 %v2847
      %v2995 = vpop.f32.mrf.mxu0
      %v2996 = vadd.f32 0.0, %v2995
      %v2997 = vpop.f32.mrf.mxu0
      %2998 = vmatprep.mubr.f32.mxu0 0.0
      %2999 = vmatmul.mubr.f32.gmra.mxu0 %v2849
      %v3000 = vpop.f32.mrf.mxu0
      %v3001 = vadd.f32 0.0, %v3000
      %v3002 = vpop.f32.mrf.mxu0
      %3003 = vmatprep.mubr.f32.mxu0 0.0
      %3004 = vmatmul.mubr.f32.gmra.mxu0 %v2851
      %v3005 = vpop.f32.mrf.mxu0
      %v3006 = vadd.f32 0.0, %v3005
      %v3007 = vpop.f32.mrf.mxu0
      %3008 = vmatprep.mubr.f32.mxu0 0.0
      %3009 = vmatmul.mubr.f32.gmra.mxu0 %v2853
      %v3010 = vpop.f32.mrf.mxu0
      %v3011 = vadd.f32 0.0, %v3010
      %v3012 = vpop.f32.mrf.mxu0
      %3013 = vmatprep.mubr.f32.mxu0 0.0
      %3014 = vmatmul.mubr.f32.gmra.mxu0 %v2855
      %v3015 = vpop.f32.mrf.mxu0
      %v3016 = vadd.f32 0.0, %v3015
      %v3017 = vpop.f32.mrf.mxu0
      %3018 = vmatprep.mubr.f32.mxu0 0.0
      %3019 = vmatmul.mubr.f32.gmra.mxu0 %v2857
      %v3020 = vpop.f32.mrf.mxu0
      %v3021 = vadd.f32 0.0, %v3020
      %v3022 = vpop.f32.mrf.mxu0
      %3023 = vmatprep.mubr.f32.mxu0 0.0
      %3024 = vmatmul.mubr.f32.gmra.mxu0 %v2859
      %v3025 = vpop.f32.mrf.mxu0
      %v3026 = vadd.f32 0.0, %v3025
      %v3027 = vpop.f32.mrf.mxu0
      %3028 = vmatprep.mubr.f32.mxu0 0.0
      %3029 = vmatmul.mubr.f32.gmra.mxu0 %v2861
      %v3030 = vpop.f32.mrf.mxu0
      %v3031 = vadd.f32 0.0, %v3030
      %v3032 = vpop.f32.mrf.mxu0
      %3033 = vmatprep.mubr.f32.mxu0 0.0
      %3034 = vmatmul.mubr.f32.gmra.mxu0 %v2863
      %v3035 = vpop.f32.mrf.mxu0
      %v3036 = vadd.f32 0.0, %v3035
      %v3037 = vpop.f32.mrf.mxu0
      %3038 = vmatprep.mubr.f32.mxu0 0.0
      %3039 = vmatmul.mubr.f32.gmra.mxu0 %v2865
      %v3040 = vpop.f32.mrf.mxu0
      %v3041 = vadd.f32 0.0, %v3040
      %v3042 = vpop.f32.mrf.mxu0
      %3043 = vmatprep.mubr.f32.mxu0 0.0
      %3044 = vmatmul.mubr.f32.gmra.mxu0 %v2867
      %v3045 = vpop.f32.mrf.mxu0
      %v3046 = vadd.f32 0.0, %v3045
      %v3047 = vpop.f32.mrf.mxu0
      %3048 = vmatprep.mubr.f32.mxu0 0.0
      %3049 = vmatmul.mubr.f32.gmra.mxu0 %v2869
      %v3050 = vpop.f32.mrf.mxu0
      %v3051 = vadd.f32 0.0, %v3050
      %v3052 = vpop.f32.mrf.mxu0
      %3053 = vmatprep.mubr.f32.mxu0 0.0
      %3054 = vmatmul.mubr.f32.gmra.mxu0 %v2871
      %v3055 = vpop.f32.mrf.mxu0
      %v3056 = vadd.f32 0.0, %v3055
      %v3057 = vpop.f32.mrf.mxu0
      %3058 = vmatprep.mubr.f32.mxu0 0.0
      %3059 = vmatmul.mubr.f32.gmra.mxu0 %v2873
      %v3060 = vpop.f32.mrf.mxu0
      %v3061 = vadd.f32 0.0, %v3060
      %v3062 = vpop.f32.mrf.mxu0
      %3063 = vmatprep.mubr.f32.mxu0 0.0
      %3064 = vmatmul.mubr.f32.gmra.mxu0 %v2875
      %v3065 = vpop.f32.mrf.mxu0
      %v3066 = vadd.f32 0.0, %v3065
      %v3067 = vpop.f32.mrf.mxu0
      %3068 = vmatprep.mubr.f32.mxu0 0.0
      %3069 = vmatmul.mubr.f32.gmra.mxu0 %v2877
      %v3070 = vpop.f32.mrf.mxu0
      %v3071 = vadd.f32 0.0, %v3070
      %v3072 = vpop.f32.mrf.mxu0
      %3073 = vmatprep.mubr.f32.mxu0 0.0
      %3074 = vmatmul.mubr.f32.gmra.mxu0 %v2879
      %v3075 = vpop.f32.mrf.mxu0
      %v3076 = vadd.f32 0.0, %v3075
      %v3077 = vpop.f32.mrf.mxu0
      %3078 = vmatprep.mubr.f32.mxu0 0.0
      %3079 = vmatmul.mubr.f32.gmra.mxu0 %v2881
      %v3080 = vpop.f32.mrf.mxu0
      %v3081 = vadd.f32 0.0, %v3080
      %v3082 = vpop.f32.mrf.mxu0
      %3083 = vmatprep.mubr.f32.mxu0 0.0
      %3084 = vmatmul.mubr.f32.gmra.mxu0 %v2883
      %v3085 = vpop.f32.mrf.mxu0
      %v3086 = vadd.f32 0.0, %v3085
      %v3087 = vpop.f32.mrf.mxu0
      %3088 = vmatprep.mubr.f32.mxu0 0.0
      %3089 = vmatmul.mubr.f32.gmra.mxu0 %v2885
      %v3090 = vpop.f32.mrf.mxu0
      %v3091 = vadd.f32 0.0, %v3090
      %v3092 = vpop.f32.mrf.mxu0
      %3093 = vmatprep.mubr.f32.mxu0 0.0
      %3094 = vmatmul.mubr.f32.gmra.mxu0 %v2887
      %v3095 = vpop.f32.mrf.mxu0
      %v3096 = vadd.f32 0.0, %v3095
      %v3097 = vpop.f32.mrf.mxu0
      %3098 = vmatprep.mubr.f32.mxu0 0.0
      %3099 = vmatmul.mubr.f32.gmra.mxu0 %v2889
      %v3100 = vpop.f32.mrf.mxu0
      %v3101 = vadd.f32 0.0, %v3100
      %v3102 = vpop.f32.mrf.mxu0
      %3103 = vmatprep.mubr.f32.mxu0 0.0
      %3104 = vmatmul.mubr.f32.gmra.mxu0 %v2891
      %v3105 = vpop.f32.mrf.mxu0
      %v3106 = vadd.f32 0.0, %v3105
      %v3107 = vpop.f32.mrf.mxu0
      %3108 = vmatprep.mubr.f32.mxu0 0.0
      %3109 = vmatmul.mubr.f32.gmra.mxu0 %v2893
      %v3110 = vpop.f32.mrf.mxu0
      %v3111 = vadd.f32 0.0, %v3110
      %v3112 = vpop.f32.mrf.mxu0
      %3113 = vmatprep.mubr.f32.mxu0 0.0
      %3114 = vmatmul.mubr.f32.gmra.mxu0 %v2895
      %v3115 = vpop.f32.mrf.mxu0
      %v3116 = vadd.f32 0.0, %v3115
      %v3117 = vpop.f32.mrf.mxu0
      %3118 = vmatprep.mubr.f32.mxu0 0.0
      %3119 = vmatmul.mubr.f32.gmra.mxu0 %v2897
      %v3120 = vpop.f32.mrf.mxu0
      %v3121 = vadd.f32 0.0, %v3120
      %v3122 = vpop.f32.mrf.mxu0
      %3123 = vdwg.mxu0
      %v3124 = vadd.f32 %v698, %v2966
      %v3125 = vadd.f32 %v699, %v2971
      %v3126 = vadd.f32 %v700, %v2976
      %v3127 = vadd.f32 %v701, %v2981
      %v3128 = vadd.f32 %v702, %v2986
      %v3129 = vadd.f32 %v703, %v2991
      %v3130 = vadd.f32 %v704, %v2996
      %v3131 = vadd.f32 %v705, %v3001
      %v3132 = vadd.f32 %v706, %v3006
      %v3133 = vadd.f32 %v707, %v3011
      %v3134 = vadd.f32 %v708, %v3016
      %v3135 = vadd.f32 %v709, %v3021
      %v3136 = vadd.f32 %v710, %v3026
      %v3137 = vadd.f32 %v711, %v3031
      %v3138 = vadd.f32 %v712, %v3036
      %v3139 = vadd.f32 %v713, %v3041
      %v3140 = vadd.f32 %v714, %v3046
      %v3141 = vadd.f32 %v715, %v3051
      %v3142 = vadd.f32 %v716, %v3056
      %v3143 = vadd.f32 %v717, %v3061
      %v3144 = vadd.f32 %v718, %v3066
      %v3145 = vadd.f32 %v719, %v3071
      %v3146 = vadd.f32 %v720, %v3076
      %v3147 = vadd.f32 %v721, %v3081
      %v3148 = vadd.f32 %v722, %v3086
      %v3149 = vadd.f32 %v723, %v3091
      %v3150 = vadd.f32 %v724, %v3096
      %v3151 = vadd.f32 %v725, %v3101
      %v3152 = vadd.f32 %v726, %v3106
      %v3153 = vadd.f32 %v727, %v3111
      %v3154 = vadd.f32 %v728, %v3116
      %v3155 = vadd.f32 %v729, %v3121
      %v3156 = vld [vmem:[#allocation2] sm:$0xff]
      %v3157 = vld [vmem:[#allocation2 + $0x8] sm:$0xff]
      %v3158 = vld [vmem:[#allocation2 + $0x18] sm:$0xff]
      %v3159 = vld [vmem:[#allocation2 + $0x20] sm:$0xff]
      %v3160 = vld [vmem:[#allocation2 + $0x30] sm:$0xff]
      %v3161 = vld [vmem:[#allocation2 + $0x38] sm:$0xff]
      %v3162 = vld [vmem:[#allocation2 + $0x48] sm:$0xff]
      %v3163 = vld [vmem:[#allocation2 + $0x50] sm:$0xff]
      %v3164 = vld [vmem:[#allocation2 + $0x60] sm:$0xff]
      %v3165 = vld [vmem:[#allocation2 + $0x68] sm:$0xff]
      %v3166 = vld [vmem:[#allocation2 + $0x78] sm:$0xff]
      %v3167 = vld [vmem:[#allocation2 + $0x80] sm:$0xff]
      %v3168 = vld [vmem:[#allocation2 + $0x90] sm:$0xff]
      %v3169 = vld [vmem:[#allocation2 + $0x98] sm:$0xff]
      %v3170 = vld [vmem:[#allocation2 + $0xa8] sm:$0xff]
      %v3171 = vld [vmem:[#allocation2 + $0xb0] sm:$0xff]
      %v3172 = vld [vmem:[#allocation2 + $0xc0] sm:$0xff]
      %v3173 = vld [vmem:[#allocation2 + $0xc8] sm:$0xff]
      %v3174 = vld [vmem:[#allocation2 + $0xd8] sm:$0xff]
      %v3175 = vld [vmem:[#allocation2 + $0xe0] sm:$0xff]
      %v3176 = vld [vmem:[#allocation2 + $0xf0] sm:$0xff]
      %v3177 = vld [vmem:[#allocation2 + $0xf8] sm:$0xff]
      %v3178 = vld [vmem:[#allocation2 + $0x108] sm:$0xff]
      %v3179 = vld [vmem:[#allocation2 + $0x110] sm:$0xff]
      %v3180 = vld [vmem:[#allocation2 + $0x120] sm:$0xff]
      %v3181 = vld [vmem:[#allocation2 + $0x128] sm:$0xff]
      %v3182 = vld [vmem:[#allocation2 + $0x138] sm:$0xff]
      %v3183 = vld [vmem:[#allocation2 + $0x140] sm:$0xff]
      %v3184 = vld [vmem:[#allocation2 + $0x150] sm:$0xff]
      %v3185 = vld [vmem:[#allocation2 + $0x158] sm:$0xff]
      %v3186 = vld [vmem:[#allocation2 + $0x168] sm:$0xff]
      %v3187 = vld [vmem:[#allocation2 + $0x170] sm:$0xff]
      %v3188 = vld [vmem:[#allocation2 + $0x1] sm:$0xff]
      %v3189 = vld [vmem:[#allocation2 + $0x9] sm:$0xff]
      %v3190 = vld [vmem:[#allocation2 + $0x19] sm:$0xff]
      %v3191 = vld [vmem:[#allocation2 + $0x21] sm:$0xff]
      %v3192 = vld [vmem:[#allocation2 + $0x31] sm:$0xff]
      %v3193 = vld [vmem:[#allocation2 + $0x39] sm:$0xff]
      %v3194 = vld [vmem:[#allocation2 + $0x49] sm:$0xff]
      %v3195 = vld [vmem:[#allocation2 + $0x51] sm:$0xff]
      %v3196 = vld [vmem:[#allocation2 + $0x61] sm:$0xff]
      %v3197 = vld [vmem:[#allocation2 + $0x69] sm:$0xff]
      %v3198 = vld [vmem:[#allocation2 + $0x79] sm:$0xff]
      %v3199 = vld [vmem:[#allocation2 + $0x81] sm:$0xff]
      %v3200 = vld [vmem:[#allocation2 + $0x91] sm:$0xff]
      %v3201 = vld [vmem:[#allocation2 + $0x99] sm:$0xff]
      %v3202 = vld [vmem:[#allocation2 + $0xa9] sm:$0xff]
      %v3203 = vld [vmem:[#allocation2 + $0xb1] sm:$0xff]
      %v3204 = vld [vmem:[#allocation2 + $0xc1] sm:$0xff]
      %v3205 = vld [vmem:[#allocation2 + $0xc9] sm:$0xff]
      %v3206 = vld [vmem:[#allocation2 + $0xd9] sm:$0xff]
      %v3207 = vld [vmem:[#allocation2 + $0xe1] sm:$0xff]
      %v3208 = vld [vmem:[#allocation2 + $0xf1] sm:$0xff]
      %v3209 = vld [vmem:[#allocation2 + $0xf9] sm:$0xff]
      %v3210 = vld [vmem:[#allocation2 + $0x109] sm:$0xff]
      %v3211 = vld [vmem:[#allocation2 + $0x111] sm:$0xff]
      %v3212 = vld [vmem:[#allocation2 + $0x121] sm:$0xff]
      %v3213 = vld [vmem:[#allocation2 + $0x129] sm:$0xff]
      %v3214 = vld [vmem:[#allocation2 + $0x139] sm:$0xff]
      %v3215 = vld [vmem:[#allocation2 + $0x141] sm:$0xff]
      %v3216 = vld [vmem:[#allocation2 + $0x151] sm:$0xff]
      %v3217 = vld [vmem:[#allocation2 + $0x159] sm:$0xff]
      %v3218 = vld [vmem:[#allocation2 + $0x169] sm:$0xff]
      %v3219 = vld [vmem:[#allocation2 + $0x171] sm:$0xff]
      %v3220 = vld [vmem:[#allocation2 + $0x2] sm:$0xff]
      %v3221 = vld [vmem:[#allocation2 + $0xa] sm:$0xff]
      %v3222 = vld [vmem:[#allocation2 + $0x1a] sm:$0xff]
      %v3223 = vld [vmem:[#allocation2 + $0x22] sm:$0xff]
      %v3224 = vld [vmem:[#allocation2 + $0x32] sm:$0xff]
      %v3225 = vld [vmem:[#allocation2 + $0x3a] sm:$0xff]
      %v3226 = vld [vmem:[#allocation2 + $0x4a] sm:$0xff]
      %v3227 = vld [vmem:[#allocation2 + $0x52] sm:$0xff]
      %v3228 = vld [vmem:[#allocation2 + $0x62] sm:$0xff]
      %v3229 = vld [vmem:[#allocation2 + $0x6a] sm:$0xff]
      %v3230 = vld [vmem:[#allocation2 + $0x7a] sm:$0xff]
      %v3231 = vld [vmem:[#allocation2 + $0x82] sm:$0xff]
      %v3232 = vld [vmem:[#allocation2 + $0x92] sm:$0xff]
      %v3233 = vld [vmem:[#allocation2 + $0x9a] sm:$0xff]
      %v3234 = vld [vmem:[#allocation2 + $0xaa] sm:$0xff]
      %v3235 = vld [vmem:[#allocation2 + $0xb2] sm:$0xff]
      %v3236 = vld [vmem:[#allocation2 + $0xc2] sm:$0xff]
      %v3237 = vld [vmem:[#allocation2 + $0xca] sm:$0xff]
      %v3238 = vld [vmem:[#allocation2 + $0xda] sm:$0xff]
      %v3239 = vld [vmem:[#allocation2 + $0xe2] sm:$0xff]
      %v3240 = vld [vmem:[#allocation2 + $0xf2] sm:$0xff]
      %v3241 = vld [vmem:[#allocation2 + $0xfa] sm:$0xff]
      %v3242 = vld [vmem:[#allocation2 + $0x10a] sm:$0xff]
      %v3243 = vld [vmem:[#allocation2 + $0x112] sm:$0xff]
      %v3244 = vld [vmem:[#allocation2 + $0x122] sm:$0xff]
      %v3245 = vld [vmem:[#allocation2 + $0x12a] sm:$0xff]
      %v3246 = vld [vmem:[#allocation2 + $0x13a] sm:$0xff]
      %v3247 = vld [vmem:[#allocation2 + $0x142] sm:$0xff]
      %v3248 = vld [vmem:[#allocation2 + $0x152] sm:$0xff]
      %v3249 = vld [vmem:[#allocation2 + $0x15a] sm:$0xff]
      %v3250 = vld [vmem:[#allocation2 + $0x16a] sm:$0xff]
      %v3251 = vld [vmem:[#allocation2 + $0x172] sm:$0xff]
      %v3252 = vld [vmem:[%s303] sm:$0xff]
      %v3253 = vld [vmem:[%s303 + $0x8] sm:$0xff]
      %v3254 = vld [vmem:[%s303 + $0x18] sm:$0xff]
      %v3255 = vld [vmem:[%s303 + $0x20] sm:$0xff]
      %v3256 = vld [vmem:[%s303 + $0x30] sm:$0xff]
      %v3257 = vld [vmem:[%s303 + $0x38] sm:$0xff]
      %v3258 = vld [vmem:[%s303 + $0x48] sm:$0xff]
      %v3259 = vld [vmem:[%s303 + $0x50] sm:$0xff]
      %v3260 = vld [vmem:[%s303 + $0x60] sm:$0xff]
      %v3261 = vld [vmem:[%s303 + $0x68] sm:$0xff]
      %v3262 = vld [vmem:[%s303 + $0x78] sm:$0xff]
      %v3263 = vld [vmem:[%s303 + $0x80] sm:$0xff]
      %v3264 = vld [vmem:[%s303 + $0x90] sm:$0xff]
      %v3265 = vld [vmem:[%s303 + $0x98] sm:$0xff]
      %v3266 = vld [vmem:[%s303 + $0xa8] sm:$0xff]
      %v3267 = vld [vmem:[%s303 + $0xb0] sm:$0xff]
      %v3268 = vld [vmem:[%s303 + $0xc0] sm:$0xff]
      %v3269 = vld [vmem:[%s303 + $0xc8] sm:$0xff]
      %v3270 = vld [vmem:[%s303 + $0xd8] sm:$0xff]
      %v3271 = vld [vmem:[%s303 + $0xe0] sm:$0xff]
      %v3272 = vld [vmem:[%s303 + $0xf0] sm:$0xff]
      %v3273 = vld [vmem:[%s303 + $0xf8] sm:$0xff]
      %v3274 = vld [vmem:[%s303 + $0x108] sm:$0xff]
      %v3275 = vld [vmem:[%s303 + $0x110] sm:$0xff]
      %v3276 = vld [vmem:[%s303 + $0x120] sm:$0xff]
      %v3277 = vld [vmem:[%s303 + $0x128] sm:$0xff]
      %v3278 = vld [vmem:[%s303 + $0x138] sm:$0xff]
      %v3279 = vld [vmem:[%s303 + $0x140] sm:$0xff]
      %v3280 = vld [vmem:[%s303 + $0x150] sm:$0xff]
      %v3281 = vld [vmem:[%s303 + $0x158] sm:$0xff]
      %v3282 = vld [vmem:[%s303 + $0x168] sm:$0xff]
      %v3283 = vld [vmem:[%s303 + $0x170] sm:$0xff]
      %v3284 = vld [vmem:[%s303 + $0x1] sm:$0xff]
      %v3285 = vld [vmem:[%s303 + $0x9] sm:$0xff]
      %v3286 = vld [vmem:[%s303 + $0x19] sm:$0xff]
      %v3287 = vld [vmem:[%s303 + $0x21] sm:$0xff]
      %v3288 = vld [vmem:[%s303 + $0x31] sm:$0xff]
      %v3289 = vld [vmem:[%s303 + $0x39] sm:$0xff]
      %v3290 = vld [vmem:[%s303 + $0x49] sm:$0xff]
      %v3291 = vld [vmem:[%s303 + $0x51] sm:$0xff]
      %v3292 = vld [vmem:[%s303 + $0x61] sm:$0xff]
      %v3293 = vld [vmem:[%s303 + $0x69] sm:$0xff]
      %v3294 = vld [vmem:[%s303 + $0x79] sm:$0xff]
      %v3295 = vld [vmem:[%s303 + $0x81] sm:$0xff]
      %v3296 = vld [vmem:[%s303 + $0x91] sm:$0xff]
      %v3297 = vld [vmem:[%s303 + $0x99] sm:$0xff]
      %v3298 = vld [vmem:[%s303 + $0xa9] sm:$0xff]
      %v3299 = vld [vmem:[%s303 + $0xb1] sm:$0xff]
      %v3300 = vld [vmem:[%s303 + $0xc1] sm:$0xff]
      %v3301 = vld [vmem:[%s303 + $0xc9] sm:$0xff]
      %v3302 = vld [vmem:[%s303 + $0xd9] sm:$0xff]
      %v3303 = vld [vmem:[%s303 + $0xe1] sm:$0xff]
      %v3304 = vld [vmem:[%s303 + $0xf1] sm:$0xff]
      %v3305 = vld [vmem:[%s303 + $0xf9] sm:$0xff]
      %v3306 = vld [vmem:[%s303 + $0x109] sm:$0xff]
      %v3307 = vld [vmem:[%s303 + $0x111] sm:$0xff]
      %v3308 = vld [vmem:[%s303 + $0x121] sm:$0xff]
      %v3309 = vld [vmem:[%s303 + $0x129] sm:$0xff]
      %v3310 = vld [vmem:[%s303 + $0x139] sm:$0xff]
      %v3311 = vld [vmem:[%s303 + $0x141] sm:$0xff]
      %v3312 = vld [vmem:[%s303 + $0x151] sm:$0xff]
      %v3313 = vld [vmem:[%s303 + $0x159] sm:$0xff]
      %v3314 = vld [vmem:[%s303 + $0x169] sm:$0xff]
      %v3315 = vld [vmem:[%s303 + $0x171] sm:$0xff]
      %v3316 = vld [vmem:[%s303 + $0x2] sm:$0xff]
      %v3317 = vld [vmem:[%s303 + $0xa] sm:$0xff]
      %v3318 = vld [vmem:[%s303 + $0x1a] sm:$0xff]
      %v3319 = vld [vmem:[%s303 + $0x22] sm:$0xff]
      %v3320 = vld [vmem:[%s303 + $0x32] sm:$0xff]
      %v3321 = vld [vmem:[%s303 + $0x3a] sm:$0xff]
      %v3322 = vld [vmem:[%s303 + $0x4a] sm:$0xff]
      %v3323 = vld [vmem:[%s303 + $0x52] sm:$0xff]
      %v3324 = vld [vmem:[%s303 + $0x62] sm:$0xff]
      %v3325 = vld [vmem:[%s303 + $0x6a] sm:$0xff]
      %v3326 = vld [vmem:[%s303 + $0x7a] sm:$0xff]
      %v3327 = vld [vmem:[%s303 + $0x82] sm:$0xff]
      %v3328 = vld [vmem:[%s303 + $0x92] sm:$0xff]
      %v3329 = vld [vmem:[%s303 + $0x9a] sm:$0xff]
      %v3330 = vld [vmem:[%s303 + $0xaa] sm:$0xff]
      %v3331 = vld [vmem:[%s303 + $0xb2] sm:$0xff]
      %v3332 = vld [vmem:[%s303 + $0xc2] sm:$0xff]
      %v3333 = vld [vmem:[%s303 + $0xca] sm:$0xff]
      %v3334 = vld [vmem:[%s303 + $0xda] sm:$0xff]
      %v3335 = vld [vmem:[%s303 + $0xe2] sm:$0xff]
      %v3336 = vld [vmem:[%s303 + $0xf2] sm:$0xff]
      %v3337 = vld [vmem:[%s303 + $0xfa] sm:$0xff]
      %v3338 = vld [vmem:[%s303 + $0x10a] sm:$0xff]
      %v3339 = vld [vmem:[%s303 + $0x112] sm:$0xff]
      %v3340 = vld [vmem:[%s303 + $0x122] sm:$0xff]
      %v3341 = vld [vmem:[%s303 + $0x12a] sm:$0xff]
      %v3342 = vld [vmem:[%s303 + $0x13a] sm:$0xff]
      %v3343 = vld [vmem:[%s303 + $0x142] sm:$0xff]
      %v3344 = vld [vmem:[%s303 + $0x152] sm:$0xff]
      %v3345 = vld [vmem:[%s303 + $0x15a] sm:$0xff]
      %v3346 = vld [vmem:[%s303 + $0x16a] sm:$0xff]
      %v3347 = vld [vmem:[%s303 + $0x172] sm:$0xff]
      %v3348 = vld [vmem:[%s922] sm:$0xff]
      %v3349 = vld [vmem:[%s922 + $0x8] sm:$0xff]
      %v3350 = vld [vmem:[%s922 + $0x18] sm:$0xff]
      %v3351 = vld [vmem:[%s922 + $0x20] sm:$0xff]
      %v3352 = vld [vmem:[%s922 + $0x30] sm:$0xff]
      %v3353 = vld [vmem:[%s922 + $0x38] sm:$0xff]
      %v3354 = vld [vmem:[%s922 + $0x48] sm:$0xff]
      %v3355 = vld [vmem:[%s922 + $0x50] sm:$0xff]
      %v3356 = vld [vmem:[%s922 + $0x60] sm:$0xff]
      %v3357 = vld [vmem:[%s922 + $0x68] sm:$0xff]
      %v3358 = vld [vmem:[%s922 + $0x78] sm:$0xff]
      %v3359 = vld [vmem:[%s922 + $0x80] sm:$0xff]
      %v3360 = vld [vmem:[%s922 + $0x90] sm:$0xff]
      %v3361 = vld [vmem:[%s922 + $0x98] sm:$0xff]
      %v3362 = vld [vmem:[%s922 + $0xa8] sm:$0xff]
      %v3363 = vld [vmem:[%s922 + $0xb0] sm:$0xff]
      %v3364 = vld [vmem:[%s922 + $0xc0] sm:$0xff]
      %v3365 = vld [vmem:[%s922 + $0xc8] sm:$0xff]
      %v3366 = vld [vmem:[%s922 + $0xd8] sm:$0xff]
      %v3367 = vld [vmem:[%s922 + $0xe0] sm:$0xff]
      %v3368 = vld [vmem:[%s922 + $0xf0] sm:$0xff]
      %v3369 = vld [vmem:[%s922 + $0xf8] sm:$0xff]
      %v3370 = vld [vmem:[%s922 + $0x108] sm:$0xff]
      %v3371 = vld [vmem:[%s922 + $0x110] sm:$0xff]
      %v3372 = vld [vmem:[%s922 + $0x120] sm:$0xff]
      %v3373 = vld [vmem:[%s922 + $0x128] sm:$0xff]
      %v3374 = vld [vmem:[%s922 + $0x138] sm:$0xff]
      %v3375 = vld [vmem:[%s922 + $0x140] sm:$0xff]
      %v3376 = vld [vmem:[%s922 + $0x150] sm:$0xff]
      %v3377 = vld [vmem:[%s922 + $0x158] sm:$0xff]
      %v3378 = vld [vmem:[%s922 + $0x168] sm:$0xff]
      %v3379 = vld [vmem:[%s922 + $0x170] sm:$0xff]
      %v3380 = vld [vmem:[%s922 + $0x1] sm:$0xff]
      %v3381 = vld [vmem:[%s922 + $0x9] sm:$0xff]
      %v3382 = vld [vmem:[%s922 + $0x19] sm:$0xff]
      %v3383 = vld [vmem:[%s922 + $0x21] sm:$0xff]
      %v3384 = vld [vmem:[%s922 + $0x31] sm:$0xff]
      %v3385 = vld [vmem:[%s922 + $0x39] sm:$0xff]
      %v3386 = vld [vmem:[%s922 + $0x49] sm:$0xff]
      %v3387 = vld [vmem:[%s922 + $0x51] sm:$0xff]
      %v3388 = vld [vmem:[%s922 + $0x61] sm:$0xff]
      %v3389 = vld [vmem:[%s922 + $0x69] sm:$0xff]
      %v3390 = vld [vmem:[%s922 + $0x79] sm:$0xff]
      %v3391 = vld [vmem:[%s922 + $0x81] sm:$0xff]
      %v3392 = vld [vmem:[%s922 + $0x91] sm:$0xff]
      %v3393 = vld [vmem:[%s922 + $0x99] sm:$0xff]
      %v3394 = vld [vmem:[%s922 + $0xa9] sm:$0xff]
      %v3395 = vld [vmem:[%s922 + $0xb1] sm:$0xff]
      %v3396 = vld [vmem:[%s922 + $0xc1] sm:$0xff]
      %v3397 = vld [vmem:[%s922 + $0xc9] sm:$0xff]
      %v3398 = vld [vmem:[%s922 + $0xd9] sm:$0xff]
      %v3399 = vld [vmem:[%s922 + $0xe1] sm:$0xff]
      %v3400 = vld [vmem:[%s922 + $0xf1] sm:$0xff]
      %v3401 = vld [vmem:[%s922 + $0xf9] sm:$0xff]
      %v3402 = vld [vmem:[%s922 + $0x109] sm:$0xff]
      %v3403 = vld [vmem:[%s922 + $0x111] sm:$0xff]
      %v3404 = vld [vmem:[%s922 + $0x121] sm:$0xff]
      %v3405 = vld [vmem:[%s922 + $0x129] sm:$0xff]
      %v3406 = vld [vmem:[%s922 + $0x139] sm:$0xff]
      %v3407 = vld [vmem:[%s922 + $0x141] sm:$0xff]
      %v3408 = vld [vmem:[%s922 + $0x151] sm:$0xff]
      %v3409 = vld [vmem:[%s922 + $0x159] sm:$0xff]
      %v3410 = vld [vmem:[%s922 + $0x169] sm:$0xff]
      %v3411 = vld [vmem:[%s922 + $0x171] sm:$0xff]
      %v3412 = vld [vmem:[%s922 + $0x2] sm:$0xff]
      %v3413 = vld [vmem:[%s922 + $0xa] sm:$0xff]
      %v3414 = vld [vmem:[%s922 + $0x1a] sm:$0xff]
      %v3415 = vld [vmem:[%s922 + $0x22] sm:$0xff]
      %v3416 = vld [vmem:[%s922 + $0x32] sm:$0xff]
      %v3417 = vld [vmem:[%s922 + $0x3a] sm:$0xff]
      %v3418 = vld [vmem:[%s922 + $0x4a] sm:$0xff]
      %v3419 = vld [vmem:[%s922 + $0x52] sm:$0xff]
      %v3420 = vld [vmem:[%s922 + $0x62] sm:$0xff]
      %v3421 = vld [vmem:[%s922 + $0x6a] sm:$0xff]
      %v3422 = vld [vmem:[%s922 + $0x7a] sm:$0xff]
      %v3423 = vld [vmem:[%s922 + $0x82] sm:$0xff]
      %v3424 = vld [vmem:[%s922 + $0x92] sm:$0xff]
      %v3425 = vld [vmem:[%s922 + $0x9a] sm:$0xff]
      %v3426 = vld [vmem:[%s922 + $0xaa] sm:$0xff]
      %v3427 = vld [vmem:[%s922 + $0xb2] sm:$0xff]
      %v3428 = vld [vmem:[%s922 + $0xc2] sm:$0xff]
      %v3429 = vld [vmem:[%s922 + $0xca] sm:$0xff]
      %v3430 = vld [vmem:[%s922 + $0xda] sm:$0xff]
      %v3431 = vld [vmem:[%s922 + $0xe2] sm:$0xff]
      %v3432 = vld [vmem:[%s922 + $0xf2] sm:$0xff]
      %v3433 = vld [vmem:[%s922 + $0xfa] sm:$0xff]
      %v3434 = vld [vmem:[%s922 + $0x10a] sm:$0xff]
      %v3435 = vld [vmem:[%s922 + $0x112] sm:$0xff]
      %v3436 = vld [vmem:[%s922 + $0x122] sm:$0xff]
      %v3437 = vld [vmem:[%s922 + $0x12a] sm:$0xff]
      %v3438 = vld [vmem:[%s922 + $0x13a] sm:$0xff]
      %v3439 = vld [vmem:[%s922 + $0x142] sm:$0xff]
      %v3440 = vld [vmem:[%s922 + $0x152] sm:$0xff]
      %v3441 = vld [vmem:[%s922 + $0x15a] sm:$0xff]
      %v3442 = vld [vmem:[%s922 + $0x16a] sm:$0xff]
      %v3443 = vld [vmem:[%s922 + $0x172] sm:$0xff]
      %3476 = vrot.lane.b32.xlu0 %v3188, 16
      %v3477 = vpop.permute.xlu0 %3476
      %3478 = vrot.lane.b32.xlu0 %v3189, 16
      %v3479 = vpop.permute.xlu0 %3478
      %3480 = vrot.lane.b32.xlu0 %v3190, 16
      %v3481 = vpop.permute.xlu0 %3480
      %3482 = vrot.lane.b32.xlu0 %v3191, 16
      %v3483 = vpop.permute.xlu0 %3482
      %3484 = vrot.lane.b32.xlu0 %v3192, 16
      %v3485 = vpop.permute.xlu0 %3484
      %3486 = vrot.lane.b32.xlu0 %v3193, 16
      %v3487 = vpop.permute.xlu0 %3486
      %3488 = vrot.lane.b32.xlu0 %v3194, 16
      %v3489 = vpop.permute.xlu0 %3488
      %3490 = vrot.lane.b32.xlu0 %v3195, 16
      %v3491 = vpop.permute.xlu0 %3490
      %3492 = vrot.lane.b32.xlu0 %v3196, 16
      %v3493 = vpop.permute.xlu0 %3492
      %3494 = vrot.lane.b32.xlu0 %v3197, 16
      %v3495 = vpop.permute.xlu0 %3494
      %3496 = vrot.lane.b32.xlu0 %v3198, 16
      %v3497 = vpop.permute.xlu0 %3496
      %3498 = vrot.lane.b32.xlu0 %v3199, 16
      %v3499 = vpop.permute.xlu0 %3498
      %3500 = vrot.lane.b32.xlu0 %v3200, 16
      %v3501 = vpop.permute.xlu0 %3500
      %3502 = vrot.lane.b32.xlu0 %v3201, 16
      %v3503 = vpop.permute.xlu0 %3502
      %3504 = vrot.lane.b32.xlu0 %v3202, 16
      %v3505 = vpop.permute.xlu0 %3504
      %3506 = vrot.lane.b32.xlu0 %v3203, 16
      %v3507 = vpop.permute.xlu0 %3506
      %3508 = vrot.lane.b32.xlu0 %v3204, 16
      %v3509 = vpop.permute.xlu0 %3508
      %3510 = vrot.lane.b32.xlu0 %v3205, 16
      %v3511 = vpop.permute.xlu0 %3510
      %3512 = vrot.lane.b32.xlu0 %v3206, 16
      %v3513 = vpop.permute.xlu0 %3512
      %3514 = vrot.lane.b32.xlu0 %v3207, 16
      %v3515 = vpop.permute.xlu0 %3514
      %3516 = vrot.lane.b32.xlu0 %v3208, 16
      %v3517 = vpop.permute.xlu0 %3516
      %3518 = vrot.lane.b32.xlu0 %v3209, 16
      %v3519 = vpop.permute.xlu0 %3518
      %3520 = vrot.lane.b32.xlu0 %v3210, 16
      %v3521 = vpop.permute.xlu0 %3520
      %3522 = vrot.lane.b32.xlu0 %v3211, 16
      %v3523 = vpop.permute.xlu0 %3522
      %3524 = vrot.lane.b32.xlu0 %v3212, 16
      %v3525 = vpop.permute.xlu0 %3524
      %3526 = vrot.lane.b32.xlu0 %v3213, 16
      %v3527 = vpop.permute.xlu0 %3526
      %3528 = vrot.lane.b32.xlu0 %v3214, 16
      %v3529 = vpop.permute.xlu0 %3528
      %3530 = vrot.lane.b32.xlu0 %v3215, 16
      %v3531 = vpop.permute.xlu0 %3530
      %3532 = vrot.lane.b32.xlu0 %v3216, 16
      %v3533 = vpop.permute.xlu0 %3532
      %3534 = vrot.lane.b32.xlu0 %v3217, 16
      %v3535 = vpop.permute.xlu0 %3534
      %3536 = vrot.lane.b32.xlu0 %v3218, 16
      %v3537 = vpop.permute.xlu0 %3536
      %3538 = vrot.lane.b32.xlu0 %v3219, 16
      %v3539 = vpop.permute.xlu0 %3538
      %3604 = vrot.lane.b32.xlu0 %v3220, 32
      %v3605 = vpop.permute.xlu0 %3604
      %3606 = vrot.lane.b32.xlu0 %v3221, 32
      %v3607 = vpop.permute.xlu0 %3606
      %3608 = vrot.lane.b32.xlu0 %v3222, 32
      %v3609 = vpop.permute.xlu0 %3608
      %3610 = vrot.lane.b32.xlu0 %v3223, 32
      %v3611 = vpop.permute.xlu0 %3610
      %3612 = vrot.lane.b32.xlu0 %v3224, 32
      %v3613 = vpop.permute.xlu0 %3612
      %3614 = vrot.lane.b32.xlu0 %v3225, 32
      %v3615 = vpop.permute.xlu0 %3614
      %3616 = vrot.lane.b32.xlu0 %v3226, 32
      %v3617 = vpop.permute.xlu0 %3616
      %3618 = vrot.lane.b32.xlu0 %v3227, 32
      %v3619 = vpop.permute.xlu0 %3618
      %3620 = vrot.lane.b32.xlu0 %v3228, 32
      %v3621 = vpop.permute.xlu0 %3620
      %3622 = vrot.lane.b32.xlu0 %v3229, 32
      %v3623 = vpop.permute.xlu0 %3622
      %3624 = vrot.lane.b32.xlu0 %v3230, 32
      %v3625 = vpop.permute.xlu0 %3624
      %3626 = vrot.lane.b32.xlu0 %v3231, 32
      %v3627 = vpop.permute.xlu0 %3626
      %3628 = vrot.lane.b32.xlu0 %v3232, 32
      %v3629 = vpop.permute.xlu0 %3628
      %3630 = vrot.lane.b32.xlu0 %v3233, 32
      %v3631 = vpop.permute.xlu0 %3630
      %3632 = vrot.lane.b32.xlu0 %v3234, 32
      %v3633 = vpop.permute.xlu0 %3632
      %3634 = vrot.lane.b32.xlu0 %v3235, 32
      %v3635 = vpop.permute.xlu0 %3634
      %3636 = vrot.lane.b32.xlu0 %v3236, 32
      %v3637 = vpop.permute.xlu0 %3636
      %3638 = vrot.lane.b32.xlu0 %v3237, 32
      %v3639 = vpop.permute.xlu0 %3638
      %3640 = vrot.lane.b32.xlu0 %v3238, 32
      %v3641 = vpop.permute.xlu0 %3640
      %3642 = vrot.lane.b32.xlu0 %v3239, 32
      %v3643 = vpop.permute.xlu0 %3642
      %3644 = vrot.lane.b32.xlu0 %v3240, 32
      %v3645 = vpop.permute.xlu0 %3644
      %3646 = vrot.lane.b32.xlu0 %v3241, 32
      %v3647 = vpop.permute.xlu0 %3646
      %3648 = vrot.lane.b32.xlu0 %v3242, 32
      %v3649 = vpop.permute.xlu0 %3648
      %3650 = vrot.lane.b32.xlu0 %v3243, 32
      %v3651 = vpop.permute.xlu0 %3650
      %3652 = vrot.lane.b32.xlu0 %v3244, 32
      %v3653 = vpop.permute.xlu0 %3652
      %3654 = vrot.lane.b32.xlu0 %v3245, 32
      %v3655 = vpop.permute.xlu0 %3654
      %3656 = vrot.lane.b32.xlu0 %v3246, 32
      %v3657 = vpop.permute.xlu0 %3656
      %3658 = vrot.lane.b32.xlu0 %v3247, 32
      %v3659 = vpop.permute.xlu0 %3658
      %3660 = vrot.lane.b32.xlu0 %v3248, 32
      %v3661 = vpop.permute.xlu0 %3660
      %3662 = vrot.lane.b32.xlu0 %v3249, 32
      %v3663 = vpop.permute.xlu0 %3662
      %3664 = vrot.lane.b32.xlu0 %v3250, 32
      %v3665 = vpop.permute.xlu0 %3664
      %3666 = vrot.lane.b32.xlu0 %v3251, 32
      %v3667 = vpop.permute.xlu0 %3666
      %3732 = vrot.lane.b32.xlu0 %v3252, 48
      %v3733 = vpop.permute.xlu0 %3732
      %3734 = vrot.lane.b32.xlu0 %v3253, 48
      %v3735 = vpop.permute.xlu0 %3734
      %3736 = vrot.lane.b32.xlu0 %v3254, 48
      %v3737 = vpop.permute.xlu0 %3736
      %3738 = vrot.lane.b32.xlu0 %v3255, 48
      %v3739 = vpop.permute.xlu0 %3738
      %3740 = vrot.lane.b32.xlu0 %v3256, 48
      %v3741 = vpop.permute.xlu0 %3740
      %3742 = vrot.lane.b32.xlu0 %v3257, 48
      %v3743 = vpop.permute.xlu0 %3742
      %3744 = vrot.lane.b32.xlu0 %v3258, 48
      %v3745 = vpop.permute.xlu0 %3744
      %3746 = vrot.lane.b32.xlu0 %v3259, 48
      %v3747 = vpop.permute.xlu0 %3746
      %3748 = vrot.lane.b32.xlu0 %v3260, 48
      %v3749 = vpop.permute.xlu0 %3748
      %3750 = vrot.lane.b32.xlu0 %v3261, 48
      %v3751 = vpop.permute.xlu0 %3750
      %3752 = vrot.lane.b32.xlu0 %v3262, 48
      %v3753 = vpop.permute.xlu0 %3752
      %3754 = vrot.lane.b32.xlu0 %v3263, 48
      %v3755 = vpop.permute.xlu0 %3754
      %3756 = vrot.lane.b32.xlu0 %v3264, 48
      %v3757 = vpop.permute.xlu0 %3756
      %3758 = vrot.lane.b32.xlu0 %v3265, 48
      %v3759 = vpop.permute.xlu0 %3758
      %3760 = vrot.lane.b32.xlu0 %v3266, 48
      %v3761 = vpop.permute.xlu0 %3760
      %3762 = vrot.lane.b32.xlu0 %v3267, 48
      %v3763 = vpop.permute.xlu0 %3762
      %3764 = vrot.lane.b32.xlu0 %v3268, 48
      %v3765 = vpop.permute.xlu0 %3764
      %3766 = vrot.lane.b32.xlu0 %v3269, 48
      %v3767 = vpop.permute.xlu0 %3766
      %3768 = vrot.lane.b32.xlu0 %v3270, 48
      %v3769 = vpop.permute.xlu0 %3768
      %3770 = vrot.lane.b32.xlu0 %v3271, 48
      %v3771 = vpop.permute.xlu0 %3770
      %3772 = vrot.lane.b32.xlu0 %v3272, 48
      %v3773 = vpop.permute.xlu0 %3772
      %3774 = vrot.lane.b32.xlu0 %v3273, 48
      %v3775 = vpop.permute.xlu0 %3774
      %3776 = vrot.lane.b32.xlu0 %v3274, 48
      %v3777 = vpop.permute.xlu0 %3776
      %3778 = vrot.lane.b32.xlu0 %v3275, 48
      %v3779 = vpop.permute.xlu0 %3778
      %3780 = vrot.lane.b32.xlu0 %v3276, 48
      %v3781 = vpop.permute.xlu0 %3780
      %3782 = vrot.lane.b32.xlu0 %v3277, 48
      %v3783 = vpop.permute.xlu0 %3782
      %3784 = vrot.lane.b32.xlu0 %v3278, 48
      %v3785 = vpop.permute.xlu0 %3784
      %3786 = vrot.lane.b32.xlu0 %v3279, 48
      %v3787 = vpop.permute.xlu0 %3786
      %3788 = vrot.lane.b32.xlu0 %v3280, 48
      %v3789 = vpop.permute.xlu0 %3788
      %3790 = vrot.lane.b32.xlu0 %v3281, 48
      %v3791 = vpop.permute.xlu0 %3790
      %3792 = vrot.lane.b32.xlu0 %v3282, 48
      %v3793 = vpop.permute.xlu0 %3792
      %3794 = vrot.lane.b32.xlu0 %v3283, 48
      %v3795 = vpop.permute.xlu0 %3794
      %3860 = vrot.lane.b32.xlu0 %v3284, 64
      %v3861 = vpop.permute.xlu0 %3860
      %3862 = vrot.lane.b32.xlu0 %v3285, 64
      %v3863 = vpop.permute.xlu0 %3862
      %3864 = vrot.lane.b32.xlu0 %v3286, 64
      %v3865 = vpop.permute.xlu0 %3864
      %3866 = vrot.lane.b32.xlu0 %v3287, 64
      %v3867 = vpop.permute.xlu0 %3866
      %3868 = vrot.lane.b32.xlu0 %v3288, 64
      %v3869 = vpop.permute.xlu0 %3868
      %3870 = vrot.lane.b32.xlu0 %v3289, 64
      %v3871 = vpop.permute.xlu0 %3870
      %3872 = vrot.lane.b32.xlu0 %v3290, 64
      %v3873 = vpop.permute.xlu0 %3872
      %3874 = vrot.lane.b32.xlu0 %v3291, 64
      %v3875 = vpop.permute.xlu0 %3874
      %3876 = vrot.lane.b32.xlu0 %v3292, 64
      %v3877 = vpop.permute.xlu0 %3876
      %3878 = vrot.lane.b32.xlu0 %v3293, 64
      %v3879 = vpop.permute.xlu0 %3878
      %3880 = vrot.lane.b32.xlu0 %v3294, 64
      %v3881 = vpop.permute.xlu0 %3880
      %3882 = vrot.lane.b32.xlu0 %v3295, 64
      %v3883 = vpop.permute.xlu0 %3882
      %3884 = vrot.lane.b32.xlu0 %v3296, 64
      %v3885 = vpop.permute.xlu0 %3884
      %3886 = vrot.lane.b32.xlu0 %v3297, 64
      %v3887 = vpop.permute.xlu0 %3886
      %3888 = vrot.lane.b32.xlu0 %v3298, 64
      %v3889 = vpop.permute.xlu0 %3888
      %3890 = vrot.lane.b32.xlu0 %v3299, 64
      %v3891 = vpop.permute.xlu0 %3890
      %3892 = vrot.lane.b32.xlu0 %v3300, 64
      %v3893 = vpop.permute.xlu0 %3892
      %3894 = vrot.lane.b32.xlu0 %v3301, 64
      %v3895 = vpop.permute.xlu0 %3894
      %3896 = vrot.lane.b32.xlu0 %v3302, 64
      %v3897 = vpop.permute.xlu0 %3896
      %3898 = vrot.lane.b32.xlu0 %v3303, 64
      %v3899 = vpop.permute.xlu0 %3898
      %3900 = vrot.lane.b32.xlu0 %v3304, 64
      %v3901 = vpop.permute.xlu0 %3900
      %3902 = vrot.lane.b32.xlu0 %v3305, 64
      %v3903 = vpop.permute.xlu0 %3902
      %3904 = vrot.lane.b32.xlu0 %v3306, 64
      %v3905 = vpop.permute.xlu0 %3904
      %3906 = vrot.lane.b32.xlu0 %v3307, 64
      %v3907 = vpop.permute.xlu0 %3906
      %3908 = vrot.lane.b32.xlu0 %v3308, 64
      %v3909 = vpop.permute.xlu0 %3908
      %3910 = vrot.lane.b32.xlu0 %v3309, 64
      %v3911 = vpop.permute.xlu0 %3910
      %3912 = vrot.lane.b32.xlu0 %v3310, 64
      %v3913 = vpop.permute.xlu0 %3912
      %3914 = vrot.lane.b32.xlu0 %v3311, 64
      %v3915 = vpop.permute.xlu0 %3914
      %3916 = vrot.lane.b32.xlu0 %v3312, 64
      %v3917 = vpop.permute.xlu0 %3916
      %3918 = vrot.lane.b32.xlu0 %v3313, 64
      %v3919 = vpop.permute.xlu0 %3918
      %3920 = vrot.lane.b32.xlu0 %v3314, 64
      %v3921 = vpop.permute.xlu0 %3920
      %3922 = vrot.lane.b32.xlu0 %v3315, 64
      %v3923 = vpop.permute.xlu0 %3922
      %3988 = vrot.lane.b32.xlu0 %v3316, 80
      %v3989 = vpop.permute.xlu0 %3988
      %3990 = vrot.lane.b32.xlu0 %v3317, 80
      %v3991 = vpop.permute.xlu0 %3990
      %3992 = vrot.lane.b32.xlu0 %v3318, 80
      %v3993 = vpop.permute.xlu0 %3992
      %3994 = vrot.lane.b32.xlu0 %v3319, 80
      %v3995 = vpop.permute.xlu0 %3994
      %3996 = vrot.lane.b32.xlu0 %v3320, 80
      %v3997 = vpop.permute.xlu0 %3996
      %3998 = vrot.lane.b32.xlu0 %v3321, 80
      %v3999 = vpop.permute.xlu0 %3998
      %4000 = vrot.lane.b32.xlu0 %v3322, 80
      %v4001 = vpop.permute.xlu0 %4000
      %4002 = vrot.lane.b32.xlu0 %v3323, 80
      %v4003 = vpop.permute.xlu0 %4002
      %4004 = vrot.lane.b32.xlu0 %v3324, 80
      %v4005 = vpop.permute.xlu0 %4004
      %4006 = vrot.lane.b32.xlu0 %v3325, 80
      %v4007 = vpop.permute.xlu0 %4006
      %4008 = vrot.lane.b32.xlu0 %v3326, 80
      %v4009 = vpop.permute.xlu0 %4008
      %4010 = vrot.lane.b32.xlu0 %v3327, 80
      %v4011 = vpop.permute.xlu0 %4010
      %4012 = vrot.lane.b32.xlu0 %v3328, 80
      %v4013 = vpop.permute.xlu0 %4012
      %4014 = vrot.lane.b32.xlu0 %v3329, 80
      %v4015 = vpop.permute.xlu0 %4014
      %4016 = vrot.lane.b32.xlu0 %v3330, 80
      %v4017 = vpop.permute.xlu0 %4016
      %4018 = vrot.lane.b32.xlu0 %v3331, 80
      %v4019 = vpop.permute.xlu0 %4018
      %4020 = vrot.lane.b32.xlu0 %v3332, 80
      %v4021 = vpop.permute.xlu0 %4020
      %4022 = vrot.lane.b32.xlu0 %v3333, 80
      %v4023 = vpop.permute.xlu0 %4022
      %4024 = vrot.lane.b32.xlu0 %v3334, 80
      %v4025 = vpop.permute.xlu0 %4024
      %4026 = vrot.lane.b32.xlu0 %v3335, 80
      %v4027 = vpop.permute.xlu0 %4026
      %4028 = vrot.lane.b32.xlu0 %v3336, 80
      %v4029 = vpop.permute.xlu0 %4028
      %4030 = vrot.lane.b32.xlu0 %v3337, 80
      %v4031 = vpop.permute.xlu0 %4030
      %4032 = vrot.lane.b32.xlu0 %v3338, 80
      %v4033 = vpop.permute.xlu0 %4032
      %4034 = vrot.lane.b32.xlu0 %v3339, 80
      %v4035 = vpop.permute.xlu0 %4034
      %4036 = vrot.lane.b32.xlu0 %v3340, 80
      %v4037 = vpop.permute.xlu0 %4036
      %4038 = vrot.lane.b32.xlu0 %v3341, 80
      %v4039 = vpop.permute.xlu0 %4038
      %4040 = vrot.lane.b32.xlu0 %v3342, 80
      %v4041 = vpop.permute.xlu0 %4040
      %4042 = vrot.lane.b32.xlu0 %v3343, 80
      %v4043 = vpop.permute.xlu0 %4042
      %4044 = vrot.lane.b32.xlu0 %v3344, 80
      %v4045 = vpop.permute.xlu0 %4044
      %4046 = vrot.lane.b32.xlu0 %v3345, 80
      %v4047 = vpop.permute.xlu0 %4046
      %4048 = vrot.lane.b32.xlu0 %v3346, 80
      %v4049 = vpop.permute.xlu0 %4048
      %4050 = vrot.lane.b32.xlu0 %v3347, 80
      %v4051 = vpop.permute.xlu0 %4050
      %4116 = vrot.lane.b32.xlu0 %v3348, 96
      %v4117 = vpop.permute.xlu0 %4116
      %4118 = vrot.lane.b32.xlu0 %v3349, 96
      %v4119 = vpop.permute.xlu0 %4118
      %4120 = vrot.lane.b32.xlu0 %v3350, 96
      %v4121 = vpop.permute.xlu0 %4120
      %4122 = vrot.lane.b32.xlu0 %v3351, 96
      %v4123 = vpop.permute.xlu0 %4122
      %4124 = vrot.lane.b32.xlu0 %v3352, 96
      %v4125 = vpop.permute.xlu0 %4124
      %4126 = vrot.lane.b32.xlu0 %v3353, 96
      %v4127 = vpop.permute.xlu0 %4126
      %4128 = vrot.lane.b32.xlu0 %v3354, 96
      %v4129 = vpop.permute.xlu0 %4128
      %4130 = vrot.lane.b32.xlu0 %v3355, 96
      %v4131 = vpop.permute.xlu0 %4130
      %4132 = vrot.lane.b32.xlu0 %v3356, 96
      %v4133 = vpop.permute.xlu0 %4132
      %4134 = vrot.lane.b32.xlu0 %v3357, 96
      %v4135 = vpop.permute.xlu0 %4134
      %4136 = vrot.lane.b32.xlu0 %v3358, 96
      %v4137 = vpop.permute.xlu0 %4136
      %4138 = vrot.lane.b32.xlu0 %v3359, 96
      %v4139 = vpop.permute.xlu0 %4138
      %4140 = vrot.lane.b32.xlu0 %v3360, 96
      %v4141 = vpop.permute.xlu0 %4140
      %4142 = vrot.lane.b32.xlu0 %v3361, 96
      %v4143 = vpop.permute.xlu0 %4142
      %4144 = vrot.lane.b32.xlu0 %v3362, 96
      %v4145 = vpop.permute.xlu0 %4144
      %4146 = vrot.lane.b32.xlu0 %v3363, 96
      %v4147 = vpop.permute.xlu0 %4146
      %4148 = vrot.lane.b32.xlu0 %v3364, 96
      %v4149 = vpop.permute.xlu0 %4148
      %4150 = vrot.lane.b32.xlu0 %v3365, 96
      %v4151 = vpop.permute.xlu0 %4150
      %4152 = vrot.lane.b32.xlu0 %v3366, 96
      %v4153 = vpop.permute.xlu0 %4152
      %4154 = vrot.lane.b32.xlu0 %v3367, 96
      %v4155 = vpop.permute.xlu0 %4154
      %4156 = vrot.lane.b32.xlu0 %v3368, 96
      %v4157 = vpop.permute.xlu0 %4156
      %4158 = vrot.lane.b32.xlu0 %v3369, 96
      %v4159 = vpop.permute.xlu0 %4158
      %4160 = vrot.lane.b32.xlu0 %v3370, 96
      %v4161 = vpop.permute.xlu0 %4160
      %4162 = vrot.lane.b32.xlu0 %v3371, 96
      %v4163 = vpop.permute.xlu0 %4162
      %4164 = vrot.lane.b32.xlu0 %v3372, 96
      %v4165 = vpop.permute.xlu0 %4164
      %4166 = vrot.lane.b32.xlu0 %v3373, 96
      %v4167 = vpop.permute.xlu0 %4166
      %4168 = vrot.lane.b32.xlu0 %v3374, 96
      %v4169 = vpop.permute.xlu0 %4168
      %4170 = vrot.lane.b32.xlu0 %v3375, 96
      %v4171 = vpop.permute.xlu0 %4170
      %4172 = vrot.lane.b32.xlu0 %v3376, 96
      %v4173 = vpop.permute.xlu0 %4172
      %4174 = vrot.lane.b32.xlu0 %v3377, 96
      %v4175 = vpop.permute.xlu0 %4174
      %4176 = vrot.lane.b32.xlu0 %v3378, 96
      %v4177 = vpop.permute.xlu0 %4176
      %4178 = vrot.lane.b32.xlu0 %v3379, 96
      %v4179 = vpop.permute.xlu0 %4178
      %4244 = vrot.lane.b32.xlu0 %v3380, 112
      %v4245 = vpop.permute.xlu0 %4244
      %4246 = vrot.lane.b32.xlu0 %v3381, 112
      %v4247 = vpop.permute.xlu0 %4246
      %4248 = vrot.lane.b32.xlu0 %v3382, 112
      %v4249 = vpop.permute.xlu0 %4248
      %4250 = vrot.lane.b32.xlu0 %v3383, 112
      %v4251 = vpop.permute.xlu0 %4250
      %4252 = vrot.lane.b32.xlu0 %v3384, 112
      %v4253 = vpop.permute.xlu0 %4252
      %4254 = vrot.lane.b32.xlu0 %v3385, 112
      %v4255 = vpop.permute.xlu0 %4254
      %4256 = vrot.lane.b32.xlu0 %v3386, 112
      %v4257 = vpop.permute.xlu0 %4256
      %4258 = vrot.lane.b32.xlu0 %v3387, 112
      %v4259 = vpop.permute.xlu0 %4258
      %4260 = vrot.lane.b32.xlu0 %v3388, 112
      %v4261 = vpop.permute.xlu0 %4260
      %4262 = vrot.lane.b32.xlu0 %v3389, 112
      %v4263 = vpop.permute.xlu0 %4262
      %4264 = vrot.lane.b32.xlu0 %v3390, 112
      %v4265 = vpop.permute.xlu0 %4264
      %4266 = vrot.lane.b32.xlu0 %v3391, 112
      %v4267 = vpop.permute.xlu0 %4266
      %4268 = vrot.lane.b32.xlu0 %v3392, 112
      %v4269 = vpop.permute.xlu0 %4268
      %4270 = vrot.lane.b32.xlu0 %v3393, 112
      %v4271 = vpop.permute.xlu0 %4270
      %4272 = vrot.lane.b32.xlu0 %v3394, 112
      %v4273 = vpop.permute.xlu0 %4272
      %4274 = vrot.lane.b32.xlu0 %v3395, 112
      %v4275 = vpop.permute.xlu0 %4274
      %4276 = vrot.lane.b32.xlu0 %v3396, 112
      %v4277 = vpop.permute.xlu0 %4276
      %4278 = vrot.lane.b32.xlu0 %v3397, 112
      %v4279 = vpop.permute.xlu0 %4278
      %4280 = vrot.lane.b32.xlu0 %v3398, 112
      %v4281 = vpop.permute.xlu0 %4280
      %4282 = vrot.lane.b32.xlu0 %v3399, 112
      %v4283 = vpop.permute.xlu0 %4282
      %4284 = vrot.lane.b32.xlu0 %v3400, 112
      %v4285 = vpop.permute.xlu0 %4284
      %4286 = vrot.lane.b32.xlu0 %v3401, 112
      %v4287 = vpop.permute.xlu0 %4286
      %4288 = vrot.lane.b32.xlu0 %v3402, 112
      %v4289 = vpop.permute.xlu0 %4288
      %4290 = vrot.lane.b32.xlu0 %v3403, 112
      %v4291 = vpop.permute.xlu0 %4290
      %4292 = vrot.lane.b32.xlu0 %v3404, 112
      %v4293 = vpop.permute.xlu0 %4292
      %4294 = vrot.lane.b32.xlu0 %v3405, 112
      %v4295 = vpop.permute.xlu0 %4294
      %4296 = vrot.lane.b32.xlu0 %v3406, 112
      %v4297 = vpop.permute.xlu0 %4296
      %4298 = vrot.lane.b32.xlu0 %v3407, 112
      %v4299 = vpop.permute.xlu0 %4298
      %4300 = vrot.lane.b32.xlu0 %v3408, 112
      %v4301 = vpop.permute.xlu0 %4300
      %4302 = vrot.lane.b32.xlu0 %v3409, 112
      %v4303 = vpop.permute.xlu0 %4302
      %4304 = vrot.lane.b32.xlu0 %v3410, 112
      %v4305 = vpop.permute.xlu0 %4304
      %4306 = vrot.lane.b32.xlu0 %v3411, 112
      %v4307 = vpop.permute.xlu0 %4306
      %v4340 = vsel %vm2075, %v3156, %v3477
      %v4341 = vsel %vm2075, %v3157, %v3479
      %v4342 = vsel %vm2075, %v3158, %v3481
      %v4343 = vsel %vm2075, %v3159, %v3483
      %v4344 = vsel %vm2075, %v3160, %v3485
      %v4345 = vsel %vm2075, %v3161, %v3487
      %v4346 = vsel %vm2075, %v3162, %v3489
      %v4347 = vsel %vm2075, %v3163, %v3491
      %v4348 = vsel %vm2075, %v3164, %v3493
      %v4349 = vsel %vm2075, %v3165, %v3495
      %v4350 = vsel %vm2075, %v3166, %v3497
      %v4351 = vsel %vm2075, %v3167, %v3499
      %v4352 = vsel %vm2075, %v3168, %v3501
      %v4353 = vsel %vm2075, %v3169, %v3503
      %v4354 = vsel %vm2075, %v3170, %v3505
      %v4355 = vsel %vm2075, %v3171, %v3507
      %v4356 = vsel %vm2075, %v3172, %v3509
      %v4357 = vsel %vm2075, %v3173, %v3511
      %v4358 = vsel %vm2075, %v3174, %v3513
      %v4359 = vsel %vm2075, %v3175, %v3515
      %v4360 = vsel %vm2075, %v3176, %v3517
      %v4361 = vsel %vm2075, %v3177, %v3519
      %v4362 = vsel %vm2075, %v3178, %v3521
      %v4363 = vsel %vm2075, %v3179, %v3523
      %v4364 = vsel %vm2075, %v3180, %v3525
      %v4365 = vsel %vm2075, %v3181, %v3527
      %v4366 = vsel %vm2075, %v3182, %v3529
      %v4367 = vsel %vm2075, %v3183, %v3531
      %v4368 = vsel %vm2075, %v3184, %v3533
      %v4369 = vsel %vm2075, %v3185, %v3535
      %v4370 = vsel %vm2075, %v3186, %v3537
      %v4371 = vsel %vm2075, %v3187, %v3539
      %v4372 = vsel %vm2140, %v4340, %v3605
      %v4373 = vsel %vm2140, %v4341, %v3607
      %v4374 = vsel %vm2140, %v4342, %v3609
      %v4375 = vsel %vm2140, %v4343, %v3611
      %v4376 = vsel %vm2140, %v4344, %v3613
      %v4377 = vsel %vm2140, %v4345, %v3615
      %v4378 = vsel %vm2140, %v4346, %v3617
      %v4379 = vsel %vm2140, %v4347, %v3619
      %v4380 = vsel %vm2140, %v4348, %v3621
      %v4381 = vsel %vm2140, %v4349, %v3623
      %v4382 = vsel %vm2140, %v4350, %v3625
      %v4383 = vsel %vm2140, %v4351, %v3627
      %v4384 = vsel %vm2140, %v4352, %v3629
      %v4385 = vsel %vm2140, %v4353, %v3631
      %v4386 = vsel %vm2140, %v4354, %v3633
      %v4387 = vsel %vm2140, %v4355, %v3635
      %v4388 = vsel %vm2140, %v4356, %v3637
      %v4389 = vsel %vm2140, %v4357, %v3639
      %v4390 = vsel %vm2140, %v4358, %v3641
      %v4391 = vsel %vm2140, %v4359, %v3643
      %v4392 = vsel %vm2140, %v4360, %v3645
      %v4393 = vsel %vm2140, %v4361, %v3647
      %v4394 = vsel %vm2140, %v4362, %v3649
      %v4395 = vsel %vm2140, %v4363, %v3651
      %v4396 = vsel %vm2140, %v4364, %v3653
      %v4397 = vsel %vm2140, %v4365, %v3655
      %v4398 = vsel %vm2140, %v4366, %v3657
      %v4399 = vsel %vm2140, %v4367, %v3659
      %v4400 = vsel %vm2140, %v4368, %v3661
      %v4401 = vsel %vm2140, %v4369, %v3663
      %v4402 = vsel %vm2140, %v4370, %v3665
      %v4403 = vsel %vm2140, %v4371, %v3667
      %v4404 = vsel %vm2206, %v4372, %v3733
      %v4405 = vsel %vm2206, %v4373, %v3735
      %v4406 = vsel %vm2206, %v4374, %v3737
      %v4407 = vsel %vm2206, %v4375, %v3739
      %v4408 = vsel %vm2206, %v4376, %v3741
      %v4409 = vsel %vm2206, %v4377, %v3743
      %v4410 = vsel %vm2206, %v4378, %v3745
      %v4411 = vsel %vm2206, %v4379, %v3747
      %v4412 = vsel %vm2206, %v4380, %v3749
      %v4413 = vsel %vm2206, %v4381, %v3751
      %v4414 = vsel %vm2206, %v4382, %v3753
      %v4415 = vsel %vm2206, %v4383, %v3755
      %v4416 = vsel %vm2206, %v4384, %v3757
      %v4417 = vsel %vm2206, %v4385, %v3759
      %v4418 = vsel %vm2206, %v4386, %v3761
      %v4419 = vsel %vm2206, %v4387, %v3763
      %v4420 = vsel %vm2206, %v4388, %v3765
      %v4421 = vsel %vm2206, %v4389, %v3767
      %v4422 = vsel %vm2206, %v4390, %v3769
      %v4423 = vsel %vm2206, %v4391, %v3771
      %v4424 = vsel %vm2206, %v4392, %v3773
      %v4425 = vsel %vm2206, %v4393, %v3775
      %v4426 = vsel %vm2206, %v4394, %v3777
      %v4427 = vsel %vm2206, %v4395, %v3779
      %v4428 = vsel %vm2206, %v4396, %v3781
      %v4429 = vsel %vm2206, %v4397, %v3783
      %v4430 = vsel %vm2206, %v4398, %v3785
      %v4431 = vsel %vm2206, %v4399, %v3787
      %v4432 = vsel %vm2206, %v4400, %v3789
      %v4433 = vsel %vm2206, %v4401, %v3791
      %v4434 = vsel %vm2206, %v4402, %v3793
      %v4435 = vsel %vm2206, %v4403, %v3795
      %v4436 = vsel %vm2272, %v4404, %v3861
      %v4437 = vsel %vm2272, %v4405, %v3863
      %v4438 = vsel %vm2272, %v4406, %v3865
      %v4439 = vsel %vm2272, %v4407, %v3867
      %v4440 = vsel %vm2272, %v4408, %v3869
      %v4441 = vsel %vm2272, %v4409, %v3871
      %v4442 = vsel %vm2272, %v4410, %v3873
      %v4443 = vsel %vm2272, %v4411, %v3875
      %v4444 = vsel %vm2272, %v4412, %v3877
      %v4445 = vsel %vm2272, %v4413, %v3879
      %v4446 = vsel %vm2272, %v4414, %v3881
      %v4447 = vsel %vm2272, %v4415, %v3883
      %v4448 = vsel %vm2272, %v4416, %v3885
      %v4449 = vsel %vm2272, %v4417, %v3887
      %v4450 = vsel %vm2272, %v4418, %v3889
      %v4451 = vsel %vm2272, %v4419, %v3891
      %v4452 = vsel %vm2272, %v4420, %v3893
      %v4453 = vsel %vm2272, %v4421, %v3895
      %v4454 = vsel %vm2272, %v4422, %v3897
      %v4455 = vsel %vm2272, %v4423, %v3899
      %v4456 = vsel %vm2272, %v4424, %v3901
      %v4457 = vsel %vm2272, %v4425, %v3903
      %v4458 = vsel %vm2272, %v4426, %v3905
      %v4459 = vsel %vm2272, %v4427, %v3907
      %v4460 = vsel %vm2272, %v4428, %v3909
      %v4461 = vsel %vm2272, %v4429, %v3911
      %v4462 = vsel %vm2272, %v4430, %v3913
      %v4463 = vsel %vm2272, %v4431, %v3915
      %v4464 = vsel %vm2272, %v4432, %v3917
      %v4465 = vsel %vm2272, %v4433, %v3919
      %v4466 = vsel %vm2272, %v4434, %v3921
      %v4467 = vsel %vm2272, %v4435, %v3923
      %vm4468 = vcmask 654336
      %v4469 = vsel %vm4468, %v4436, %v3989
      %v4470 = vsel %vm4468, %v4437, %v3991
      %v4471 = vsel %vm4468, %v4438, %v3993
      %v4472 = vsel %vm4468, %v4439, %v3995
      %v4473 = vsel %vm4468, %v4440, %v3997
      %v4474 = vsel %vm4468, %v4441, %v3999
      %v4475 = vsel %vm4468, %v4442, %v4001
      %v4476 = vsel %vm4468, %v4443, %v4003
      %v4477 = vsel %vm4468, %v4444, %v4005
      %v4478 = vsel %vm4468, %v4445, %v4007
      %v4479 = vsel %vm4468, %v4446, %v4009
      %v4480 = vsel %vm4468, %v4447, %v4011
      %v4481 = vsel %vm4468, %v4448, %v4013
      %v4482 = vsel %vm4468, %v4449, %v4015
      %v4483 = vsel %vm4468, %v4450, %v4017
      %v4484 = vsel %vm4468, %v4451, %v4019
      %v4485 = vsel %vm4468, %v4452, %v4021
      %v4486 = vsel %vm4468, %v4453, %v4023
      %v4487 = vsel %vm4468, %v4454, %v4025
      %v4488 = vsel %vm4468, %v4455, %v4027
      %v4489 = vsel %vm4468, %v4456, %v4029
      %v4490 = vsel %vm4468, %v4457, %v4031
      %v4491 = vsel %vm4468, %v4458, %v4033
      %v4492 = vsel %vm4468, %v4459, %v4035
      %v4493 = vsel %vm4468, %v4460, %v4037
      %v4494 = vsel %vm4468, %v4461, %v4039
      %v4495 = vsel %vm4468, %v4462, %v4041
      %v4496 = vsel %vm4468, %v4463, %v4043
      %v4497 = vsel %vm4468, %v4464, %v4045
      %v4498 = vsel %vm4468, %v4465, %v4047
      %v4499 = vsel %vm4468, %v4466, %v4049
      %v4500 = vsel %vm4468, %v4467, %v4051
      %vm4501 = vcmask 785408
      %v4502 = vsel %vm4501, %v4469, %v4117
      %v4503 = vsel %vm4501, %v4470, %v4119
      %v4504 = vsel %vm4501, %v4471, %v4121
      %v4505 = vsel %vm4501, %v4472, %v4123
      %v4506 = vsel %vm4501, %v4473, %v4125
      %v4507 = vsel %vm4501, %v4474, %v4127
      %v4508 = vsel %vm4501, %v4475, %v4129
      %v4509 = vsel %vm4501, %v4476, %v4131
      %v4510 = vsel %vm4501, %v4477, %v4133
      %v4511 = vsel %vm4501, %v4478, %v4135
      %v4512 = vsel %vm4501, %v4479, %v4137
      %v4513 = vsel %vm4501, %v4480, %v4139
      %v4514 = vsel %vm4501, %v4481, %v4141
      %v4515 = vsel %vm4501, %v4482, %v4143
      %v4516 = vsel %vm4501, %v4483, %v4145
      %v4517 = vsel %vm4501, %v4484, %v4147
      %v4518 = vsel %vm4501, %v4485, %v4149
      %v4519 = vsel %vm4501, %v4486, %v4151
      %v4520 = vsel %vm4501, %v4487, %v4153
      %v4521 = vsel %vm4501, %v4488, %v4155
      %v4522 = vsel %vm4501, %v4489, %v4157
      %v4523 = vsel %vm4501, %v4490, %v4159
      %v4524 = vsel %vm4501, %v4491, %v4161
      %v4525 = vsel %vm4501, %v4492, %v4163
      %v4526 = vsel %vm4501, %v4493, %v4165
      %v4527 = vsel %vm4501, %v4494, %v4167
      %v4528 = vsel %vm4501, %v4495, %v4169
      %v4529 = vsel %vm4501, %v4496, %v4171
      %v4530 = vsel %vm4501, %v4497, %v4173
      %v4531 = vsel %vm4501, %v4498, %v4175
      %v4532 = vsel %vm4501, %v4499, %v4177
      %v4533 = vsel %vm4501, %v4500, %v4179
      %vm4534 = vcmask 916480
      %v4535 = vsel %vm4534, %v4502, %v4245
      %v4536 = vsel %vm4534, %v4503, %v4247
      %v4537 = vsel %vm4534, %v4504, %v4249
      %v4538 = vsel %vm4534, %v4505, %v4251
      %v4539 = vsel %vm4534, %v4506, %v4253
      %v4540 = vsel %vm4534, %v4507, %v4255
      %v4541 = vsel %vm4534, %v4508, %v4257
      %v4542 = vsel %vm4534, %v4509, %v4259
      %v4543 = vsel %vm4534, %v4510, %v4261
      %v4544 = vsel %vm4534, %v4511, %v4263
      %v4545 = vsel %vm4534, %v4512, %v4265
      %v4546 = vsel %vm4534, %v4513, %v4267
      %v4547 = vsel %vm4534, %v4514, %v4269
      %v4548 = vsel %vm4534, %v4515, %v4271
      %v4549 = vsel %vm4534, %v4516, %v4273
      %v4550 = vsel %vm4534, %v4517, %v4275
      %v4551 = vsel %vm4534, %v4518, %v4277
      %v4552 = vsel %vm4534, %v4519, %v4279
      %v4553 = vsel %vm4534, %v4520, %v4281
      %v4554 = vsel %vm4534, %v4521, %v4283
      %v4555 = vsel %vm4534, %v4522, %v4285
      %v4556 = vsel %vm4534, %v4523, %v4287
      %v4557 = vsel %vm4534, %v4524, %v4289
      %v4558 = vsel %vm4534, %v4525, %v4291
      %v4559 = vsel %vm4534, %v4526, %v4293
      %v4560 = vsel %vm4534, %v4527, %v4295
      %v4561 = vsel %vm4534, %v4528, %v4297
      %v4562 = vsel %vm4534, %v4529, %v4299
      %v4563 = vsel %vm4534, %v4530, %v4301
      %v4564 = vsel %vm4534, %v4531, %v4303
      %v4565 = vsel %vm4534, %v4532, %v4305
      %v4566 = vsel %vm4534, %v4533, %v4307
      %v4567 = vld [vmem:[%s1 + $0x48] sm:$0xff]
      %v4568 = vld [vmem:[%s1 + $0x50] sm:$0xff]
      %v4569 = vld [vmem:[%s1 + $0x58] sm:$0xff]
      %v4570 = vld [vmem:[%s1 + $0x60] sm:$0xff]
      %v4571 = vld [vmem:[%s1 + $0x68] sm:$0xff]
      %v4572 = vld [vmem:[%s1 + $0x70] sm:$0xff]
      %v4573 = vld [vmem:[%s1 + $0x78] sm:$0xff]
      %v4574 = vld [vmem:[%s1 + $0x80] sm:$0xff]
      %v4575 = vld [vmem:[%s1 + $0x88] sm:$0xff]
      %v4576 = vld [vmem:[%s1 + $0x90] sm:$0xff]
      %v4577 = vld [vmem:[%s1 + $0x98] sm:$0xff]
      %v4578 = vld [vmem:[%s1 + $0xa0] sm:$0xff]
      %v4579 = vld [vmem:[%s1 + $0xa8] sm:$0xff]
      %v4580 = vld [vmem:[%s1 + $0xb0] sm:$0xff]
      %v4581 = vld [vmem:[%s1 + $0xb8] sm:$0xff]
      %v4582 = vld [vmem:[%s1 + $0xc0] sm:$0xff]
      %v4583 = vld [vmem:[%s1 + $0xc8] sm:$0xff]
      %v4584 = vld [vmem:[%s1 + $0xd0] sm:$0xff]
      %v4585 = vld [vmem:[%s2 + $0x1] sm:$0x1]
      %v4586 = vlaneseq
      %v4587 = vshrl.u32 %v4586, 7
      %v4588 = vsub.s32 0, %v4587
      %v4589 = vrot.slane %v4585, %v4588
      %v4591 = vsel %vm2075, %v3412, 0
      %v4594 = vsel %vm2075, %v3413, 0
      %v4597 = vsel %vm2075, %v3414, 0
      %v4600 = vsel %vm2075, %v3415, 0
      %v4603 = vsel %vm2075, %v3416, 0
      %v4606 = vsel %vm2075, %v3417, 0
      %v4609 = vsel %vm2075, %v3418, 0
      %v4612 = vsel %vm2075, %v3419, 0
      %v4615 = vsel %vm2075, %v3420, 0
      %v4618 = vsel %vm2075, %v3421, 0
      %v4621 = vsel %vm2075, %v3422, 0
      %v4624 = vsel %vm2075, %v3423, 0
      %v4627 = vsel %vm2075, %v3424, 0
      %v4630 = vsel %vm2075, %v3425, 0
      %v4633 = vsel %vm2075, %v3426, 0
      %v4636 = vsel %vm2075, %v3427, 0
      %v4639 = vsel %vm2075, %v3428, 0
      %v4642 = vsel %vm2075, %v3429, 0
      %v4645 = vsel %vm2075, %v3430, 0
      %v4648 = vsel %vm2075, %v3431, 0
      %v4651 = vsel %vm2075, %v3432, 0
      %v4654 = vsel %vm2075, %v3433, 0
      %v4657 = vsel %vm2075, %v3434, 0
      %v4660 = vsel %vm2075, %v3435, 0
      %v4663 = vsel %vm2075, %v3436, 0
      %v4666 = vsel %vm2075, %v3437, 0
      %v4669 = vsel %vm2075, %v3438, 0
      %v4672 = vsel %vm2075, %v3439, 0
      %v4675 = vsel %vm2075, %v3440, 0
      %v4678 = vsel %vm2075, %v3441, 0
      %v4681 = vsel %vm2075, %v3442, 0
      %v4684 = vsel %vm2075, %v3443, 0
      %4686 = vmatprep.subr.mxu0 0.0
      %4687 = vmatpush1.msra.mxu0 %v4582
      %4688 = vmatprep.subr.mxu0 0.0
      %4689 = vmatpush1.msra.mxu0 %v4581
      %4690 = vmatprep.subr.mxu0 0.0
      %4691 = vmatpush1.msra.mxu0 %v4580
      %4692 = vmatprep.subr.mxu0 0.0
      %4693 = vmatpush1.msra.mxu0 %v4579
      %4694 = vmatprep.subr.mxu0 0.0
      %4695 = vmatpush1.msra.mxu0 %v4578
      %4696 = vmatprep.subr.mxu0 0.0
      %4697 = vmatpush1.msra.mxu0 %v4577
      %4698 = vmatprep.subr.mxu0 0.0
      %4699 = vmatpush1.msra.mxu0 %v4576
      %4700 = vmatprep.subr.mxu0 0.0
      %4701 = vmatpush1.msra.mxu0 %v4575
      %4702 = vmatprep.subr.mxu0 0.0
      %4703 = vmatpush1.msra.mxu0 %v4574
      %4704 = vmatprep.subr.mxu0 0.0
      %4705 = vmatpush1.msra.mxu0 %v4573
      %4706 = vmatprep.subr.mxu0 0.0
      %4707 = vmatpush1.msra.mxu0 %v4572
      %4708 = vmatprep.subr.mxu0 0.0
      %4709 = vmatpush1.msra.mxu0 %v4571
      %4710 = vmatprep.subr.mxu0 0.0
      %4711 = vmatpush1.msra.mxu0 %v4570
      %4712 = vmatprep.subr.mxu0 0.0
      %4713 = vmatpush1.msra.mxu0 %v4569
      %4714 = vmatprep.subr.mxu0 0.0
      %4715 = vmatpush1.msra.mxu0 %v4568
      %4716 = vmatprep.subr.mxu0 0.0
      %4717 = vmatpush1.msra.mxu0 %v4567
      %4718 = vmatprep.subr.mxu0 0.0
      %4719 = vmatpush2.msra.mxu0 0.0
      %4720 = vmatprep.subr.mxu0 0.0
      %4721 = vmatpush2.msra.mxu0 0.0
      %4722 = vmatprep.subr.mxu0 0.0
      %4723 = vmatpush2.msra.mxu0 0.0
      %4724 = vmatprep.subr.mxu0 0.0
      %4725 = vmatpush2.msra.mxu0 0.0
      %4726 = vmatprep.subr.mxu0 0.0
      %4727 = vmatpush2.msra.mxu0 0.0
      %4728 = vmatprep.subr.mxu0 0.0
      %4729 = vmatpush2.msra.mxu0 0.0
      %4730 = vmatprep.subr.mxu0 0.0
      %4731 = vmatpush2.msra.mxu0 0.0
      %4732 = vmatprep.subr.mxu0 0.0
      %4733 = vmatpush2.msra.mxu0 0.0
      %4734 = vmatprep.subr.mxu0 0.0
      %4735 = vmatpush2.msra.mxu0 0.0
      %4736 = vmatprep.subr.mxu0 0.0
      %4737 = vmatpush2.msra.mxu0 0.0
      %4738 = vmatprep.subr.mxu0 0.0
      %4739 = vmatpush2.msra.mxu0 0.0
      %4740 = vmatprep.subr.mxu0 0.0
      %4741 = vmatpush2.msra.mxu0 0.0
      %4742 = vmatprep.subr.mxu0 0.0
      %4743 = vmatpush2.msra.mxu0 0.0
      %4744 = vmatprep.subr.mxu0 0.0
      %4745 = vmatpush2.msra.mxu0 0.0
      %4746 = vmatprep.subr.mxu0 0.0
      %4747 = vmatpush2.msra.mxu0 %v4584
      %4748 = vmatprep.subr.mxu0 0.0
      %4749 = vmatpush2.msra.mxu0 %v4583
      %4750 = vmatprep.mubr.f32.mxu0 %v4591
      %4751 = vmatmul.mubr.f32.gmra.mxu0 %v4535
      %v4752 = vpop.f32.mrf.mxu0
      %v4753 = vadd.f32 %v4589, %v4752
      %v4754 = vpop.f32.mrf.mxu0
      %4755 = vmatprep.mubr.f32.mxu0 %v4594
      %4756 = vmatmul.mubr.f32.gmra.mxu0 %v4536
      %v4757 = vpop.f32.mrf.mxu0
      %v4758 = vadd.f32 %v4589, %v4757
      %v4759 = vpop.f32.mrf.mxu0
      %4760 = vmatprep.mubr.f32.mxu0 %v4597
      %4761 = vmatmul.mubr.f32.gmra.mxu0 %v4537
      %v4762 = vpop.f32.mrf.mxu0
      %v4763 = vadd.f32 %v4589, %v4762
      %v4764 = vpop.f32.mrf.mxu0
      %4765 = vmatprep.mubr.f32.mxu0 %v4600
      %4766 = vmatmul.mubr.f32.gmra.mxu0 %v4538
      %v4767 = vpop.f32.mrf.mxu0
      %v4768 = vadd.f32 %v4589, %v4767
      %v4769 = vpop.f32.mrf.mxu0
      %4770 = vmatprep.mubr.f32.mxu0 %v4603
      %4771 = vmatmul.mubr.f32.gmra.mxu0 %v4539
      %v4772 = vpop.f32.mrf.mxu0
      %v4773 = vadd.f32 %v4589, %v4772
      %v4774 = vpop.f32.mrf.mxu0
      %4775 = vmatprep.mubr.f32.mxu0 %v4606
      %4776 = vmatmul.mubr.f32.gmra.mxu0 %v4540
      %v4777 = vpop.f32.mrf.mxu0
      %v4778 = vadd.f32 %v4589, %v4777
      %v4779 = vpop.f32.mrf.mxu0
      %4780 = vmatprep.mubr.f32.mxu0 %v4609
      %4781 = vmatmul.mubr.f32.gmra.mxu0 %v4541
      %v4782 = vpop.f32.mrf.mxu0
      %v4783 = vadd.f32 %v4589, %v4782
      %v4784 = vpop.f32.mrf.mxu0
      %4785 = vmatprep.mubr.f32.mxu0 %v4612
      %4786 = vmatmul.mubr.f32.gmra.mxu0 %v4542
      %v4787 = vpop.f32.mrf.mxu0
      %v4788 = vadd.f32 %v4589, %v4787
      %v4789 = vpop.f32.mrf.mxu0
      %4790 = vmatprep.mubr.f32.mxu0 %v4615
      %4791 = vmatmul.mubr.f32.gmra.mxu0 %v4543
      %v4792 = vpop.f32.mrf.mxu0
      %v4793 = vadd.f32 %v4589, %v4792
      %v4794 = vpop.f32.mrf.mxu0
      %4795 = vmatprep.mubr.f32.mxu0 %v4618
      %4796 = vmatmul.mubr.f32.gmra.mxu0 %v4544
      %v4797 = vpop.f32.mrf.mxu0
      %v4798 = vadd.f32 %v4589, %v4797
      %v4799 = vpop.f32.mrf.mxu0
      %4800 = vmatprep.mubr.f32.mxu0 %v4621
      %4801 = vmatmul.mubr.f32.gmra.mxu0 %v4545
      %v4802 = vpop.f32.mrf.mxu0
      %v4803 = vadd.f32 %v4589, %v4802
      %v4804 = vpop.f32.mrf.mxu0
      %4805 = vmatprep.mubr.f32.mxu0 %v4624
      %4806 = vmatmul.mubr.f32.gmra.mxu0 %v4546
      %v4807 = vpop.f32.mrf.mxu0
      %v4808 = vadd.f32 %v4589, %v4807
      %v4809 = vpop.f32.mrf.mxu0
      %4810 = vmatprep.mubr.f32.mxu0 %v4627
      %4811 = vmatmul.mubr.f32.gmra.mxu0 %v4547
      %v4812 = vpop.f32.mrf.mxu0
      %v4813 = vadd.f32 %v4589, %v4812
      %v4814 = vpop.f32.mrf.mxu0
      %4815 = vmatprep.mubr.f32.mxu0 %v4630
      %4816 = vmatmul.mubr.f32.gmra.mxu0 %v4548
      %v4817 = vpop.f32.mrf.mxu0
      %v4818 = vadd.f32 %v4589, %v4817
      %v4819 = vpop.f32.mrf.mxu0
      %4820 = vmatprep.mubr.f32.mxu0 %v4633
      %4821 = vmatmul.mubr.f32.gmra.mxu0 %v4549
      %v4822 = vpop.f32.mrf.mxu0
      %v4823 = vadd.f32 %v4589, %v4822
      %v4824 = vpop.f32.mrf.mxu0
      %4825 = vmatprep.mubr.f32.mxu0 %v4636
      %4826 = vmatmul.mubr.f32.gmra.mxu0 %v4550
      %v4827 = vpop.f32.mrf.mxu0
      %v4828 = vadd.f32 %v4589, %v4827
      %v4829 = vpop.f32.mrf.mxu0
      %4830 = vmatprep.mubr.f32.mxu0 %v4639
      %4831 = vmatmul.mubr.f32.gmra.mxu0 %v4551
      %v4832 = vpop.f32.mrf.mxu0
      %v4833 = vadd.f32 %v4589, %v4832
      %v4834 = vpop.f32.mrf.mxu0
      %4835 = vmatprep.mubr.f32.mxu0 %v4642
      %4836 = vmatmul.mubr.f32.gmra.mxu0 %v4552
      %v4837 = vpop.f32.mrf.mxu0
      %v4838 = vadd.f32 %v4589, %v4837
      %v4839 = vpop.f32.mrf.mxu0
      %4840 = vmatprep.mubr.f32.mxu0 %v4645
      %4841 = vmatmul.mubr.f32.gmra.mxu0 %v4553
      %v4842 = vpop.f32.mrf.mxu0
      %v4843 = vadd.f32 %v4589, %v4842
      %v4844 = vpop.f32.mrf.mxu0
      %4845 = vmatprep.mubr.f32.mxu0 %v4648
      %4846 = vmatmul.mubr.f32.gmra.mxu0 %v4554
      %v4847 = vpop.f32.mrf.mxu0
      %v4848 = vadd.f32 %v4589, %v4847
      %v4849 = vpop.f32.mrf.mxu0
      %4850 = vmatprep.mubr.f32.mxu0 %v4651
      %4851 = vmatmul.mubr.f32.gmra.mxu0 %v4555
      %v4852 = vpop.f32.mrf.mxu0
      %v4853 = vadd.f32 %v4589, %v4852
      %v4854 = vpop.f32.mrf.mxu0
      %4855 = vmatprep.mubr.f32.mxu0 %v4654
      %4856 = vmatmul.mubr.f32.gmra.mxu0 %v4556
      %v4857 = vpop.f32.mrf.mxu0
      %v4858 = vadd.f32 %v4589, %v4857
      %v4859 = vpop.f32.mrf.mxu0
      %4860 = vmatprep.mubr.f32.mxu0 %v4657
      %4861 = vmatmul.mubr.f32.gmra.mxu0 %v4557
      %v4862 = vpop.f32.mrf.mxu0
      %v4863 = vadd.f32 %v4589, %v4862
      %v4864 = vpop.f32.mrf.mxu0
      %4865 = vmatprep.mubr.f32.mxu0 %v4660
      %4866 = vmatmul.mubr.f32.gmra.mxu0 %v4558
      %v4867 = vpop.f32.mrf.mxu0
      %v4868 = vadd.f32 %v4589, %v4867
      %v4869 = vpop.f32.mrf.mxu0
      %4870 = vmatprep.mubr.f32.mxu0 %v4663
      %4871 = vmatmul.mubr.f32.gmra.mxu0 %v4559
      %v4872 = vpop.f32.mrf.mxu0
      %v4873 = vadd.f32 %v4589, %v4872
      %v4874 = vpop.f32.mrf.mxu0
      %4875 = vmatprep.mubr.f32.mxu0 %v4666
      %4876 = vmatmul.mubr.f32.gmra.mxu0 %v4560
      %v4877 = vpop.f32.mrf.mxu0
      %v4878 = vadd.f32 %v4589, %v4877
      %v4879 = vpop.f32.mrf.mxu0
      %4880 = vmatprep.mubr.f32.mxu0 %v4669
      %4881 = vmatmul.mubr.f32.gmra.mxu0 %v4561
      %v4882 = vpop.f32.mrf.mxu0
      %v4883 = vadd.f32 %v4589, %v4882
      %v4884 = vpop.f32.mrf.mxu0
      %4885 = vmatprep.mubr.f32.mxu0 %v4672
      %4886 = vmatmul.mubr.f32.gmra.mxu0 %v4562
      %v4887 = vpop.f32.mrf.mxu0
      %v4888 = vadd.f32 %v4589, %v4887
      %v4889 = vpop.f32.mrf.mxu0
      %4890 = vmatprep.mubr.f32.mxu0 %v4675
      %4891 = vmatmul.mubr.f32.gmra.mxu0 %v4563
      %v4892 = vpop.f32.mrf.mxu0
      %v4893 = vadd.f32 %v4589, %v4892
      %v4894 = vpop.f32.mrf.mxu0
      %4895 = vmatprep.mubr.f32.mxu0 %v4678
      %4896 = vmatmul.mubr.f32.gmra.mxu0 %v4564
      %v4897 = vpop.f32.mrf.mxu0
      %v4898 = vadd.f32 %v4589, %v4897
      %v4899 = vpop.f32.mrf.mxu0
      %4900 = vmatprep.mubr.f32.mxu0 %v4681
      %4901 = vmatmul.mubr.f32.gmra.mxu0 %v4565
      %v4902 = vpop.f32.mrf.mxu0
      %v4903 = vadd.f32 %v4589, %v4902
      %v4904 = vpop.f32.mrf.mxu0
      %4905 = vmatprep.mubr.f32.mxu0 %v4684
      %4906 = vmatmul.mubr.f32.gmra.mxu0 %v4566
      %v4907 = vpop.f32.mrf.mxu0
      %v4908 = vadd.f32 %v4589, %v4907
      %v4909 = vpop.f32.mrf.mxu0
      %4910 = vdwg.mxu0
      %v4911 = vmax.f32 %v4753, 0.0
      %v4912 = vmax.f32 %v4758, 0.0
      %v4913 = vmax.f32 %v4763, 0.0
      %v4914 = vmax.f32 %v4768, 0.0
      %v4915 = vmax.f32 %v4773, 0.0
      %v4916 = vmax.f32 %v4778, 0.0
      %v4917 = vmax.f32 %v4783, 0.0
      %v4918 = vmax.f32 %v4788, 0.0
      %v4919 = vmax.f32 %v4793, 0.0
      %v4920 = vmax.f32 %v4798, 0.0
      %v4921 = vmax.f32 %v4803, 0.0
      %v4922 = vmax.f32 %v4808, 0.0
      %v4923 = vmax.f32 %v4813, 0.0
      %v4924 = vmax.f32 %v4818, 0.0
      %v4925 = vmax.f32 %v4823, 0.0
      %v4926 = vmax.f32 %v4828, 0.0
      %v4927 = vmax.f32 %v4833, 0.0
      %v4928 = vmax.f32 %v4838, 0.0
      %v4929 = vmax.f32 %v4843, 0.0
      %v4930 = vmax.f32 %v4848, 0.0
      %v4931 = vmax.f32 %v4853, 0.0
      %v4932 = vmax.f32 %v4858, 0.0
      %v4933 = vmax.f32 %v4863, 0.0
      %v4934 = vmax.f32 %v4868, 0.0
      %v4935 = vmax.f32 %v4873, 0.0
      %v4936 = vmax.f32 %v4878, 0.0
      %v4937 = vmax.f32 %v4883, 0.0
      %v4938 = vmax.f32 %v4888, 0.0
      %v4939 = vmax.f32 %v4893, 0.0
      %v4940 = vmax.f32 %v4898, 0.0
      %v4941 = vmax.f32 %v4903, 0.0
      %v4942 = vmax.f32 %v4908, 0.0
      %4975 = vrot.lane.b32.xlu0 %v4911, 16
      %v4976 = vpop.permute.xlu0 %4975
      %4977 = vrot.lane.b32.xlu0 %v4912, 16
      %v4978 = vpop.permute.xlu0 %4977
      %4979 = vrot.lane.b32.xlu0 %v4913, 16
      %v4980 = vpop.permute.xlu0 %4979
      %4981 = vrot.lane.b32.xlu0 %v4914, 16
      %v4982 = vpop.permute.xlu0 %4981
      %4983 = vrot.lane.b32.xlu0 %v4915, 16
      %v4984 = vpop.permute.xlu0 %4983
      %4985 = vrot.lane.b32.xlu0 %v4916, 16
      %v4986 = vpop.permute.xlu0 %4985
      %4987 = vrot.lane.b32.xlu0 %v4917, 16
      %v4988 = vpop.permute.xlu0 %4987
      %4989 = vrot.lane.b32.xlu0 %v4918, 16
      %v4990 = vpop.permute.xlu0 %4989
      %4991 = vrot.lane.b32.xlu0 %v4919, 16
      %v4992 = vpop.permute.xlu0 %4991
      %4993 = vrot.lane.b32.xlu0 %v4920, 16
      %v4994 = vpop.permute.xlu0 %4993
      %4995 = vrot.lane.b32.xlu0 %v4921, 16
      %v4996 = vpop.permute.xlu0 %4995
      %4997 = vrot.lane.b32.xlu0 %v4922, 16
      %v4998 = vpop.permute.xlu0 %4997
      %4999 = vrot.lane.b32.xlu0 %v4923, 16
      %v5000 = vpop.permute.xlu0 %4999
      %5001 = vrot.lane.b32.xlu0 %v4924, 16
      %v5002 = vpop.permute.xlu0 %5001
      %5003 = vrot.lane.b32.xlu0 %v4925, 16
      %v5004 = vpop.permute.xlu0 %5003
      %5005 = vrot.lane.b32.xlu0 %v4926, 16
      %v5006 = vpop.permute.xlu0 %5005
      %5007 = vrot.lane.b32.xlu0 %v4927, 16
      %v5008 = vpop.permute.xlu0 %5007
      %5009 = vrot.lane.b32.xlu0 %v4928, 16
      %v5010 = vpop.permute.xlu0 %5009
      %5011 = vrot.lane.b32.xlu0 %v4929, 16
      %v5012 = vpop.permute.xlu0 %5011
      %5013 = vrot.lane.b32.xlu0 %v4930, 16
      %v5014 = vpop.permute.xlu0 %5013
      %5015 = vrot.lane.b32.xlu0 %v4931, 16
      %v5016 = vpop.permute.xlu0 %5015
      %5017 = vrot.lane.b32.xlu0 %v4932, 16
      %v5018 = vpop.permute.xlu0 %5017
      %5019 = vrot.lane.b32.xlu0 %v4933, 16
      %v5020 = vpop.permute.xlu0 %5019
      %5021 = vrot.lane.b32.xlu0 %v4934, 16
      %v5022 = vpop.permute.xlu0 %5021
      %5023 = vrot.lane.b32.xlu0 %v4935, 16
      %v5024 = vpop.permute.xlu0 %5023
      %5025 = vrot.lane.b32.xlu0 %v4936, 16
      %v5026 = vpop.permute.xlu0 %5025
      %5027 = vrot.lane.b32.xlu0 %v4937, 16
      %v5028 = vpop.permute.xlu0 %5027
      %5029 = vrot.lane.b32.xlu0 %v4938, 16
      %v5030 = vpop.permute.xlu0 %5029
      %5031 = vrot.lane.b32.xlu0 %v4939, 16
      %v5032 = vpop.permute.xlu0 %5031
      %5033 = vrot.lane.b32.xlu0 %v4940, 16
      %v5034 = vpop.permute.xlu0 %5033
      %5035 = vrot.lane.b32.xlu0 %v4941, 16
      %v5036 = vpop.permute.xlu0 %5035
      %5037 = vrot.lane.b32.xlu0 %v4942, 16
      %v5038 = vpop.permute.xlu0 %5037
      %vm5071 = vcmask 195712
      %5072 = vst.msk [vmem:[%s303 + $0x1] sm:$0xff] %vm5071, %v4976
      %5073 = vst.msk [vmem:[%s303 + $0x9] sm:$0xff] %vm5071, %v4978
      %5074 = vst.msk [vmem:[%s303 + $0x19] sm:$0xff] %vm5071, %v4980
      %5075 = vst.msk [vmem:[%s303 + $0x21] sm:$0xff] %vm5071, %v4982
      %5076 = vst.msk [vmem:[%s303 + $0x31] sm:$0xff] %vm5071, %v4984
      %5077 = vst.msk [vmem:[%s303 + $0x39] sm:$0xff] %vm5071, %v4986
      %5078 = vst.msk [vmem:[%s303 + $0x49] sm:$0xff] %vm5071, %v4988
      %5079 = vst.msk [vmem:[%s303 + $0x51] sm:$0xff] %vm5071, %v4990
      %5080 = vst.msk [vmem:[%s303 + $0x61] sm:$0xff] %vm5071, %v4992
      %5081 = vst.msk [vmem:[%s303 + $0x69] sm:$0xff] %vm5071, %v4994
      %5082 = vst.msk [vmem:[%s303 + $0x79] sm:$0xff] %vm5071, %v4996
      %5083 = vst.msk [vmem:[%s303 + $0x81] sm:$0xff] %vm5071, %v4998
      %5084 = vst.msk [vmem:[%s303 + $0x91] sm:$0xff] %vm5071, %v5000
      %5085 = vst.msk [vmem:[%s303 + $0x99] sm:$0xff] %vm5071, %v5002
      %5086 = vst.msk [vmem:[%s303 + $0xa9] sm:$0xff] %vm5071, %v5004
      %5087 = vst.msk [vmem:[%s303 + $0xb1] sm:$0xff] %vm5071, %v5006
      %5088 = vst.msk [vmem:[%s303 + $0xc1] sm:$0xff] %vm5071, %v5008
      %5089 = vst.msk [vmem:[%s303 + $0xc9] sm:$0xff] %vm5071, %v5010
      %5090 = vst.msk [vmem:[%s303 + $0xd9] sm:$0xff] %vm5071, %v5012
      %5091 = vst.msk [vmem:[%s303 + $0xe1] sm:$0xff] %vm5071, %v5014
      %5092 = vst.msk [vmem:[%s303 + $0xf1] sm:$0xff] %vm5071, %v5016
      %5093 = vst.msk [vmem:[%s303 + $0xf9] sm:$0xff] %vm5071, %v5018
      %5094 = vst.msk [vmem:[%s303 + $0x109] sm:$0xff] %vm5071, %v5020
      %5095 = vst.msk [vmem:[%s303 + $0x111] sm:$0xff] %vm5071, %v5022
      %5096 = vst.msk [vmem:[%s303 + $0x121] sm:$0xff] %vm5071, %v5024
      %5097 = vst.msk [vmem:[%s303 + $0x129] sm:$0xff] %vm5071, %v5026
      %5098 = vst.msk [vmem:[%s303 + $0x139] sm:$0xff] %vm5071, %v5028
      %5099 = vst.msk [vmem:[%s303 + $0x141] sm:$0xff] %vm5071, %v5030
      %5100 = vst.msk [vmem:[%s303 + $0x151] sm:$0xff] %vm5071, %v5032
      %5101 = vst.msk [vmem:[%s303 + $0x159] sm:$0xff] %vm5071, %v5034
      %5102 = vst.msk [vmem:[%s303 + $0x169] sm:$0xff] %vm5071, %v5036
      %5103 = vst.msk [vmem:[%s303 + $0x171] sm:$0xff] %vm5071, %v5038
      %v5104 = vld [vmem:[%s3 + $0x10] sm:$0xff]
      %v5105 = vsel %vm304, %v4911, 0
      %v5107 = vsel %vm304, %v4912, 0
      %v5109 = vsel %vm304, %v4913, 0
      %v5111 = vsel %vm304, %v4914, 0
      %v5113 = vsel %vm304, %v4915, 0
      %v5115 = vsel %vm304, %v4916, 0
      %v5117 = vsel %vm304, %v4917, 0
      %v5119 = vsel %vm304, %v4918, 0
      %v5121 = vsel %vm304, %v4919, 0
      %v5123 = vsel %vm304, %v4920, 0
      %v5125 = vsel %vm304, %v4921, 0
      %v5127 = vsel %vm304, %v4922, 0
      %v5129 = vsel %vm304, %v4923, 0
      %v5131 = vsel %vm304, %v4924, 0
      %v5133 = vsel %vm304, %v4925, 0
      %v5135 = vsel %vm304, %v4926, 0
      %v5137 = vsel %vm304, %v4927, 0
      %v5139 = vsel %vm304, %v4928, 0
      %v5141 = vsel %vm304, %v4929, 0
      %v5143 = vsel %vm304, %v4930, 0
      %v5145 = vsel %vm304, %v4931, 0
      %v5147 = vsel %vm304, %v4932, 0
      %v5149 = vsel %vm304, %v4933, 0
      %v5151 = vsel %vm304, %v4934, 0
      %v5153 = vsel %vm304, %v4935, 0
      %v5155 = vsel %vm304, %v4936, 0
      %v5157 = vsel %vm304, %v4937, 0
      %v5159 = vsel %vm304, %v4938, 0
      %v5161 = vsel %vm304, %v4939, 0
      %v5163 = vsel %vm304, %v4940, 0
      %v5165 = vsel %vm304, %v4941, 0
      %v5167 = vsel %vm304, %v4942, 0
      %5169 = vmatprep.subr.mxu0 0.0
      %5170 = vmatpush1.msra.mxu0 0.0
      %5171 = vmatprep.subr.mxu0 0.0
      %5172 = vmatpush1.msra.mxu0 0.0
      %5173 = vmatprep.subr.mxu0 0.0
      %5174 = vmatpush1.msra.mxu0 0.0
      %5175 = vmatprep.subr.mxu0 0.0
      %5176 = vmatpush1.msra.mxu0 0.0
      %5177 = vmatprep.subr.mxu0 0.0
      %5178 = vmatpush1.msra.mxu0 0.0
      %5179 = vmatprep.subr.mxu0 0.0
      %5180 = vmatpush1.msra.mxu0 0.0
      %5181 = vmatprep.subr.mxu0 0.0
      %5182 = vmatpush1.msra.mxu0 0.0
      %5183 = vmatprep.subr.mxu0 0.0
      %5184 = vmatpush1.msra.mxu0 0.0
      %5185 = vmatprep.subr.mxu0 0.0
      %5186 = vmatpush1.msra.mxu0 0.0
      %5187 = vmatprep.subr.mxu0 0.0
      %5188 = vmatpush1.msra.mxu0 0.0
      %5189 = vmatprep.subr.mxu0 0.0
      %5190 = vmatpush1.msra.mxu0 0.0
      %5191 = vmatprep.subr.mxu0 0.0
      %5192 = vmatpush1.msra.mxu0 0.0
      %5193 = vmatprep.subr.mxu0 0.0
      %5194 = vmatpush1.msra.mxu0 0.0
      %5195 = vmatprep.subr.mxu0 0.0
      %5196 = vmatpush1.msra.mxu0 0.0
      %5197 = vmatprep.subr.mxu0 0.0
      %5198 = vmatpush1.msra.mxu0 0.0
      %5199 = vmatprep.subr.mxu0 0.0
      %5200 = vmatpush1.msra.mxu0 %v5104
      %5201 = vmatprep.subr.mxu0 0.0
      %5202 = vmatpush2.msra.mxu0 0.0
      %5203 = vmatprep.subr.mxu0 0.0
      %5204 = vmatpush2.msra.mxu0 0.0
      %5205 = vmatprep.subr.mxu0 0.0
      %5206 = vmatpush2.msra.mxu0 0.0
      %5207 = vmatprep.subr.mxu0 0.0
      %5208 = vmatpush2.msra.mxu0 0.0
      %5209 = vmatprep.subr.mxu0 0.0
      %5210 = vmatpush2.msra.mxu0 0.0
      %5211 = vmatprep.subr.mxu0 0.0
      %5212 = vmatpush2.msra.mxu0 0.0
      %5213 = vmatprep.subr.mxu0 0.0
      %5214 = vmatpush2.msra.mxu0 0.0
      %5215 = vmatprep.subr.mxu0 0.0
      %5216 = vmatpush2.msra.mxu0 0.0
      %5217 = vmatprep.subr.mxu0 0.0
      %5218 = vmatpush2.msra.mxu0 0.0
      %5219 = vmatprep.subr.mxu0 0.0
      %5220 = vmatpush2.msra.mxu0 0.0
      %5221 = vmatprep.subr.mxu0 0.0
      %5222 = vmatpush2.msra.mxu0 0.0
      %5223 = vmatprep.subr.mxu0 0.0
      %5224 = vmatpush2.msra.mxu0 0.0
      %5225 = vmatprep.subr.mxu0 0.0
      %5226 = vmatpush2.msra.mxu0 0.0
      %5227 = vmatprep.subr.mxu0 0.0
      %5228 = vmatpush2.msra.mxu0 0.0
      %5229 = vmatprep.subr.mxu0 0.0
      %5230 = vmatpush2.msra.mxu0 0.0
      %5231 = vmatprep.subr.mxu0 0.0
      %5232 = vmatpush2.msra.mxu0 0.0
      %5233 = vmatprep.mubr.f32.mxu0 0.0
      %5234 = vmatmul.mubr.f32.gmra.mxu0 %v5105
      %v5235 = vpop.f32.mrf.mxu0
      %v5236 = vadd.f32 0.0, %v5235
      %v5237 = vpop.f32.mrf.mxu0
      %5238 = vmatprep.mubr.f32.mxu0 0.0
      %5239 = vmatmul.mubr.f32.gmra.mxu0 %v5107
      %v5240 = vpop.f32.mrf.mxu0
      %v5241 = vadd.f32 0.0, %v5240
      %v5242 = vpop.f32.mrf.mxu0
      %5243 = vmatprep.mubr.f32.mxu0 0.0
      %5244 = vmatmul.mubr.f32.gmra.mxu0 %v5109
      %v5245 = vpop.f32.mrf.mxu0
      %v5246 = vadd.f32 0.0, %v5245
      %v5247 = vpop.f32.mrf.mxu0
      %5248 = vmatprep.mubr.f32.mxu0 0.0
      %5249 = vmatmul.mubr.f32.gmra.mxu0 %v5111
      %v5250 = vpop.f32.mrf.mxu0
      %v5251 = vadd.f32 0.0, %v5250
      %v5252 = vpop.f32.mrf.mxu0
      %5253 = vmatprep.mubr.f32.mxu0 0.0
      %5254 = vmatmul.mubr.f32.gmra.mxu0 %v5113
      %v5255 = vpop.f32.mrf.mxu0
      %v5256 = vadd.f32 0.0, %v5255
      %v5257 = vpop.f32.mrf.mxu0
      %5258 = vmatprep.mubr.f32.mxu0 0.0
      %5259 = vmatmul.mubr.f32.gmra.mxu0 %v5115
      %v5260 = vpop.f32.mrf.mxu0
      %v5261 = vadd.f32 0.0, %v5260
      %v5262 = vpop.f32.mrf.mxu0
      %5263 = vmatprep.mubr.f32.mxu0 0.0
      %5264 = vmatmul.mubr.f32.gmra.mxu0 %v5117
      %v5265 = vpop.f32.mrf.mxu0
      %v5266 = vadd.f32 0.0, %v5265
      %v5267 = vpop.f32.mrf.mxu0
      %5268 = vmatprep.mubr.f32.mxu0 0.0
      %5269 = vmatmul.mubr.f32.gmra.mxu0 %v5119
      %v5270 = vpop.f32.mrf.mxu0
      %v5271 = vadd.f32 0.0, %v5270
      %v5272 = vpop.f32.mrf.mxu0
      %5273 = vmatprep.mubr.f32.mxu0 0.0
      %5274 = vmatmul.mubr.f32.gmra.mxu0 %v5121
      %v5275 = vpop.f32.mrf.mxu0
      %v5276 = vadd.f32 0.0, %v5275
      %v5277 = vpop.f32.mrf.mxu0
      %5278 = vmatprep.mubr.f32.mxu0 0.0
      %5279 = vmatmul.mubr.f32.gmra.mxu0 %v5123
      %v5280 = vpop.f32.mrf.mxu0
      %v5281 = vadd.f32 0.0, %v5280
      %v5282 = vpop.f32.mrf.mxu0
      %5283 = vmatprep.mubr.f32.mxu0 0.0
      %5284 = vmatmul.mubr.f32.gmra.mxu0 %v5125
      %v5285 = vpop.f32.mrf.mxu0
      %v5286 = vadd.f32 0.0, %v5285
      %v5287 = vpop.f32.mrf.mxu0
      %5288 = vmatprep.mubr.f32.mxu0 0.0
      %5289 = vmatmul.mubr.f32.gmra.mxu0 %v5127
      %v5290 = vpop.f32.mrf.mxu0
      %v5291 = vadd.f32 0.0, %v5290
      %v5292 = vpop.f32.mrf.mxu0
      %5293 = vmatprep.mubr.f32.mxu0 0.0
      %5294 = vmatmul.mubr.f32.gmra.mxu0 %v5129
      %v5295 = vpop.f32.mrf.mxu0
      %v5296 = vadd.f32 0.0, %v5295
      %v5297 = vpop.f32.mrf.mxu0
      %5298 = vmatprep.mubr.f32.mxu0 0.0
      %5299 = vmatmul.mubr.f32.gmra.mxu0 %v5131
      %v5300 = vpop.f32.mrf.mxu0
      %v5301 = vadd.f32 0.0, %v5300
      %v5302 = vpop.f32.mrf.mxu0
      %5303 = vmatprep.mubr.f32.mxu0 0.0
      %5304 = vmatmul.mubr.f32.gmra.mxu0 %v5133
      %v5305 = vpop.f32.mrf.mxu0
      %v5306 = vadd.f32 0.0, %v5305
      %v5307 = vpop.f32.mrf.mxu0
      %5308 = vmatprep.mubr.f32.mxu0 0.0
      %5309 = vmatmul.mubr.f32.gmra.mxu0 %v5135
      %v5310 = vpop.f32.mrf.mxu0
      %v5311 = vadd.f32 0.0, %v5310
      %v5312 = vpop.f32.mrf.mxu0
      %5313 = vmatprep.mubr.f32.mxu0 0.0
      %5314 = vmatmul.mubr.f32.gmra.mxu0 %v5137
      %v5315 = vpop.f32.mrf.mxu0
      %v5316 = vadd.f32 0.0, %v5315
      %v5317 = vpop.f32.mrf.mxu0
      %5318 = vmatprep.mubr.f32.mxu0 0.0
      %5319 = vmatmul.mubr.f32.gmra.mxu0 %v5139
      %v5320 = vpop.f32.mrf.mxu0
      %v5321 = vadd.f32 0.0, %v5320
      %v5322 = vpop.f32.mrf.mxu0
      %5323 = vmatprep.mubr.f32.mxu0 0.0
      %5324 = vmatmul.mubr.f32.gmra.mxu0 %v5141
      %v5325 = vpop.f32.mrf.mxu0
      %v5326 = vadd.f32 0.0, %v5325
      %v5327 = vpop.f32.mrf.mxu0
      %5328 = vmatprep.mubr.f32.mxu0 0.0
      %5329 = vmatmul.mubr.f32.gmra.mxu0 %v5143
      %v5330 = vpop.f32.mrf.mxu0
      %v5331 = vadd.f32 0.0, %v5330
      %v5332 = vpop.f32.mrf.mxu0
      %5333 = vmatprep.mubr.f32.mxu0 0.0
      %5334 = vmatmul.mubr.f32.gmra.mxu0 %v5145
      %v5335 = vpop.f32.mrf.mxu0
      %v5336 = vadd.f32 0.0, %v5335
      %v5337 = vpop.f32.mrf.mxu0
      %5338 = vmatprep.mubr.f32.mxu0 0.0
      %5339 = vmatmul.mubr.f32.gmra.mxu0 %v5147
      %v5340 = vpop.f32.mrf.mxu0
      %v5341 = vadd.f32 0.0, %v5340
      %v5342 = vpop.f32.mrf.mxu0
      %5343 = vmatprep.mubr.f32.mxu0 0.0
      %5344 = vmatmul.mubr.f32.gmra.mxu0 %v5149
      %v5345 = vpop.f32.mrf.mxu0
      %v5346 = vadd.f32 0.0, %v5345
      %v5347 = vpop.f32.mrf.mxu0
      %5348 = vmatprep.mubr.f32.mxu0 0.0
      %5349 = vmatmul.mubr.f32.gmra.mxu0 %v5151
      %v5350 = vpop.f32.mrf.mxu0
      %v5351 = vadd.f32 0.0, %v5350
      %v5352 = vpop.f32.mrf.mxu0
      %5353 = vmatprep.mubr.f32.mxu0 0.0
      %5354 = vmatmul.mubr.f32.gmra.mxu0 %v5153
      %v5355 = vpop.f32.mrf.mxu0
      %v5356 = vadd.f32 0.0, %v5355
      %v5357 = vpop.f32.mrf.mxu0
      %5358 = vmatprep.mubr.f32.mxu0 0.0
      %5359 = vmatmul.mubr.f32.gmra.mxu0 %v5155
      %v5360 = vpop.f32.mrf.mxu0
      %v5361 = vadd.f32 0.0, %v5360
      %v5362 = vpop.f32.mrf.mxu0
      %5363 = vmatprep.mubr.f32.mxu0 0.0
      %5364 = vmatmul.mubr.f32.gmra.mxu0 %v5157
      %v5365 = vpop.f32.mrf.mxu0
      %v5366 = vadd.f32 0.0, %v5365
      %v5367 = vpop.f32.mrf.mxu0
      %5368 = vmatprep.mubr.f32.mxu0 0.0
      %5369 = vmatmul.mubr.f32.gmra.mxu0 %v5159
      %v5370 = vpop.f32.mrf.mxu0
      %v5371 = vadd.f32 0.0, %v5370
      %v5372 = vpop.f32.mrf.mxu0
      %5373 = vmatprep.mubr.f32.mxu0 0.0
      %5374 = vmatmul.mubr.f32.gmra.mxu0 %v5161
      %v5375 = vpop.f32.mrf.mxu0
      %v5376 = vadd.f32 0.0, %v5375
      %v5377 = vpop.f32.mrf.mxu0
      %5378 = vmatprep.mubr.f32.mxu0 0.0
      %5379 = vmatmul.mubr.f32.gmra.mxu0 %v5163
      %v5380 = vpop.f32.mrf.mxu0
      %v5381 = vadd.f32 0.0, %v5380
      %v5382 = vpop.f32.mrf.mxu0
      %5383 = vmatprep.mubr.f32.mxu0 0.0
      %5384 = vmatmul.mubr.f32.gmra.mxu0 %v5165
      %v5385 = vpop.f32.mrf.mxu0
      %v5386 = vadd.f32 0.0, %v5385
      %v5387 = vpop.f32.mrf.mxu0
      %5388 = vmatprep.mubr.f32.mxu0 0.0
      %5389 = vmatmul.mubr.f32.gmra.mxu0 %v5167
      %v5390 = vpop.f32.mrf.mxu0
      %v5391 = vadd.f32 0.0, %v5390
      %v5392 = vpop.f32.mrf.mxu0
      %5393 = vdwg.mxu0
      %v5394 = vadd.f32 %v3124, %v5236
      %v5395 = vadd.f32 %v3125, %v5241
      %v5396 = vadd.f32 %v3126, %v5246
      %v5397 = vadd.f32 %v3127, %v5251
      %v5398 = vadd.f32 %v3128, %v5256
      %v5399 = vadd.f32 %v3129, %v5261
      %v5400 = vadd.f32 %v3130, %v5266
      %v5401 = vadd.f32 %v3131, %v5271
      %v5402 = vadd.f32 %v3132, %v5276
      %v5403 = vadd.f32 %v3133, %v5281
      %v5404 = vadd.f32 %v3134, %v5286
      %v5405 = vadd.f32 %v3135, %v5291
      %v5406 = vadd.f32 %v3136, %v5296
      %v5407 = vadd.f32 %v3137, %v5301
      %v5408 = vadd.f32 %v3138, %v5306
      %v5409 = vadd.f32 %v3139, %v5311
      %v5410 = vadd.f32 %v3140, %v5316
      %v5411 = vadd.f32 %v3141, %v5321
      %v5412 = vadd.f32 %v3142, %v5326
      %v5413 = vadd.f32 %v3143, %v5331
      %v5414 = vadd.f32 %v3144, %v5336
      %v5415 = vadd.f32 %v3145, %v5341
      %v5416 = vadd.f32 %v3146, %v5346
      %v5417 = vadd.f32 %v3147, %v5351
      %v5418 = vadd.f32 %v3148, %v5356
      %v5419 = vadd.f32 %v3149, %v5361
      %v5420 = vadd.f32 %v3150, %v5366
      %v5421 = vadd.f32 %v3151, %v5371
      %v5422 = vadd.f32 %v3152, %v5376
      %v5423 = vadd.f32 %v3153, %v5381
      %v5424 = vadd.f32 %v3154, %v5386
      %v5425 = vadd.f32 %v3155, %v5391
      %v5426 = vld [vmem:[#allocation2] sm:$0xff]
      %v5427 = vld [vmem:[#allocation2 + $0x8] sm:$0xff]
      %v5428 = vld [vmem:[#allocation2 + $0x18] sm:$0xff]
      %v5429 = vld [vmem:[#allocation2 + $0x20] sm:$0xff]
      %v5430 = vld [vmem:[#allocation2 + $0x30] sm:$0xff]
      %v5431 = vld [vmem:[#allocation2 + $0x38] sm:$0xff]
      %v5432 = vld [vmem:[#allocation2 + $0x48] sm:$0xff]
      %v5433 = vld [vmem:[#allocation2 + $0x50] sm:$0xff]
      %v5434 = vld [vmem:[#allocation2 + $0x60] sm:$0xff]
      %v5435 = vld [vmem:[#allocation2 + $0x68] sm:$0xff]
      %v5436 = vld [vmem:[#allocation2 + $0x78] sm:$0xff]
      %v5437 = vld [vmem:[#allocation2 + $0x80] sm:$0xff]
      %v5438 = vld [vmem:[#allocation2 + $0x90] sm:$0xff]
      %v5439 = vld [vmem:[#allocation2 + $0x98] sm:$0xff]
      %v5440 = vld [vmem:[#allocation2 + $0xa8] sm:$0xff]
      %v5441 = vld [vmem:[#allocation2 + $0xb0] sm:$0xff]
      %v5442 = vld [vmem:[#allocation2 + $0xc0] sm:$0xff]
      %v5443 = vld [vmem:[#allocation2 + $0xc8] sm:$0xff]
      %v5444 = vld [vmem:[#allocation2 + $0xd8] sm:$0xff]
      %v5445 = vld [vmem:[#allocation2 + $0xe0] sm:$0xff]
      %v5446 = vld [vmem:[#allocation2 + $0xf0] sm:$0xff]
      %v5447 = vld [vmem:[#allocation2 + $0xf8] sm:$0xff]
      %v5448 = vld [vmem:[#allocation2 + $0x108] sm:$0xff]
      %v5449 = vld [vmem:[#allocation2 + $0x110] sm:$0xff]
      %v5450 = vld [vmem:[#allocation2 + $0x120] sm:$0xff]
      %v5451 = vld [vmem:[#allocation2 + $0x128] sm:$0xff]
      %v5452 = vld [vmem:[#allocation2 + $0x138] sm:$0xff]
      %v5453 = vld [vmem:[#allocation2 + $0x140] sm:$0xff]
      %v5454 = vld [vmem:[#allocation2 + $0x150] sm:$0xff]
      %v5455 = vld [vmem:[#allocation2 + $0x158] sm:$0xff]
      %v5456 = vld [vmem:[#allocation2 + $0x168] sm:$0xff]
      %v5457 = vld [vmem:[#allocation2 + $0x170] sm:$0xff]
      %v5458 = vld [vmem:[#allocation2 + $0x1] sm:$0xff]
      %v5459 = vld [vmem:[#allocation2 + $0x9] sm:$0xff]
      %v5460 = vld [vmem:[#allocation2 + $0x19] sm:$0xff]
      %v5461 = vld [vmem:[#allocation2 + $0x21] sm:$0xff]
      %v5462 = vld [vmem:[#allocation2 + $0x31] sm:$0xff]
      %v5463 = vld [vmem:[#allocation2 + $0x39] sm:$0xff]
      %v5464 = vld [vmem:[#allocation2 + $0x49] sm:$0xff]
      %v5465 = vld [vmem:[#allocation2 + $0x51] sm:$0xff]
      %v5466 = vld [vmem:[#allocation2 + $0x61] sm:$0xff]
      %v5467 = vld [vmem:[#allocation2 + $0x69] sm:$0xff]
      %v5468 = vld [vmem:[#allocation2 + $0x79] sm:$0xff]
      %v5469 = vld [vmem:[#allocation2 + $0x81] sm:$0xff]
      %v5470 = vld [vmem:[#allocation2 + $0x91] sm:$0xff]
      %v5471 = vld [vmem:[#allocation2 + $0x99] sm:$0xff]
      %v5472 = vld [vmem:[#allocation2 + $0xa9] sm:$0xff]
      %v5473 = vld [vmem:[#allocation2 + $0xb1] sm:$0xff]
      %v5474 = vld [vmem:[#allocation2 + $0xc1] sm:$0xff]
      %v5475 = vld [vmem:[#allocation2 + $0xc9] sm:$0xff]
      %v5476 = vld [vmem:[#allocation2 + $0xd9] sm:$0xff]
      %v5477 = vld [vmem:[#allocation2 + $0xe1] sm:$0xff]
      %v5478 = vld [vmem:[#allocation2 + $0xf1] sm:$0xff]
      %v5479 = vld [vmem:[#allocation2 + $0xf9] sm:$0xff]
      %v5480 = vld [vmem:[#allocation2 + $0x109] sm:$0xff]
      %v5481 = vld [vmem:[#allocation2 + $0x111] sm:$0xff]
      %v5482 = vld [vmem:[#allocation2 + $0x121] sm:$0xff]
      %v5483 = vld [vmem:[#allocation2 + $0x129] sm:$0xff]
      %v5484 = vld [vmem:[#allocation2 + $0x139] sm:$0xff]
      %v5485 = vld [vmem:[#allocation2 + $0x141] sm:$0xff]
      %v5486 = vld [vmem:[#allocation2 + $0x151] sm:$0xff]
      %v5487 = vld [vmem:[#allocation2 + $0x159] sm:$0xff]
      %v5488 = vld [vmem:[#allocation2 + $0x169] sm:$0xff]
      %v5489 = vld [vmem:[#allocation2 + $0x171] sm:$0xff]
      %v5490 = vld [vmem:[#allocation2 + $0x2] sm:$0xff]
      %v5491 = vld [vmem:[#allocation2 + $0xa] sm:$0xff]
      %v5492 = vld [vmem:[#allocation2 + $0x1a] sm:$0xff]
      %v5493 = vld [vmem:[#allocation2 + $0x22] sm:$0xff]
      %v5494 = vld [vmem:[#allocation2 + $0x32] sm:$0xff]
      %v5495 = vld [vmem:[#allocation2 + $0x3a] sm:$0xff]
      %v5496 = vld [vmem:[#allocation2 + $0x4a] sm:$0xff]
      %v5497 = vld [vmem:[#allocation2 + $0x52] sm:$0xff]
      %v5498 = vld [vmem:[#allocation2 + $0x62] sm:$0xff]
      %v5499 = vld [vmem:[#allocation2 + $0x6a] sm:$0xff]
      %v5500 = vld [vmem:[#allocation2 + $0x7a] sm:$0xff]
      %v5501 = vld [vmem:[#allocation2 + $0x82] sm:$0xff]
      %v5502 = vld [vmem:[#allocation2 + $0x92] sm:$0xff]
      %v5503 = vld [vmem:[#allocation2 + $0x9a] sm:$0xff]
      %v5504 = vld [vmem:[#allocation2 + $0xaa] sm:$0xff]
      %v5505 = vld [vmem:[#allocation2 + $0xb2] sm:$0xff]
      %v5506 = vld [vmem:[#allocation2 + $0xc2] sm:$0xff]
      %v5507 = vld [vmem:[#allocation2 + $0xca] sm:$0xff]
      %v5508 = vld [vmem:[#allocation2 + $0xda] sm:$0xff]
      %v5509 = vld [vmem:[#allocation2 + $0xe2] sm:$0xff]
      %v5510 = vld [vmem:[#allocation2 + $0xf2] sm:$0xff]
      %v5511 = vld [vmem:[#allocation2 + $0xfa] sm:$0xff]
      %v5512 = vld [vmem:[#allocation2 + $0x10a] sm:$0xff]
      %v5513 = vld [vmem:[#allocation2 + $0x112] sm:$0xff]
      %v5514 = vld [vmem:[#allocation2 + $0x122] sm:$0xff]
      %v5515 = vld [vmem:[#allocation2 + $0x12a] sm:$0xff]
      %v5516 = vld [vmem:[#allocation2 + $0x13a] sm:$0xff]
      %v5517 = vld [vmem:[#allocation2 + $0x142] sm:$0xff]
      %v5518 = vld [vmem:[#allocation2 + $0x152] sm:$0xff]
      %v5519 = vld [vmem:[#allocation2 + $0x15a] sm:$0xff]
      %v5520 = vld [vmem:[#allocation2 + $0x16a] sm:$0xff]
      %v5521 = vld [vmem:[#allocation2 + $0x172] sm:$0xff]
      %v5522 = vld [vmem:[%s303] sm:$0xff]
      %v5523 = vld [vmem:[%s303 + $0x8] sm:$0xff]
      %v5524 = vld [vmem:[%s303 + $0x18] sm:$0xff]
      %v5525 = vld [vmem:[%s303 + $0x20] sm:$0xff]
      %v5526 = vld [vmem:[%s303 + $0x30] sm:$0xff]
      %v5527 = vld [vmem:[%s303 + $0x38] sm:$0xff]
      %v5528 = vld [vmem:[%s303 + $0x48] sm:$0xff]
      %v5529 = vld [vmem:[%s303 + $0x50] sm:$0xff]
      %v5530 = vld [vmem:[%s303 + $0x60] sm:$0xff]
      %v5531 = vld [vmem:[%s303 + $0x68] sm:$0xff]
      %v5532 = vld [vmem:[%s303 + $0x78] sm:$0xff]
      %v5533 = vld [vmem:[%s303 + $0x80] sm:$0xff]
      %v5534 = vld [vmem:[%s303 + $0x90] sm:$0xff]
      %v5535 = vld [vmem:[%s303 + $0x98] sm:$0xff]
      %v5536 = vld [vmem:[%s303 + $0xa8] sm:$0xff]
      %v5537 = vld [vmem:[%s303 + $0xb0] sm:$0xff]
      %v5538 = vld [vmem:[%s303 + $0xc0] sm:$0xff]
      %v5539 = vld [vmem:[%s303 + $0xc8] sm:$0xff]
      %v5540 = vld [vmem:[%s303 + $0xd8] sm:$0xff]
      %v5541 = vld [vmem:[%s303 + $0xe0] sm:$0xff]
      %v5542 = vld [vmem:[%s303 + $0xf0] sm:$0xff]
      %v5543 = vld [vmem:[%s303 + $0xf8] sm:$0xff]
      %v5544 = vld [vmem:[%s303 + $0x108] sm:$0xff]
      %v5545 = vld [vmem:[%s303 + $0x110] sm:$0xff]
      %v5546 = vld [vmem:[%s303 + $0x120] sm:$0xff]
      %v5547 = vld [vmem:[%s303 + $0x128] sm:$0xff]
      %v5548 = vld [vmem:[%s303 + $0x138] sm:$0xff]
      %v5549 = vld [vmem:[%s303 + $0x140] sm:$0xff]
      %v5550 = vld [vmem:[%s303 + $0x150] sm:$0xff]
      %v5551 = vld [vmem:[%s303 + $0x158] sm:$0xff]
      %v5552 = vld [vmem:[%s303 + $0x168] sm:$0xff]
      %v5553 = vld [vmem:[%s303 + $0x170] sm:$0xff]
      %v5554 = vld [vmem:[%s303 + $0x1] sm:$0xff]
      %v5555 = vld [vmem:[%s303 + $0x9] sm:$0xff]
      %v5556 = vld [vmem:[%s303 + $0x19] sm:$0xff]
      %v5557 = vld [vmem:[%s303 + $0x21] sm:$0xff]
      %v5558 = vld [vmem:[%s303 + $0x31] sm:$0xff]
      %v5559 = vld [vmem:[%s303 + $0x39] sm:$0xff]
      %v5560 = vld [vmem:[%s303 + $0x49] sm:$0xff]
      %v5561 = vld [vmem:[%s303 + $0x51] sm:$0xff]
      %v5562 = vld [vmem:[%s303 + $0x61] sm:$0xff]
      %v5563 = vld [vmem:[%s303 + $0x69] sm:$0xff]
      %v5564 = vld [vmem:[%s303 + $0x79] sm:$0xff]
      %v5565 = vld [vmem:[%s303 + $0x81] sm:$0xff]
      %v5566 = vld [vmem:[%s303 + $0x91] sm:$0xff]
      %v5567 = vld [vmem:[%s303 + $0x99] sm:$0xff]
      %v5568 = vld [vmem:[%s303 + $0xa9] sm:$0xff]
      %v5569 = vld [vmem:[%s303 + $0xb1] sm:$0xff]
      %v5570 = vld [vmem:[%s303 + $0xc1] sm:$0xff]
      %v5571 = vld [vmem:[%s303 + $0xc9] sm:$0xff]
      %v5572 = vld [vmem:[%s303 + $0xd9] sm:$0xff]
      %v5573 = vld [vmem:[%s303 + $0xe1] sm:$0xff]
      %v5574 = vld [vmem:[%s303 + $0xf1] sm:$0xff]
      %v5575 = vld [vmem:[%s303 + $0xf9] sm:$0xff]
      %v5576 = vld [vmem:[%s303 + $0x109] sm:$0xff]
      %v5577 = vld [vmem:[%s303 + $0x111] sm:$0xff]
      %v5578 = vld [vmem:[%s303 + $0x121] sm:$0xff]
      %v5579 = vld [vmem:[%s303 + $0x129] sm:$0xff]
      %v5580 = vld [vmem:[%s303 + $0x139] sm:$0xff]
      %v5581 = vld [vmem:[%s303 + $0x141] sm:$0xff]
      %v5582 = vld [vmem:[%s303 + $0x151] sm:$0xff]
      %v5583 = vld [vmem:[%s303 + $0x159] sm:$0xff]
      %v5584 = vld [vmem:[%s303 + $0x169] sm:$0xff]
      %v5585 = vld [vmem:[%s303 + $0x171] sm:$0xff]
      %v5586 = vld [vmem:[%s303 + $0x2] sm:$0xff]
      %v5587 = vld [vmem:[%s303 + $0xa] sm:$0xff]
      %v5588 = vld [vmem:[%s303 + $0x1a] sm:$0xff]
      %v5589 = vld [vmem:[%s303 + $0x22] sm:$0xff]
      %v5590 = vld [vmem:[%s303 + $0x32] sm:$0xff]
      %v5591 = vld [vmem:[%s303 + $0x3a] sm:$0xff]
      %v5592 = vld [vmem:[%s303 + $0x4a] sm:$0xff]
      %v5593 = vld [vmem:[%s303 + $0x52] sm:$0xff]
      %v5594 = vld [vmem:[%s303 + $0x62] sm:$0xff]
      %v5595 = vld [vmem:[%s303 + $0x6a] sm:$0xff]
      %v5596 = vld [vmem:[%s303 + $0x7a] sm:$0xff]
      %v5597 = vld [vmem:[%s303 + $0x82] sm:$0xff]
      %v5598 = vld [vmem:[%s303 + $0x92] sm:$0xff]
      %v5599 = vld [vmem:[%s303 + $0x9a] sm:$0xff]
      %v5600 = vld [vmem:[%s303 + $0xaa] sm:$0xff]
      %v5601 = vld [vmem:[%s303 + $0xb2] sm:$0xff]
      %v5602 = vld [vmem:[%s303 + $0xc2] sm:$0xff]
      %v5603 = vld [vmem:[%s303 + $0xca] sm:$0xff]
      %v5604 = vld [vmem:[%s303 + $0xda] sm:$0xff]
      %v5605 = vld [vmem:[%s303 + $0xe2] sm:$0xff]
      %v5606 = vld [vmem:[%s303 + $0xf2] sm:$0xff]
      %v5607 = vld [vmem:[%s303 + $0xfa] sm:$0xff]
      %v5608 = vld [vmem:[%s303 + $0x10a] sm:$0xff]
      %v5609 = vld [vmem:[%s303 + $0x112] sm:$0xff]
      %v5610 = vld [vmem:[%s303 + $0x122] sm:$0xff]
      %v5611 = vld [vmem:[%s303 + $0x12a] sm:$0xff]
      %v5612 = vld [vmem:[%s303 + $0x13a] sm:$0xff]
      %v5613 = vld [vmem:[%s303 + $0x142] sm:$0xff]
      %v5614 = vld [vmem:[%s303 + $0x152] sm:$0xff]
      %v5615 = vld [vmem:[%s303 + $0x15a] sm:$0xff]
      %v5616 = vld [vmem:[%s303 + $0x16a] sm:$0xff]
      %v5617 = vld [vmem:[%s303 + $0x172] sm:$0xff]
      %v5618 = vld [vmem:[%s922] sm:$0xff]
      %v5619 = vld [vmem:[%s922 + $0x8] sm:$0xff]
      %v5620 = vld [vmem:[%s922 + $0x18] sm:$0xff]
      %v5621 = vld [vmem:[%s922 + $0x20] sm:$0xff]
      %v5622 = vld [vmem:[%s922 + $0x30] sm:$0xff]
      %v5623 = vld [vmem:[%s922 + $0x38] sm:$0xff]
      %v5624 = vld [vmem:[%s922 + $0x48] sm:$0xff]
      %v5625 = vld [vmem:[%s922 + $0x50] sm:$0xff]
      %v5626 = vld [vmem:[%s922 + $0x60] sm:$0xff]
      %v5627 = vld [vmem:[%s922 + $0x68] sm:$0xff]
      %v5628 = vld [vmem:[%s922 + $0x78] sm:$0xff]
      %v5629 = vld [vmem:[%s922 + $0x80] sm:$0xff]
      %v5630 = vld [vmem:[%s922 + $0x90] sm:$0xff]
      %v5631 = vld [vmem:[%s922 + $0x98] sm:$0xff]
      %v5632 = vld [vmem:[%s922 + $0xa8] sm:$0xff]
      %v5633 = vld [vmem:[%s922 + $0xb0] sm:$0xff]
      %v5634 = vld [vmem:[%s922 + $0xc0] sm:$0xff]
      %v5635 = vld [vmem:[%s922 + $0xc8] sm:$0xff]
      %v5636 = vld [vmem:[%s922 + $0xd8] sm:$0xff]
      %v5637 = vld [vmem:[%s922 + $0xe0] sm:$0xff]
      %v5638 = vld [vmem:[%s922 + $0xf0] sm:$0xff]
      %v5639 = vld [vmem:[%s922 + $0xf8] sm:$0xff]
      %v5640 = vld [vmem:[%s922 + $0x108] sm:$0xff]
      %v5641 = vld [vmem:[%s922 + $0x110] sm:$0xff]
      %v5642 = vld [vmem:[%s922 + $0x120] sm:$0xff]
      %v5643 = vld [vmem:[%s922 + $0x128] sm:$0xff]
      %v5644 = vld [vmem:[%s922 + $0x138] sm:$0xff]
      %v5645 = vld [vmem:[%s922 + $0x140] sm:$0xff]
      %v5646 = vld [vmem:[%s922 + $0x150] sm:$0xff]
      %v5647 = vld [vmem:[%s922 + $0x158] sm:$0xff]
      %v5648 = vld [vmem:[%s922 + $0x168] sm:$0xff]
      %v5649 = vld [vmem:[%s922 + $0x170] sm:$0xff]
      %v5650 = vld [vmem:[%s922 + $0x1] sm:$0xff]
      %v5651 = vld [vmem:[%s922 + $0x9] sm:$0xff]
      %v5652 = vld [vmem:[%s922 + $0x19] sm:$0xff]
      %v5653 = vld [vmem:[%s922 + $0x21] sm:$0xff]
      %v5654 = vld [vmem:[%s922 + $0x31] sm:$0xff]
      %v5655 = vld [vmem:[%s922 + $0x39] sm:$0xff]
      %v5656 = vld [vmem:[%s922 + $0x49] sm:$0xff]
      %v5657 = vld [vmem:[%s922 + $0x51] sm:$0xff]
      %v5658 = vld [vmem:[%s922 + $0x61] sm:$0xff]
      %v5659 = vld [vmem:[%s922 + $0x69] sm:$0xff]
      %v5660 = vld [vmem:[%s922 + $0x79] sm:$0xff]
      %v5661 = vld [vmem:[%s922 + $0x81] sm:$0xff]
      %v5662 = vld [vmem:[%s922 + $0x91] sm:$0xff]
      %v5663 = vld [vmem:[%s922 + $0x99] sm:$0xff]
      %v5664 = vld [vmem:[%s922 + $0xa9] sm:$0xff]
      %v5665 = vld [vmem:[%s922 + $0xb1] sm:$0xff]
      %v5666 = vld [vmem:[%s922 + $0xc1] sm:$0xff]
      %v5667 = vld [vmem:[%s922 + $0xc9] sm:$0xff]
      %v5668 = vld [vmem:[%s922 + $0xd9] sm:$0xff]
      %v5669 = vld [vmem:[%s922 + $0xe1] sm:$0xff]
      %v5670 = vld [vmem:[%s922 + $0xf1] sm:$0xff]
      %v5671 = vld [vmem:[%s922 + $0xf9] sm:$0xff]
      %v5672 = vld [vmem:[%s922 + $0x109] sm:$0xff]
      %v5673 = vld [vmem:[%s922 + $0x111] sm:$0xff]
      %v5674 = vld [vmem:[%s922 + $0x121] sm:$0xff]
      %v5675 = vld [vmem:[%s922 + $0x129] sm:$0xff]
      %v5676 = vld [vmem:[%s922 + $0x139] sm:$0xff]
      %v5677 = vld [vmem:[%s922 + $0x141] sm:$0xff]
      %v5678 = vld [vmem:[%s922 + $0x151] sm:$0xff]
      %v5679 = vld [vmem:[%s922 + $0x159] sm:$0xff]
      %v5680 = vld [vmem:[%s922 + $0x169] sm:$0xff]
      %v5681 = vld [vmem:[%s922 + $0x171] sm:$0xff]
      %v5682 = vld [vmem:[%s922 + $0x2] sm:$0xff]
      %v5683 = vld [vmem:[%s922 + $0xa] sm:$0xff]
      %v5684 = vld [vmem:[%s922 + $0x1a] sm:$0xff]
      %v5685 = vld [vmem:[%s922 + $0x22] sm:$0xff]
      %v5686 = vld [vmem:[%s922 + $0x32] sm:$0xff]
      %v5687 = vld [vmem:[%s922 + $0x3a] sm:$0xff]
      %v5688 = vld [vmem:[%s922 + $0x4a] sm:$0xff]
      %v5689 = vld [vmem:[%s922 + $0x52] sm:$0xff]
      %v5690 = vld [vmem:[%s922 + $0x62] sm:$0xff]
      %v5691 = vld [vmem:[%s922 + $0x6a] sm:$0xff]
      %v5692 = vld [vmem:[%s922 + $0x7a] sm:$0xff]
      %v5693 = vld [vmem:[%s922 + $0x82] sm:$0xff]
      %v5694 = vld [vmem:[%s922 + $0x92] sm:$0xff]
      %v5695 = vld [vmem:[%s922 + $0x9a] sm:$0xff]
      %v5696 = vld [vmem:[%s922 + $0xaa] sm:$0xff]
      %v5697 = vld [vmem:[%s922 + $0xb2] sm:$0xff]
      %v5698 = vld [vmem:[%s922 + $0xc2] sm:$0xff]
      %v5699 = vld [vmem:[%s922 + $0xca] sm:$0xff]
      %v5700 = vld [vmem:[%s922 + $0xda] sm:$0xff]
      %v5701 = vld [vmem:[%s922 + $0xe2] sm:$0xff]
      %v5702 = vld [vmem:[%s922 + $0xf2] sm:$0xff]
      %v5703 = vld [vmem:[%s922 + $0xfa] sm:$0xff]
      %v5704 = vld [vmem:[%s922 + $0x10a] sm:$0xff]
      %v5705 = vld [vmem:[%s922 + $0x112] sm:$0xff]
      %v5706 = vld [vmem:[%s922 + $0x122] sm:$0xff]
      %v5707 = vld [vmem:[%s922 + $0x12a] sm:$0xff]
      %v5708 = vld [vmem:[%s922 + $0x13a] sm:$0xff]
      %v5709 = vld [vmem:[%s922 + $0x142] sm:$0xff]
      %v5710 = vld [vmem:[%s922 + $0x152] sm:$0xff]
      %v5711 = vld [vmem:[%s922 + $0x15a] sm:$0xff]
      %v5712 = vld [vmem:[%s922 + $0x16a] sm:$0xff]
      %v5713 = vld [vmem:[%s922 + $0x172] sm:$0xff]
      %5746 = vrot.lane.b32.xlu0 %v5458, 24
      %v5747 = vpop.permute.xlu0 %5746
      %5748 = vrot.lane.b32.xlu0 %v5459, 24
      %v5749 = vpop.permute.xlu0 %5748
      %5750 = vrot.lane.b32.xlu0 %v5460, 24
      %v5751 = vpop.permute.xlu0 %5750
      %5752 = vrot.lane.b32.xlu0 %v5461, 24
      %v5753 = vpop.permute.xlu0 %5752
      %5754 = vrot.lane.b32.xlu0 %v5462, 24
      %v5755 = vpop.permute.xlu0 %5754
      %5756 = vrot.lane.b32.xlu0 %v5463, 24
      %v5757 = vpop.permute.xlu0 %5756
      %5758 = vrot.lane.b32.xlu0 %v5464, 24
      %v5759 = vpop.permute.xlu0 %5758
      %5760 = vrot.lane.b32.xlu0 %v5465, 24
      %v5761 = vpop.permute.xlu0 %5760
      %5762 = vrot.lane.b32.xlu0 %v5466, 24
      %v5763 = vpop.permute.xlu0 %5762
      %5764 = vrot.lane.b32.xlu0 %v5467, 24
      %v5765 = vpop.permute.xlu0 %5764
      %5766 = vrot.lane.b32.xlu0 %v5468, 24
      %v5767 = vpop.permute.xlu0 %5766
      %5768 = vrot.lane.b32.xlu0 %v5469, 24
      %v5769 = vpop.permute.xlu0 %5768
      %5770 = vrot.lane.b32.xlu0 %v5470, 24
      %v5771 = vpop.permute.xlu0 %5770
      %5772 = vrot.lane.b32.xlu0 %v5471, 24
      %v5773 = vpop.permute.xlu0 %5772
      %5774 = vrot.lane.b32.xlu0 %v5472, 24
      %v5775 = vpop.permute.xlu0 %5774
      %5776 = vrot.lane.b32.xlu0 %v5473, 24
      %v5777 = vpop.permute.xlu0 %5776
      %5778 = vrot.lane.b32.xlu0 %v5474, 24
      %v5779 = vpop.permute.xlu0 %5778
      %5780 = vrot.lane.b32.xlu0 %v5475, 24
      %v5781 = vpop.permute.xlu0 %5780
      %5782 = vrot.lane.b32.xlu0 %v5476, 24
      %v5783 = vpop.permute.xlu0 %5782
      %5784 = vrot.lane.b32.xlu0 %v5477, 24
      %v5785 = vpop.permute.xlu0 %5784
      %5786 = vrot.lane.b32.xlu0 %v5478, 24
      %v5787 = vpop.permute.xlu0 %5786
      %5788 = vrot.lane.b32.xlu0 %v5479, 24
      %v5789 = vpop.permute.xlu0 %5788
      %5790 = vrot.lane.b32.xlu0 %v5480, 24
      %v5791 = vpop.permute.xlu0 %5790
      %5792 = vrot.lane.b32.xlu0 %v5481, 24
      %v5793 = vpop.permute.xlu0 %5792
      %5794 = vrot.lane.b32.xlu0 %v5482, 24
      %v5795 = vpop.permute.xlu0 %5794
      %5796 = vrot.lane.b32.xlu0 %v5483, 24
      %v5797 = vpop.permute.xlu0 %5796
      %5798 = vrot.lane.b32.xlu0 %v5484, 24
      %v5799 = vpop.permute.xlu0 %5798
      %5800 = vrot.lane.b32.xlu0 %v5485, 24
      %v5801 = vpop.permute.xlu0 %5800
      %5802 = vrot.lane.b32.xlu0 %v5486, 24
      %v5803 = vpop.permute.xlu0 %5802
      %5804 = vrot.lane.b32.xlu0 %v5487, 24
      %v5805 = vpop.permute.xlu0 %5804
      %5806 = vrot.lane.b32.xlu0 %v5488, 24
      %v5807 = vpop.permute.xlu0 %5806
      %5808 = vrot.lane.b32.xlu0 %v5489, 24
      %v5809 = vpop.permute.xlu0 %5808
      %5874 = vrot.lane.b32.xlu0 %v5490, 48
      %v5875 = vpop.permute.xlu0 %5874
      %5876 = vrot.lane.b32.xlu0 %v5491, 48
      %v5877 = vpop.permute.xlu0 %5876
      %5878 = vrot.lane.b32.xlu0 %v5492, 48
      %v5879 = vpop.permute.xlu0 %5878
      %5880 = vrot.lane.b32.xlu0 %v5493, 48
      %v5881 = vpop.permute.xlu0 %5880
      %5882 = vrot.lane.b32.xlu0 %v5494, 48
      %v5883 = vpop.permute.xlu0 %5882
      %5884 = vrot.lane.b32.xlu0 %v5495, 48
      %v5885 = vpop.permute.xlu0 %5884
      %5886 = vrot.lane.b32.xlu0 %v5496, 48
      %v5887 = vpop.permute.xlu0 %5886
      %5888 = vrot.lane.b32.xlu0 %v5497, 48
      %v5889 = vpop.permute.xlu0 %5888
      %5890 = vrot.lane.b32.xlu0 %v5498, 48
      %v5891 = vpop.permute.xlu0 %5890
      %5892 = vrot.lane.b32.xlu0 %v5499, 48
      %v5893 = vpop.permute.xlu0 %5892
      %5894 = vrot.lane.b32.xlu0 %v5500, 48
      %v5895 = vpop.permute.xlu0 %5894
      %5896 = vrot.lane.b32.xlu0 %v5501, 48
      %v5897 = vpop.permute.xlu0 %5896
      %5898 = vrot.lane.b32.xlu0 %v5502, 48
      %v5899 = vpop.permute.xlu0 %5898
      %5900 = vrot.lane.b32.xlu0 %v5503, 48
      %v5901 = vpop.permute.xlu0 %5900
      %5902 = vrot.lane.b32.xlu0 %v5504, 48
      %v5903 = vpop.permute.xlu0 %5902
      %5904 = vrot.lane.b32.xlu0 %v5505, 48
      %v5905 = vpop.permute.xlu0 %5904
      %5906 = vrot.lane.b32.xlu0 %v5506, 48
      %v5907 = vpop.permute.xlu0 %5906
      %5908 = vrot.lane.b32.xlu0 %v5507, 48
      %v5909 = vpop.permute.xlu0 %5908
      %5910 = vrot.lane.b32.xlu0 %v5508, 48
      %v5911 = vpop.permute.xlu0 %5910
      %5912 = vrot.lane.b32.xlu0 %v5509, 48
      %v5913 = vpop.permute.xlu0 %5912
      %5914 = vrot.lane.b32.xlu0 %v5510, 48
      %v5915 = vpop.permute.xlu0 %5914
      %5916 = vrot.lane.b32.xlu0 %v5511, 48
      %v5917 = vpop.permute.xlu0 %5916
      %5918 = vrot.lane.b32.xlu0 %v5512, 48
      %v5919 = vpop.permute.xlu0 %5918
      %5920 = vrot.lane.b32.xlu0 %v5513, 48
      %v5921 = vpop.permute.xlu0 %5920
      %5922 = vrot.lane.b32.xlu0 %v5514, 48
      %v5923 = vpop.permute.xlu0 %5922
      %5924 = vrot.lane.b32.xlu0 %v5515, 48
      %v5925 = vpop.permute.xlu0 %5924
      %5926 = vrot.lane.b32.xlu0 %v5516, 48
      %v5927 = vpop.permute.xlu0 %5926
      %5928 = vrot.lane.b32.xlu0 %v5517, 48
      %v5929 = vpop.permute.xlu0 %5928
      %5930 = vrot.lane.b32.xlu0 %v5518, 48
      %v5931 = vpop.permute.xlu0 %5930
      %5932 = vrot.lane.b32.xlu0 %v5519, 48
      %v5933 = vpop.permute.xlu0 %5932
      %5934 = vrot.lane.b32.xlu0 %v5520, 48
      %v5935 = vpop.permute.xlu0 %5934
      %5936 = vrot.lane.b32.xlu0 %v5521, 48
      %v5937 = vpop.permute.xlu0 %5936
      %6002 = vrot.lane.b32.xlu0 %v5522, 72
      %v6003 = vpop.permute.xlu0 %6002
      %6004 = vrot.lane.b32.xlu0 %v5523, 72
      %v6005 = vpop.permute.xlu0 %6004
      %6006 = vrot.lane.b32.xlu0 %v5524, 72
      %v6007 = vpop.permute.xlu0 %6006
      %6008 = vrot.lane.b32.xlu0 %v5525, 72
      %v6009 = vpop.permute.xlu0 %6008
      %6010 = vrot.lane.b32.xlu0 %v5526, 72
      %v6011 = vpop.permute.xlu0 %6010
      %6012 = vrot.lane.b32.xlu0 %v5527, 72
      %v6013 = vpop.permute.xlu0 %6012
      %6014 = vrot.lane.b32.xlu0 %v5528, 72
      %v6015 = vpop.permute.xlu0 %6014
      %6016 = vrot.lane.b32.xlu0 %v5529, 72
      %v6017 = vpop.permute.xlu0 %6016
      %6018 = vrot.lane.b32.xlu0 %v5530, 72
      %v6019 = vpop.permute.xlu0 %6018
      %6020 = vrot.lane.b32.xlu0 %v5531, 72
      %v6021 = vpop.permute.xlu0 %6020
      %6022 = vrot.lane.b32.xlu0 %v5532, 72
      %v6023 = vpop.permute.xlu0 %6022
      %6024 = vrot.lane.b32.xlu0 %v5533, 72
      %v6025 = vpop.permute.xlu0 %6024
      %6026 = vrot.lane.b32.xlu0 %v5534, 72
      %v6027 = vpop.permute.xlu0 %6026
      %6028 = vrot.lane.b32.xlu0 %v5535, 72
      %v6029 = vpop.permute.xlu0 %6028
      %6030 = vrot.lane.b32.xlu0 %v5536, 72
      %v6031 = vpop.permute.xlu0 %6030
      %6032 = vrot.lane.b32.xlu0 %v5537, 72
      %v6033 = vpop.permute.xlu0 %6032
      %6034 = vrot.lane.b32.xlu0 %v5538, 72
      %v6035 = vpop.permute.xlu0 %6034
      %6036 = vrot.lane.b32.xlu0 %v5539, 72
      %v6037 = vpop.permute.xlu0 %6036
      %6038 = vrot.lane.b32.xlu0 %v5540, 72
      %v6039 = vpop.permute.xlu0 %6038
      %6040 = vrot.lane.b32.xlu0 %v5541, 72
      %v6041 = vpop.permute.xlu0 %6040
      %6042 = vrot.lane.b32.xlu0 %v5542, 72
      %v6043 = vpop.permute.xlu0 %6042
      %6044 = vrot.lane.b32.xlu0 %v5543, 72
      %v6045 = vpop.permute.xlu0 %6044
      %6046 = vrot.lane.b32.xlu0 %v5544, 72
      %v6047 = vpop.permute.xlu0 %6046
      %6048 = vrot.lane.b32.xlu0 %v5545, 72
      %v6049 = vpop.permute.xlu0 %6048
      %6050 = vrot.lane.b32.xlu0 %v5546, 72
      %v6051 = vpop.permute.xlu0 %6050
      %6052 = vrot.lane.b32.xlu0 %v5547, 72
      %v6053 = vpop.permute.xlu0 %6052
      %6054 = vrot.lane.b32.xlu0 %v5548, 72
      %v6055 = vpop.permute.xlu0 %6054
      %6056 = vrot.lane.b32.xlu0 %v5549, 72
      %v6057 = vpop.permute.xlu0 %6056
      %6058 = vrot.lane.b32.xlu0 %v5550, 72
      %v6059 = vpop.permute.xlu0 %6058
      %6060 = vrot.lane.b32.xlu0 %v5551, 72
      %v6061 = vpop.permute.xlu0 %6060
      %6062 = vrot.lane.b32.xlu0 %v5552, 72
      %v6063 = vpop.permute.xlu0 %6062
      %6064 = vrot.lane.b32.xlu0 %v5553, 72
      %v6065 = vpop.permute.xlu0 %6064
      %6130 = vrot.lane.b32.xlu0 %v5554, 96
      %v6131 = vpop.permute.xlu0 %6130
      %6132 = vrot.lane.b32.xlu0 %v5555, 96
      %v6133 = vpop.permute.xlu0 %6132
      %6134 = vrot.lane.b32.xlu0 %v5556, 96
      %v6135 = vpop.permute.xlu0 %6134
      %6136 = vrot.lane.b32.xlu0 %v5557, 96
      %v6137 = vpop.permute.xlu0 %6136
      %6138 = vrot.lane.b32.xlu0 %v5558, 96
      %v6139 = vpop.permute.xlu0 %6138
      %6140 = vrot.lane.b32.xlu0 %v5559, 96
      %v6141 = vpop.permute.xlu0 %6140
      %6142 = vrot.lane.b32.xlu0 %v5560, 96
      %v6143 = vpop.permute.xlu0 %6142
      %6144 = vrot.lane.b32.xlu0 %v5561, 96
      %v6145 = vpop.permute.xlu0 %6144
      %6146 = vrot.lane.b32.xlu0 %v5562, 96
      %v6147 = vpop.permute.xlu0 %6146
      %6148 = vrot.lane.b32.xlu0 %v5563, 96
      %v6149 = vpop.permute.xlu0 %6148
      %6150 = vrot.lane.b32.xlu0 %v5564, 96
      %v6151 = vpop.permute.xlu0 %6150
      %6152 = vrot.lane.b32.xlu0 %v5565, 96
      %v6153 = vpop.permute.xlu0 %6152
      %6154 = vrot.lane.b32.xlu0 %v5566, 96
      %v6155 = vpop.permute.xlu0 %6154
      %6156 = vrot.lane.b32.xlu0 %v5567, 96
      %v6157 = vpop.permute.xlu0 %6156
      %6158 = vrot.lane.b32.xlu0 %v5568, 96
      %v6159 = vpop.permute.xlu0 %6158
      %6160 = vrot.lane.b32.xlu0 %v5569, 96
      %v6161 = vpop.permute.xlu0 %6160
      %6162 = vrot.lane.b32.xlu0 %v5570, 96
      %v6163 = vpop.permute.xlu0 %6162
      %6164 = vrot.lane.b32.xlu0 %v5571, 96
      %v6165 = vpop.permute.xlu0 %6164
      %6166 = vrot.lane.b32.xlu0 %v5572, 96
      %v6167 = vpop.permute.xlu0 %6166
      %6168 = vrot.lane.b32.xlu0 %v5573, 96
      %v6169 = vpop.permute.xlu0 %6168
      %6170 = vrot.lane.b32.xlu0 %v5574, 96
      %v6171 = vpop.permute.xlu0 %6170
      %6172 = vrot.lane.b32.xlu0 %v5575, 96
      %v6173 = vpop.permute.xlu0 %6172
      %6174 = vrot.lane.b32.xlu0 %v5576, 96
      %v6175 = vpop.permute.xlu0 %6174
      %6176 = vrot.lane.b32.xlu0 %v5577, 96
      %v6177 = vpop.permute.xlu0 %6176
      %6178 = vrot.lane.b32.xlu0 %v5578, 96
      %v6179 = vpop.permute.xlu0 %6178
      %6180 = vrot.lane.b32.xlu0 %v5579, 96
      %v6181 = vpop.permute.xlu0 %6180
      %6182 = vrot.lane.b32.xlu0 %v5580, 96
      %v6183 = vpop.permute.xlu0 %6182
      %6184 = vrot.lane.b32.xlu0 %v5581, 96
      %v6185 = vpop.permute.xlu0 %6184
      %6186 = vrot.lane.b32.xlu0 %v5582, 96
      %v6187 = vpop.permute.xlu0 %6186
      %6188 = vrot.lane.b32.xlu0 %v5583, 96
      %v6189 = vpop.permute.xlu0 %6188
      %6190 = vrot.lane.b32.xlu0 %v5584, 96
      %v6191 = vpop.permute.xlu0 %6190
      %6192 = vrot.lane.b32.xlu0 %v5585, 96
      %v6193 = vpop.permute.xlu0 %6192
      %6258 = vrot.lane.b32.xlu0 %v5586, 120
      %v6259 = vpop.permute.xlu0 %6258
      %6260 = vrot.lane.b32.xlu0 %v5587, 120
      %v6261 = vpop.permute.xlu0 %6260
      %6262 = vrot.lane.b32.xlu0 %v5588, 120
      %v6263 = vpop.permute.xlu0 %6262
      %6264 = vrot.lane.b32.xlu0 %v5589, 120
      %v6265 = vpop.permute.xlu0 %6264
      %6266 = vrot.lane.b32.xlu0 %v5590, 120
      %v6267 = vpop.permute.xlu0 %6266
      %6268 = vrot.lane.b32.xlu0 %v5591, 120
      %v6269 = vpop.permute.xlu0 %6268
      %6270 = vrot.lane.b32.xlu0 %v5592, 120
      %v6271 = vpop.permute.xlu0 %6270
      %6272 = vrot.lane.b32.xlu0 %v5593, 120
      %v6273 = vpop.permute.xlu0 %6272
      %6274 = vrot.lane.b32.xlu0 %v5594, 120
      %v6275 = vpop.permute.xlu0 %6274
      %6276 = vrot.lane.b32.xlu0 %v5595, 120
      %v6277 = vpop.permute.xlu0 %6276
      %6278 = vrot.lane.b32.xlu0 %v5596, 120
      %v6279 = vpop.permute.xlu0 %6278
      %6280 = vrot.lane.b32.xlu0 %v5597, 120
      %v6281 = vpop.permute.xlu0 %6280
      %6282 = vrot.lane.b32.xlu0 %v5598, 120
      %v6283 = vpop.permute.xlu0 %6282
      %6284 = vrot.lane.b32.xlu0 %v5599, 120
      %v6285 = vpop.permute.xlu0 %6284
      %6286 = vrot.lane.b32.xlu0 %v5600, 120
      %v6287 = vpop.permute.xlu0 %6286
      %6288 = vrot.lane.b32.xlu0 %v5601, 120
      %v6289 = vpop.permute.xlu0 %6288
      %6290 = vrot.lane.b32.xlu0 %v5602, 120
      %v6291 = vpop.permute.xlu0 %6290
      %6292 = vrot.lane.b32.xlu0 %v5603, 120
      %v6293 = vpop.permute.xlu0 %6292
      %6294 = vrot.lane.b32.xlu0 %v5604, 120
      %v6295 = vpop.permute.xlu0 %6294
      %6296 = vrot.lane.b32.xlu0 %v5605, 120
      %v6297 = vpop.permute.xlu0 %6296
      %6298 = vrot.lane.b32.xlu0 %v5606, 120
      %v6299 = vpop.permute.xlu0 %6298
      %6300 = vrot.lane.b32.xlu0 %v5607, 120
      %v6301 = vpop.permute.xlu0 %6300
      %6302 = vrot.lane.b32.xlu0 %v5608, 120
      %v6303 = vpop.permute.xlu0 %6302
      %6304 = vrot.lane.b32.xlu0 %v5609, 120
      %v6305 = vpop.permute.xlu0 %6304
      %6306 = vrot.lane.b32.xlu0 %v5610, 120
      %v6307 = vpop.permute.xlu0 %6306
      %6308 = vrot.lane.b32.xlu0 %v5611, 120
      %v6309 = vpop.permute.xlu0 %6308
      %6310 = vrot.lane.b32.xlu0 %v5612, 120
      %v6311 = vpop.permute.xlu0 %6310
      %6312 = vrot.lane.b32.xlu0 %v5613, 120
      %v6313 = vpop.permute.xlu0 %6312
      %6314 = vrot.lane.b32.xlu0 %v5614, 120
      %v6315 = vpop.permute.xlu0 %6314
      %6316 = vrot.lane.b32.xlu0 %v5615, 120
      %v6317 = vpop.permute.xlu0 %6316
      %6318 = vrot.lane.b32.xlu0 %v5616, 120
      %v6319 = vpop.permute.xlu0 %6318
      %6320 = vrot.lane.b32.xlu0 %v5617, 120
      %v6321 = vpop.permute.xlu0 %6320
      %6386 = vrot.lane.b32.xlu0 %v5618, 16
      %v6387 = vpop.permute.xlu0 %6386
      %6388 = vrot.lane.b32.xlu0 %v5619, 16
      %v6389 = vpop.permute.xlu0 %6388
      %6390 = vrot.lane.b32.xlu0 %v5620, 16
      %v6391 = vpop.permute.xlu0 %6390
      %6392 = vrot.lane.b32.xlu0 %v5621, 16
      %v6393 = vpop.permute.xlu0 %6392
      %6394 = vrot.lane.b32.xlu0 %v5622, 16
      %v6395 = vpop.permute.xlu0 %6394
      %6396 = vrot.lane.b32.xlu0 %v5623, 16
      %v6397 = vpop.permute.xlu0 %6396
      %6398 = vrot.lane.b32.xlu0 %v5624, 16
      %v6399 = vpop.permute.xlu0 %6398
      %6400 = vrot.lane.b32.xlu0 %v5625, 16
      %v6401 = vpop.permute.xlu0 %6400
      %6402 = vrot.lane.b32.xlu0 %v5626, 16
      %v6403 = vpop.permute.xlu0 %6402
      %6404 = vrot.lane.b32.xlu0 %v5627, 16
      %v6405 = vpop.permute.xlu0 %6404
      %6406 = vrot.lane.b32.xlu0 %v5628, 16
      %v6407 = vpop.permute.xlu0 %6406
      %6408 = vrot.lane.b32.xlu0 %v5629, 16
      %v6409 = vpop.permute.xlu0 %6408
      %6410 = vrot.lane.b32.xlu0 %v5630, 16
      %v6411 = vpop.permute.xlu0 %6410
      %6412 = vrot.lane.b32.xlu0 %v5631, 16
      %v6413 = vpop.permute.xlu0 %6412
      %6414 = vrot.lane.b32.xlu0 %v5632, 16
      %v6415 = vpop.permute.xlu0 %6414
      %6416 = vrot.lane.b32.xlu0 %v5633, 16
      %v6417 = vpop.permute.xlu0 %6416
      %6418 = vrot.lane.b32.xlu0 %v5634, 16
      %v6419 = vpop.permute.xlu0 %6418
      %6420 = vrot.lane.b32.xlu0 %v5635, 16
      %v6421 = vpop.permute.xlu0 %6420
      %6422 = vrot.lane.b32.xlu0 %v5636, 16
      %v6423 = vpop.permute.xlu0 %6422
      %6424 = vrot.lane.b32.xlu0 %v5637, 16
      %v6425 = vpop.permute.xlu0 %6424
      %6426 = vrot.lane.b32.xlu0 %v5638, 16
      %v6427 = vpop.permute.xlu0 %6426
      %6428 = vrot.lane.b32.xlu0 %v5639, 16
      %v6429 = vpop.permute.xlu0 %6428
      %6430 = vrot.lane.b32.xlu0 %v5640, 16
      %v6431 = vpop.permute.xlu0 %6430
      %6432 = vrot.lane.b32.xlu0 %v5641, 16
      %v6433 = vpop.permute.xlu0 %6432
      %6434 = vrot.lane.b32.xlu0 %v5642, 16
      %v6435 = vpop.permute.xlu0 %6434
      %6436 = vrot.lane.b32.xlu0 %v5643, 16
      %v6437 = vpop.permute.xlu0 %6436
      %6438 = vrot.lane.b32.xlu0 %v5644, 16
      %v6439 = vpop.permute.xlu0 %6438
      %6440 = vrot.lane.b32.xlu0 %v5645, 16
      %v6441 = vpop.permute.xlu0 %6440
      %6442 = vrot.lane.b32.xlu0 %v5646, 16
      %v6443 = vpop.permute.xlu0 %6442
      %6444 = vrot.lane.b32.xlu0 %v5647, 16
      %v6445 = vpop.permute.xlu0 %6444
      %6446 = vrot.lane.b32.xlu0 %v5648, 16
      %v6447 = vpop.permute.xlu0 %6446
      %6448 = vrot.lane.b32.xlu0 %v5649, 16
      %v6449 = vpop.permute.xlu0 %6448
      %6514 = vrot.lane.b32.xlu0 %v5650, 40
      %v6515 = vpop.permute.xlu0 %6514
      %6516 = vrot.lane.b32.xlu0 %v5651, 40
      %v6517 = vpop.permute.xlu0 %6516
      %6518 = vrot.lane.b32.xlu0 %v5652, 40
      %v6519 = vpop.permute.xlu0 %6518
      %6520 = vrot.lane.b32.xlu0 %v5653, 40
      %v6521 = vpop.permute.xlu0 %6520
      %6522 = vrot.lane.b32.xlu0 %v5654, 40
      %v6523 = vpop.permute.xlu0 %6522
      %6524 = vrot.lane.b32.xlu0 %v5655, 40
      %v6525 = vpop.permute.xlu0 %6524
      %6526 = vrot.lane.b32.xlu0 %v5656, 40
      %v6527 = vpop.permute.xlu0 %6526
      %6528 = vrot.lane.b32.xlu0 %v5657, 40
      %v6529 = vpop.permute.xlu0 %6528
      %6530 = vrot.lane.b32.xlu0 %v5658, 40
      %v6531 = vpop.permute.xlu0 %6530
      %6532 = vrot.lane.b32.xlu0 %v5659, 40
      %v6533 = vpop.permute.xlu0 %6532
      %6534 = vrot.lane.b32.xlu0 %v5660, 40
      %v6535 = vpop.permute.xlu0 %6534
      %6536 = vrot.lane.b32.xlu0 %v5661, 40
      %v6537 = vpop.permute.xlu0 %6536
      %6538 = vrot.lane.b32.xlu0 %v5662, 40
      %v6539 = vpop.permute.xlu0 %6538
      %6540 = vrot.lane.b32.xlu0 %v5663, 40
      %v6541 = vpop.permute.xlu0 %6540
      %6542 = vrot.lane.b32.xlu0 %v5664, 40
      %v6543 = vpop.permute.xlu0 %6542
      %6544 = vrot.lane.b32.xlu0 %v5665, 40
      %v6545 = vpop.permute.xlu0 %6544
      %6546 = vrot.lane.b32.xlu0 %v5666, 40
      %v6547 = vpop.permute.xlu0 %6546
      %6548 = vrot.lane.b32.xlu0 %v5667, 40
      %v6549 = vpop.permute.xlu0 %6548
      %6550 = vrot.lane.b32.xlu0 %v5668, 40
      %v6551 = vpop.permute.xlu0 %6550
      %6552 = vrot.lane.b32.xlu0 %v5669, 40
      %v6553 = vpop.permute.xlu0 %6552
      %6554 = vrot.lane.b32.xlu0 %v5670, 40
      %v6555 = vpop.permute.xlu0 %6554
      %6556 = vrot.lane.b32.xlu0 %v5671, 40
      %v6557 = vpop.permute.xlu0 %6556
      %6558 = vrot.lane.b32.xlu0 %v5672, 40
      %v6559 = vpop.permute.xlu0 %6558
      %6560 = vrot.lane.b32.xlu0 %v5673, 40
      %v6561 = vpop.permute.xlu0 %6560
      %6562 = vrot.lane.b32.xlu0 %v5674, 40
      %v6563 = vpop.permute.xlu0 %6562
      %6564 = vrot.lane.b32.xlu0 %v5675, 40
      %v6565 = vpop.permute.xlu0 %6564
      %6566 = vrot.lane.b32.xlu0 %v5676, 40
      %v6567 = vpop.permute.xlu0 %6566
      %6568 = vrot.lane.b32.xlu0 %v5677, 40
      %v6569 = vpop.permute.xlu0 %6568
      %6570 = vrot.lane.b32.xlu0 %v5678, 40
      %v6571 = vpop.permute.xlu0 %6570
      %6572 = vrot.lane.b32.xlu0 %v5679, 40
      %v6573 = vpop.permute.xlu0 %6572
      %6574 = vrot.lane.b32.xlu0 %v5680, 40
      %v6575 = vpop.permute.xlu0 %6574
      %6576 = vrot.lane.b32.xlu0 %v5681, 40
      %v6577 = vpop.permute.xlu0 %6576
      %6642 = vrot.lane.b32.xlu0 %v5682, 64
      %v6643 = vpop.permute.xlu0 %6642
      %6644 = vrot.lane.b32.xlu0 %v5683, 64
      %v6645 = vpop.permute.xlu0 %6644
      %6646 = vrot.lane.b32.xlu0 %v5684, 64
      %v6647 = vpop.permute.xlu0 %6646
      %6648 = vrot.lane.b32.xlu0 %v5685, 64
      %v6649 = vpop.permute.xlu0 %6648
      %6650 = vrot.lane.b32.xlu0 %v5686, 64
      %v6651 = vpop.permute.xlu0 %6650
      %6652 = vrot.lane.b32.xlu0 %v5687, 64
      %v6653 = vpop.permute.xlu0 %6652
      %6654 = vrot.lane.b32.xlu0 %v5688, 64
      %v6655 = vpop.permute.xlu0 %6654
      %6656 = vrot.lane.b32.xlu0 %v5689, 64
      %v6657 = vpop.permute.xlu0 %6656
      %6658 = vrot.lane.b32.xlu0 %v5690, 64
      %v6659 = vpop.permute.xlu0 %6658
      %6660 = vrot.lane.b32.xlu0 %v5691, 64
      %v6661 = vpop.permute.xlu0 %6660
      %6662 = vrot.lane.b32.xlu0 %v5692, 64
      %v6663 = vpop.permute.xlu0 %6662
      %6664 = vrot.lane.b32.xlu0 %v5693, 64
      %v6665 = vpop.permute.xlu0 %6664
      %6666 = vrot.lane.b32.xlu0 %v5694, 64
      %v6667 = vpop.permute.xlu0 %6666
      %6668 = vrot.lane.b32.xlu0 %v5695, 64
      %v6669 = vpop.permute.xlu0 %6668
      %6670 = vrot.lane.b32.xlu0 %v5696, 64
      %v6671 = vpop.permute.xlu0 %6670
      %6672 = vrot.lane.b32.xlu0 %v5697, 64
      %v6673 = vpop.permute.xlu0 %6672
      %6674 = vrot.lane.b32.xlu0 %v5698, 64
      %v6675 = vpop.permute.xlu0 %6674
      %6676 = vrot.lane.b32.xlu0 %v5699, 64
      %v6677 = vpop.permute.xlu0 %6676
      %6678 = vrot.lane.b32.xlu0 %v5700, 64
      %v6679 = vpop.permute.xlu0 %6678
      %6680 = vrot.lane.b32.xlu0 %v5701, 64
      %v6681 = vpop.permute.xlu0 %6680
      %6682 = vrot.lane.b32.xlu0 %v5702, 64
      %v6683 = vpop.permute.xlu0 %6682
      %6684 = vrot.lane.b32.xlu0 %v5703, 64
      %v6685 = vpop.permute.xlu0 %6684
      %6686 = vrot.lane.b32.xlu0 %v5704, 64
      %v6687 = vpop.permute.xlu0 %6686
      %6688 = vrot.lane.b32.xlu0 %v5705, 64
      %v6689 = vpop.permute.xlu0 %6688
      %6690 = vrot.lane.b32.xlu0 %v5706, 64
      %v6691 = vpop.permute.xlu0 %6690
      %6692 = vrot.lane.b32.xlu0 %v5707, 64
      %v6693 = vpop.permute.xlu0 %6692
      %6694 = vrot.lane.b32.xlu0 %v5708, 64
      %v6695 = vpop.permute.xlu0 %6694
      %6696 = vrot.lane.b32.xlu0 %v5709, 64
      %v6697 = vpop.permute.xlu0 %6696
      %6698 = vrot.lane.b32.xlu0 %v5710, 64
      %v6699 = vpop.permute.xlu0 %6698
      %6700 = vrot.lane.b32.xlu0 %v5711, 64
      %v6701 = vpop.permute.xlu0 %6700
      %6702 = vrot.lane.b32.xlu0 %v5712, 64
      %v6703 = vpop.permute.xlu0 %6702
      %6704 = vrot.lane.b32.xlu0 %v5713, 64
      %v6705 = vpop.permute.xlu0 %6704
      %v6738 = vsel %vm225, %v5426, %v5747
      %v6739 = vsel %vm225, %v5427, %v5749
      %v6740 = vsel %vm225, %v5428, %v5751
      %v6741 = vsel %vm225, %v5429, %v5753
      %v6742 = vsel %vm225, %v5430, %v5755
      %v6743 = vsel %vm225, %v5431, %v5757
      %v6744 = vsel %vm225, %v5432, %v5759
      %v6745 = vsel %vm225, %v5433, %v5761
      %v6746 = vsel %vm225, %v5434, %v5763
      %v6747 = vsel %vm225, %v5435, %v5765
      %v6748 = vsel %vm225, %v5436, %v5767
      %v6749 = vsel %vm225, %v5437, %v5769
      %v6750 = vsel %vm225, %v5438, %v5771
      %v6751 = vsel %vm225, %v5439, %v5773
      %v6752 = vsel %vm225, %v5440, %v5775
      %v6753 = vsel %vm225, %v5441, %v5777
      %v6754 = vsel %vm225, %v5442, %v5779
      %v6755 = vsel %vm225, %v5443, %v5781
      %v6756 = vsel %vm225, %v5444, %v5783
      %v6757 = vsel %vm225, %v5445, %v5785
      %v6758 = vsel %vm225, %v5446, %v5787
      %v6759 = vsel %vm225, %v5447, %v5789
      %v6760 = vsel %vm225, %v5448, %v5791
      %v6761 = vsel %vm225, %v5449, %v5793
      %v6762 = vsel %vm225, %v5450, %v5795
      %v6763 = vsel %vm225, %v5451, %v5797
      %v6764 = vsel %vm225, %v5452, %v5799
      %v6765 = vsel %vm225, %v5453, %v5801
      %v6766 = vsel %vm225, %v5454, %v5803
      %v6767 = vsel %vm225, %v5455, %v5805
      %v6768 = vsel %vm225, %v5456, %v5807
      %v6769 = vsel %vm225, %v5457, %v5809
      %v6770 = vsel %vm2206, %v6738, %v5875
      %v6771 = vsel %vm2206, %v6739, %v5877
      %v6772 = vsel %vm2206, %v6740, %v5879
      %v6773 = vsel %vm2206, %v6741, %v5881
      %v6774 = vsel %vm2206, %v6742, %v5883
      %v6775 = vsel %vm2206, %v6743, %v5885
      %v6776 = vsel %vm2206, %v6744, %v5887
      %v6777 = vsel %vm2206, %v6745, %v5889
      %v6778 = vsel %vm2206, %v6746, %v5891
      %v6779 = vsel %vm2206, %v6747, %v5893
      %v6780 = vsel %vm2206, %v6748, %v5895
      %v6781 = vsel %vm2206, %v6749, %v5897
      %v6782 = vsel %vm2206, %v6750, %v5899
      %v6783 = vsel %vm2206, %v6751, %v5901
      %v6784 = vsel %vm2206, %v6752, %v5903
      %v6785 = vsel %vm2206, %v6753, %v5905
      %v6786 = vsel %vm2206, %v6754, %v5907
      %v6787 = vsel %vm2206, %v6755, %v5909
      %v6788 = vsel %vm2206, %v6756, %v5911
      %v6789 = vsel %vm2206, %v6757, %v5913
      %v6790 = vsel %vm2206, %v6758, %v5915
      %v6791 = vsel %vm2206, %v6759, %v5917
      %v6792 = vsel %vm2206, %v6760, %v5919
      %v6793 = vsel %vm2206, %v6761, %v5921
      %v6794 = vsel %vm2206, %v6762, %v5923
      %v6795 = vsel %vm2206, %v6763, %v5925
      %v6796 = vsel %vm2206, %v6764, %v5927
      %v6797 = vsel %vm2206, %v6765, %v5929
      %v6798 = vsel %vm2206, %v6766, %v5931
      %v6799 = vsel %vm2206, %v6767, %v5933
      %v6800 = vsel %vm2206, %v6768, %v5935
      %v6801 = vsel %vm2206, %v6769, %v5937
      %v6802 = vsel %vm2319, %v6770, %v6003
      %v6803 = vsel %vm2319, %v6771, %v6005
      %v6804 = vsel %vm2319, %v6772, %v6007
      %v6805 = vsel %vm2319, %v6773, %v6009
      %v6806 = vsel %vm2319, %v6774, %v6011
      %v6807 = vsel %vm2319, %v6775, %v6013
      %v6808 = vsel %vm2319, %v6776, %v6015
      %v6809 = vsel %vm2319, %v6777, %v6017
      %v6810 = vsel %vm2319, %v6778, %v6019
      %v6811 = vsel %vm2319, %v6779, %v6021
      %v6812 = vsel %vm2319, %v6780, %v6023
      %v6813 = vsel %vm2319, %v6781, %v6025
      %v6814 = vsel %vm2319, %v6782, %v6027
      %v6815 = vsel %vm2319, %v6783, %v6029
      %v6816 = vsel %vm2319, %v6784, %v6031
      %v6817 = vsel %vm2319, %v6785, %v6033
      %v6818 = vsel %vm2319, %v6786, %v6035
      %v6819 = vsel %vm2319, %v6787, %v6037
      %v6820 = vsel %vm2319, %v6788, %v6039
      %v6821 = vsel %vm2319, %v6789, %v6041
      %v6822 = vsel %vm2319, %v6790, %v6043
      %v6823 = vsel %vm2319, %v6791, %v6045
      %v6824 = vsel %vm2319, %v6792, %v6047
      %v6825 = vsel %vm2319, %v6793, %v6049
      %v6826 = vsel %vm2319, %v6794, %v6051
      %v6827 = vsel %vm2319, %v6795, %v6053
      %v6828 = vsel %vm2319, %v6796, %v6055
      %v6829 = vsel %vm2319, %v6797, %v6057
      %v6830 = vsel %vm2319, %v6798, %v6059
      %v6831 = vsel %vm2319, %v6799, %v6061
      %v6832 = vsel %vm2319, %v6800, %v6063
      %v6833 = vsel %vm2319, %v6801, %v6065
      %v6834 = vsel %vm4501, %v6802, %v6131
      %v6835 = vsel %vm4501, %v6803, %v6133
      %v6836 = vsel %vm4501, %v6804, %v6135
      %v6837 = vsel %vm4501, %v6805, %v6137
      %v6838 = vsel %vm4501, %v6806, %v6139
      %v6839 = vsel %vm4501, %v6807, %v6141
      %v6840 = vsel %vm4501, %v6808, %v6143
      %v6841 = vsel %vm4501, %v6809, %v6145
      %v6842 = vsel %vm4501, %v6810, %v6147
      %v6843 = vsel %vm4501, %v6811, %v6149
      %v6844 = vsel %vm4501, %v6812, %v6151
      %v6845 = vsel %vm4501, %v6813, %v6153
      %v6846 = vsel %vm4501, %v6814, %v6155
      %v6847 = vsel %vm4501, %v6815, %v6157
      %v6848 = vsel %vm4501, %v6816, %v6159
      %v6849 = vsel %vm4501, %v6817, %v6161
      %v6850 = vsel %vm4501, %v6818, %v6163
      %v6851 = vsel %vm4501, %v6819, %v6165
      %v6852 = vsel %vm4501, %v6820, %v6167
      %v6853 = vsel %vm4501, %v6821, %v6169
      %v6854 = vsel %vm4501, %v6822, %v6171
      %v6855 = vsel %vm4501, %v6823, %v6173
      %v6856 = vsel %vm4501, %v6824, %v6175
      %v6857 = vsel %vm4501, %v6825, %v6177
      %v6858 = vsel %vm4501, %v6826, %v6179
      %v6859 = vsel %vm4501, %v6827, %v6181
      %v6860 = vsel %vm4501, %v6828, %v6183
      %v6861 = vsel %vm4501, %v6829, %v6185
      %v6862 = vsel %vm4501, %v6830, %v6187
      %v6863 = vsel %vm4501, %v6831, %v6189
      %v6864 = vsel %vm4501, %v6832, %v6191
      %v6865 = vsel %vm4501, %v6833, %v6193
      %vm6866 = vcmask 982016
      %v6867 = vsel %vm6866, %v6834, %v6259
      %v6868 = vsel %vm6866, %v6835, %v6261
      %v6869 = vsel %vm6866, %v6836, %v6263
      %v6870 = vsel %vm6866, %v6837, %v6265
      %v6871 = vsel %vm6866, %v6838, %v6267
      %v6872 = vsel %vm6866, %v6839, %v6269
      %v6873 = vsel %vm6866, %v6840, %v6271
      %v6874 = vsel %vm6866, %v6841, %v6273
      %v6875 = vsel %vm6866, %v6842, %v6275
      %v6876 = vsel %vm6866, %v6843, %v6277
      %v6877 = vsel %vm6866, %v6844, %v6279
      %v6878 = vsel %vm6866, %v6845, %v6281
      %v6879 = vsel %vm6866, %v6846, %v6283
      %v6880 = vsel %vm6866, %v6847, %v6285
      %v6881 = vsel %vm6866, %v6848, %v6287
      %v6882 = vsel %vm6866, %v6849, %v6289
      %v6883 = vsel %vm6866, %v6850, %v6291
      %v6884 = vsel %vm6866, %v6851, %v6293
      %v6885 = vsel %vm6866, %v6852, %v6295
      %v6886 = vsel %vm6866, %v6853, %v6297
      %v6887 = vsel %vm6866, %v6854, %v6299
      %v6888 = vsel %vm6866, %v6855, %v6301
      %v6889 = vsel %vm6866, %v6856, %v6303
      %v6890 = vsel %vm6866, %v6857, %v6305
      %v6891 = vsel %vm6866, %v6858, %v6307
      %v6892 = vsel %vm6866, %v6859, %v6309
      %v6893 = vsel %vm6866, %v6860, %v6311
      %v6894 = vsel %vm6866, %v6861, %v6313
      %v6895 = vsel %vm6866, %v6862, %v6315
      %v6896 = vsel %vm6866, %v6863, %v6317
      %v6897 = vsel %vm6866, %v6864, %v6319
      %v6898 = vsel %vm6866, %v6865, %v6321
      %v6899 = vsel %vm2075, %v6259, %v6387
      %v6900 = vsel %vm2075, %v6261, %v6389
      %v6901 = vsel %vm2075, %v6263, %v6391
      %v6902 = vsel %vm2075, %v6265, %v6393
      %v6903 = vsel %vm2075, %v6267, %v6395
      %v6904 = vsel %vm2075, %v6269, %v6397
      %v6905 = vsel %vm2075, %v6271, %v6399
      %v6906 = vsel %vm2075, %v6273, %v6401
      %v6907 = vsel %vm2075, %v6275, %v6403
      %v6908 = vsel %vm2075, %v6277, %v6405
      %v6909 = vsel %vm2075, %v6279, %v6407
      %v6910 = vsel %vm2075, %v6281, %v6409
      %v6911 = vsel %vm2075, %v6283, %v6411
      %v6912 = vsel %vm2075, %v6285, %v6413
      %v6913 = vsel %vm2075, %v6287, %v6415
      %v6914 = vsel %vm2075, %v6289, %v6417
      %v6915 = vsel %vm2075, %v6291, %v6419
      %v6916 = vsel %vm2075, %v6293, %v6421
      %v6917 = vsel %vm2075, %v6295, %v6423
      %v6918 = vsel %vm2075, %v6297, %v6425
      %v6919 = vsel %vm2075, %v6299, %v6427
      %v6920 = vsel %vm2075, %v6301, %v6429
      %v6921 = vsel %vm2075, %v6303, %v6431
      %v6922 = vsel %vm2075, %v6305, %v6433
      %v6923 = vsel %vm2075, %v6307, %v6435
      %v6924 = vsel %vm2075, %v6309, %v6437
      %v6925 = vsel %vm2075, %v6311, %v6439
      %v6926 = vsel %vm2075, %v6313, %v6441
      %v6927 = vsel %vm2075, %v6315, %v6443
      %v6928 = vsel %vm2075, %v6317, %v6445
      %v6929 = vsel %vm2075, %v6319, %v6447
      %v6930 = vsel %vm2075, %v6321, %v6449
      %v6931 = vsel %vm2173, %v6899, %v6515
      %v6932 = vsel %vm2173, %v6900, %v6517
      %v6933 = vsel %vm2173, %v6901, %v6519
      %v6934 = vsel %vm2173, %v6902, %v6521
      %v6935 = vsel %vm2173, %v6903, %v6523
      %v6936 = vsel %vm2173, %v6904, %v6525
      %v6937 = vsel %vm2173, %v6905, %v6527
      %v6938 = vsel %vm2173, %v6906, %v6529
      %v6939 = vsel %vm2173, %v6907, %v6531
      %v6940 = vsel %vm2173, %v6908, %v6533
      %v6941 = vsel %vm2173, %v6909, %v6535
      %v6942 = vsel %vm2173, %v6910, %v6537
      %v6943 = vsel %vm2173, %v6911, %v6539
      %v6944 = vsel %vm2173, %v6912, %v6541
      %v6945 = vsel %vm2173, %v6913, %v6543
      %v6946 = vsel %vm2173, %v6914, %v6545
      %v6947 = vsel %vm2173, %v6915, %v6547
      %v6948 = vsel %vm2173, %v6916, %v6549
      %v6949 = vsel %vm2173, %v6917, %v6551
      %v6950 = vsel %vm2173, %v6918, %v6553
      %v6951 = vsel %vm2173, %v6919, %v6555
      %v6952 = vsel %vm2173, %v6920, %v6557
      %v6953 = vsel %vm2173, %v6921, %v6559
      %v6954 = vsel %vm2173, %v6922, %v6561
      %v6955 = vsel %vm2173, %v6923, %v6563
      %v6956 = vsel %vm2173, %v6924, %v6565
      %v6957 = vsel %vm2173, %v6925, %v6567
      %v6958 = vsel %vm2173, %v6926, %v6569
      %v6959 = vsel %vm2173, %v6927, %v6571
      %v6960 = vsel %vm2173, %v6928, %v6573
      %v6961 = vsel %vm2173, %v6929, %v6575
      %v6962 = vsel %vm2173, %v6930, %v6577
      %v6963 = vsel %vm2272, %v6931, %v6643
      %v6964 = vsel %vm2272, %v6932, %v6645
      %v6965 = vsel %vm2272, %v6933, %v6647
      %v6966 = vsel %vm2272, %v6934, %v6649
      %v6967 = vsel %vm2272, %v6935, %v6651
      %v6968 = vsel %vm2272, %v6936, %v6653
      %v6969 = vsel %vm2272, %v6937, %v6655
      %v6970 = vsel %vm2272, %v6938, %v6657
      %v6971 = vsel %vm2272, %v6939, %v6659
      %v6972 = vsel %vm2272, %v6940, %v6661
      %v6973 = vsel %vm2272, %v6941, %v6663
      %v6974 = vsel %vm2272, %v6942, %v6665
      %v6975 = vsel %vm2272, %v6943, %v6667
      %v6976 = vsel %vm2272, %v6944, %v6669
      %v6977 = vsel %vm2272, %v6945, %v6671
      %v6978 = vsel %vm2272, %v6946, %v6673
      %v6979 = vsel %vm2272, %v6947, %v6675
      %v6980 = vsel %vm2272, %v6948, %v6677
      %v6981 = vsel %vm2272, %v6949, %v6679
      %v6982 = vsel %vm2272, %v6950, %v6681
      %v6983 = vsel %vm2272, %v6951, %v6683
      %v6984 = vsel %vm2272, %v6952, %v6685
      %v6985 = vsel %vm2272, %v6953, %v6687
      %v6986 = vsel %vm2272, %v6954, %v6689
      %v6987 = vsel %vm2272, %v6955, %v6691
      %v6988 = vsel %vm2272, %v6956, %v6693
      %v6989 = vsel %vm2272, %v6957, %v6695
      %v6990 = vsel %vm2272, %v6958, %v6697
      %v6991 = vsel %vm2272, %v6959, %v6699
      %v6992 = vsel %vm2272, %v6960, %v6701
      %v6993 = vsel %vm2272, %v6961, %v6703
      %v6994 = vsel %vm2272, %v6962, %v6705
      %v6995 = vld [vmem:[%s1 + $0xd8] sm:$0xff]
      %v6996 = vld [vmem:[%s1 + $0xe0] sm:$0xff]
      %v6997 = vld [vmem:[%s1 + $0xe8] sm:$0xff]
      %v6998 = vld [vmem:[%s1 + $0xf0] sm:$0xff]
      %v6999 = vld [vmem:[%s1 + $0xf8] sm:$0xff]
      %v7000 = vld [vmem:[%s1 + $0x100] sm:$0xff]
      %v7001 = vld [vmem:[%s1 + $0x108] sm:$0xff]
      %v7002 = vld [vmem:[%s1 + $0x110] sm:$0xff]
      %v7003 = vld [vmem:[%s1 + $0x118] sm:$0xff]
      %v7004 = vld [vmem:[%s1 + $0x120] sm:$0xff]
      %v7005 = vld [vmem:[%s1 + $0x128] sm:$0xff]
      %v7006 = vld [vmem:[%s1 + $0x130] sm:$0xff]
      %v7007 = vld [vmem:[%s1 + $0x138] sm:$0xff]
      %v7008 = vld [vmem:[%s1 + $0x140] sm:$0xff]
      %v7009 = vld [vmem:[%s1 + $0x148] sm:$0xff]
      %v7010 = vld [vmem:[%s1 + $0x150] sm:$0xff]
      %v7011 = vld [vmem:[%s1 + $0x158] sm:$0xff]
      %v7012 = vld [vmem:[%s1 + $0x160] sm:$0xff]
      %v7013 = vld [vmem:[%s1 + $0x168] sm:$0xff]
      %v7014 = vld [vmem:[%s1 + $0x170] sm:$0xff]
      %v7015 = vld [vmem:[%s1 + $0x178] sm:$0xff]
      %v7016 = vld [vmem:[%s1 + $0x180] sm:$0xff]
      %v7017 = vld [vmem:[%s1 + $0x188] sm:$0xff]
      %v7018 = vld [vmem:[%s1 + $0x190] sm:$0xff]
      %v7019 = vld [vmem:[%s1 + $0x198] sm:$0xff]
      %v7020 = vld [vmem:[%s1 + $0x1a0] sm:$0xff]
      %v7021 = vld [vmem:[%s1 + $0x1a8] sm:$0xff]
      %v7022 = vld [vmem:[%s2 + $0x2] sm:$0x1]
      %v7023 = vlaneseq
      %v7024 = vshrl.u32 %v7023, 7
      %v7025 = vsub.s32 0, %v7024
      %v7026 = vrot.slane %v7022, %v7025
      %vm7027 = vcmask 719872
      %v7029 = vsel %vm7027, %v6963, 0
      %v7032 = vsel %vm7027, %v6964, 0
      %v7035 = vsel %vm7027, %v6965, 0
      %v7038 = vsel %vm7027, %v6966, 0
      %v7041 = vsel %vm7027, %v6967, 0
      %v7044 = vsel %vm7027, %v6968, 0
      %v7047 = vsel %vm7027, %v6969, 0
      %v7050 = vsel %vm7027, %v6970, 0
      %v7053 = vsel %vm7027, %v6971, 0
      %v7056 = vsel %vm7027, %v6972, 0
      %v7059 = vsel %vm7027, %v6973, 0
      %v7062 = vsel %vm7027, %v6974, 0
      %v7065 = vsel %vm7027, %v6975, 0
      %v7068 = vsel %vm7027, %v6976, 0
      %v7071 = vsel %vm7027, %v6977, 0
      %v7074 = vsel %vm7027, %v6978, 0
      %v7077 = vsel %vm7027, %v6979, 0
      %v7080 = vsel %vm7027, %v6980, 0
      %v7083 = vsel %vm7027, %v6981, 0
      %v7086 = vsel %vm7027, %v6982, 0
      %v7089 = vsel %vm7027, %v6983, 0
      %v7092 = vsel %vm7027, %v6984, 0
      %v7095 = vsel %vm7027, %v6985, 0
      %v7098 = vsel %vm7027, %v6986, 0
      %v7101 = vsel %vm7027, %v6987, 0
      %v7104 = vsel %vm7027, %v6988, 0
      %v7107 = vsel %vm7027, %v6989, 0
      %v7110 = vsel %vm7027, %v6990, 0
      %v7113 = vsel %vm7027, %v6991, 0
      %v7116 = vsel %vm7027, %v6992, 0
      %v7119 = vsel %vm7027, %v6993, 0
      %v7122 = vsel %vm7027, %v6994, 0
      %7124 = vmatprep.subr.mxu0 0.0
      %7125 = vmatpush1.msra.mxu0 %v7010
      %7126 = vmatprep.subr.mxu0 0.0
      %7127 = vmatpush1.msra.mxu0 %v7009
      %7128 = vmatprep.subr.mxu0 0.0
      %7129 = vmatpush1.msra.mxu0 %v7008
      %7130 = vmatprep.subr.mxu0 0.0
      %7131 = vmatpush1.msra.mxu0 %v7007
      %7132 = vmatprep.subr.mxu0 0.0
      %7133 = vmatpush1.msra.mxu0 %v7006
      %7134 = vmatprep.subr.mxu0 0.0
      %7135 = vmatpush1.msra.mxu0 %v7005
      %7136 = vmatprep.subr.mxu0 0.0
      %7137 = vmatpush1.msra.mxu0 %v7004
      %7138 = vmatprep.subr.mxu0 0.0
      %7139 = vmatpush1.msra.mxu0 %v7003
      %7140 = vmatprep.subr.mxu0 0.0
      %7141 = vmatpush1.msra.mxu0 %v7002
      %7142 = vmatprep.subr.mxu0 0.0
      %7143 = vmatpush1.msra.mxu0 %v7001
      %7144 = vmatprep.subr.mxu0 0.0
      %7145 = vmatpush1.msra.mxu0 %v7000
      %7146 = vmatprep.subr.mxu0 0.0
      %7147 = vmatpush1.msra.mxu0 %v6999
      %7148 = vmatprep.subr.mxu0 0.0
      %7149 = vmatpush1.msra.mxu0 %v6998
      %7150 = vmatprep.subr.mxu0 0.0
      %7151 = vmatpush1.msra.mxu0 %v6997
      %7152 = vmatprep.subr.mxu0 0.0
      %7153 = vmatpush1.msra.mxu0 %v6996
      %7154 = vmatprep.subr.mxu0 0.0
      %7155 = vmatpush1.msra.mxu0 %v6995
      %7156 = vmatprep.subr.mxu0 0.0
      %7157 = vmatpush2.msra.mxu0 0.0
      %7158 = vmatprep.subr.mxu0 0.0
      %7159 = vmatpush2.msra.mxu0 0.0
      %7160 = vmatprep.subr.mxu0 0.0
      %7161 = vmatpush2.msra.mxu0 0.0
      %7162 = vmatprep.subr.mxu0 0.0
      %7163 = vmatpush2.msra.mxu0 0.0
      %7164 = vmatprep.subr.mxu0 0.0
      %7165 = vmatpush2.msra.mxu0 0.0
      %7166 = vmatprep.subr.mxu0 0.0
      %7167 = vmatpush2.msra.mxu0 %v7021
      %7168 = vmatprep.subr.mxu0 0.0
      %7169 = vmatpush2.msra.mxu0 %v7020
      %7170 = vmatprep.subr.mxu0 0.0
      %7171 = vmatpush2.msra.mxu0 %v7019
      %7172 = vmatprep.subr.mxu0 0.0
      %7173 = vmatpush2.msra.mxu0 %v7018
      %7174 = vmatprep.subr.mxu0 0.0
      %7175 = vmatpush2.msra.mxu0 %v7017
      %7176 = vmatprep.subr.mxu0 0.0
      %7177 = vmatpush2.msra.mxu0 %v7016
      %7178 = vmatprep.subr.mxu0 0.0
      %7179 = vmatpush2.msra.mxu0 %v7015
      %7180 = vmatprep.subr.mxu0 0.0
      %7181 = vmatpush2.msra.mxu0 %v7014
      %7182 = vmatprep.subr.mxu0 0.0
      %7183 = vmatpush2.msra.mxu0 %v7013
      %7184 = vmatprep.subr.mxu0 0.0
      %7185 = vmatpush2.msra.mxu0 %v7012
      %7186 = vmatprep.subr.mxu0 0.0
      %7187 = vmatpush2.msra.mxu0 %v7011
      %7188 = vmatprep.mubr.f32.mxu0 %v7029
      %7189 = vmatmul.mubr.f32.gmra.mxu0 %v6867
      %v7190 = vpop.f32.mrf.mxu0
      %v7191 = vadd.f32 %v7026, %v7190
      %v7192 = vpop.f32.mrf.mxu0
      %7193 = vmatprep.mubr.f32.mxu0 %v7032
      %7194 = vmatmul.mubr.f32.gmra.mxu0 %v6868
      %v7195 = vpop.f32.mrf.mxu0
      %v7196 = vadd.f32 %v7026, %v7195
      %v7197 = vpop.f32.mrf.mxu0
      %7198 = vmatprep.mubr.f32.mxu0 %v7035
      %7199 = vmatmul.mubr.f32.gmra.mxu0 %v6869
      %v7200 = vpop.f32.mrf.mxu0
      %v7201 = vadd.f32 %v7026, %v7200
      %v7202 = vpop.f32.mrf.mxu0
      %7203 = vmatprep.mubr.f32.mxu0 %v7038
      %7204 = vmatmul.mubr.f32.gmra.mxu0 %v6870
      %v7205 = vpop.f32.mrf.mxu0
      %v7206 = vadd.f32 %v7026, %v7205
      %v7207 = vpop.f32.mrf.mxu0
      %7208 = vmatprep.mubr.f32.mxu0 %v7041
      %7209 = vmatmul.mubr.f32.gmra.mxu0 %v6871
      %v7210 = vpop.f32.mrf.mxu0
      %v7211 = vadd.f32 %v7026, %v7210
      %v7212 = vpop.f32.mrf.mxu0
      %7213 = vmatprep.mubr.f32.mxu0 %v7044
      %7214 = vmatmul.mubr.f32.gmra.mxu0 %v6872
      %v7215 = vpop.f32.mrf.mxu0
      %v7216 = vadd.f32 %v7026, %v7215
      %v7217 = vpop.f32.mrf.mxu0
      %7218 = vmatprep.mubr.f32.mxu0 %v7047
      %7219 = vmatmul.mubr.f32.gmra.mxu0 %v6873
      %v7220 = vpop.f32.mrf.mxu0
      %v7221 = vadd.f32 %v7026, %v7220
      %v7222 = vpop.f32.mrf.mxu0
      %7223 = vmatprep.mubr.f32.mxu0 %v7050
      %7224 = vmatmul.mubr.f32.gmra.mxu0 %v6874
      %v7225 = vpop.f32.mrf.mxu0
      %v7226 = vadd.f32 %v7026, %v7225
      %v7227 = vpop.f32.mrf.mxu0
      %7228 = vmatprep.mubr.f32.mxu0 %v7053
      %7229 = vmatmul.mubr.f32.gmra.mxu0 %v6875
      %v7230 = vpop.f32.mrf.mxu0
      %v7231 = vadd.f32 %v7026, %v7230
      %v7232 = vpop.f32.mrf.mxu0
      %7233 = vmatprep.mubr.f32.mxu0 %v7056
      %7234 = vmatmul.mubr.f32.gmra.mxu0 %v6876
      %v7235 = vpop.f32.mrf.mxu0
      %v7236 = vadd.f32 %v7026, %v7235
      %v7237 = vpop.f32.mrf.mxu0
      %7238 = vmatprep.mubr.f32.mxu0 %v7059
      %7239 = vmatmul.mubr.f32.gmra.mxu0 %v6877
      %v7240 = vpop.f32.mrf.mxu0
      %v7241 = vadd.f32 %v7026, %v7240
      %v7242 = vpop.f32.mrf.mxu0
      %7243 = vmatprep.mubr.f32.mxu0 %v7062
      %7244 = vmatmul.mubr.f32.gmra.mxu0 %v6878
      %v7245 = vpop.f32.mrf.mxu0
      %v7246 = vadd.f32 %v7026, %v7245
      %v7247 = vpop.f32.mrf.mxu0
      %7248 = vmatprep.mubr.f32.mxu0 %v7065
      %7249 = vmatmul.mubr.f32.gmra.mxu0 %v6879
      %v7250 = vpop.f32.mrf.mxu0
      %v7251 = vadd.f32 %v7026, %v7250
      %v7252 = vpop.f32.mrf.mxu0
      %7253 = vmatprep.mubr.f32.mxu0 %v7068
      %7254 = vmatmul.mubr.f32.gmra.mxu0 %v6880
      %v7255 = vpop.f32.mrf.mxu0
      %v7256 = vadd.f32 %v7026, %v7255
      %v7257 = vpop.f32.mrf.mxu0
      %7258 = vmatprep.mubr.f32.mxu0 %v7071
      %7259 = vmatmul.mubr.f32.gmra.mxu0 %v6881
      %v7260 = vpop.f32.mrf.mxu0
      %v7261 = vadd.f32 %v7026, %v7260
      %v7262 = vpop.f32.mrf.mxu0
      %7263 = vmatprep.mubr.f32.mxu0 %v7074
      %7264 = vmatmul.mubr.f32.gmra.mxu0 %v6882
      %v7265 = vpop.f32.mrf.mxu0
      %v7266 = vadd.f32 %v7026, %v7265
      %v7267 = vpop.f32.mrf.mxu0
      %7268 = vmatprep.mubr.f32.mxu0 %v7077
      %7269 = vmatmul.mubr.f32.gmra.mxu0 %v6883
      %v7270 = vpop.f32.mrf.mxu0
      %v7271 = vadd.f32 %v7026, %v7270
      %v7272 = vpop.f32.mrf.mxu0
      %7273 = vmatprep.mubr.f32.mxu0 %v7080
      %7274 = vmatmul.mubr.f32.gmra.mxu0 %v6884
      %v7275 = vpop.f32.mrf.mxu0
      %v7276 = vadd.f32 %v7026, %v7275
      %v7277 = vpop.f32.mrf.mxu0
      %7278 = vmatprep.mubr.f32.mxu0 %v7083
      %7279 = vmatmul.mubr.f32.gmra.mxu0 %v6885
      %v7280 = vpop.f32.mrf.mxu0
      %v7281 = vadd.f32 %v7026, %v7280
      %v7282 = vpop.f32.mrf.mxu0
      %7283 = vmatprep.mubr.f32.mxu0 %v7086
      %7284 = vmatmul.mubr.f32.gmra.mxu0 %v6886
      %v7285 = vpop.f32.mrf.mxu0
      %v7286 = vadd.f32 %v7026, %v7285
      %v7287 = vpop.f32.mrf.mxu0
      %7288 = vmatprep.mubr.f32.mxu0 %v7089
      %7289 = vmatmul.mubr.f32.gmra.mxu0 %v6887
      %v7290 = vpop.f32.mrf.mxu0
      %v7291 = vadd.f32 %v7026, %v7290
      %v7292 = vpop.f32.mrf.mxu0
      %7293 = vmatprep.mubr.f32.mxu0 %v7092
      %7294 = vmatmul.mubr.f32.gmra.mxu0 %v6888
      %v7295 = vpop.f32.mrf.mxu0
      %v7296 = vadd.f32 %v7026, %v7295
      %v7297 = vpop.f32.mrf.mxu0
      %7298 = vmatprep.mubr.f32.mxu0 %v7095
      %7299 = vmatmul.mubr.f32.gmra.mxu0 %v6889
      %v7300 = vpop.f32.mrf.mxu0
      %v7301 = vadd.f32 %v7026, %v7300
      %v7302 = vpop.f32.mrf.mxu0
      %7303 = vmatprep.mubr.f32.mxu0 %v7098
      %7304 = vmatmul.mubr.f32.gmra.mxu0 %v6890
      %v7305 = vpop.f32.mrf.mxu0
      %v7306 = vadd.f32 %v7026, %v7305
      %v7307 = vpop.f32.mrf.mxu0
      %7308 = vmatprep.mubr.f32.mxu0 %v7101
      %7309 = vmatmul.mubr.f32.gmra.mxu0 %v6891
      %v7310 = vpop.f32.mrf.mxu0
      %v7311 = vadd.f32 %v7026, %v7310
      %v7312 = vpop.f32.mrf.mxu0
      %7313 = vmatprep.mubr.f32.mxu0 %v7104
      %7314 = vmatmul.mubr.f32.gmra.mxu0 %v6892
      %v7315 = vpop.f32.mrf.mxu0
      %v7316 = vadd.f32 %v7026, %v7315
      %v7317 = vpop.f32.mrf.mxu0
      %7318 = vmatprep.mubr.f32.mxu0 %v7107
      %7319 = vmatmul.mubr.f32.gmra.mxu0 %v6893
      %v7320 = vpop.f32.mrf.mxu0
      %v7321 = vadd.f32 %v7026, %v7320
      %v7322 = vpop.f32.mrf.mxu0
      %7323 = vmatprep.mubr.f32.mxu0 %v7110
      %7324 = vmatmul.mubr.f32.gmra.mxu0 %v6894
      %v7325 = vpop.f32.mrf.mxu0
      %v7326 = vadd.f32 %v7026, %v7325
      %v7327 = vpop.f32.mrf.mxu0
      %7328 = vmatprep.mubr.f32.mxu0 %v7113
      %7329 = vmatmul.mubr.f32.gmra.mxu0 %v6895
      %v7330 = vpop.f32.mrf.mxu0
      %v7331 = vadd.f32 %v7026, %v7330
      %v7332 = vpop.f32.mrf.mxu0
      %7333 = vmatprep.mubr.f32.mxu0 %v7116
      %7334 = vmatmul.mubr.f32.gmra.mxu0 %v6896
      %v7335 = vpop.f32.mrf.mxu0
      %v7336 = vadd.f32 %v7026, %v7335
      %v7337 = vpop.f32.mrf.mxu0
      %7338 = vmatprep.mubr.f32.mxu0 %v7119
      %7339 = vmatmul.mubr.f32.gmra.mxu0 %v6897
      %v7340 = vpop.f32.mrf.mxu0
      %v7341 = vadd.f32 %v7026, %v7340
      %v7342 = vpop.f32.mrf.mxu0
      %7343 = vmatprep.mubr.f32.mxu0 %v7122
      %7344 = vmatmul.mubr.f32.gmra.mxu0 %v6898
      %v7345 = vpop.f32.mrf.mxu0
      %v7346 = vadd.f32 %v7026, %v7345
      %v7347 = vpop.f32.mrf.mxu0
      %7348 = vdwg.mxu0
      %v7349 = vmax.f32 %v7191, 0.0
      %v7350 = vmax.f32 %v7196, 0.0
      %v7351 = vmax.f32 %v7201, 0.0
      %v7352 = vmax.f32 %v7206, 0.0
      %v7353 = vmax.f32 %v7211, 0.0
      %v7354 = vmax.f32 %v7216, 0.0
      %v7355 = vmax.f32 %v7221, 0.0
      %v7356 = vmax.f32 %v7226, 0.0
      %v7357 = vmax.f32 %v7231, 0.0
      %v7358 = vmax.f32 %v7236, 0.0
      %v7359 = vmax.f32 %v7241, 0.0
      %v7360 = vmax.f32 %v7246, 0.0
      %v7361 = vmax.f32 %v7251, 0.0
      %v7362 = vmax.f32 %v7256, 0.0
      %v7363 = vmax.f32 %v7261, 0.0
      %v7364 = vmax.f32 %v7266, 0.0
      %v7365 = vmax.f32 %v7271, 0.0
      %v7366 = vmax.f32 %v7276, 0.0
      %v7367 = vmax.f32 %v7281, 0.0
      %v7368 = vmax.f32 %v7286, 0.0
      %v7369 = vmax.f32 %v7291, 0.0
      %v7370 = vmax.f32 %v7296, 0.0
      %v7371 = vmax.f32 %v7301, 0.0
      %v7372 = vmax.f32 %v7306, 0.0
      %v7373 = vmax.f32 %v7311, 0.0
      %v7374 = vmax.f32 %v7316, 0.0
      %v7375 = vmax.f32 %v7321, 0.0
      %v7376 = vmax.f32 %v7326, 0.0
      %v7377 = vmax.f32 %v7331, 0.0
      %v7378 = vmax.f32 %v7336, 0.0
      %v7379 = vmax.f32 %v7341, 0.0
      %v7380 = vmax.f32 %v7346, 0.0
      %v7381 = vld [vmem:[%s3 + $0x18] sm:$0xff]
      %v7383 = vsel %vm304, %v7349, 0
      %v7386 = vsel %vm304, %v7350, 0
      %v7389 = vsel %vm304, %v7351, 0
      %v7392 = vsel %vm304, %v7352, 0
      %v7395 = vsel %vm304, %v7353, 0
      %v7398 = vsel %vm304, %v7354, 0
      %v7401 = vsel %vm304, %v7355, 0
      %v7404 = vsel %vm304, %v7356, 0
      %v7407 = vsel %vm304, %v7357, 0
      %v7410 = vsel %vm304, %v7358, 0
      %v7413 = vsel %vm304, %v7359, 0
      %v7416 = vsel %vm304, %v7360, 0
      %v7419 = vsel %vm304, %v7361, 0
      %v7422 = vsel %vm304, %v7362, 0
      %v7425 = vsel %vm304, %v7363, 0
      %v7428 = vsel %vm304, %v7364, 0
      %v7431 = vsel %vm304, %v7365, 0
      %v7434 = vsel %vm304, %v7366, 0
      %v7437 = vsel %vm304, %v7367, 0
      %v7440 = vsel %vm304, %v7368, 0
      %v7443 = vsel %vm304, %v7369, 0
      %v7446 = vsel %vm304, %v7370, 0
      %v7449 = vsel %vm304, %v7371, 0
      %v7452 = vsel %vm304, %v7372, 0
      %v7455 = vsel %vm304, %v7373, 0
      %v7458 = vsel %vm304, %v7374, 0
      %v7461 = vsel %vm304, %v7375, 0
      %v7464 = vsel %vm304, %v7376, 0
      %v7467 = vsel %vm304, %v7377, 0
      %v7470 = vsel %vm304, %v7378, 0
      %v7473 = vsel %vm304, %v7379, 0
      %v7476 = vsel %vm304, %v7380, 0
      %7478 = vmatprep.subr.mxu0 0.0
      %7479 = vmatpush1.msra.mxu0 0.0
      %7480 = vmatprep.subr.mxu0 0.0
      %7481 = vmatpush1.msra.mxu0 0.0
      %7482 = vmatprep.subr.mxu0 0.0
      %7483 = vmatpush1.msra.mxu0 0.0
      %7484 = vmatprep.subr.mxu0 0.0
      %7485 = vmatpush1.msra.mxu0 0.0
      %7486 = vmatprep.subr.mxu0 0.0
      %7487 = vmatpush1.msra.mxu0 0.0
      %7488 = vmatprep.subr.mxu0 0.0
      %7489 = vmatpush1.msra.mxu0 0.0
      %7490 = vmatprep.subr.mxu0 0.0
      %7491 = vmatpush1.msra.mxu0 0.0
      %7492 = vmatprep.subr.mxu0 0.0
      %7493 = vmatpush1.msra.mxu0 0.0
      %7494 = vmatprep.subr.mxu0 0.0
      %7495 = vmatpush1.msra.mxu0 0.0
      %7496 = vmatprep.subr.mxu0 0.0
      %7497 = vmatpush1.msra.mxu0 0.0
      %7498 = vmatprep.subr.mxu0 0.0
      %7499 = vmatpush1.msra.mxu0 0.0
      %7500 = vmatprep.subr.mxu0 0.0
      %7501 = vmatpush1.msra.mxu0 0.0
      %7502 = vmatprep.subr.mxu0 0.0
      %7503 = vmatpush1.msra.mxu0 0.0
      %7504 = vmatprep.subr.mxu0 0.0
      %7505 = vmatpush1.msra.mxu0 0.0
      %7506 = vmatprep.subr.mxu0 0.0
      %7507 = vmatpush1.msra.mxu0 0.0
      %7508 = vmatprep.subr.mxu0 0.0
      %7509 = vmatpush1.msra.mxu0 %v7381
      %7510 = vmatprep.subr.mxu0 0.0
      %7511 = vmatpush2.msra.mxu0 0.0
      %7512 = vmatprep.subr.mxu0 0.0
      %7513 = vmatpush2.msra.mxu0 0.0
      %7514 = vmatprep.subr.mxu0 0.0
      %7515 = vmatpush2.msra.mxu0 0.0
      %7516 = vmatprep.subr.mxu0 0.0
      %7517 = vmatpush2.msra.mxu0 0.0
      %7518 = vmatprep.subr.mxu0 0.0
      %7519 = vmatpush2.msra.mxu0 0.0
      %7520 = vmatprep.subr.mxu0 0.0
      %7521 = vmatpush2.msra.mxu0 0.0
      %7522 = vmatprep.subr.mxu0 0.0
      %7523 = vmatpush2.msra.mxu0 0.0
      %7524 = vmatprep.subr.mxu0 0.0
      %7525 = vmatpush2.msra.mxu0 0.0
      %7526 = vmatprep.subr.mxu0 0.0
      %7527 = vmatpush2.msra.mxu0 0.0
      %7528 = vmatprep.subr.mxu0 0.0
      %7529 = vmatpush2.msra.mxu0 0.0
      %7530 = vmatprep.subr.mxu0 0.0
      %7531 = vmatpush2.msra.mxu0 0.0
      %7532 = vmatprep.subr.mxu0 0.0
      %7533 = vmatpush2.msra.mxu0 0.0
      %7534 = vmatprep.subr.mxu0 0.0
      %7535 = vmatpush2.msra.mxu0 0.0
      %7536 = vmatprep.subr.mxu0 0.0
      %7537 = vmatpush2.msra.mxu0 0.0
      %7538 = vmatprep.subr.mxu0 0.0
      %7539 = vmatpush2.msra.mxu0 0.0
      %7540 = vmatprep.subr.mxu0 0.0
      %7541 = vmatpush2.msra.mxu0 0.0
      %7542 = vmatprep.mubr.f32.mxu0 0.0
      %7543 = vmatmul.mubr.f32.gmra.mxu0 %v7383
      %v7544 = vpop.f32.mrf.mxu0
      %v7545 = vadd.f32 0.0, %v7544
      %v7546 = vpop.f32.mrf.mxu0
      %7547 = vmatprep.mubr.f32.mxu0 0.0
      %7548 = vmatmul.mubr.f32.gmra.mxu0 %v7386
      %v7549 = vpop.f32.mrf.mxu0
      %v7550 = vadd.f32 0.0, %v7549
      %v7551 = vpop.f32.mrf.mxu0
      %7552 = vmatprep.mubr.f32.mxu0 0.0
      %7553 = vmatmul.mubr.f32.gmra.mxu0 %v7389
      %v7554 = vpop.f32.mrf.mxu0
      %v7555 = vadd.f32 0.0, %v7554
      %v7556 = vpop.f32.mrf.mxu0
      %7557 = vmatprep.mubr.f32.mxu0 0.0
      %7558 = vmatmul.mubr.f32.gmra.mxu0 %v7392
      %v7559 = vpop.f32.mrf.mxu0
      %v7560 = vadd.f32 0.0, %v7559
      %v7561 = vpop.f32.mrf.mxu0
      %7562 = vmatprep.mubr.f32.mxu0 0.0
      %7563 = vmatmul.mubr.f32.gmra.mxu0 %v7395
      %v7564 = vpop.f32.mrf.mxu0
      %v7565 = vadd.f32 0.0, %v7564
      %v7566 = vpop.f32.mrf.mxu0
      %7567 = vmatprep.mubr.f32.mxu0 0.0
      %7568 = vmatmul.mubr.f32.gmra.mxu0 %v7398
      %v7569 = vpop.f32.mrf.mxu0
      %v7570 = vadd.f32 0.0, %v7569
      %v7571 = vpop.f32.mrf.mxu0
      %7572 = vmatprep.mubr.f32.mxu0 0.0
      %7573 = vmatmul.mubr.f32.gmra.mxu0 %v7401
      %v7574 = vpop.f32.mrf.mxu0
      %v7575 = vadd.f32 0.0, %v7574
      %v7576 = vpop.f32.mrf.mxu0
      %7577 = vmatprep.mubr.f32.mxu0 0.0
      %7578 = vmatmul.mubr.f32.gmra.mxu0 %v7404
      %v7579 = vpop.f32.mrf.mxu0
      %v7580 = vadd.f32 0.0, %v7579
      %v7581 = vpop.f32.mrf.mxu0
      %7582 = vmatprep.mubr.f32.mxu0 0.0
      %7583 = vmatmul.mubr.f32.gmra.mxu0 %v7407
      %v7584 = vpop.f32.mrf.mxu0
      %v7585 = vadd.f32 0.0, %v7584
      %v7586 = vpop.f32.mrf.mxu0
      %7587 = vmatprep.mubr.f32.mxu0 0.0
      %7588 = vmatmul.mubr.f32.gmra.mxu0 %v7410
      %v7589 = vpop.f32.mrf.mxu0
      %v7590 = vadd.f32 0.0, %v7589
      %v7591 = vpop.f32.mrf.mxu0
      %7592 = vmatprep.mubr.f32.mxu0 0.0
      %7593 = vmatmul.mubr.f32.gmra.mxu0 %v7413
      %v7594 = vpop.f32.mrf.mxu0
      %v7595 = vadd.f32 0.0, %v7594
      %v7596 = vpop.f32.mrf.mxu0
      %7597 = vmatprep.mubr.f32.mxu0 0.0
      %7598 = vmatmul.mubr.f32.gmra.mxu0 %v7416
      %v7599 = vpop.f32.mrf.mxu0
      %v7600 = vadd.f32 0.0, %v7599
      %v7601 = vpop.f32.mrf.mxu0
      %7602 = vmatprep.mubr.f32.mxu0 0.0
      %7603 = vmatmul.mubr.f32.gmra.mxu0 %v7419
      %v7604 = vpop.f32.mrf.mxu0
      %v7605 = vadd.f32 0.0, %v7604
      %v7606 = vpop.f32.mrf.mxu0
      %7607 = vmatprep.mubr.f32.mxu0 0.0
      %7608 = vmatmul.mubr.f32.gmra.mxu0 %v7422
      %v7609 = vpop.f32.mrf.mxu0
      %v7610 = vadd.f32 0.0, %v7609
      %v7611 = vpop.f32.mrf.mxu0
      %7612 = vmatprep.mubr.f32.mxu0 0.0
      %7613 = vmatmul.mubr.f32.gmra.mxu0 %v7425
      %v7614 = vpop.f32.mrf.mxu0
      %v7615 = vadd.f32 0.0, %v7614
      %v7616 = vpop.f32.mrf.mxu0
      %7617 = vmatprep.mubr.f32.mxu0 0.0
      %7618 = vmatmul.mubr.f32.gmra.mxu0 %v7428
      %v7619 = vpop.f32.mrf.mxu0
      %v7620 = vadd.f32 0.0, %v7619
      %v7621 = vpop.f32.mrf.mxu0
      %7622 = vmatprep.mubr.f32.mxu0 0.0
      %7623 = vmatmul.mubr.f32.gmra.mxu0 %v7431
      %v7624 = vpop.f32.mrf.mxu0
      %v7625 = vadd.f32 0.0, %v7624
      %v7626 = vpop.f32.mrf.mxu0
      %7627 = vmatprep.mubr.f32.mxu0 0.0
      %7628 = vmatmul.mubr.f32.gmra.mxu0 %v7434
      %v7629 = vpop.f32.mrf.mxu0
      %v7630 = vadd.f32 0.0, %v7629
      %v7631 = vpop.f32.mrf.mxu0
      %7632 = vmatprep.mubr.f32.mxu0 0.0
      %7633 = vmatmul.mubr.f32.gmra.mxu0 %v7437
      %v7634 = vpop.f32.mrf.mxu0
      %v7635 = vadd.f32 0.0, %v7634
      %v7636 = vpop.f32.mrf.mxu0
      %7637 = vmatprep.mubr.f32.mxu0 0.0
      %7638 = vmatmul.mubr.f32.gmra.mxu0 %v7440
      %v7639 = vpop.f32.mrf.mxu0
      %v7640 = vadd.f32 0.0, %v7639
      %v7641 = vpop.f32.mrf.mxu0
      %7642 = vmatprep.mubr.f32.mxu0 0.0
      %7643 = vmatmul.mubr.f32.gmra.mxu0 %v7443
      %v7644 = vpop.f32.mrf.mxu0
      %v7645 = vadd.f32 0.0, %v7644
      %v7646 = vpop.f32.mrf.mxu0
      %7647 = vmatprep.mubr.f32.mxu0 0.0
      %7648 = vmatmul.mubr.f32.gmra.mxu0 %v7446
      %v7649 = vpop.f32.mrf.mxu0
      %v7650 = vadd.f32 0.0, %v7649
      %v7651 = vpop.f32.mrf.mxu0
      %7652 = vmatprep.mubr.f32.mxu0 0.0
      %7653 = vmatmul.mubr.f32.gmra.mxu0 %v7449
      %v7654 = vpop.f32.mrf.mxu0
      %v7655 = vadd.f32 0.0, %v7654
      %v7656 = vpop.f32.mrf.mxu0
      %7657 = vmatprep.mubr.f32.mxu0 0.0
      %7658 = vmatmul.mubr.f32.gmra.mxu0 %v7452
      %v7659 = vpop.f32.mrf.mxu0
      %v7660 = vadd.f32 0.0, %v7659
      %v7661 = vpop.f32.mrf.mxu0
      %7662 = vmatprep.mubr.f32.mxu0 0.0
      %7663 = vmatmul.mubr.f32.gmra.mxu0 %v7455
      %v7664 = vpop.f32.mrf.mxu0
      %v7665 = vadd.f32 0.0, %v7664
      %v7666 = vpop.f32.mrf.mxu0
      %7667 = vmatprep.mubr.f32.mxu0 0.0
      %7668 = vmatmul.mubr.f32.gmra.mxu0 %v7458
      %v7669 = vpop.f32.mrf.mxu0
      %v7670 = vadd.f32 0.0, %v7669
      %v7671 = vpop.f32.mrf.mxu0
      %7672 = vmatprep.mubr.f32.mxu0 0.0
      %7673 = vmatmul.mubr.f32.gmra.mxu0 %v7461
      %v7674 = vpop.f32.mrf.mxu0
      %v7675 = vadd.f32 0.0, %v7674
      %v7676 = vpop.f32.mrf.mxu0
      %7677 = vmatprep.mubr.f32.mxu0 0.0
      %7678 = vmatmul.mubr.f32.gmra.mxu0 %v7464
      %v7679 = vpop.f32.mrf.mxu0
      %v7680 = vadd.f32 0.0, %v7679
      %v7681 = vpop.f32.mrf.mxu0
      %7682 = vmatprep.mubr.f32.mxu0 0.0
      %7683 = vmatmul.mubr.f32.gmra.mxu0 %v7467
      %v7684 = vpop.f32.mrf.mxu0
      %v7685 = vadd.f32 0.0, %v7684
      %v7686 = vpop.f32.mrf.mxu0
      %7687 = vmatprep.mubr.f32.mxu0 0.0
      %7688 = vmatmul.mubr.f32.gmra.mxu0 %v7470
      %v7689 = vpop.f32.mrf.mxu0
      %v7690 = vadd.f32 0.0, %v7689
      %v7691 = vpop.f32.mrf.mxu0
      %7692 = vmatprep.mubr.f32.mxu0 0.0
      %7693 = vmatmul.mubr.f32.gmra.mxu0 %v7473
      %v7694 = vpop.f32.mrf.mxu0
      %v7695 = vadd.f32 0.0, %v7694
      %v7696 = vpop.f32.mrf.mxu0
      %7697 = vmatprep.mubr.f32.mxu0 0.0
      %7698 = vmatmul.mubr.f32.gmra.mxu0 %v7476
      %v7699 = vpop.f32.mrf.mxu0
      %v7700 = vadd.f32 0.0, %v7699
      %v7701 = vpop.f32.mrf.mxu0
      %7702 = vdwg.mxu0
      %v7703 = vadd.f32 %v5394, %v7545
      %v7704 = vadd.f32 %v5395, %v7550
      %v7705 = vadd.f32 %v5396, %v7555
      %v7706 = vadd.f32 %v5397, %v7560
      %v7707 = vadd.f32 %v5398, %v7565
      %v7708 = vadd.f32 %v5399, %v7570
      %v7709 = vadd.f32 %v5400, %v7575
      %v7710 = vadd.f32 %v5401, %v7580
      %v7711 = vadd.f32 %v5402, %v7585
      %v7712 = vadd.f32 %v5403, %v7590
      %v7713 = vadd.f32 %v5404, %v7595
      %v7714 = vadd.f32 %v5405, %v7600
      %v7715 = vadd.f32 %v5406, %v7605
      %v7716 = vadd.f32 %v5407, %v7610
      %v7717 = vadd.f32 %v5408, %v7615
      %v7718 = vadd.f32 %v5409, %v7620
      %v7719 = vadd.f32 %v5410, %v7625
      %v7720 = vadd.f32 %v5411, %v7630
      %v7721 = vadd.f32 %v5412, %v7635
      %v7722 = vadd.f32 %v5413, %v7640
      %v7723 = vadd.f32 %v5414, %v7645
      %v7724 = vadd.f32 %v5415, %v7650
      %v7725 = vadd.f32 %v5416, %v7655
      %v7726 = vadd.f32 %v5417, %v7660
      %v7727 = vadd.f32 %v5418, %v7665
      %v7728 = vadd.f32 %v5419, %v7670
      %v7729 = vadd.f32 %v5420, %v7675
      %v7730 = vadd.f32 %v5421, %v7680
      %v7731 = vadd.f32 %v5422, %v7685
      %v7732 = vadd.f32 %v5423, %v7690
      %v7733 = vadd.f32 %v5424, %v7695
      %v7734 = vadd.f32 %v5425, %v7700
      %7735 = vst.msk [vmem:[%s224] sm:$0xff] %vm304, %v7703
      %7736 = vst.msk [vmem:[%s224 + $0x8] sm:$0xff] %vm304, %v7704
      %7737 = vst.msk [vmem:[%s224 + $0x10] sm:$0xff] %vm304, %v7705
      %7738 = vst.msk [vmem:[%s224 + $0x18] sm:$0xff] %vm304, %v7706
      %7739 = vst.msk [vmem:[%s224 + $0x20] sm:$0xff] %vm304, %v7707
      %7740 = vst.msk [vmem:[%s224 + $0x28] sm:$0xff] %vm304, %v7708
      %7741 = vst.msk [vmem:[%s224 + $0x30] sm:$0xff] %vm304, %v7709
      %7742 = vst.msk [vmem:[%s224 + $0x38] sm:$0xff] %vm304, %v7710
      %7743 = vst.msk [vmem:[%s224 + $0x40] sm:$0xff] %vm304, %v7711
      %7744 = vst.msk [vmem:[%s224 + $0x48] sm:$0xff] %vm304, %v7712
      %7745 = vst.msk [vmem:[%s224 + $0x50] sm:$0xff] %vm304, %v7713
      %7746 = vst.msk [vmem:[%s224 + $0x58] sm:$0xff] %vm304, %v7714
      %7747 = vst.msk [vmem:[%s224 + $0x60] sm:$0xff] %vm304, %v7715
      %7748 = vst.msk [vmem:[%s224 + $0x68] sm:$0xff] %vm304, %v7716
      %7749 = vst.msk [vmem:[%s224 + $0x70] sm:$0xff] %vm304, %v7717
      %7750 = vst.msk [vmem:[%s224 + $0x78] sm:$0xff] %vm304, %v7718
      %7751 = vst.msk [vmem:[%s224 + $0x80] sm:$0xff] %vm304, %v7719
      %7752 = vst.msk [vmem:[%s224 + $0x88] sm:$0xff] %vm304, %v7720
      %7753 = vst.msk [vmem:[%s224 + $0x90] sm:$0xff] %vm304, %v7721
      %7754 = vst.msk [vmem:[%s224 + $0x98] sm:$0xff] %vm304, %v7722
      %7755 = vst.msk [vmem:[%s224 + $0xa0] sm:$0xff] %vm304, %v7723
      %7756 = vst.msk [vmem:[%s224 + $0xa8] sm:$0xff] %vm304, %v7724
      %7757 = vst.msk [vmem:[%s224 + $0xb0] sm:$0xff] %vm304, %v7725
      %7758 = vst.msk [vmem:[%s224 + $0xb8] sm:$0xff] %vm304, %v7726
      %7759 = vst.msk [vmem:[%s224 + $0xc0] sm:$0xff] %vm304, %v7727
      %7760 = vst.msk [vmem:[%s224 + $0xc8] sm:$0xff] %vm304, %v7728
      %7761 = vst.msk [vmem:[%s224 + $0xd0] sm:$0xff] %vm304, %v7729
      %7762 = vst.msk [vmem:[%s224 + $0xd8] sm:$0xff] %vm304, %v7730
      %7763 = vst.msk [vmem:[%s224 + $0xe0] sm:$0xff] %vm304, %v7731
      %7764 = vst.msk [vmem:[%s224 + $0xe8] sm:$0xff] %vm304, %v7732
      %7765 = vst.msk [vmem:[%s224 + $0xf0] sm:$0xff] %vm304, %v7733
      %7766 = vst.msk [vmem:[%s224 + $0xf8] sm:$0xff] %vm304, %v7734
      %p7767 = scmp.lt.s32.totalorder %s16, 1
      %s7768 = scalar_select %p7767, %s16, 1
      %s7769 = smul.addr %s7768, 32
      %s7770 = smul.addr %s7769, 8
      %s7771 = scalar_lea.vmem %s5, %s7770
      // Predicated region
      $region41: #{rdb_forward.1} parent=39 // pred_check
        %p7772 = pneg %p144
      $region42: #{rdb_forward.1} parent=39 // pred_check_branch
        %7774 = sbr.rel (%p7772) target = $region44
      $region43: #{rdb_forward.1} parent=39 // pred_region
        _
      $region44: #{rdb_forward.1} parent=39 // pred_fallthru
        _
    $region40: #{rdb_forward.1} parent=5 // pred_fallthru
      _
    %p7775 = scmp.le.s32.totalorder 2, %s11
    // Predicated region
    $region45: #{rdb_forward.1} parent=5 // pred_check
      %p7776 = pneg %p7775
    $region46: #{rdb_forward.1} parent=5 // pred_check_branch
      %7778 = sbr.rel (%p7776) target = $region48
    $region47: #{rdb_forward.1} parent=5 // pred_region
      %s7779 = ssub.s32 %s11, 2
      // Predicated region
      $region49: #{rdb_forward.1} parent=47 // pred_check
        %p7780 = pneg %p150
      $region50: #{rdb_forward.1} parent=47 // pred_check_branch
        %7782 = sbr.rel (%p7780) target = $region52
      $region51: #{rdb_forward.1} parent=47 // pred_region
        %p7783 = scmp.lt.s32.totalorder %s17, 1
        %s7784 = scalar_select %p7783, %s17, 1
        %s7785 = smul.addr %s7784, 32
        %s7786 = smul.addr %s7785, 8
        %s7787 = scalar_lea.vmem %s5, %s7786
      $region52: #{rdb_forward.1} parent=47 // pred_fallthru
        _
    $region48: #{rdb_forward.1} parent=5 // pred_fallthru
      _
  $region6: #{rdb_forward.1} parent=0 // loop_footer
    %s15 = sadd.s32 1, %s11
  $region7: #{rdb_forward.1} parent=0 // loop_footer_branch
    %10 = sbr.rel target = $region3
  $region8: #{rdb_forward.1} parent=0 // loop_exit
    _

</llo_original>
